<compile_context>
chip_gen: v5e
topology: v5e:2x2
jax: 0.10.0
libtpu: 0.0.40
codegen_flags: <defaults>
</compile_context>

<pallas_src>
import functools
import math

import jax
import jax.numpy as jnp
import numpy as np
from jax import lax
from jax.experimental import pallas as pl
from jax.experimental.pallas import tpu as pltpu


# 4-phase sub-pixel taps for ConvTranspose2d(k=4, s=2, p=1).
#   output row oy = 2p + a gets contributions from input rows (p + d - 1)
#   with kernel row ky, for (d, ky) in _TAPS[a]; identically for columns.
_TAPS = {0: ((0, 3), (1, 1)), 1: ((1, 2), (2, 0))}


# ----------------------------- Pallas kernel -------------------------------

def _decoder_kernel(xp_ref, w3_ref, b3_ref, w1_ref, b1_ref, wup_ref, bup_ref,
                    out_ref, yp_scr, *, H, W, C, Cout):
    f32, bf16 = jnp.float32, jnp.bfloat16
    M = H * W

    xp = xp_ref[0]                              # (H+2, W+2, C) f32, x padded by 1
    a = jnp.maximum(xp, 0.0)                    # ReLU (zero padding preserved)
    a_b = a.astype(bf16)                        # cast ONCE for all 9 MXU taps

    # ---- ResBlock conv3x3 (padding=1): 9 shifted-slice MXU matmuls --------
    acc = jnp.zeros((M, C), f32)
    for kh in range(3):
        for kw in range(3):
            sl = a_b[kh:kh + H, kw:kw + W, :].reshape(M, C)
            acc = acc + jnp.dot(sl, w3_ref[kh * 3 + kw],
                                preferred_element_type=f32)
    h = jnp.maximum(acc + b3_ref[...], 0.0)     # bias + ReLU, f32

    # ---- ResBlock conv1x1 + residual + trailing decoder ReLU --------------
    r = jnp.dot(h.astype(bf16), w1_ref[...], preferred_element_type=f32)
    x_center = xp[1:H + 1, 1:W + 1, :].reshape(M, C)      # original x (f32)
    y = jnp.maximum(r + b1_ref[...] + x_center, 0.0)      # (M, C) f32

    # ---- zero-padded copy of y kept in VMEM (aligned store at col 8) ------
    yp_scr[...] = jnp.zeros(yp_scr.shape, yp_scr.dtype)
    yp_scr[1:H + 1, 8:8 + W, :] = y.reshape(H, W, C)

    # ---- ConvTranspose2d(k=4, s=2, p=1): 4-phase decomposition ------------
    bup = bup_ref[...]
    for pa in range(2):
        for pb in range(2):
            acc_t = jnp.zeros((M, Cout), f32)
            t = 0
            for (dy, _ky) in _TAPS[pa]:
                for (dx, _kx) in _TAPS[pb]:
                    sl = yp_scr[dy:dy + H, 7 + dx:7 + dx + W, :]
                    sl = sl.reshape(M, C).astype(bf16)
                    acc_t = acc_t + jnp.dot(sl, wup_ref[pa, pb, t],
                                            preferred_element_type=f32)
                    t += 1
            out_ref[0, pa, pb] = (acc_t + bup).reshape(H, W, Cout) \
                                              .astype(out_ref.dtype)


# ----------------------------- wrapper --------------------------------------

def decoder_forward_pallas(x_nchw, packed):
    """Decoder(channel, out_channel, upsample=2, n_res_blocks=1) forward."""
    N, C, H, W = x_nchw.shape
    Cout = packed["bup"].shape[-1]

    x = jnp.transpose(x_nchw, (0, 2, 3, 1)).astype(jnp.float32)      # NHWC
    xp = jnp.pad(x, ((0, 0), (1, 1), (1, 1), (0, 0)))                # pad=1

    kernel = functools.partial(_decoder_kernel, H=H, W=W, C=C, Cout=Cout)

    out6 = pl.pallas_call(
        kernel,
        grid=(N,),
        in_specs=[
            pl.BlockSpec((1, H + 2, W + 2, C), lambda n: (n, 0, 0, 0)),
            pl.BlockSpec((9, C, C), lambda n: (0, 0, 0)),
            pl.BlockSpec((1, C), lambda n: (0, 0)),
            pl.BlockSpec((C, C), lambda n: (0, 0)),
            pl.BlockSpec((1, C), lambda n: (0, 0)),
            pl.BlockSpec((2, 2, 4, C, Cout), lambda n: (0, 0, 0, 0, 0)),
            pl.BlockSpec((1, Cout), lambda n: (0, 0)),
        ],
        out_specs=pl.BlockSpec((1, 2, 2, H, W, Cout),
                               lambda n: (n, 0, 0, 0, 0, 0)),
        out_shape=jax.ShapeDtypeStruct((N, 2, 2, H, W, Cout), jnp.float32),
        scratch_shapes=[pltpu.VMEM((H + 2, W + 16, C), jnp.float32)],
        compiler_params=pltpu.CompilerParams(
            dimension_semantics=("parallel",)),
    )(xp, packed["w3"], packed["b3"], packed["w1"], packed["b1"],
      packed["wup"], packed["bup"])

    # interleave phase planes: out[n, 2p+a, 2q+b, :] = out6[n, a, b, p, q, :]
    out = jnp.transpose(out6, (0, 3, 1, 4, 2, 5)).reshape(N, 2 * H, 2 * W, Cout)
    return jnp.transpose(out, (0, 3, 1, 2))                          # NCHW


# --------------------- one-time weight packing (outside jit) ----------------

def pack_decoder_params(p):
    C = p["res_b1"].shape[0]
    # conv3x3: OIHW -> (kh*3+kw, Cin, Cout), bf16
    w3 = jnp.transpose(p["res_w1"], (2, 3, 1, 0)).reshape(9, C, C)
    # conv1x1: OIHW -> (Cin, Cout), bf16
    w1 = jnp.transpose(p["res_w2"][:, :, 0, 0], (1, 0))
    # ConvTranspose2d: (Cin, Cout, 4, 4) -> per-phase / per-tap (Cin, Cout)
    up_w = p["up_w"]
    Cout = up_w.shape[1]
    phases = []
    for pa in (0, 1):
        row = []
        for pb in (0, 1):
            taps = [up_w[:, :, ky, kx]
                    for (_dy, ky) in _TAPS[pa] for (_dx, kx) in _TAPS[pb]]
            row.append(jnp.stack(taps, axis=0))          # (4, Cin, Cout)
        phases.append(jnp.stack(row, axis=0))            # (2, 4, Cin, Cout)
    wup = jnp.stack(phases, axis=0)                      # (2, 2, 4, Cin, Cout)
    return {
        "w3": w3.astype(jnp.bfloat16),
        "b3": p["res_b1"].reshape(1, C).astype(jnp.float32),
        "w1": w1.astype(jnp.bfloat16),
        "b1": p["res_b2"].reshape(1, C).astype(jnp.float32),
        "wup": wup.astype(jnp.bfloat16),
        "bup": p["up_b"].reshape(1, Cout).astype(jnp.float32),
    }


# ----------------------------- reference ------------------------------------

def decoder_forward_ref(x_nchw, p, *, round_bf16):
    """Pure-JAX reference (lax convs, dilated lowering of ConvTranspose2d).

    round_bf16=True rounds every conv operand to bf16 (matching the kernel's
    MXU numerics) while accumulating in f32, for a tight comparison.
    """
    f32 = jnp.float32

    def rnd(v):
        v = v.astype(f32)
        return v.astype(jnp.bfloat16).astype(f32) if round_bf16 else v

    def conv(v, w_oihw, pad, lhs_dil=(1, 1)):
        w = jnp.transpose(w_oihw, (2, 3, 1, 0))          # HWIO
        return lax.conv_general_dilated(
            rnd(v), rnd(w), (1, 1), [(pad, pad), (pad, pad)],
            lhs_dilation=lhs_dil,
            dimension_numbers=("NHWC", "HWIO", "NHWC"),
            precision=lax.Precision.HIGHEST)

    x = jnp.transpose(x_nchw, (0, 2, 3, 1)).astype(f32)
    a = jax.nn.relu(x)
    h = jax.nn.relu(conv(a, p["res_w1"], 1) + p["res_b1"])
    r = conv(h, p["res_w2"], 0) + p["res_b2"] + x
    y = jax.nn.relu(r)
    w_up = jnp.transpose(jnp.flip(p["up_w"], axis=(2, 3)), (1, 0, 2, 3))
    out = conv(y, w_up, 2, lhs_dil=(2, 2)) + p["up_b"]
    return jnp.transpose(out, (0, 3, 1, 2))


# ----------------------------- param init -----------------------------------

def init_params(key, channel, out_channel):
    def uni(k, shape, fan_in):
        bound = 1.0 / math.sqrt(fan_in)
        return jax.random.uniform(k, shape, jnp.float32, -bound, bound)

    ks = jax.random.split(key, 6)
    C = channel
    return {
        "res_w1": uni(ks[0], (C, C, 3, 3), C * 9),        # Conv2d(C, C, 3, pad=1)
        "res_b1": uni(ks[1], (C,), C * 9),
        "res_w2": uni(ks[2], (C, C, 1, 1), C),            # Conv2d(C, C, 1)
        "res_b2": uni(ks[3], (C,), C),
        "up_w": uni(ks[4], (C, out_channel, 4, 4), C * 16),  # ConvTranspose2d
        "up_b": uni(ks[5], (out_channel,), C * 16),
    }


# ----------------------------- main ------------------------------------------

if __name__ == "__main__":
    key = jax.random.PRNGKey(0)
    kx, kp = jax.random.split(key)

    batch, channel, out_channel, spatial = 2, 8, 4, 16   # upsample=2, n_res_blocks=1
    x = jax.random.normal(kx, (batch, channel, spatial, spatial), jnp.float32)
    params = init_params(kp, channel, out_channel)
    packed = pack_decoder_params(params)                 # packed once, outside jit

    fwd = jax.jit(decoder_forward_pallas)
    out = jax.block_until_ready(fwd(x, packed))

    assert out.shape == (batch, out_channel, 2 * spatial, 2 * spatial), out.shape

    # Tight check against a reference with matching bf16 operand rounding.
    ref_bf16 = decoder_forward_ref(x, params, round_bf16=True)
    np.testing.assert_allclose(np.asarray(out), np.asarray(ref_bf16),
                               rtol=5e-4, atol=5e-4)
    # Loose sanity check against the pure-f32 reference.
    ref_f32 = decoder_forward_ref(x, params, round_bf16=False)
    np.testing.assert_allclose(np.asarray(out), np.asarray(ref_f32),
                               rtol=5e-2, atol=5e-2)
    print("KERNEL_OK")
</pallas_src>

<mosaic_0001>
module attributes {stable_mosaic.version = 11 : i64} {
  func.func @_decoder_kernel(%arg0: i32, %arg1: memref<1x18x18x8xf32, #tpu.memory_space<vmem>>, %arg2: memref<9x8x8xbf16, #tpu.memory_space<vmem>>, %arg3: memref<1x8xf32, #tpu.memory_space<vmem>>, %arg4: memref<8x8xbf16, #tpu.memory_space<vmem>>, %arg5: memref<1x8xf32, #tpu.memory_space<vmem>>, %arg6: memref<2x2x4x8x4xbf16, #tpu.memory_space<vmem>>, %arg7: memref<1x4xf32, #tpu.memory_space<vmem>>, %arg8: memref<1x2x2x16x16x4xf32, #tpu.memory_space<vmem>>, %arg9: memref<18x32x8xf32, #tpu.memory_space<vmem>>) attributes {dimension_semantics = [#tpu.dimension_semantics<parallel>], iteration_bounds = array<i64: 2>, scalar_prefetch = 0 : i64, scratch_operands = 1 : i64, tpu.core_type = #tpu.core_type<tc>, window_params = [{transform_indices = @transform_0, window_bounds = array<i64: 1, 18, 18, 8>}, {pipeline_mode = #tpu.pipeline_mode<synchronous>, transform_indices = @transform_1, window_bounds = array<i64: 9, 8, 8>}, {pipeline_mode = #tpu.pipeline_mode<synchronous>, transform_indices = @transform_2, window_bounds = array<i64: 1, 8>}, {pipeline_mode = #tpu.pipeline_mode<synchronous>, transform_indices = @transform_3, window_bounds = array<i64: 8, 8>}, {pipeline_mode = #tpu.pipeline_mode<synchronous>, transform_indices = @transform_4, window_bounds = array<i64: 1, 8>}, {pipeline_mode = #tpu.pipeline_mode<synchronous>, transform_indices = @transform_5, window_bounds = array<i64: 2, 2, 4, 8, 4>}, {pipeline_mode = #tpu.pipeline_mode<synchronous>, transform_indices = @transform_6, window_bounds = array<i64: 1, 4>}, {transform_indices = @transform_7, window_bounds = array<i64: 1, 2, 2, 16, 16, 4>}]} {
    %c0 = arith.constant 0 : index
    %c0_0 = arith.constant 0 : index
    %c0_1 = arith.constant 0 : index
    %c0_2 = arith.constant 0 : index
    %0 = vector.load %arg1[%c0, %c0_0, %c0_1, %c0_2] : memref<1x18x18x8xf32, #tpu.memory_space<vmem>>, vector<1x18x18x8xf32>
    %1 = vector.shape_cast %0 : vector<1x18x18x8xf32> to vector<18x18x8xf32>
    %cst = arith.constant 0.000000e+00 : f32
    %2 = vector.broadcast %cst : f32 to vector<18x18x8xf32>
    %3 = arith.maximumf %1, %2 : vector<18x18x8xf32>
    %4 = arith.truncf %3 : vector<18x18x8xf32> to vector<18x18x8xbf16>
    %cst_3 = arith.constant 0.000000e+00 : f32
    %5 = vector.broadcast %cst_3 : f32 to vector<256x8xf32>
    %6 = vector.extract_strided_slice %4 {offsets = [0, 0, 0], sizes = [16, 16, 8], strides = [1, 1, 1]} : vector<18x18x8xbf16> to vector<16x16x8xbf16>
    %7 = vector.shape_cast %6 : vector<16x16x8xbf16> to vector<256x8xbf16>
    %c0_4 = arith.constant 0 : index
    %c0_5 = arith.constant 0 : index
    %c0_6 = arith.constant 0 : index
    %8 = vector.load %arg2[%c0_4, %c0_5, %c0_6] : memref<9x8x8xbf16, #tpu.memory_space<vmem>>, vector<1x8x8xbf16>
    %9 = vector.shape_cast %8 : vector<1x8x8xbf16> to vector<8x8xbf16>
    %cst_7 = arith.constant dense<0.000000e+00> : vector<256x8xf32>
    %10 = tpu.matmul %7, %9, %cst_7 {dimension_numbers = #tpu.dot_dimension_numbers<[1], [0], [0], [1], [0, 0, 1, 1], [], []>} : vector<256x8xbf16>, vector<8x8xbf16>, vector<256x8xf32> -> vector<256x8xf32>
    %11 = arith.addf %5, %10 : vector<256x8xf32>
    %12 = vector.extract_strided_slice %4 {offsets = [0, 1, 0], sizes = [16, 16, 8], strides = [1, 1, 1]} : vector<18x18x8xbf16> to vector<16x16x8xbf16>
    %13 = vector.shape_cast %12 : vector<16x16x8xbf16> to vector<256x8xbf16>
    %c1 = arith.constant 1 : index
    %c0_8 = arith.constant 0 : index
    %c0_9 = arith.constant 0 : index
    %14 = vector.load %arg2[%c1, %c0_8, %c0_9] : memref<9x8x8xbf16, #tpu.memory_space<vmem>>, vector<1x8x8xbf16>
    %15 = vector.shape_cast %14 : vector<1x8x8xbf16> to vector<8x8xbf16>
    %cst_10 = arith.constant dense<0.000000e+00> : vector<256x8xf32>
    %16 = tpu.matmul %13, %15, %cst_10 {dimension_numbers = #tpu.dot_dimension_numbers<[1], [0], [0], [1], [0, 0, 1, 1], [], []>} : vector<256x8xbf16>, vector<8x8xbf16>, vector<256x8xf32> -> vector<256x8xf32>
    %17 = arith.addf %11, %16 : vector<256x8xf32>
    %18 = vector.extract_strided_slice %4 {offsets = [0, 2, 0], sizes = [16, 16, 8], strides = [1, 1, 1]} : vector<18x18x8xbf16> to vector<16x16x8xbf16>
    %19 = vector.shape_cast %18 : vector<16x16x8xbf16> to vector<256x8xbf16>
    %c2 = arith.constant 2 : index
    %c0_11 = arith.constant 0 : index
    %c0_12 = arith.constant 0 : index
    %20 = vector.load %arg2[%c2, %c0_11, %c0_12] : memref<9x8x8xbf16, #tpu.memory_space<vmem>>, vector<1x8x8xbf16>
    %21 = vector.shape_cast %20 : vector<1x8x8xbf16> to vector<8x8xbf16>
    %cst_13 = arith.constant dense<0.000000e+00> : vector<256x8xf32>
    %22 = tpu.matmul %19, %21, %cst_13 {dimension_numbers = #tpu.dot_dimension_numbers<[1], [0], [0], [1], [0, 0, 1, 1], [], []>} : vector<256x8xbf16>, vector<8x8xbf16>, vector<256x8xf32> -> vector<256x8xf32>
    %23 = arith.addf %17, %22 : vector<256x8xf32>
    %24 = vector.extract_strided_slice %4 {offsets = [1, 0, 0], sizes = [16, 16, 8], strides = [1, 1, 1]} : vector<18x18x8xbf16> to vector<16x16x8xbf16>
    %25 = vector.shape_cast %24 : vector<16x16x8xbf16> to vector<256x8xbf16>
    %c3 = arith.constant 3 : index
    %c0_14 = arith.constant 0 : index
    %c0_15 = arith.constant 0 : index
    %26 = vector.load %arg2[%c3, %c0_14, %c0_15] : memref<9x8x8xbf16, #tpu.memory_space<vmem>>, vector<1x8x8xbf16>
    %27 = vector.shape_cast %26 : vector<1x8x8xbf16> to vector<8x8xbf16>
    %cst_16 = arith.constant dense<0.000000e+00> : vector<256x8xf32>
    %28 = tpu.matmul %25, %27, %cst_16 {dimension_numbers = #tpu.dot_dimension_numbers<[1], [0], [0], [1], [0, 0, 1, 1], [], []>} : vector<256x8xbf16>, vector<8x8xbf16>, vector<256x8xf32> -> vector<256x8xf32>
    %29 = arith.addf %23, %28 : vector<256x8xf32>
    %30 = vector.extract_strided_slice %4 {offsets = [1, 1, 0], sizes = [16, 16, 8], strides = [1, 1, 1]} : vector<18x18x8xbf16> to vector<16x16x8xbf16>
    %31 = vector.shape_cast %30 : vector<16x16x8xbf16> to vector<256x8xbf16>
    %c4 = arith.constant 4 : index
    %c0_17 = arith.constant 0 : index
    %c0_18 = arith.constant 0 : index
    %32 = vector.load %arg2[%c4, %c0_17, %c0_18] : memref<9x8x8xbf16, #tpu.memory_space<vmem>>, vector<1x8x8xbf16>
    %33 = vector.shape_cast %32 : vector<1x8x8xbf16> to vector<8x8xbf16>
    %cst_19 = arith.constant dense<0.000000e+00> : vector<256x8xf32>
    %34 = tpu.matmul %31, %33, %cst_19 {dimension_numbers = #tpu.dot_dimension_numbers<[1], [0], [0], [1], [0, 0, 1, 1], [], []>} : vector<256x8xbf16>, vector<8x8xbf16>, vector<256x8xf32> -> vector<256x8xf32>
    %35 = arith.addf %29, %34 : vector<256x8xf32>
    %36 = vector.extract_strided_slice %4 {offsets = [1, 2, 0], sizes = [16, 16, 8], strides = [1, 1, 1]} : vector<18x18x8xbf16> to vector<16x16x8xbf16>
    %37 = vector.shape_cast %36 : vector<16x16x8xbf16> to vector<256x8xbf16>
    %c5 = arith.constant 5 : index
    %c0_20 = arith.constant 0 : index
    %c0_21 = arith.constant 0 : index
    %38 = vector.load %arg2[%c5, %c0_20, %c0_21] : memref<9x8x8xbf16, #tpu.memory_space<vmem>>, vector<1x8x8xbf16>
    %39 = vector.shape_cast %38 : vector<1x8x8xbf16> to vector<8x8xbf16>
    %cst_22 = arith.constant dense<0.000000e+00> : vector<256x8xf32>
    %40 = tpu.matmul %37, %39, %cst_22 {dimension_numbers = #tpu.dot_dimension_numbers<[1], [0], [0], [1], [0, 0, 1, 1], [], []>} : vector<256x8xbf16>, vector<8x8xbf16>, vector<256x8xf32> -> vector<256x8xf32>
    %41 = arith.addf %35, %40 : vector<256x8xf32>
    %42 = vector.extract_strided_slice %4 {offsets = [2, 0, 0], sizes = [16, 16, 8], strides = [1, 1, 1]} : vector<18x18x8xbf16> to vector<16x16x8xbf16>
    %43 = vector.shape_cast %42 : vector<16x16x8xbf16> to vector<256x8xbf16>
    %c6 = arith.constant 6 : index
    %c0_23 = arith.constant 0 : index
    %c0_24 = arith.constant 0 : index
    %44 = vector.load %arg2[%c6, %c0_23, %c0_24] : memref<9x8x8xbf16, #tpu.memory_space<vmem>>, vector<1x8x8xbf16>
    %45 = vector.shape_cast %44 : vector<1x8x8xbf16> to vector<8x8xbf16>
    %cst_25 = arith.constant dense<0.000000e+00> : vector<256x8xf32>
    %46 = tpu.matmul %43, %45, %cst_25 {dimension_numbers = #tpu.dot_dimension_numbers<[1], [0], [0], [1], [0, 0, 1, 1], [], []>} : vector<256x8xbf16>, vector<8x8xbf16>, vector<256x8xf32> -> vector<256x8xf32>
    %47 = arith.addf %41, %46 : vector<256x8xf32>
    %48 = vector.extract_strided_slice %4 {offsets = [2, 1, 0], sizes = [16, 16, 8], strides = [1, 1, 1]} : vector<18x18x8xbf16> to vector<16x16x8xbf16>
    %49 = vector.shape_cast %48 : vector<16x16x8xbf16> to vector<256x8xbf16>
    %c7 = arith.constant 7 : index
    %c0_26 = arith.constant 0 : index
    %c0_27 = arith.constant 0 : index
    %50 = vector.load %arg2[%c7, %c0_26, %c0_27] : memref<9x8x8xbf16, #tpu.memory_space<vmem>>, vector<1x8x8xbf16>
    %51 = vector.shape_cast %50 : vector<1x8x8xbf16> to vector<8x8xbf16>
    %cst_28 = arith.constant dense<0.000000e+00> : vector<256x8xf32>
    %52 = tpu.matmul %49, %51, %cst_28 {dimension_numbers = #tpu.dot_dimension_numbers<[1], [0], [0], [1], [0, 0, 1, 1], [], []>} : vector<256x8xbf16>, vector<8x8xbf16>, vector<256x8xf32> -> vector<256x8xf32>
    %53 = arith.addf %47, %52 : vector<256x8xf32>
    %54 = vector.extract_strided_slice %4 {offsets = [2, 2, 0], sizes = [16, 16, 8], strides = [1, 1, 1]} : vector<18x18x8xbf16> to vector<16x16x8xbf16>
    %55 = vector.shape_cast %54 : vector<16x16x8xbf16> to vector<256x8xbf16>
    %c8 = arith.constant 8 : index
    %c0_29 = arith.constant 0 : index
    %c0_30 = arith.constant 0 : index
    %56 = vector.load %arg2[%c8, %c0_29, %c0_30] : memref<9x8x8xbf16, #tpu.memory_space<vmem>>, vector<1x8x8xbf16>
    %57 = vector.shape_cast %56 : vector<1x8x8xbf16> to vector<8x8xbf16>
    %cst_31 = arith.constant dense<0.000000e+00> : vector<256x8xf32>
    %58 = tpu.matmul %55, %57, %cst_31 {dimension_numbers = #tpu.dot_dimension_numbers<[1], [0], [0], [1], [0, 0, 1, 1], [], []>} : vector<256x8xbf16>, vector<8x8xbf16>, vector<256x8xf32> -> vector<256x8xf32>
    %59 = arith.addf %53, %58 : vector<256x8xf32>
    %c0_32 = arith.constant 0 : index
    %c0_33 = arith.constant 0 : index
    %60 = vector.load %arg3[%c0_32, %c0_33] : memref<1x8xf32, #tpu.memory_space<vmem>>, vector<1x8xf32>
    %61 = vector.broadcast %60 : vector<1x8xf32> to vector<256x8xf32>
    %62 = arith.addf %59, %61 : vector<256x8xf32>
    %cst_34 = arith.constant 0.000000e+00 : f32
    %63 = vector.broadcast %cst_34 : f32 to vector<256x8xf32>
    %64 = arith.maximumf %62, %63 : vector<256x8xf32>
    %65 = arith.truncf %64 : vector<256x8xf32> to vector<256x8xbf16>
    %c0_35 = arith.constant 0 : index
    %c0_36 = arith.constant 0 : index
    %66 = vector.load %arg4[%c0_35, %c0_36] : memref<8x8xbf16, #tpu.memory_space<vmem>>, vector<8x8xbf16>
    %cst_37 = arith.constant dense<0.000000e+00> : vector<256x8xf32>
    %67 = tpu.matmul %65, %66, %cst_37 {dimension_numbers = #tpu.dot_dimension_numbers<[1], [0], [0], [1], [0, 0, 1, 1], [], []>} : vector<256x8xbf16>, vector<8x8xbf16>, vector<256x8xf32> -> vector<256x8xf32>
    %68 = vector.extract_strided_slice %1 {offsets = [1, 1, 0], sizes = [16, 16, 8], strides = [1, 1, 1]} : vector<18x18x8xf32> to vector<16x16x8xf32>
    %69 = vector.shape_cast %68 : vector<16x16x8xf32> to vector<256x8xf32>
    %c0_38 = arith.constant 0 : index
    %c0_39 = arith.constant 0 : index
    %70 = vector.load %arg5[%c0_38, %c0_39] : memref<1x8xf32, #tpu.memory_space<vmem>>, vector<1x8xf32>
    %71 = vector.broadcast %70 : vector<1x8xf32> to vector<256x8xf32>
    %72 = arith.addf %67, %71 : vector<256x8xf32>
    %73 = arith.addf %72, %69 : vector<256x8xf32>
    %cst_40 = arith.constant 0.000000e+00 : f32
    %74 = vector.broadcast %cst_40 : f32 to vector<256x8xf32>
    %75 = arith.maximumf %73, %74 : vector<256x8xf32>
    %cst_41 = arith.constant 0.000000e+00 : f32
    %76 = vector.broadcast %cst_41 : f32 to vector<18x32x8xf32>
    %c0_42 = arith.constant 0 : index
    %c0_43 = arith.constant 0 : index
    %c0_44 = arith.constant 0 : index
    %77 = vector.load %arg9[%c0_42, %c0_43, %c0_44] : memref<18x32x8xf32, #tpu.memory_space<vmem>>, vector<18x32x8xf32>
    tpu.vector_store %arg9[%c0_42, %c0_43, %c0_44], %76 {strides = array<i32>} : memref<18x32x8xf32, #tpu.memory_space<vmem>>, vector<18x32x8xf32>,
    %78 = vector.shape_cast %75 : vector<256x8xf32> to vector<16x16x8xf32>
    %c1_45 = arith.constant 1 : index
    %c8_46 = arith.constant 8 : index
    %c0_47 = arith.constant 0 : index
    %79 = vector.load %arg9[%c1_45, %c8_46, %c0_47] : memref<18x32x8xf32, #tpu.memory_space<vmem>>, vector<16x16x8xf32>
    tpu.vector_store %arg9[%c1_45, %c8_46, %c0_47], %78 {strides = array<i32>} : memref<18x32x8xf32, #tpu.memory_space<vmem>>, vector<16x16x8xf32>,
    %c0_48 = arith.constant 0 : index
    %c0_49 = arith.constant 0 : index
    %80 = vector.load %arg7[%c0_48, %c0_49] : memref<1x4xf32, #tpu.memory_space<vmem>>, vector<1x4xf32>
    %cst_50 = arith.constant 0.000000e+00 : f32
    %81 = vector.broadcast %cst_50 : f32 to vector<256x4xf32>
    %c0_51 = arith.constant 0 : index
    %c7_52 = arith.constant 7 : index
    %c0_53 = arith.constant 0 : index
    %82 = vector.load %arg9[%c0_51, %c7_52, %c0_53] : memref<18x32x8xf32, #tpu.memory_space<vmem>>, vector<16x16x8xf32>
    %83 = vector.shape_cast %82 : vector<16x16x8xf32> to vector<256x8xf32>
    %84 = arith.truncf %83 : vector<256x8xf32> to vector<256x8xbf16>
    %c0_54 = arith.constant 0 : index
    %c0_55 = arith.constant 0 : index
    %c0_56 = arith.constant 0 : index
    %c0_57 = arith.constant 0 : index
    %c0_58 = arith.constant 0 : index
    %85 = vector.load %arg6[%c0_54, %c0_55, %c0_56, %c0_57, %c0_58] : memref<2x2x4x8x4xbf16, #tpu.memory_space<vmem>>, vector<1x1x1x8x4xbf16>
    %86 = vector.shape_cast %85 : vector<1x1x1x8x4xbf16> to vector<8x4xbf16>
    %cst_59 = arith.constant dense<0.000000e+00> : vector<256x4xf32>
    %87 = tpu.matmul %84, %86, %cst_59 {dimension_numbers = #tpu.dot_dimension_numbers<[1], [0], [0], [1], [0, 0, 1, 1], [], []>} : vector<256x8xbf16>, vector<8x4xbf16>, vector<256x4xf32> -> vector<256x4xf32>
    %88 = arith.addf %81, %87 : vector<256x4xf32>
    %c0_60 = arith.constant 0 : index
    %c8_61 = arith.constant 8 : index
    %c0_62 = arith.constant 0 : index
    %89 = vector.load %arg9[%c0_60, %c8_61, %c0_62] : memref<18x32x8xf32, #tpu.memory_space<vmem>>, vector<16x16x8xf32>
    %90 = vector.shape_cast %89 : vector<16x16x8xf32> to vector<256x8xf32>
    %91 = arith.truncf %90 : vector<256x8xf32> to vector<256x8xbf16>
    %c0_63 = arith.constant 0 : index
    %c0_64 = arith.constant 0 : index
    %c1_65 = arith.constant 1 : index
    %c0_66 = arith.constant 0 : index
    %c0_67 = arith.constant 0 : index
    %92 = vector.load %arg6[%c0_63, %c0_64, %c1_65, %c0_66, %c0_67] : memref<2x2x4x8x4xbf16, #tpu.memory_space<vmem>>, vector<1x1x1x8x4xbf16>
    %93 = vector.shape_cast %92 : vector<1x1x1x8x4xbf16> to vector<8x4xbf16>
    %cst_68 = arith.constant dense<0.000000e+00> : vector<256x4xf32>
    %94 = tpu.matmul %91, %93, %cst_68 {dimension_numbers = #tpu.dot_dimension_numbers<[1], [0], [0], [1], [0, 0, 1, 1], [], []>} : vector<256x8xbf16>, vector<8x4xbf16>, vector<256x4xf32> -> vector<256x4xf32>
    %95 = arith.addf %88, %94 : vector<256x4xf32>
    %c1_69 = arith.constant 1 : index
    %c7_70 = arith.constant 7 : index
    %c0_71 = arith.constant 0 : index
    %96 = vector.load %arg9[%c1_69, %c7_70, %c0_71] : memref<18x32x8xf32, #tpu.memory_space<vmem>>, vector<16x16x8xf32>
    %97 = vector.shape_cast %96 : vector<16x16x8xf32> to vector<256x8xf32>
    %98 = arith.truncf %97 : vector<256x8xf32> to vector<256x8xbf16>
    %c0_72 = arith.constant 0 : index
    %c0_73 = arith.constant 0 : index
    %c2_74 = arith.constant 2 : index
    %c0_75 = arith.constant 0 : index
    %c0_76 = arith.constant 0 : index
    %99 = vector.load %arg6[%c0_72, %c0_73, %c2_74, %c0_75, %c0_76] : memref<2x2x4x8x4xbf16, #tpu.memory_space<vmem>>, vector<1x1x1x8x4xbf16>
    %100 = vector.shape_cast %99 : vector<1x1x1x8x4xbf16> to vector<8x4xbf16>
    %cst_77 = arith.constant dense<0.000000e+00> : vector<256x4xf32>
    %101 = tpu.matmul %98, %100, %cst_77 {dimension_numbers = #tpu.dot_dimension_numbers<[1], [0], [0], [1], [0, 0, 1, 1], [], []>} : vector<256x8xbf16>, vector<8x4xbf16>, vector<256x4xf32> -> vector<256x4xf32>
    %102 = arith.addf %95, %101 : vector<256x4xf32>
    %c1_78 = arith.constant 1 : index
    %c8_79 = arith.constant 8 : index
    %c0_80 = arith.constant 0 : index
    %103 = vector.load %arg9[%c1_78, %c8_79, %c0_80] : memref<18x32x8xf32, #tpu.memory_space<vmem>>, vector<16x16x8xf32>
    %104 = vector.shape_cast %103 : vector<16x16x8xf32> to vector<256x8xf32>
    %105 = arith.truncf %104 : vector<256x8xf32> to vector<256x8xbf16>
    %c0_81 = arith.constant 0 : index
    %c0_82 = arith.constant 0 : index
    %c3_83 = arith.constant 3 : index
    %c0_84 = arith.constant 0 : index
    %c0_85 = arith.constant 0 : index
    %106 = vector.load %arg6[%c0_81, %c0_82, %c3_83, %c0_84, %c0_85] : memref<2x2x4x8x4xbf16, #tpu.memory_space<vmem>>, vector<1x1x1x8x4xbf16>
    %107 = vector.shape_cast %106 : vector<1x1x1x8x4xbf16> to vector<8x4xbf16>
    %cst_86 = arith.constant dense<0.000000e+00> : vector<256x4xf32>
    %108 = tpu.matmul %105, %107, %cst_86 {dimension_numbers = #tpu.dot_dimension_numbers<[1], [0], [0], [1], [0, 0, 1, 1], [], []>} : vector<256x8xbf16>, vector<8x4xbf16>, vector<256x4xf32> -> vector<256x4xf32>
    %109 = arith.addf %102, %108 : vector<256x4xf32>
    %110 = vector.broadcast %80 : vector<1x4xf32> to vector<256x4xf32>
    %111 = arith.addf %109, %110 : vector<256x4xf32>
    %112 = vector.shape_cast %111 : vector<256x4xf32> to vector<16x16x4xf32>
    %c0_87 = arith.constant 0 : index
    %c0_88 = arith.constant 0 : index
    %c0_89 = arith.constant 0 : index
    %c0_90 = arith.constant 0 : index
    %c0_91 = arith.constant 0 : index
    %c0_92 = arith.constant 0 : index
    %113 = vector.load %arg8[%c0_87, %c0_88, %c0_89, %c0_90, %c0_91, %c0_92] : memref<1x2x2x16x16x4xf32, #tpu.memory_space<vmem>>, vector<1x1x1x16x16x4xf32>
    %114 = vector.shape_cast %113 : vector<1x1x1x16x16x4xf32> to vector<16x16x4xf32>
    %115 = vector.shape_cast %112 : vector<16x16x4xf32> to vector<1x1x1x16x16x4xf32>
    tpu.vector_store %arg8[%c0_87, %c0_88, %c0_89, %c0_90, %c0_91, %c0_92], %115 {strides = array<i32>} : memref<1x2x2x16x16x4xf32, #tpu.memory_space<vmem>>, vector<1x1x1x16x16x4xf32>,
    %cst_93 = arith.constant 0.000000e+00 : f32
    %116 = vector.broadcast %cst_93 : f32 to vector<256x4xf32>
    %c0_94 = arith.constant 0 : index
    %c8_95 = arith.constant 8 : index
    %c0_96 = arith.constant 0 : index
    %117 = vector.load %arg9[%c0_94, %c8_95, %c0_96] : memref<18x32x8xf32, #tpu.memory_space<vmem>>, vector<16x16x8xf32>
    %118 = vector.shape_cast %117 : vector<16x16x8xf32> to vector<256x8xf32>
    %119 = arith.truncf %118 : vector<256x8xf32> to vector<256x8xbf16>
    %c0_97 = arith.constant 0 : index
    %c1_98 = arith.constant 1 : index
    %c0_99 = arith.constant 0 : index
    %c0_100 = arith.constant 0 : index
    %c0_101 = arith.constant 0 : index
    %120 = vector.load %arg6[%c0_97, %c1_98, %c0_99, %c0_100, %c0_101] : memref<2x2x4x8x4xbf16, #tpu.memory_space<vmem>>, vector<1x1x1x8x4xbf16>
    %121 = vector.shape_cast %120 : vector<1x1x1x8x4xbf16> to vector<8x4xbf16>
    %cst_102 = arith.constant dense<0.000000e+00> : vector<256x4xf32>
    %122 = tpu.matmul %119, %121, %cst_102 {dimension_numbers = #tpu.dot_dimension_numbers<[1], [0], [0], [1], [0, 0, 1, 1], [], []>} : vector<256x8xbf16>, vector<8x4xbf16>, vector<256x4xf32> -> vector<256x4xf32>
    %123 = arith.addf %116, %122 : vector<256x4xf32>
    %c0_103 = arith.constant 0 : index
    %c9 = arith.constant 9 : index
    %c0_104 = arith.constant 0 : index
    %124 = vector.load %arg9[%c0_103, %c9, %c0_104] : memref<18x32x8xf32, #tpu.memory_space<vmem>>, vector<16x16x8xf32>
    %125 = vector.shape_cast %124 : vector<16x16x8xf32> to vector<256x8xf32>
    %126 = arith.truncf %125 : vector<256x8xf32> to vector<256x8xbf16>
    %c0_105 = arith.constant 0 : index
    %c1_106 = arith.constant 1 : index
    %c1_107 = arith.constant 1 : index
    %c0_108 = arith.constant 0 : index
    %c0_109 = arith.constant 0 : index
    %127 = vector.load %arg6[%c0_105, %c1_106, %c1_107, %c0_108, %c0_109] : memref<2x2x4x8x4xbf16, #tpu.memory_space<vmem>>, vector<1x1x1x8x4xbf16>
    %128 = vector.shape_cast %127 : vector<1x1x1x8x4xbf16> to vector<8x4xbf16>
    %cst_110 = arith.constant dense<0.000000e+00> : vector<256x4xf32>
    %129 = tpu.matmul %126, %128, %cst_110 {dimension_numbers = #tpu.dot_dimension_numbers<[1], [0], [0], [1], [0, 0, 1, 1], [], []>} : vector<256x8xbf16>, vector<8x4xbf16>, vector<256x4xf32> -> vector<256x4xf32>
    %130 = arith.addf %123, %129 : vector<256x4xf32>
    %c1_111 = arith.constant 1 : index
    %c8_112 = arith.constant 8 : index
    %c0_113 = arith.constant 0 : index
    %131 = vector.load %arg9[%c1_111, %c8_112, %c0_113] : memref<18x32x8xf32, #tpu.memory_space<vmem>>, vector<16x16x8xf32>
    %132 = vector.shape_cast %131 : vector<16x16x8xf32> to vector<256x8xf32>
    %133 = arith.truncf %132 : vector<256x8xf32> to vector<256x8xbf16>
    %c0_114 = arith.constant 0 : index
    %c1_115 = arith.constant 1 : index
    %c2_116 = arith.constant 2 : index
    %c0_117 = arith.constant 0 : index
    %c0_118 = arith.constant 0 : index
    %134 = vector.load %arg6[%c0_114, %c1_115, %c2_116, %c0_117, %c0_118] : memref<2x2x4x8x4xbf16, #tpu.memory_space<vmem>>, vector<1x1x1x8x4xbf16>
    %135 = vector.shape_cast %134 : vector<1x1x1x8x4xbf16> to vector<8x4xbf16>
    %cst_119 = arith.constant dense<0.000000e+00> : vector<256x4xf32>
    %136 = tpu.matmul %133, %135, %cst_119 {dimension_numbers = #tpu.dot_dimension_numbers<[1], [0], [0], [1], [0, 0, 1, 1], [], []>} : vector<256x8xbf16>, vector<8x4xbf16>, vector<256x4xf32> -> vector<256x4xf32>
    %137 = arith.addf %130, %136 : vector<256x4xf32>
    %c1_120 = arith.constant 1 : index
    %c9_121 = arith.constant 9 : index
    %c0_122 = arith.constant 0 : index
    %138 = vector.load %arg9[%c1_120, %c9_121, %c0_122] : memref<18x32x8xf32, #tpu.memory_space<vmem>>, vector<16x16x8xf32>
    %139 = vector.shape_cast %138 : vector<16x16x8xf32> to vector<256x8xf32>
    %140 = arith.truncf %139 : vector<256x8xf32> to vector<256x8xbf16>
    %c0_123 = arith.constant 0 : index
    %c1_124 = arith.constant 1 : index
    %c3_125 = arith.constant 3 : index
    %c0_126 = arith.constant 0 : index
    %c0_127 = arith.constant 0 : index
    %141 = vector.load %arg6[%c0_123, %c1_124, %c3_125, %c0_126, %c0_127] : memref<2x2x4x8x4xbf16, #tpu.memory_space<vmem>>, vector<1x1x1x8x4xbf16>
    %142 = vector.shape_cast %141 : vector<1x1x1x8x4xbf16> to vector<8x4xbf16>
    %cst_128 = arith.constant dense<0.000000e+00> : vector<256x4xf32>
    %143 = tpu.matmul %140, %142, %cst_128 {dimension_numbers = #tpu.dot_dimension_numbers<[1], [0], [0], [1], [0, 0, 1, 1], [], []>} : vector<256x8xbf16>, vector<8x4xbf16>, vector<256x4xf32> -> vector<256x4xf32>
    %144 = arith.addf %137, %143 : vector<256x4xf32>
    %145 = vector.broadcast %80 : vector<1x4xf32> to vector<256x4xf32>
    %146 = arith.addf %144, %145 : vector<256x4xf32>
    %147 = vector.shape_cast %146 : vector<256x4xf32> to vector<16x16x4xf32>
    %c0_129 = arith.constant 0 : index
    %c0_130 = arith.constant 0 : index
    %c1_131 = arith.constant 1 : index
    %c0_132 = arith.constant 0 : index
    %c0_133 = arith.constant 0 : index
    %c0_134 = arith.constant 0 : index
    %148 = vector.load %arg8[%c0_129, %c0_130, %c1_131, %c0_132, %c0_133, %c0_134] : memref<1x2x2x16x16x4xf32, #tpu.memory_space<vmem>>, vector<1x1x1x16x16x4xf32>
    %149 = vector.shape_cast %148 : vector<1x1x1x16x16x4xf32> to vector<16x16x4xf32>
    %150 = vector.shape_cast %147 : vector<16x16x4xf32> to vector<1x1x1x16x16x4xf32>
    tpu.vector_store %arg8[%c0_129, %c0_130, %c1_131, %c0_132, %c0_133, %c0_134], %150 {strides = array<i32>} : memref<1x2x2x16x16x4xf32, #tpu.memory_space<vmem>>, vector<1x1x1x16x16x4xf32>,
    %cst_135 = arith.constant 0.000000e+00 : f32
    %151 = vector.broadcast %cst_135 : f32 to vector<256x4xf32>
    %c1_136 = arith.constant 1 : index
    %c7_137 = arith.constant 7 : index
    %c0_138 = arith.constant 0 : index
    %152 = vector.load %arg9[%c1_136, %c7_137, %c0_138] : memref<18x32x8xf32, #tpu.memory_space<vmem>>, vector<16x16x8xf32>
    %153 = vector.shape_cast %152 : vector<16x16x8xf32> to vector<256x8xf32>
    %154 = arith.truncf %153 : vector<256x8xf32> to vector<256x8xbf16>
    %c1_139 = arith.constant 1 : index
    %c0_140 = arith.constant 0 : index
    %c0_141 = arith.constant 0 : index
    %c0_142 = arith.constant 0 : index
    %c0_143 = arith.constant 0 : index
    %155 = vector.load %arg6[%c1_139, %c0_140, %c0_141, %c0_142, %c0_143] : memref<2x2x4x8x4xbf16, #tpu.memory_space<vmem>>, vector<1x1x1x8x4xbf16>
    %156 = vector.shape_cast %155 : vector<1x1x1x8x4xbf16> to vector<8x4xbf16>
    %cst_144 = arith.constant dense<0.000000e+00> : vector<256x4xf32>
    %157 = tpu.matmul %154, %156, %cst_144 {dimension_numbers = #tpu.dot_dimension_numbers<[1], [0], [0], [1], [0, 0, 1, 1], [], []>} : vector<256x8xbf16>, vector<8x4xbf16>, vector<256x4xf32> -> vector<256x4xf32>
    %158 = arith.addf %151, %157 : vector<256x4xf32>
    %c1_145 = arith.constant 1 : index
    %c8_146 = arith.constant 8 : index
    %c0_147 = arith.constant 0 : index
    %159 = vector.load %arg9[%c1_145, %c8_146, %c0_147] : memref<18x32x8xf32, #tpu.memory_space<vmem>>, vector<16x16x8xf32>
    %160 = vector.shape_cast %159 : vector<16x16x8xf32> to vector<256x8xf32>
    %161 = arith.truncf %160 : vector<256x8xf32> to vector<256x8xbf16>
    %c1_148 = arith.constant 1 : index
    %c0_149 = arith.constant 0 : index
    %c1_150 = arith.constant 1 : index
    %c0_151 = arith.constant 0 : index
    %c0_152 = arith.constant 0 : index
    %162 = vector.load %arg6[%c1_148, %c0_149, %c1_150, %c0_151, %c0_152] : memref<2x2x4x8x4xbf16, #tpu.memory_space<vmem>>, vector<1x1x1x8x4xbf16>
    %163 = vector.shape_cast %162 : vector<1x1x1x8x4xbf16> to vector<8x4xbf16>
    %cst_153 = arith.constant dense<0.000000e+00> : vector<256x4xf32>
    %164 = tpu.matmul %161, %163, %cst_153 {dimension_numbers = #tpu.dot_dimension_numbers<[1], [0], [0], [1], [0, 0, 1, 1], [], []>} : vector<256x8xbf16>, vector<8x4xbf16>, vector<256x4xf32> -> vector<256x4xf32>
    %165 = arith.addf %158, %164 : vector<256x4xf32>
    %c2_154 = arith.constant 2 : index
    %c7_155 = arith.constant 7 : index
    %c0_156 = arith.constant 0 : index
    %166 = vector.load %arg9[%c2_154, %c7_155, %c0_156] : memref<18x32x8xf32, #tpu.memory_space<vmem>>, vector<16x16x8xf32>
    %167 = vector.shape_cast %166 : vector<16x16x8xf32> to vector<256x8xf32>
    %168 = arith.truncf %167 : vector<256x8xf32> to vector<256x8xbf16>
    %c1_157 = arith.constant 1 : index
    %c0_158 = arith.constant 0 : index
    %c2_159 = arith.constant 2 : index
    %c0_160 = arith.constant 0 : index
    %c0_161 = arith.constant 0 : index
    %169 = vector.load %arg6[%c1_157, %c0_158, %c2_159, %c0_160, %c0_161] : memref<2x2x4x8x4xbf16, #tpu.memory_space<vmem>>, vector<1x1x1x8x4xbf16>
    %170 = vector.shape_cast %169 : vector<1x1x1x8x4xbf16> to vector<8x4xbf16>
    %cst_162 = arith.constant dense<0.000000e+00> : vector<256x4xf32>
    %171 = tpu.matmul %168, %170, %cst_162 {dimension_numbers = #tpu.dot_dimension_numbers<[1], [0], [0], [1], [0, 0, 1, 1], [], []>} : vector<256x8xbf16>, vector<8x4xbf16>, vector<256x4xf32> -> vector<256x4xf32>
    %172 = arith.addf %165, %171 : vector<256x4xf32>
    %c2_163 = arith.constant 2 : index
    %c8_164 = arith.constant 8 : index
    %c0_165 = arith.constant 0 : index
    %173 = vector.load %arg9[%c2_163, %c8_164, %c0_165] : memref<18x32x8xf32, #tpu.memory_space<vmem>>, vector<16x16x8xf32>
    %174 = vector.shape_cast %173 : vector<16x16x8xf32> to vector<256x8xf32>
    %175 = arith.truncf %174 : vector<256x8xf32> to vector<256x8xbf16>
    %c1_166 = arith.constant 1 : index
    %c0_167 = arith.constant 0 : index
    %c3_168 = arith.constant 3 : index
    %c0_169 = arith.constant 0 : index
    %c0_170 = arith.constant 0 : index
    %176 = vector.load %arg6[%c1_166, %c0_167, %c3_168, %c0_169, %c0_170] : memref<2x2x4x8x4xbf16, #tpu.memory_space<vmem>>, vector<1x1x1x8x4xbf16>
    %177 = vector.shape_cast %176 : vector<1x1x1x8x4xbf16> to vector<8x4xbf16>
    %cst_171 = arith.constant dense<0.000000e+00> : vector<256x4xf32>
    %178 = tpu.matmul %175, %177, %cst_171 {dimension_numbers = #tpu.dot_dimension_numbers<[1], [0], [0], [1], [0, 0, 1, 1], [], []>} : vector<256x8xbf16>, vector<8x4xbf16>, vector<256x4xf32> -> vector<256x4xf32>
    %179 = arith.addf %172, %178 : vector<256x4xf32>
    %180 = vector.broadcast %80 : vector<1x4xf32> to vector<256x4xf32>
    %181 = arith.addf %179, %180 : vector<256x4xf32>
    %182 = vector.shape_cast %181 : vector<256x4xf32> to vector<16x16x4xf32>
    %c0_172 = arith.constant 0 : index
    %c1_173 = arith.constant 1 : index
    %c0_174 = arith.constant 0 : index
    %c0_175 = arith.constant 0 : index
    %c0_176 = arith.constant 0 : index
    %c0_177 = arith.constant 0 : index
    %183 = vector.load %arg8[%c0_172, %c1_173, %c0_174, %c0_175, %c0_176, %c0_177] : memref<1x2x2x16x16x4xf32, #tpu.memory_space<vmem>>, vector<1x1x1x16x16x4xf32>
    %184 = vector.shape_cast %183 : vector<1x1x1x16x16x4xf32> to vector<16x16x4xf32>
    %185 = vector.shape_cast %182 : vector<16x16x4xf32> to vector<1x1x1x16x16x4xf32>
    tpu.vector_store %arg8[%c0_172, %c1_173, %c0_174, %c0_175, %c0_176, %c0_177], %185 {strides = array<i32>} : memref<1x2x2x16x16x4xf32, #tpu.memory_space<vmem>>, vector<1x1x1x16x16x4xf32>,
    %cst_178 = arith.constant 0.000000e+00 : f32
    %186 = vector.broadcast %cst_178 : f32 to vector<256x4xf32>
    %c1_179 = arith.constant 1 : index
    %c8_180 = arith.constant 8 : index
    %c0_181 = arith.constant 0 : index
    %187 = vector.load %arg9[%c1_179, %c8_180, %c0_181] : memref<18x32x8xf32, #tpu.memory_space<vmem>>, vector<16x16x8xf32>
    %188 = vector.shape_cast %187 : vector<16x16x8xf32> to vector<256x8xf32>
    %189 = arith.truncf %188 : vector<256x8xf32> to vector<256x8xbf16>
    %c1_182 = arith.constant 1 : index
    %c1_183 = arith.constant 1 : index
    %c0_184 = arith.constant 0 : index
    %c0_185 = arith.constant 0 : index
    %c0_186 = arith.constant 0 : index
    %190 = vector.load %arg6[%c1_182, %c1_183, %c0_184, %c0_185, %c0_186] : memref<2x2x4x8x4xbf16, #tpu.memory_space<vmem>>, vector<1x1x1x8x4xbf16>
    %191 = vector.shape_cast %190 : vector<1x1x1x8x4xbf16> to vector<8x4xbf16>
    %cst_187 = arith.constant dense<0.000000e+00> : vector<256x4xf32>
    %192 = tpu.matmul %189, %191, %cst_187 {dimension_numbers = #tpu.dot_dimension_numbers<[1], [0], [0], [1], [0, 0, 1, 1], [], []>} : vector<256x8xbf16>, vector<8x4xbf16>, vector<256x4xf32> -> vector<256x4xf32>
    %193 = arith.addf %186, %192 : vector<256x4xf32>
    %c1_188 = arith.constant 1 : index
    %c9_189 = arith.constant 9 : index
    %c0_190 = arith.constant 0 : index
    %194 = vector.load %arg9[%c1_188, %c9_189, %c0_190] : memref<18x32x8xf32, #tpu.memory_space<vmem>>, vector<16x16x8xf32>
    %195 = vector.shape_cast %194 : vector<16x16x8xf32> to vector<256x8xf32>
    %196 = arith.truncf %195 : vector<256x8xf32> to vector<256x8xbf16>
    %c1_191 = arith.constant 1 : index
    %c1_192 = arith.constant 1 : index
    %c1_193 = arith.constant 1 : index
    %c0_194 = arith.constant 0 : index
    %c0_195 = arith.constant 0 : index
    %197 = vector.load %arg6[%c1_191, %c1_192, %c1_193, %c0_194, %c0_195] : memref<2x2x4x8x4xbf16, #tpu.memory_space<vmem>>, vector<1x1x1x8x4xbf16>
    %198 = vector.shape_cast %197 : vector<1x1x1x8x4xbf16> to vector<8x4xbf16>
    %cst_196 = arith.constant dense<0.000000e+00> : vector<256x4xf32>
    %199 = tpu.matmul %196, %198, %cst_196 {dimension_numbers = #tpu.dot_dimension_numbers<[1], [0], [0], [1], [0, 0, 1, 1], [], []>} : vector<256x8xbf16>, vector<8x4xbf16>, vector<256x4xf32> -> vector<256x4xf32>
    %200 = arith.addf %193, %199 : vector<256x4xf32>
    %c2_197 = arith.constant 2 : index
    %c8_198 = arith.constant 8 : index
    %c0_199 = arith.constant 0 : index
    %201 = vector.load %arg9[%c2_197, %c8_198, %c0_199] : memref<18x32x8xf32, #tpu.memory_space<vmem>>, vector<16x16x8xf32>
    %202 = vector.shape_cast %201 : vector<16x16x8xf32> to vector<256x8xf32>
    %203 = arith.truncf %202 : vector<256x8xf32> to vector<256x8xbf16>
    %c1_200 = arith.constant 1 : index
    %c1_201 = arith.constant 1 : index
    %c2_202 = arith.constant 2 : index
    %c0_203 = arith.constant 0 : index
    %c0_204 = arith.constant 0 : index
    %204 = vector.load %arg6[%c1_200, %c1_201, %c2_202, %c0_203, %c0_204] : memref<2x2x4x8x4xbf16, #tpu.memory_space<vmem>>, vector<1x1x1x8x4xbf16>
    %205 = vector.shape_cast %204 : vector<1x1x1x8x4xbf16> to vector<8x4xbf16>
    %cst_205 = arith.constant dense<0.000000e+00> : vector<256x4xf32>
    %206 = tpu.matmul %203, %205, %cst_205 {dimension_numbers = #tpu.dot_dimension_numbers<[1], [0], [0], [1], [0, 0, 1, 1], [], []>} : vector<256x8xbf16>, vector<8x4xbf16>, vector<256x4xf32> -> vector<256x4xf32>
    %207 = arith.addf %200, %206 : vector<256x4xf32>
    %c2_206 = arith.constant 2 : index
    %c9_207 = arith.constant 9 : index
    %c0_208 = arith.constant 0 : index
    %208 = vector.load %arg9[%c2_206, %c9_207, %c0_208] : memref<18x32x8xf32, #tpu.memory_space<vmem>>, vector<16x16x8xf32>
    %209 = vector.shape_cast %208 : vector<16x16x8xf32> to vector<256x8xf32>
    %210 = arith.truncf %209 : vector<256x8xf32> to vector<256x8xbf16>
    %c1_209 = arith.constant 1 : index
    %c1_210 = arith.constant 1 : index
    %c3_211 = arith.constant 3 : index
    %c0_212 = arith.constant 0 : index
    %c0_213 = arith.constant 0 : index
    %211 = vector.load %arg6[%c1_209, %c1_210, %c3_211, %c0_212, %c0_213] : memref<2x2x4x8x4xbf16, #tpu.memory_space<vmem>>, vector<1x1x1x8x4xbf16>
    %212 = vector.shape_cast %211 : vector<1x1x1x8x4xbf16> to vector<8x4xbf16>
    %cst_214 = arith.constant dense<0.000000e+00> : vector<256x4xf32>
    %213 = tpu.matmul %210, %212, %cst_214 {dimension_numbers = #tpu.dot_dimension_numbers<[1], [0], [0], [1], [0, 0, 1, 1], [], []>} : vector<256x8xbf16>, vector<8x4xbf16>, vector<256x4xf32> -> vector<256x4xf32>
    %214 = arith.addf %207, %213 : vector<256x4xf32>
    %215 = vector.broadcast %80 : vector<1x4xf32> to vector<256x4xf32>
    %216 = arith.addf %214, %215 : vector<256x4xf32>
    %217 = vector.shape_cast %216 : vector<256x4xf32> to vector<16x16x4xf32>
    %c0_215 = arith.constant 0 : index
    %c1_216 = arith.constant 1 : index
    %c1_217 = arith.constant 1 : index
    %c0_218 = arith.constant 0 : index
    %c0_219 = arith.constant 0 : index
    %c0_220 = arith.constant 0 : index
    %218 = vector.load %arg8[%c0_215, %c1_216, %c1_217, %c0_218, %c0_219, %c0_220] : memref<1x2x2x16x16x4xf32, #tpu.memory_space<vmem>>, vector<1x1x1x16x16x4xf32>
    %219 = vector.shape_cast %218 : vector<1x1x1x16x16x4xf32> to vector<16x16x4xf32>
    %220 = vector.shape_cast %217 : vector<16x16x4xf32> to vector<1x1x1x16x16x4xf32>
    tpu.vector_store %arg8[%c0_215, %c1_216, %c1_217, %c0_218, %c0_219, %c0_220], %220 {strides = array<i32>} : memref<1x2x2x16x16x4xf32, #tpu.memory_space<vmem>>, vector<1x1x1x16x16x4xf32>,
    return
  }
  func.func @transform_0(%arg0: i32) -> (i32, i32, i32, i32) {
    %c0_i32 = arith.constant 0 : i32
    %c0_i32_0 = arith.constant 0 : i32
    %c0_i32_1 = arith.constant 0 : i32
    %c0_i32_2 = arith.constant 0 : i32
    return %arg0, %c0_i32, %c0_i32_0, %c0_i32_1 : i32, i32, i32, i32
  }
  func.func @transform_1(%arg0: i32) -> (i32, i32, i32) {
    %c0_i32 = arith.constant 0 : i32
    %c0_i32_0 = arith.constant 0 : i32
    %c0_i32_1 = arith.constant 0 : i32
    %c0_i32_2 = arith.constant 0 : i32
    return %c0_i32, %c0_i32_0, %c0_i32_1 : i32, i32, i32
  }
  func.func @transform_2(%arg0: i32) -> (i32, i32) {
    %c0_i32 = arith.constant 0 : i32
    %c0_i32_0 = arith.constant 0 : i32
    %c0_i32_1 = arith.constant 0 : i32
    return %c0_i32, %c0_i32_0 : i32, i32
  }
  func.func @transform_3(%arg0: i32) -> (i32, i32) {
    %c0_i32 = arith.constant 0 : i32
    %c0_i32_0 = arith.constant 0 : i32
    %c0_i32_1 = arith.constant 0 : i32
    return %c0_i32, %c0_i32_0 : i32, i32
  }
  func.func @transform_4(%arg0: i32) -> (i32, i32) {
    %c0_i32 = arith.constant 0 : i32
    %c0_i32_0 = arith.constant 0 : i32
    %c0_i32_1 = arith.constant 0 : i32
    return %c0_i32, %c0_i32_0 : i32, i32
  }
  func.func @transform_5(%arg0: i32) -> (i32, i32, i32, i32, i32) {
    %c0_i32 = arith.constant 0 : i32
    %c0_i32_0 = arith.constant 0 : i32
    %c0_i32_1 = arith.constant 0 : i32
    %c0_i32_2 = arith.constant 0 : i32
    %c0_i32_3 = arith.constant 0 : i32
    %c0_i32_4 = arith.constant 0 : i32
    return %c0_i32, %c0_i32_0, %c0_i32_1, %c0_i32_2, %c0_i32_3 : i32, i32, i32, i32, i32
  }
  func.func @transform_6(%arg0: i32) -> (i32, i32) {
    %c0_i32 = arith.constant 0 : i32
    %c0_i32_0 = arith.constant 0 : i32
    %c0_i32_1 = arith.constant 0 : i32
    return %c0_i32, %c0_i32_0 : i32, i32
  }
  func.func @transform_7(%arg0: i32) -> (i32, i32, i32, i32, i32, i32) {
    %c0_i32 = arith.constant 0 : i32
    %c0_i32_0 = arith.constant 0 : i32
    %c0_i32_1 = arith.constant 0 : i32
    %c0_i32_2 = arith.constant 0 : i32
    %c0_i32_3 = arith.constant 0 : i32
    %c0_i32_4 = arith.constant 0 : i32
    return %arg0, %c0_i32, %c0_i32_0, %c0_i32_1, %c0_i32_2, %c0_i32_3 : i32, i32, i32, i32, i32, i32
  }
}

</mosaic_0001>

<llo_original>
// kernel: decoder_forward_pallas.1
$region0: #{decoder_forward_pallas.1}
  #allocation0 [shape = 'u32[]', space=smem, size = 0x4, offset = 0x4, fixed_abs, tag = 'smem constant byte address 0x4 - core index']
  #allocation1 [shape = 'u32[72,128]{1,0:T(1,128)}', space=vmem, size = 0x9000, scoped, tag = 'internal scratch']
  #allocation2 [shape = 'f32[18,32,8]{2,1,0:T(8,128)}', space=vmem, size = 0x48000, scoped, tag = 'scratch operand']
  %s0 = inlined_call_operand.vmem [shape: f32[2,18,18,8], index: 0, kind: input, shape index: {}]
  %s1 = inlined_call_operand.vmem [shape: bf16[9,8,8], index: 1, kind: input, shape index: {}]
  %s2 = inlined_call_operand.vmem [shape: f32[1,8], index: 2, kind: input, shape index: {}]
  %s3 = inlined_call_operand.vmem [shape: bf16[8,8], index: 3, kind: input, shape index: {}]
  %s4 = inlined_call_operand.vmem [shape: f32[1,8], index: 4, kind: input, shape index: {}]
  %s5 = inlined_call_operand.vmem [shape: bf16[2,2,4,8,4], index: 5, kind: input, shape index: {}]
  %s6 = inlined_call_operand.vmem [shape: f32[1,4], index: 6, kind: input, shape index: {}]
  %s7 = inlined_call_operand.vmem [shape: f32[2,2,2,16,16,4], index: 7, kind: output, shape index: {}]
  %s8 = sld [smem:[#allocation0]]
  $region61: #{decoder_forward_pallas.1} parent=0
    _
  %s10 = ssub.s32 1, %s8
  %s11 = scalar_select 0, %s10, %s8
  loop: start=0, step=1, limit=4
  $region2: #{decoder_forward_pallas.1} parent=0 // loop_pre_header
    _
  $region3: #{decoder_forward_pallas.1} parent=0 // loop_header
    %s13 = sphi 0, %s17
    %p14 = scmp.ge.s32.totalorder %s13, 4
    %s23 = sphi 0, %s25
    %s26 = sphi 0, %s23
    %s27 = sphi 0, %s26
    %s43 = sphi 0, %s27
    %s47 = sphi 0, %s47
    %s49 = sphi 0, %s47
    %s50 = sphi 0, %s49
    %s64 = sphi 0, %s50
    %s68 = sphi 0, %s68
    %s70 = sphi 0, %s68
    %s71 = sphi 0, %s70
    %s85 = sphi 0, %s71
    %s89 = sphi 0, %s89
    %s91 = sphi 0, %s89
    %s92 = sphi 0, %s91
    %s106 = sphi 0, %s92
    %s110 = sphi 0, %s110
    %s112 = sphi 0, %s110
    %s113 = sphi 0, %s112
    %s127 = sphi 0, %s113
    %s131 = sphi 0, %s131
    %s133 = sphi 0, %s131
    %s134 = sphi 0, %s133
    %s148 = sphi 0, %s134
    %s152 = sphi 0, %s152
    %s154 = sphi 0, %s152
    %s155 = sphi 0, %s154
    %s169 = sphi 0, %s155
    %s175 = sphi 0, %s177
    %s178 = sphi 0, %s175
    %s179 = sphi 0, %s178
    %s195 = sphi 0, %s179
  $region4: #{decoder_forward_pallas.1} parent=0 // loop_header_branch
    %16 = sbr.rel (%p14) target = $region8
  $region5: #{decoder_forward_pallas.1} parent=0 // loop_body
    %s18 = ssub.s32 %s13, 1
    %s19 = ssub.s32 %s13, 2
    %s20 = sadd.s32 %s13, 1
    %s21 = ssub.s32 %s13, %s20
    %p22 = scmp.eq.s32.totalorder %s21, 0
    %s24 = sadd.s32 %s23, 1
    %s25 = scalar_select %p22, %s23, %s24
    %p28 = pneg %p22
    %p29 = scmp.eq.s32.totalorder %s13, 1
    %p30 = por %p28, %p29
    %p31 = scmp.ne.s32.totalorder %s23, %s26
    %p32 = scmp.eq.s32.totalorder %s13, 0
    %p33 = por %p31, %p32
    %p34 = scmp.ne.s32.totalorder %s23, %s26
    %p35 = scmp.eq.s32.totalorder %s18, 1
    %p36 = por %p34, %p35
    %p37 = scmp.ne.s32.totalorder %s26, %s27
    %p38 = scmp.eq.s32.totalorder %s18, 0
    %p39 = por %p37, %p38
    %p40 = scmp.ne.s32.totalorder %s26, %s27
    %p41 = scmp.eq.s32.totalorder %s19, 1
    %p42 = por %p40, %p41
    %p44 = scmp.ne.s32.totalorder %s27, %s43
    %p45 = scmp.eq.s32.totalorder %s19, 0
    %p46 = por %p44, %p45
    %s48 = sadd.s32 %s47, 1
    %p51 = scmp.eq.s32.totalorder %s13, 1
    %p52 = scmp.ne.s32.totalorder %s47, %s49
    %p53 = scmp.eq.s32.totalorder %s13, 0
    %p54 = por %p52, %p53
    %p55 = scmp.ne.s32.totalorder %s47, %s49
    %p56 = scmp.eq.s32.totalorder %s18, 1
    %p57 = por %p55, %p56
    %p58 = scmp.ne.s32.totalorder %s49, %s50
    %p59 = scmp.eq.s32.totalorder %s18, 0
    %p60 = por %p58, %p59
    %p61 = scmp.ne.s32.totalorder %s49, %s50
    %p62 = scmp.eq.s32.totalorder %s19, 1
    %p63 = por %p61, %p62
    %p65 = scmp.ne.s32.totalorder %s50, %s64
    %p66 = scmp.eq.s32.totalorder %s19, 0
    %p67 = por %p65, %p66
    %s69 = sadd.s32 %s68, 1
    %p72 = scmp.eq.s32.totalorder %s13, 1
    %p73 = scmp.ne.s32.totalorder %s68, %s70
    %p74 = scmp.eq.s32.totalorder %s13, 0
    %p75 = por %p73, %p74
    %p76 = scmp.ne.s32.totalorder %s68, %s70
    %p77 = scmp.eq.s32.totalorder %s18, 1
    %p78 = por %p76, %p77
    %p79 = scmp.ne.s32.totalorder %s70, %s71
    %p80 = scmp.eq.s32.totalorder %s18, 0
    %p81 = por %p79, %p80
    %p82 = scmp.ne.s32.totalorder %s70, %s71
    %p83 = scmp.eq.s32.totalorder %s19, 1
    %p84 = por %p82, %p83
    %p86 = scmp.ne.s32.totalorder %s71, %s85
    %p87 = scmp.eq.s32.totalorder %s19, 0
    %p88 = por %p86, %p87
    %s90 = sadd.s32 %s89, 1
    %p93 = scmp.eq.s32.totalorder %s13, 1
    %p94 = scmp.ne.s32.totalorder %s89, %s91
    %p95 = scmp.eq.s32.totalorder %s13, 0
    %p96 = por %p94, %p95
    %p97 = scmp.ne.s32.totalorder %s89, %s91
    %p98 = scmp.eq.s32.totalorder %s18, 1
    %p99 = por %p97, %p98
    %p100 = scmp.ne.s32.totalorder %s91, %s92
    %p101 = scmp.eq.s32.totalorder %s18, 0
    %p102 = por %p100, %p101
    %p103 = scmp.ne.s32.totalorder %s91, %s92
    %p104 = scmp.eq.s32.totalorder %s19, 1
    %p105 = por %p103, %p104
    %p107 = scmp.ne.s32.totalorder %s92, %s106
    %p108 = scmp.eq.s32.totalorder %s19, 0
    %p109 = por %p107, %p108
    %s111 = sadd.s32 %s110, 1
    %p114 = scmp.eq.s32.totalorder %s13, 1
    %p115 = scmp.ne.s32.totalorder %s110, %s112
    %p116 = scmp.eq.s32.totalorder %s13, 0
    %p117 = por %p115, %p116
    %p118 = scmp.ne.s32.totalorder %s110, %s112
    %p119 = scmp.eq.s32.totalorder %s18, 1
    %p120 = por %p118, %p119
    %p121 = scmp.ne.s32.totalorder %s112, %s113
    %p122 = scmp.eq.s32.totalorder %s18, 0
    %p123 = por %p121, %p122
    %p124 = scmp.ne.s32.totalorder %s112, %s113
    %p125 = scmp.eq.s32.totalorder %s19, 1
    %p126 = por %p124, %p125
    %p128 = scmp.ne.s32.totalorder %s113, %s127
    %p129 = scmp.eq.s32.totalorder %s19, 0
    %p130 = por %p128, %p129
    %s132 = sadd.s32 %s131, 1
    %p135 = scmp.eq.s32.totalorder %s13, 1
    %p136 = scmp.ne.s32.totalorder %s131, %s133
    %p137 = scmp.eq.s32.totalorder %s13, 0
    %p138 = por %p136, %p137
    %p139 = scmp.ne.s32.totalorder %s131, %s133
    %p140 = scmp.eq.s32.totalorder %s18, 1
    %p141 = por %p139, %p140
    %p142 = scmp.ne.s32.totalorder %s133, %s134
    %p143 = scmp.eq.s32.totalorder %s18, 0
    %p144 = por %p142, %p143
    %p145 = scmp.ne.s32.totalorder %s133, %s134
    %p146 = scmp.eq.s32.totalorder %s19, 1
    %p147 = por %p145, %p146
    %p149 = scmp.ne.s32.totalorder %s134, %s148
    %p150 = scmp.eq.s32.totalorder %s19, 0
    %p151 = por %p149, %p150
    %s153 = sadd.s32 %s152, 1
    %p156 = scmp.eq.s32.totalorder %s13, 1
    %p157 = scmp.ne.s32.totalorder %s152, %s154
    %p158 = scmp.eq.s32.totalorder %s13, 0
    %p159 = por %p157, %p158
    %p160 = scmp.ne.s32.totalorder %s152, %s154
    %p161 = scmp.eq.s32.totalorder %s18, 1
    %p162 = por %p160, %p161
    %p163 = scmp.ne.s32.totalorder %s154, %s155
    %p164 = scmp.eq.s32.totalorder %s18, 0
    %p165 = por %p163, %p164
    %p166 = scmp.ne.s32.totalorder %s154, %s155
    %p167 = scmp.eq.s32.totalorder %s19, 1
    %p168 = por %p166, %p167
    %p170 = scmp.ne.s32.totalorder %s155, %s169
    %p171 = scmp.eq.s32.totalorder %s19, 0
    %p172 = por %p170, %p171
    %s173 = ssub.s32 %s13, %s20
    %p174 = scmp.eq.s32.totalorder %s173, 0
    %s176 = sadd.s32 %s175, 1
    %s177 = scalar_select %p174, %s175, %s176
    %p180 = pneg %p174
    %p181 = scmp.eq.s32.totalorder %s13, 1
    %p182 = por %p180, %p181
    %p183 = scmp.ne.s32.totalorder %s175, %s178
    %p184 = scmp.eq.s32.totalorder %s13, 0
    %p185 = por %p183, %p184
    %p186 = scmp.ne.s32.totalorder %s175, %s178
    %p187 = scmp.eq.s32.totalorder %s18, 1
    %p188 = por %p186, %p187
    %p189 = scmp.ne.s32.totalorder %s178, %s179
    %p190 = scmp.eq.s32.totalorder %s18, 0
    %p191 = por %p189, %p190
    %p192 = scmp.ne.s32.totalorder %s178, %s179
    %p193 = scmp.eq.s32.totalorder %s19, 1
    %p194 = por %p192, %p193
    %p196 = scmp.ne.s32.totalorder %s179, %s195
    %p197 = scmp.eq.s32.totalorder %s19, 0
    %p198 = por %p196, %p197
    %p199 = scmp.le.s32.totalorder 1, %s13
    %p200 = scmp.lt.s32.totalorder %s13, 3
    %p201 = pnand %p199, %p200
    %p202 = pneg %p201
    // Predicated region
    $region9: #{decoder_forward_pallas.1} parent=5 // pred_check
      _
    $region10: #{decoder_forward_pallas.1} parent=5 // pred_check_branch
      %204 = sbr.rel (%p201) target = $region12
    $region11: #{decoder_forward_pallas.1} parent=5 // pred_region
      %s205 = ssub.s32 %s13, 1
      // Predicated region
      $region13: #{decoder_forward_pallas.1} parent=11 // pred_check
        %p206 = pneg %p60
      $region14: #{decoder_forward_pallas.1} parent=11 // pred_check_branch
        %208 = sbr.rel (%p206) target = $region16
      $region15: #{decoder_forward_pallas.1} parent=11 // pred_region
        _
      $region16: #{decoder_forward_pallas.1} parent=11 // pred_fallthru
        _
      // Predicated region
      $region17: #{decoder_forward_pallas.1} parent=11 // pred_check
        %p209 = pneg %p81
      $region18: #{decoder_forward_pallas.1} parent=11 // pred_check_branch
        %211 = sbr.rel (%p209) target = $region20
      $region19: #{decoder_forward_pallas.1} parent=11 // pred_region
        _
      $region20: #{decoder_forward_pallas.1} parent=11 // pred_fallthru
        _
      // Predicated region
      $region21: #{decoder_forward_pallas.1} parent=11 // pred_check
        %p212 = pneg %p102
      $region22: #{decoder_forward_pallas.1} parent=11 // pred_check_branch
        %214 = sbr.rel (%p212) target = $region24
      $region23: #{decoder_forward_pallas.1} parent=11 // pred_region
        _
      $region24: #{decoder_forward_pallas.1} parent=11 // pred_fallthru
        _
      // Predicated region
      $region25: #{decoder_forward_pallas.1} parent=11 // pred_check
        %p215 = pneg %p123
      $region26: #{decoder_forward_pallas.1} parent=11 // pred_check_branch
        %217 = sbr.rel (%p215) target = $region28
      $region27: #{decoder_forward_pallas.1} parent=11 // pred_region
        _
      $region28: #{decoder_forward_pallas.1} parent=11 // pred_fallthru
        _
      // Predicated region
      $region29: #{decoder_forward_pallas.1} parent=11 // pred_check
        %p218 = pneg %p144
      $region30: #{decoder_forward_pallas.1} parent=11 // pred_check_branch
        %220 = sbr.rel (%p218) target = $region32
      $region31: #{decoder_forward_pallas.1} parent=11 // pred_region
        _
      $region32: #{decoder_forward_pallas.1} parent=11 // pred_fallthru
        _
      // Predicated region
      $region33: #{decoder_forward_pallas.1} parent=11 // pred_check
        %p221 = pneg %p165
      $region34: #{decoder_forward_pallas.1} parent=11 // pred_check_branch
        %223 = sbr.rel (%p221) target = $region36
      $region35: #{decoder_forward_pallas.1} parent=11 // pred_region
        _
      $region36: #{decoder_forward_pallas.1} parent=11 // pred_fallthru
        _
    $region12: #{decoder_forward_pallas.1} parent=5 // pred_fallthru
      _
    %p224 = scmp.lt.s32.totalorder %s13, 2
    // Predicated region
    $region37: #{decoder_forward_pallas.1} parent=5 // pred_check
      %p225 = pneg %p224
    $region38: #{decoder_forward_pallas.1} parent=5 // pred_check_branch
      %227 = sbr.rel (%p225) target = $region40
    $region39: #{decoder_forward_pallas.1} parent=5 // pred_region
      // Predicated region
      $region41: #{decoder_forward_pallas.1} parent=39 // pred_check
        %p228 = pneg %p33
      $region42: #{decoder_forward_pallas.1} parent=39 // pred_check_branch
        %230 = sbr.rel (%p228) target = $region44
      $region43: #{decoder_forward_pallas.1} parent=39 // pred_region
        %p231 = scmp.lt.s32.totalorder %s13, 1
        %s232 = scalar_select %p231, %s13, 1
        %s233 = smul.addr %s232, 54
        %s234 = smul.addr %s233, 8
        %s235 = scalar_lea.vmem %s0, %s234
      $region44: #{decoder_forward_pallas.1} parent=39 // pred_fallthru
        _
    $region40: #{decoder_forward_pallas.1} parent=5 // pred_fallthru
      _
    %p236 = scmp.le.s32.totalorder 1, %s13
    %p237 = scmp.lt.s32.totalorder %s13, 3
    %p238 = pnand %p236, %p237
    %p239 = pneg %p238
    // Predicated region
    $region45: #{decoder_forward_pallas.1} parent=5 // pred_check
      _
    $region46: #{decoder_forward_pallas.1} parent=5 // pred_check_branch
      %241 = sbr.rel (%p238) target = $region48
    $region47: #{decoder_forward_pallas.1} parent=5 // pred_region
      %s242 = ssub.s32 %s13, 1
      %p243 = scmp.lt.s32.totalorder %s18, 1
      %s244 = scalar_select %p243, %s18, 1
      %s245 = smul.addr %s244, 54
      %s246 = smul.addr %s245, 8
      %s247 = scalar_lea.vmem %s0, %s246
      %p248 = pneg %p39
      %p249 = pneg %p36
      %p250 = pneg %p60
      %p251 = pneg %p57
      %p252 = pneg %p81
      %p253 = pneg %p78
      %p254 = pneg %p102
      %p255 = pneg %p99
      %p256 = pneg %p123
      %p257 = pneg %p120
      %p258 = pneg %p144
      %p259 = pneg %p141
      %p260 = pneg %p165
      %p261 = pneg %p162
      %p262 = pneg %p191
      %p263 = pneg %p188
      %p264 = scmp.lt.s32.totalorder %s18, 1
      %s265 = scalar_select %p264, %s18, 1
      %s266 = smul.addr %s265, 128
      %s267 = smul.addr %s266, 8
      %s268 = scalar_lea.vmem %s7, %s267
      %p269 = scmp.lt.s32.totalorder %s18, 1
      %s270 = scalar_select %p269, %s18, 1
      %s271 = smul.addr %s270, 54
      %s272 = smul.addr %s271, 8
      %s273 = scalar_lea.vmem %s0, %s272
      %p274 = scmp.lt.s32.totalorder %s18, 1
      %s275 = scalar_select %p274, %s18, 1
      %s276 = smul.addr %s275, 128
      %s277 = smul.addr %s276, 8
      %s278 = scalar_lea.vmem %s7, %s277
      %v280 = vld [vmem:[%s273] sm:$0xff]
      %v281 = vld [vmem:[%s273 + $0x8] sm:$0xff]
      %v282 = vld [vmem:[%s273 + $0x10] sm:$0x3]
      %v283 = vld [vmem:[%s273 + $0x18] sm:$0xff]
      %v284 = vld [vmem:[%s273 + $0x20] sm:$0xff]
      %v285 = vld [vmem:[%s273 + $0x28] sm:$0x3]
      %v286 = vld [vmem:[%s273 + $0x30] sm:$0xff]
      %v287 = vld [vmem:[%s273 + $0x38] sm:$0xff]
      %v288 = vld [vmem:[%s273 + $0x40] sm:$0x3]
      %v289 = vld [vmem:[%s273 + $0x48] sm:$0xff]
      %v290 = vld [vmem:[%s273 + $0x50] sm:$0xff]
      %v291 = vld [vmem:[%s273 + $0x58] sm:$0x3]
      %v292 = vld [vmem:[%s273 + $0x60] sm:$0xff]
      %v293 = vld [vmem:[%s273 + $0x68] sm:$0xff]
      %v294 = vld [vmem:[%s273 + $0x70] sm:$0x3]
      %v295 = vld [vmem:[%s273 + $0x78] sm:$0xff]
      %v296 = vld [vmem:[%s273 + $0x80] sm:$0xff]
      %v297 = vld [vmem:[%s273 + $0x88] sm:$0x3]
      %v298 = vld [vmem:[%s273 + $0x90] sm:$0xff]
      %v299 = vld [vmem:[%s273 + $0x98] sm:$0xff]
      %v300 = vld [vmem:[%s273 + $0xa0] sm:$0x3]
      %v301 = vld [vmem:[%s273 + $0xa8] sm:$0xff]
      %v302 = vld [vmem:[%s273 + $0xb0] sm:$0xff]
      %v303 = vld [vmem:[%s273 + $0xb8] sm:$0x3]
      %v304 = vld [vmem:[%s273 + $0xc0] sm:$0xff]
      %v305 = vld [vmem:[%s273 + $0xc8] sm:$0xff]
      %v306 = vld [vmem:[%s273 + $0xd0] sm:$0x3]
      %v307 = vld [vmem:[%s273 + $0xd8] sm:$0xff]
      %v308 = vld [vmem:[%s273 + $0xe0] sm:$0xff]
      %v309 = vld [vmem:[%s273 + $0xe8] sm:$0x3]
      %v310 = vld [vmem:[%s273 + $0xf0] sm:$0xff]
      %v311 = vld [vmem:[%s273 + $0xf8] sm:$0xff]
      %v312 = vld [vmem:[%s273 + $0x100] sm:$0x3]
      %v313 = vld [vmem:[%s273 + $0x108] sm:$0xff]
      %v314 = vld [vmem:[%s273 + $0x110] sm:$0xff]
      %v315 = vld [vmem:[%s273 + $0x118] sm:$0x3]
      %v316 = vld [vmem:[%s273 + $0x120] sm:$0xff]
      %v317 = vld [vmem:[%s273 + $0x128] sm:$0xff]
      %v318 = vld [vmem:[%s273 + $0x130] sm:$0x3]
      %v319 = vld [vmem:[%s273 + $0x138] sm:$0xff]
      %v320 = vld [vmem:[%s273 + $0x140] sm:$0xff]
      %v321 = vld [vmem:[%s273 + $0x148] sm:$0x3]
      %v322 = vld [vmem:[%s273 + $0x150] sm:$0xff]
      %v323 = vld [vmem:[%s273 + $0x158] sm:$0xff]
      %v324 = vld [vmem:[%s273 + $0x160] sm:$0x3]
      %v325 = vld [vmem:[%s273 + $0x168] sm:$0xff]
      %v326 = vld [vmem:[%s273 + $0x170] sm:$0xff]
      %v327 = vld [vmem:[%s273 + $0x178] sm:$0x3]
      %v328 = vld [vmem:[%s273 + $0x180] sm:$0xff]
      %v329 = vld [vmem:[%s273 + $0x188] sm:$0xff]
      %v330 = vld [vmem:[%s273 + $0x190] sm:$0x3]
      %v331 = vld [vmem:[%s273 + $0x198] sm:$0xff]
      %v332 = vld [vmem:[%s273 + $0x1a0] sm:$0xff]
      %v333 = vld [vmem:[%s273 + $0x1a8] sm:$0x3]
      %v334 = vmax.f32 %v280, 0.0
      %v335 = vmax.f32 %v281, 0.0
      %v336 = vmax.f32 %v282, 0.0
      %v337 = vmax.f32 %v283, 0.0
      %v338 = vmax.f32 %v284, 0.0
      %v339 = vmax.f32 %v285, 0.0
      %v340 = vmax.f32 %v286, 0.0
      %v341 = vmax.f32 %v287, 0.0
      %v342 = vmax.f32 %v288, 0.0
      %v343 = vmax.f32 %v289, 0.0
      %v344 = vmax.f32 %v290, 0.0
      %v345 = vmax.f32 %v291, 0.0
      %v346 = vmax.f32 %v292, 0.0
      %v347 = vmax.f32 %v293, 0.0
      %v348 = vmax.f32 %v294, 0.0
      %v349 = vmax.f32 %v295, 0.0
      %v350 = vmax.f32 %v296, 0.0
      %v351 = vmax.f32 %v297, 0.0
      %v352 = vmax.f32 %v298, 0.0
      %v353 = vmax.f32 %v299, 0.0
      %v354 = vmax.f32 %v300, 0.0
      %v355 = vmax.f32 %v301, 0.0
      %v356 = vmax.f32 %v302, 0.0
      %v357 = vmax.f32 %v303, 0.0
      %v358 = vmax.f32 %v304, 0.0
      %v359 = vmax.f32 %v305, 0.0
      %v360 = vmax.f32 %v306, 0.0
      %v361 = vmax.f32 %v307, 0.0
      %v362 = vmax.f32 %v308, 0.0
      %v363 = vmax.f32 %v309, 0.0
      %v364 = vmax.f32 %v310, 0.0
      %v365 = vmax.f32 %v311, 0.0
      %v366 = vmax.f32 %v312, 0.0
      %v367 = vmax.f32 %v313, 0.0
      %v368 = vmax.f32 %v314, 0.0
      %v369 = vmax.f32 %v315, 0.0
      %v370 = vmax.f32 %v316, 0.0
      %v371 = vmax.f32 %v317, 0.0
      %v372 = vmax.f32 %v318, 0.0
      %v373 = vmax.f32 %v319, 0.0
      %v374 = vmax.f32 %v320, 0.0
      %v375 = vmax.f32 %v321, 0.0
      %v376 = vmax.f32 %v322, 0.0
      %v377 = vmax.f32 %v323, 0.0
      %v378 = vmax.f32 %v324, 0.0
      %v379 = vmax.f32 %v325, 0.0
      %v380 = vmax.f32 %v326, 0.0
      %v381 = vmax.f32 %v327, 0.0
      %v382 = vmax.f32 %v328, 0.0
      %v383 = vmax.f32 %v329, 0.0
      %v384 = vmax.f32 %v330, 0.0
      %v385 = vmax.f32 %v331, 0.0
      %v386 = vmax.f32 %v332, 0.0
      %v387 = vmax.f32 %v333, 0.0
      %v388 = vpack.c.bf16 %v334, %v334
      %v389 = vpack.c.bf16 %v335, %v335
      %v390 = vpack.c.bf16 %v336, %v336
      %v391 = vpack.c.bf16 %v337, %v337
      %v392 = vpack.c.bf16 %v338, %v338
      %v393 = vpack.c.bf16 %v339, %v339
      %v394 = vpack.c.bf16 %v340, %v340
      %v395 = vpack.c.bf16 %v341, %v341
      %v396 = vpack.c.bf16 %v342, %v342
      %v397 = vpack.c.bf16 %v343, %v343
      %v398 = vpack.c.bf16 %v344, %v344
      %v399 = vpack.c.bf16 %v345, %v345
      %v400 = vpack.c.bf16 %v346, %v346
      %v401 = vpack.c.bf16 %v347, %v347
      %v402 = vpack.c.bf16 %v348, %v348
      %v403 = vpack.c.bf16 %v349, %v349
      %v404 = vpack.c.bf16 %v350, %v350
      %v405 = vpack.c.bf16 %v351, %v351
      %v406 = vpack.c.bf16 %v352, %v352
      %v407 = vpack.c.bf16 %v353, %v353
      %v408 = vpack.c.bf16 %v354, %v354
      %v409 = vpack.c.bf16 %v355, %v355
      %v410 = vpack.c.bf16 %v356, %v356
      %v411 = vpack.c.bf16 %v357, %v357
      %v412 = vpack.c.bf16 %v358, %v358
      %v413 = vpack.c.bf16 %v359, %v359
      %v414 = vpack.c.bf16 %v360, %v360
      %v415 = vpack.c.bf16 %v361, %v361
      %v416 = vpack.c.bf16 %v362, %v362
      %v417 = vpack.c.bf16 %v363, %v363
      %v418 = vpack.c.bf16 %v364, %v364
      %v419 = vpack.c.bf16 %v365, %v365
      %v420 = vpack.c.bf16 %v366, %v366
      %v421 = vpack.c.bf16 %v367, %v367
      %v422 = vpack.c.bf16 %v368, %v368
      %v423 = vpack.c.bf16 %v369, %v369
      %v424 = vpack.c.bf16 %v370, %v370
      %v425 = vpack.c.bf16 %v371, %v371
      %v426 = vpack.c.bf16 %v372, %v372
      %v427 = vpack.c.bf16 %v373, %v373
      %v428 = vpack.c.bf16 %v374, %v374
      %v429 = vpack.c.bf16 %v375, %v375
      %v430 = vpack.c.bf16 %v376, %v376
      %v431 = vpack.c.bf16 %v377, %v377
      %v432 = vpack.c.bf16 %v378, %v378
      %v433 = vpack.c.bf16 %v379, %v379
      %v434 = vpack.c.bf16 %v380, %v380
      %v435 = vpack.c.bf16 %v381, %v381
      %v436 = vpack.c.bf16 %v382, %v382
      %v437 = vpack.c.bf16 %v383, %v383
      %v438 = vpack.c.bf16 %v384, %v384
      %v439 = vpack.c.bf16 %v385, %v385
      %v440 = vpack.c.bf16 %v386, %v386
      %v441 = vpack.c.bf16 %v387, %v387
      %v442 = vld [vmem:[%s1] sm:$0xf]
      %vm443 = vsmask.f32 3328
      %vm444 = vsmask.f32 7440
      %vm445 = vmor %vm443, %vm444
      %v447 = vshrl.u32 %v388, 16
      %v449 = vrot.slane %v447, 4
      %v450 = vshll.u32 %v388, 16
      %v452 = vrot.slane %v450, 5
      %v453 = vor.u32 %v449, %v452
      %v454 = vrot.slane %v453, 4
      %v456 = vshll.u32 %v389, 16
      %v458 = vrot.slane %v456, 5
      %v459 = vsel %vm445, %v454, %v458
      %v460 = vshrl.u32 %v389, 16
      %v462 = vrot.slane %v460, 4
      %v463 = vor.u32 %v462, %v458
      %v464 = vrot.slane %v463, 4
      %v466 = vshll.u32 %v390, 16
      %v468 = vrot.slane %v466, 5
      %v469 = vsel %vm445, %v464, %v468
      %v471 = vshrl.u32 %v391, 16
      %v473 = vrot.slane %v471, 4
      %v474 = vshll.u32 %v391, 16
      %v476 = vrot.slane %v474, 5
      %v477 = vor.u32 %v473, %v476
      %v478 = vrot.slane %v477, 4
      %v480 = vshll.u32 %v392, 16
      %v482 = vrot.slane %v480, 5
      %v483 = vsel %vm445, %v478, %v482
      %v484 = vshrl.u32 %v392, 16
      %v486 = vrot.slane %v484, 4
      %v487 = vor.u32 %v486, %v482
      %v488 = vrot.slane %v487, 4
      %v490 = vshll.u32 %v393, 16
      %v492 = vrot.slane %v490, 5
      %v493 = vsel %vm445, %v488, %v492
      %v495 = vshrl.u32 %v394, 16
      %v497 = vrot.slane %v495, 4
      %v498 = vshll.u32 %v394, 16
      %v500 = vrot.slane %v498, 5
      %v501 = vor.u32 %v497, %v500
      %v502 = vrot.slane %v501, 4
      %v504 = vshll.u32 %v395, 16
      %v506 = vrot.slane %v504, 5
      %v507 = vsel %vm445, %v502, %v506
      %v508 = vshrl.u32 %v395, 16
      %v510 = vrot.slane %v508, 4
      %v511 = vor.u32 %v510, %v506
      %v512 = vrot.slane %v511, 4
      %v514 = vshll.u32 %v396, 16
      %v516 = vrot.slane %v514, 5
      %v517 = vsel %vm445, %v512, %v516
      %v519 = vshrl.u32 %v397, 16
      %v521 = vrot.slane %v519, 4
      %v522 = vshll.u32 %v397, 16
      %v524 = vrot.slane %v522, 5
      %v525 = vor.u32 %v521, %v524
      %v526 = vrot.slane %v525, 4
      %v528 = vshll.u32 %v398, 16
      %v530 = vrot.slane %v528, 5
      %v531 = vsel %vm445, %v526, %v530
      %v532 = vshrl.u32 %v398, 16
      %v534 = vrot.slane %v532, 4
      %v535 = vor.u32 %v534, %v530
      %v536 = vrot.slane %v535, 4
      %v538 = vshll.u32 %v399, 16
      %v540 = vrot.slane %v538, 5
      %v541 = vsel %vm445, %v536, %v540
      %v543 = vshrl.u32 %v400, 16
      %v545 = vrot.slane %v543, 4
      %v546 = vshll.u32 %v400, 16
      %v548 = vrot.slane %v546, 5
      %v549 = vor.u32 %v545, %v548
      %v550 = vrot.slane %v549, 4
      %v552 = vshll.u32 %v401, 16
      %v554 = vrot.slane %v552, 5
      %v555 = vsel %vm445, %v550, %v554
      %v556 = vshrl.u32 %v401, 16
      %v558 = vrot.slane %v556, 4
      %v559 = vor.u32 %v558, %v554
      %v560 = vrot.slane %v559, 4
      %v562 = vshll.u32 %v402, 16
      %v564 = vrot.slane %v562, 5
      %v565 = vsel %vm445, %v560, %v564
      %v567 = vshrl.u32 %v403, 16
      %v569 = vrot.slane %v567, 4
      %v570 = vshll.u32 %v403, 16
      %v572 = vrot.slane %v570, 5
      %v573 = vor.u32 %v569, %v572
      %v574 = vrot.slane %v573, 4
      %v576 = vshll.u32 %v404, 16
      %v578 = vrot.slane %v576, 5
      %v579 = vsel %vm445, %v574, %v578
      %v580 = vshrl.u32 %v404, 16
      %v582 = vrot.slane %v580, 4
      %v583 = vor.u32 %v582, %v578
      %v584 = vrot.slane %v583, 4
      %v586 = vshll.u32 %v405, 16
      %v588 = vrot.slane %v586, 5
      %v589 = vsel %vm445, %v584, %v588
      %v591 = vshrl.u32 %v406, 16
      %v593 = vrot.slane %v591, 4
      %v594 = vshll.u32 %v406, 16
      %v596 = vrot.slane %v594, 5
      %v597 = vor.u32 %v593, %v596
      %v598 = vrot.slane %v597, 4
      %v600 = vshll.u32 %v407, 16
      %v602 = vrot.slane %v600, 5
      %v603 = vsel %vm445, %v598, %v602
      %v604 = vshrl.u32 %v407, 16
      %v606 = vrot.slane %v604, 4
      %v607 = vor.u32 %v606, %v602
      %v608 = vrot.slane %v607, 4
      %v610 = vshll.u32 %v408, 16
      %v612 = vrot.slane %v610, 5
      %v613 = vsel %vm445, %v608, %v612
      %v615 = vshrl.u32 %v409, 16
      %v617 = vrot.slane %v615, 4
      %v618 = vshll.u32 %v409, 16
      %v620 = vrot.slane %v618, 5
      %v621 = vor.u32 %v617, %v620
      %v622 = vrot.slane %v621, 4
      %v624 = vshll.u32 %v410, 16
      %v626 = vrot.slane %v624, 5
      %v627 = vsel %vm445, %v622, %v626
      %v628 = vshrl.u32 %v410, 16
      %v630 = vrot.slane %v628, 4
      %v631 = vor.u32 %v630, %v626
      %v632 = vrot.slane %v631, 4
      %v634 = vshll.u32 %v411, 16
      %v636 = vrot.slane %v634, 5
      %v637 = vsel %vm445, %v632, %v636
      %v639 = vshrl.u32 %v412, 16
      %v641 = vrot.slane %v639, 4
      %v642 = vshll.u32 %v412, 16
      %v644 = vrot.slane %v642, 5
      %v645 = vor.u32 %v641, %v644
      %v646 = vrot.slane %v645, 4
      %v648 = vshll.u32 %v413, 16
      %v650 = vrot.slane %v648, 5
      %v651 = vsel %vm445, %v646, %v650
      %v652 = vshrl.u32 %v413, 16
      %v654 = vrot.slane %v652, 4
      %v655 = vor.u32 %v654, %v650
      %v656 = vrot.slane %v655, 4
      %v658 = vshll.u32 %v414, 16
      %v660 = vrot.slane %v658, 5
      %v661 = vsel %vm445, %v656, %v660
      %v663 = vshrl.u32 %v415, 16
      %v665 = vrot.slane %v663, 4
      %v666 = vshll.u32 %v415, 16
      %v668 = vrot.slane %v666, 5
      %v669 = vor.u32 %v665, %v668
      %v670 = vrot.slane %v669, 4
      %v672 = vshll.u32 %v416, 16
      %v674 = vrot.slane %v672, 5
      %v675 = vsel %vm445, %v670, %v674
      %v676 = vshrl.u32 %v416, 16
      %v678 = vrot.slane %v676, 4
      %v679 = vor.u32 %v678, %v674
      %v680 = vrot.slane %v679, 4
      %v682 = vshll.u32 %v417, 16
      %v684 = vrot.slane %v682, 5
      %v685 = vsel %vm445, %v680, %v684
      %v687 = vshrl.u32 %v418, 16
      %v689 = vrot.slane %v687, 4
      %v690 = vshll.u32 %v418, 16
      %v692 = vrot.slane %v690, 5
      %v693 = vor.u32 %v689, %v692
      %v694 = vrot.slane %v693, 4
      %v696 = vshll.u32 %v419, 16
      %v698 = vrot.slane %v696, 5
      %v699 = vsel %vm445, %v694, %v698
      %v700 = vshrl.u32 %v419, 16
      %v702 = vrot.slane %v700, 4
      %v703 = vor.u32 %v702, %v698
      %v704 = vrot.slane %v703, 4
      %v706 = vshll.u32 %v420, 16
      %v708 = vrot.slane %v706, 5
      %v709 = vsel %vm445, %v704, %v708
      %v711 = vshrl.u32 %v421, 16
      %v713 = vrot.slane %v711, 4
      %v714 = vshll.u32 %v421, 16
      %v716 = vrot.slane %v714, 5
      %v717 = vor.u32 %v713, %v716
      %v718 = vrot.slane %v717, 4
      %v720 = vshll.u32 %v422, 16
      %v722 = vrot.slane %v720, 5
      %v723 = vsel %vm445, %v718, %v722
      %v724 = vshrl.u32 %v422, 16
      %v726 = vrot.slane %v724, 4
      %v727 = vor.u32 %v726, %v722
      %v728 = vrot.slane %v727, 4
      %v730 = vshll.u32 %v423, 16
      %v732 = vrot.slane %v730, 5
      %v733 = vsel %vm445, %v728, %v732
      %v735 = vshrl.u32 %v424, 16
      %v737 = vrot.slane %v735, 4
      %v738 = vshll.u32 %v424, 16
      %v740 = vrot.slane %v738, 5
      %v741 = vor.u32 %v737, %v740
      %v742 = vrot.slane %v741, 4
      %v744 = vshll.u32 %v425, 16
      %v746 = vrot.slane %v744, 5
      %v747 = vsel %vm445, %v742, %v746
      %v748 = vshrl.u32 %v425, 16
      %v750 = vrot.slane %v748, 4
      %v751 = vor.u32 %v750, %v746
      %v752 = vrot.slane %v751, 4
      %v754 = vshll.u32 %v426, 16
      %v756 = vrot.slane %v754, 5
      %v757 = vsel %vm445, %v752, %v756
      %v759 = vshrl.u32 %v427, 16
      %v761 = vrot.slane %v759, 4
      %v762 = vshll.u32 %v427, 16
      %v764 = vrot.slane %v762, 5
      %v765 = vor.u32 %v761, %v764
      %v766 = vrot.slane %v765, 4
      %v768 = vshll.u32 %v428, 16
      %v770 = vrot.slane %v768, 5
      %v771 = vsel %vm445, %v766, %v770
      %v772 = vshrl.u32 %v428, 16
      %v774 = vrot.slane %v772, 4
      %v775 = vor.u32 %v774, %v770
      %v776 = vrot.slane %v775, 4
      %v778 = vshll.u32 %v429, 16
      %v780 = vrot.slane %v778, 5
      %v781 = vsel %vm445, %v776, %v780
      %v783 = vshrl.u32 %v430, 16
      %v785 = vrot.slane %v783, 4
      %v786 = vshll.u32 %v430, 16
      %v788 = vrot.slane %v786, 5
      %v789 = vor.u32 %v785, %v788
      %v790 = vrot.slane %v789, 4
      %v792 = vshll.u32 %v431, 16
      %v794 = vrot.slane %v792, 5
      %v795 = vsel %vm445, %v790, %v794
      %v796 = vshrl.u32 %v431, 16
      %v798 = vrot.slane %v796, 4
      %v799 = vor.u32 %v798, %v794
      %v800 = vrot.slane %v799, 4
      %v802 = vshll.u32 %v432, 16
      %v804 = vrot.slane %v802, 5
      %v805 = vsel %vm445, %v800, %v804
      %v807 = vshrl.u32 %v433, 16
      %v809 = vrot.slane %v807, 4
      %v810 = vshll.u32 %v433, 16
      %v812 = vrot.slane %v810, 5
      %v813 = vor.u32 %v809, %v812
      %v814 = vrot.slane %v813, 4
      %v816 = vshll.u32 %v434, 16
      %v818 = vrot.slane %v816, 5
      %v819 = vsel %vm445, %v814, %v818
      %v820 = vshrl.u32 %v434, 16
      %v822 = vrot.slane %v820, 4
      %v823 = vor.u32 %v822, %v818
      %v824 = vrot.slane %v823, 4
      %v826 = vshll.u32 %v435, 16
      %v828 = vrot.slane %v826, 5
      %v829 = vsel %vm445, %v824, %v828
      %s830 = scalar_lea.vmem %s1, 4
      %v831 = vld [vmem:[%s830] sm:$0xf]
      %v832 = vunpack.c.l.b16 %v459
      %v833 = vunpack.c.l.b16 %v469
      %v834 = vunpack.c.l.b16 %v483
      %v835 = vunpack.c.l.b16 %v493
      %v836 = vunpack.c.l.b16 %v507
      %v837 = vunpack.c.l.b16 %v517
      %v838 = vunpack.c.l.b16 %v531
      %v839 = vunpack.c.l.b16 %v541
      %v840 = vunpack.c.l.b16 %v555
      %v841 = vunpack.c.l.b16 %v565
      %v842 = vunpack.c.l.b16 %v579
      %v843 = vunpack.c.l.b16 %v589
      %v844 = vunpack.c.l.b16 %v603
      %v845 = vunpack.c.l.b16 %v613
      %v846 = vunpack.c.l.b16 %v627
      %v847 = vunpack.c.l.b16 %v637
      %v848 = vunpack.c.l.b16 %v651
      %v849 = vunpack.c.l.b16 %v661
      %v850 = vunpack.c.l.b16 %v675
      %v851 = vunpack.c.l.b16 %v685
      %v852 = vunpack.c.l.b16 %v699
      %v853 = vunpack.c.l.b16 %v709
      %v854 = vunpack.c.l.b16 %v723
      %v855 = vunpack.c.l.b16 %v733
      %v856 = vunpack.c.l.b16 %v747
      %v857 = vunpack.c.l.b16 %v757
      %v858 = vunpack.c.l.b16 %v771
      %v859 = vunpack.c.l.b16 %v781
      %v860 = vunpack.c.l.b16 %v795
      %v861 = vunpack.c.l.b16 %v805
      %v862 = vunpack.c.l.b16 %v819
      %v863 = vunpack.c.l.b16 %v829
      %v864 = vpack.c.b16 %v833, %v832
      %v865 = vpack.c.b16 %v835, %v834
      %v866 = vpack.c.b16 %v837, %v836
      %v867 = vpack.c.b16 %v839, %v838
      %v868 = vpack.c.b16 %v841, %v840
      %v869 = vpack.c.b16 %v843, %v842
      %v870 = vpack.c.b16 %v845, %v844
      %v871 = vpack.c.b16 %v847, %v846
      %v872 = vpack.c.b16 %v849, %v848
      %v873 = vpack.c.b16 %v851, %v850
      %v874 = vpack.c.b16 %v853, %v852
      %v875 = vpack.c.b16 %v855, %v854
      %v876 = vpack.c.b16 %v857, %v856
      %v877 = vpack.c.b16 %v859, %v858
      %v878 = vpack.c.b16 %v861, %v860
      %v879 = vpack.c.b16 %v863, %v862
      %vm880 = vcmask 64512
      %v882 = vsel %vm880, %v864, 0
      %v885 = vsel %vm880, %v865, 0
      %v888 = vsel %vm880, %v866, 0
      %v891 = vsel %vm880, %v867, 0
      %v894 = vsel %vm880, %v868, 0
      %v897 = vsel %vm880, %v869, 0
      %v900 = vsel %vm880, %v870, 0
      %v903 = vsel %vm880, %v871, 0
      %v906 = vsel %vm880, %v872, 0
      %v909 = vsel %vm880, %v873, 0
      %v912 = vsel %vm880, %v874, 0
      %v915 = vsel %vm880, %v875, 0
      %v918 = vsel %vm880, %v876, 0
      %v921 = vsel %vm880, %v877, 0
      %v924 = vsel %vm880, %v878, 0
      %v927 = vsel %vm880, %v879, 0
      %vm929 = vcmask 1043456
      %v931 = vsel %vm929, %v831, 0
      %933 = vmatpush.bf16.msra.mxu0 0
      %934 = vmatpush.bf16.msra.mxu0 0
      %935 = vmatpush.bf16.msra.mxu0 0
      %936 = vmatpush.bf16.msra.mxu0 0
      %937 = vmatpush.bf16.msra.mxu0 0
      %938 = vmatpush.bf16.msra.mxu0 0
      %939 = vmatpush.bf16.msra.mxu0 0
      %940 = vmatpush.bf16.msra.mxu0 %v931
      %941 = vmatmul.bf16.gmra.mxu0 %v882
      %v942 = vpop.f32.mrf.mxu0
      %v943 = vadd.f32 0.0, %v942
      %v944 = vpop.f32.mrf.mxu0
      %v945 = vadd.f32 0.0, %v944
      %946 = vmatmul.bf16.gmra.mxu0 %v885
      %v947 = vpop.f32.mrf.mxu0
      %v948 = vadd.f32 0.0, %v947
      %v949 = vpop.f32.mrf.mxu0
      %v950 = vadd.f32 0.0, %v949
      %951 = vmatmul.bf16.gmra.mxu0 %v888
      %v952 = vpop.f32.mrf.mxu0
      %v953 = vadd.f32 0.0, %v952
      %v954 = vpop.f32.mrf.mxu0
      %v955 = vadd.f32 0.0, %v954
      %956 = vmatmul.bf16.gmra.mxu0 %v891
      %v957 = vpop.f32.mrf.mxu0
      %v958 = vadd.f32 0.0, %v957
      %v959 = vpop.f32.mrf.mxu0
      %v960 = vadd.f32 0.0, %v959
      %961 = vmatmul.bf16.gmra.mxu0 %v894
      %v962 = vpop.f32.mrf.mxu0
      %v963 = vadd.f32 0.0, %v962
      %v964 = vpop.f32.mrf.mxu0
      %v965 = vadd.f32 0.0, %v964
      %966 = vmatmul.bf16.gmra.mxu0 %v897
      %v967 = vpop.f32.mrf.mxu0
      %v968 = vadd.f32 0.0, %v967
      %v969 = vpop.f32.mrf.mxu0
      %v970 = vadd.f32 0.0, %v969
      %971 = vmatmul.bf16.gmra.mxu0 %v900
      %v972 = vpop.f32.mrf.mxu0
      %v973 = vadd.f32 0.0, %v972
      %v974 = vpop.f32.mrf.mxu0
      %v975 = vadd.f32 0.0, %v974
      %976 = vmatmul.bf16.gmra.mxu0 %v903
      %v977 = vpop.f32.mrf.mxu0
      %v978 = vadd.f32 0.0, %v977
      %v979 = vpop.f32.mrf.mxu0
      %v980 = vadd.f32 0.0, %v979
      %981 = vmatmul.bf16.gmra.mxu0 %v906
      %v982 = vpop.f32.mrf.mxu0
      %v983 = vadd.f32 0.0, %v982
      %v984 = vpop.f32.mrf.mxu0
      %v985 = vadd.f32 0.0, %v984
      %986 = vmatmul.bf16.gmra.mxu0 %v909
      %v987 = vpop.f32.mrf.mxu0
      %v988 = vadd.f32 0.0, %v987
      %v989 = vpop.f32.mrf.mxu0
      %v990 = vadd.f32 0.0, %v989
      %991 = vmatmul.bf16.gmra.mxu0 %v912
      %v992 = vpop.f32.mrf.mxu0
      %v993 = vadd.f32 0.0, %v992
      %v994 = vpop.f32.mrf.mxu0
      %v995 = vadd.f32 0.0, %v994
      %996 = vmatmul.bf16.gmra.mxu0 %v915
      %v997 = vpop.f32.mrf.mxu0
      %v998 = vadd.f32 0.0, %v997
      %v999 = vpop.f32.mrf.mxu0
      %v1000 = vadd.f32 0.0, %v999
      %1001 = vmatmul.bf16.gmra.mxu0 %v918
      %v1002 = vpop.f32.mrf.mxu0
      %v1003 = vadd.f32 0.0, %v1002
      %v1004 = vpop.f32.mrf.mxu0
      %v1005 = vadd.f32 0.0, %v1004
      %1006 = vmatmul.bf16.gmra.mxu0 %v921
      %v1007 = vpop.f32.mrf.mxu0
      %v1008 = vadd.f32 0.0, %v1007
      %v1009 = vpop.f32.mrf.mxu0
      %v1010 = vadd.f32 0.0, %v1009
      %1011 = vmatmul.bf16.gmra.mxu0 %v924
      %v1012 = vpop.f32.mrf.mxu0
      %v1013 = vadd.f32 0.0, %v1012
      %v1014 = vpop.f32.mrf.mxu0
      %v1015 = vadd.f32 0.0, %v1014
      %1016 = vmatmul.bf16.gmra.mxu0 %v927
      %v1017 = vpop.f32.mrf.mxu0
      %v1018 = vadd.f32 0.0, %v1017
      %v1019 = vpop.f32.mrf.mxu0
      %v1020 = vadd.f32 0.0, %v1019
      %1021 = vdwg.mxu0
      %v1054 = vunpack.c.l.b16 %v388
      %v1055 = vunpack.c.l.b16 %v389
      %v1056 = vunpack.c.l.b16 %v391
      %v1057 = vunpack.c.l.b16 %v392
      %v1058 = vunpack.c.l.b16 %v394
      %v1059 = vunpack.c.l.b16 %v395
      %v1060 = vunpack.c.l.b16 %v397
      %v1061 = vunpack.c.l.b16 %v398
      %v1062 = vunpack.c.l.b16 %v400
      %v1063 = vunpack.c.l.b16 %v401
      %v1064 = vunpack.c.l.b16 %v403
      %v1065 = vunpack.c.l.b16 %v404
      %v1066 = vunpack.c.l.b16 %v406
      %v1067 = vunpack.c.l.b16 %v407
      %v1068 = vunpack.c.l.b16 %v409
      %v1069 = vunpack.c.l.b16 %v410
      %v1070 = vunpack.c.l.b16 %v412
      %v1071 = vunpack.c.l.b16 %v413
      %v1072 = vunpack.c.l.b16 %v415
      %v1073 = vunpack.c.l.b16 %v416
      %v1074 = vunpack.c.l.b16 %v418
      %v1075 = vunpack.c.l.b16 %v419
      %v1076 = vunpack.c.l.b16 %v421
      %v1077 = vunpack.c.l.b16 %v422
      %v1078 = vunpack.c.l.b16 %v424
      %v1079 = vunpack.c.l.b16 %v425
      %v1080 = vunpack.c.l.b16 %v427
      %v1081 = vunpack.c.l.b16 %v428
      %v1082 = vunpack.c.l.b16 %v430
      %v1083 = vunpack.c.l.b16 %v431
      %v1084 = vunpack.c.l.b16 %v433
      %v1085 = vunpack.c.l.b16 %v434
      %v1086 = vpack.c.b16 %v1055, %v1054
      %v1087 = vpack.c.b16 %v1057, %v1056
      %v1088 = vpack.c.b16 %v1059, %v1058
      %v1089 = vpack.c.b16 %v1061, %v1060
      %v1090 = vpack.c.b16 %v1063, %v1062
      %v1091 = vpack.c.b16 %v1065, %v1064
      %v1092 = vpack.c.b16 %v1067, %v1066
      %v1093 = vpack.c.b16 %v1069, %v1068
      %v1094 = vpack.c.b16 %v1071, %v1070
      %v1095 = vpack.c.b16 %v1073, %v1072
      %v1096 = vpack.c.b16 %v1075, %v1074
      %v1097 = vpack.c.b16 %v1077, %v1076
      %v1098 = vpack.c.b16 %v1079, %v1078
      %v1099 = vpack.c.b16 %v1081, %v1080
      %v1100 = vpack.c.b16 %v1083, %v1082
      %v1101 = vpack.c.b16 %v1085, %v1084
      %v1103 = vsel %vm880, %v1086, 0
      %v1106 = vsel %vm880, %v1087, 0
      %v1109 = vsel %vm880, %v1088, 0
      %v1112 = vsel %vm880, %v1089, 0
      %v1115 = vsel %vm880, %v1090, 0
      %v1118 = vsel %vm880, %v1091, 0
      %v1121 = vsel %vm880, %v1092, 0
      %v1124 = vsel %vm880, %v1093, 0
      %v1127 = vsel %vm880, %v1094, 0
      %v1130 = vsel %vm880, %v1095, 0
      %v1133 = vsel %vm880, %v1096, 0
      %v1136 = vsel %vm880, %v1097, 0
      %v1139 = vsel %vm880, %v1098, 0
      %v1142 = vsel %vm880, %v1099, 0
      %v1145 = vsel %vm880, %v1100, 0
      %v1148 = vsel %vm880, %v1101, 0
      %v1151 = vsel %vm929, %v442, 0
      %1153 = vmatpush.bf16.msra.mxu0 0
      %1154 = vmatpush.bf16.msra.mxu0 0
      %1155 = vmatpush.bf16.msra.mxu0 0
      %1156 = vmatpush.bf16.msra.mxu0 0
      %1157 = vmatpush.bf16.msra.mxu0 0
      %1158 = vmatpush.bf16.msra.mxu0 0
      %1159 = vmatpush.bf16.msra.mxu0 0
      %1160 = vmatpush.bf16.msra.mxu0 %v1151
      %1161 = vmatmul.bf16.gmra.mxu0 %v1103
      %v1162 = vpop.f32.mrf.mxu0
      %v1163 = vadd.f32 %v943, %v1162
      %v1164 = vpop.f32.mrf.mxu0
      %v1165 = vadd.f32 %v945, %v1164
      %1166 = vmatmul.bf16.gmra.mxu0 %v1106
      %v1167 = vpop.f32.mrf.mxu0
      %v1168 = vadd.f32 %v948, %v1167
      %v1169 = vpop.f32.mrf.mxu0
      %v1170 = vadd.f32 %v950, %v1169
      %1171 = vmatmul.bf16.gmra.mxu0 %v1109
      %v1172 = vpop.f32.mrf.mxu0
      %v1173 = vadd.f32 %v953, %v1172
      %v1174 = vpop.f32.mrf.mxu0
      %v1175 = vadd.f32 %v955, %v1174
      %1176 = vmatmul.bf16.gmra.mxu0 %v1112
      %v1177 = vpop.f32.mrf.mxu0
      %v1178 = vadd.f32 %v958, %v1177
      %v1179 = vpop.f32.mrf.mxu0
      %v1180 = vadd.f32 %v960, %v1179
      %1181 = vmatmul.bf16.gmra.mxu0 %v1115
      %v1182 = vpop.f32.mrf.mxu0
      %v1183 = vadd.f32 %v963, %v1182
      %v1184 = vpop.f32.mrf.mxu0
      %v1185 = vadd.f32 %v965, %v1184
      %1186 = vmatmul.bf16.gmra.mxu0 %v1118
      %v1187 = vpop.f32.mrf.mxu0
      %v1188 = vadd.f32 %v968, %v1187
      %v1189 = vpop.f32.mrf.mxu0
      %v1190 = vadd.f32 %v970, %v1189
      %1191 = vmatmul.bf16.gmra.mxu0 %v1121
      %v1192 = vpop.f32.mrf.mxu0
      %v1193 = vadd.f32 %v973, %v1192
      %v1194 = vpop.f32.mrf.mxu0
      %v1195 = vadd.f32 %v975, %v1194
      %1196 = vmatmul.bf16.gmra.mxu0 %v1124
      %v1197 = vpop.f32.mrf.mxu0
      %v1198 = vadd.f32 %v978, %v1197
      %v1199 = vpop.f32.mrf.mxu0
      %v1200 = vadd.f32 %v980, %v1199
      %1201 = vmatmul.bf16.gmra.mxu0 %v1127
      %v1202 = vpop.f32.mrf.mxu0
      %v1203 = vadd.f32 %v983, %v1202
      %v1204 = vpop.f32.mrf.mxu0
      %v1205 = vadd.f32 %v985, %v1204
      %1206 = vmatmul.bf16.gmra.mxu0 %v1130
      %v1207 = vpop.f32.mrf.mxu0
      %v1208 = vadd.f32 %v988, %v1207
      %v1209 = vpop.f32.mrf.mxu0
      %v1210 = vadd.f32 %v990, %v1209
      %1211 = vmatmul.bf16.gmra.mxu0 %v1133
      %v1212 = vpop.f32.mrf.mxu0
      %v1213 = vadd.f32 %v993, %v1212
      %v1214 = vpop.f32.mrf.mxu0
      %v1215 = vadd.f32 %v995, %v1214
      %1216 = vmatmul.bf16.gmra.mxu0 %v1136
      %v1217 = vpop.f32.mrf.mxu0
      %v1218 = vadd.f32 %v998, %v1217
      %v1219 = vpop.f32.mrf.mxu0
      %v1220 = vadd.f32 %v1000, %v1219
      %1221 = vmatmul.bf16.gmra.mxu0 %v1139
      %v1222 = vpop.f32.mrf.mxu0
      %v1223 = vadd.f32 %v1003, %v1222
      %v1224 = vpop.f32.mrf.mxu0
      %v1225 = vadd.f32 %v1005, %v1224
      %1226 = vmatmul.bf16.gmra.mxu0 %v1142
      %v1227 = vpop.f32.mrf.mxu0
      %v1228 = vadd.f32 %v1008, %v1227
      %v1229 = vpop.f32.mrf.mxu0
      %v1230 = vadd.f32 %v1010, %v1229
      %1231 = vmatmul.bf16.gmra.mxu0 %v1145
      %v1232 = vpop.f32.mrf.mxu0
      %v1233 = vadd.f32 %v1013, %v1232
      %v1234 = vpop.f32.mrf.mxu0
      %v1235 = vadd.f32 %v1015, %v1234
      %1236 = vmatmul.bf16.gmra.mxu0 %v1148
      %v1237 = vpop.f32.mrf.mxu0
      %v1238 = vadd.f32 %v1018, %v1237
      %v1239 = vpop.f32.mrf.mxu0
      %v1240 = vadd.f32 %v1020, %v1239
      %1241 = vdwg.mxu0
      %vm1258 = vcmask 1042432
      %vm1259 = vcmask 1046532
      %vm1260 = vmor %vm1258, %vm1259
      %v1261 = vrot.slane %v388, 5
      %v1262 = vrot.slane %v1261, 4
      %v1263 = vrot.slane %v389, 5
      %v1264 = vsel %vm1260, %v1262, %v1263
      %v1265 = vrot.slane %v1263, 4
      %v1266 = vrot.slane %v390, 5
      %v1267 = vsel %vm1260, %v1265, %v1266
      %v1268 = vrot.slane %v391, 5
      %v1269 = vrot.slane %v1268, 4
      %v1270 = vrot.slane %v392, 5
      %v1271 = vsel %vm1260, %v1269, %v1270
      %v1272 = vrot.slane %v1270, 4
      %v1273 = vrot.slane %v393, 5
      %v1274 = vsel %vm1260, %v1272, %v1273
      %v1275 = vrot.slane %v394, 5
      %v1276 = vrot.slane %v1275, 4
      %v1277 = vrot.slane %v395, 5
      %v1278 = vsel %vm1260, %v1276, %v1277
      %v1279 = vrot.slane %v1277, 4
      %v1280 = vrot.slane %v396, 5
      %v1281 = vsel %vm1260, %v1279, %v1280
      %v1282 = vrot.slane %v397, 5
      %v1283 = vrot.slane %v1282, 4
      %v1284 = vrot.slane %v398, 5
      %v1285 = vsel %vm1260, %v1283, %v1284
      %v1286 = vrot.slane %v1284, 4
      %v1287 = vrot.slane %v399, 5
      %v1288 = vsel %vm1260, %v1286, %v1287
      %v1289 = vrot.slane %v400, 5
      %v1290 = vrot.slane %v1289, 4
      %v1291 = vrot.slane %v401, 5
      %v1292 = vsel %vm1260, %v1290, %v1291
      %v1293 = vrot.slane %v1291, 4
      %v1294 = vrot.slane %v402, 5
      %v1295 = vsel %vm1260, %v1293, %v1294
      %v1296 = vrot.slane %v403, 5
      %v1297 = vrot.slane %v1296, 4
      %v1298 = vrot.slane %v404, 5
      %v1299 = vsel %vm1260, %v1297, %v1298
      %v1300 = vrot.slane %v1298, 4
      %v1301 = vrot.slane %v405, 5
      %v1302 = vsel %vm1260, %v1300, %v1301
      %v1303 = vrot.slane %v406, 5
      %v1304 = vrot.slane %v1303, 4
      %v1305 = vrot.slane %v407, 5
      %v1306 = vsel %vm1260, %v1304, %v1305
      %v1307 = vrot.slane %v1305, 4
      %v1308 = vrot.slane %v408, 5
      %v1309 = vsel %vm1260, %v1307, %v1308
      %v1310 = vrot.slane %v409, 5
      %v1311 = vrot.slane %v1310, 4
      %v1312 = vrot.slane %v410, 5
      %v1313 = vsel %vm1260, %v1311, %v1312
      %v1314 = vrot.slane %v1312, 4
      %v1315 = vrot.slane %v411, 5
      %v1316 = vsel %vm1260, %v1314, %v1315
      %v1317 = vrot.slane %v412, 5
      %v1318 = vrot.slane %v1317, 4
      %v1319 = vrot.slane %v413, 5
      %v1320 = vsel %vm1260, %v1318, %v1319
      %v1321 = vrot.slane %v1319, 4
      %v1322 = vrot.slane %v414, 5
      %v1323 = vsel %vm1260, %v1321, %v1322
      %v1324 = vrot.slane %v415, 5
      %v1325 = vrot.slane %v1324, 4
      %v1326 = vrot.slane %v416, 5
      %v1327 = vsel %vm1260, %v1325, %v1326
      %v1328 = vrot.slane %v1326, 4
      %v1329 = vrot.slane %v417, 5
      %v1330 = vsel %vm1260, %v1328, %v1329
      %v1331 = vrot.slane %v418, 5
      %v1332 = vrot.slane %v1331, 4
      %v1333 = vrot.slane %v419, 5
      %v1334 = vsel %vm1260, %v1332, %v1333
      %v1335 = vrot.slane %v1333, 4
      %v1336 = vrot.slane %v420, 5
      %v1337 = vsel %vm1260, %v1335, %v1336
      %v1338 = vrot.slane %v421, 5
      %v1339 = vrot.slane %v1338, 4
      %v1340 = vrot.slane %v422, 5
      %v1341 = vsel %vm1260, %v1339, %v1340
      %v1342 = vrot.slane %v1340, 4
      %v1343 = vrot.slane %v423, 5
      %v1344 = vsel %vm1260, %v1342, %v1343
      %v1345 = vrot.slane %v424, 5
      %v1346 = vrot.slane %v1345, 4
      %v1347 = vrot.slane %v425, 5
      %v1348 = vsel %vm1260, %v1346, %v1347
      %v1349 = vrot.slane %v1347, 4
      %v1350 = vrot.slane %v426, 5
      %v1351 = vsel %vm1260, %v1349, %v1350
      %v1352 = vrot.slane %v427, 5
      %v1353 = vrot.slane %v1352, 4
      %v1354 = vrot.slane %v428, 5
      %v1355 = vsel %vm1260, %v1353, %v1354
      %v1356 = vrot.slane %v1354, 4
      %v1357 = vrot.slane %v429, 5
      %v1358 = vsel %vm1260, %v1356, %v1357
      %v1359 = vrot.slane %v430, 5
      %v1360 = vrot.slane %v1359, 4
      %v1361 = vrot.slane %v431, 5
      %v1362 = vsel %vm1260, %v1360, %v1361
      %v1363 = vrot.slane %v1361, 4
      %v1364 = vrot.slane %v432, 5
      %v1365 = vsel %vm1260, %v1363, %v1364
      %v1366 = vrot.slane %v433, 5
      %v1367 = vrot.slane %v1366, 4
      %v1368 = vrot.slane %v434, 5
      %v1369 = vsel %vm1260, %v1367, %v1368
      %v1370 = vrot.slane %v1368, 4
      %v1371 = vrot.slane %v435, 5
      %v1372 = vsel %vm1260, %v1370, %v1371
      %s1373 = scalar_lea.vmem %s1, 8
      %v1374 = vld [vmem:[%s1373] sm:$0xf]
      %v1375 = vunpack.c.l.b16 %v1264
      %v1376 = vunpack.c.l.b16 %v1267
      %v1377 = vunpack.c.l.b16 %v1271
      %v1378 = vunpack.c.l.b16 %v1274
      %v1379 = vunpack.c.l.b16 %v1278
      %v1380 = vunpack.c.l.b16 %v1281
      %v1381 = vunpack.c.l.b16 %v1285
      %v1382 = vunpack.c.l.b16 %v1288
      %v1383 = vunpack.c.l.b16 %v1292
      %v1384 = vunpack.c.l.b16 %v1295
      %v1385 = vunpack.c.l.b16 %v1299
      %v1386 = vunpack.c.l.b16 %v1302
      %v1387 = vunpack.c.l.b16 %v1306
      %v1388 = vunpack.c.l.b16 %v1309
      %v1389 = vunpack.c.l.b16 %v1313
      %v1390 = vunpack.c.l.b16 %v1316
      %v1391 = vunpack.c.l.b16 %v1320
      %v1392 = vunpack.c.l.b16 %v1323
      %v1393 = vunpack.c.l.b16 %v1327
      %v1394 = vunpack.c.l.b16 %v1330
      %v1395 = vunpack.c.l.b16 %v1334
      %v1396 = vunpack.c.l.b16 %v1337
      %v1397 = vunpack.c.l.b16 %v1341
      %v1398 = vunpack.c.l.b16 %v1344
      %v1399 = vunpack.c.l.b16 %v1348
      %v1400 = vunpack.c.l.b16 %v1351
      %v1401 = vunpack.c.l.b16 %v1355
      %v1402 = vunpack.c.l.b16 %v1358
      %v1403 = vunpack.c.l.b16 %v1362
      %v1404 = vunpack.c.l.b16 %v1365
      %v1405 = vunpack.c.l.b16 %v1369
      %v1406 = vunpack.c.l.b16 %v1372
      %v1407 = vpack.c.b16 %v1376, %v1375
      %v1408 = vpack.c.b16 %v1378, %v1377
      %v1409 = vpack.c.b16 %v1380, %v1379
      %v1410 = vpack.c.b16 %v1382, %v1381
      %v1411 = vpack.c.b16 %v1384, %v1383
      %v1412 = vpack.c.b16 %v1386, %v1385
      %v1413 = vpack.c.b16 %v1388, %v1387
      %v1414 = vpack.c.b16 %v1390, %v1389
      %v1415 = vpack.c.b16 %v1392, %v1391
      %v1416 = vpack.c.b16 %v1394, %v1393
      %v1417 = vpack.c.b16 %v1396, %v1395
      %v1418 = vpack.c.b16 %v1398, %v1397
      %v1419 = vpack.c.b16 %v1400, %v1399
      %v1420 = vpack.c.b16 %v1402, %v1401
      %v1421 = vpack.c.b16 %v1404, %v1403
      %v1422 = vpack.c.b16 %v1406, %v1405
      %v1424 = vsel %vm880, %v1407, 0
      %v1427 = vsel %vm880, %v1408, 0
      %v1430 = vsel %vm880, %v1409, 0
      %v1433 = vsel %vm880, %v1410, 0
      %v1436 = vsel %vm880, %v1411, 0
      %v1439 = vsel %vm880, %v1412, 0
      %v1442 = vsel %vm880, %v1413, 0
      %v1445 = vsel %vm880, %v1414, 0
      %v1448 = vsel %vm880, %v1415, 0
      %v1451 = vsel %vm880, %v1416, 0
      %v1454 = vsel %vm880, %v1417, 0
      %v1457 = vsel %vm880, %v1418, 0
      %v1460 = vsel %vm880, %v1419, 0
      %v1463 = vsel %vm880, %v1420, 0
      %v1466 = vsel %vm880, %v1421, 0
      %v1469 = vsel %vm880, %v1422, 0
      %v1472 = vsel %vm929, %v1374, 0
      %1474 = vmatpush.bf16.msra.mxu0 0
      %1475 = vmatpush.bf16.msra.mxu0 0
      %1476 = vmatpush.bf16.msra.mxu0 0
      %1477 = vmatpush.bf16.msra.mxu0 0
      %1478 = vmatpush.bf16.msra.mxu0 0
      %1479 = vmatpush.bf16.msra.mxu0 0
      %1480 = vmatpush.bf16.msra.mxu0 0
      %1481 = vmatpush.bf16.msra.mxu0 %v1472
      %1482 = vmatmul.bf16.gmra.mxu0 %v1424
      %v1483 = vpop.f32.mrf.mxu0
      %v1484 = vadd.f32 0.0, %v1483
      %v1485 = vpop.f32.mrf.mxu0
      %v1486 = vadd.f32 0.0, %v1485
      %1487 = vmatmul.bf16.gmra.mxu0 %v1427
      %v1488 = vpop.f32.mrf.mxu0
      %v1489 = vadd.f32 0.0, %v1488
      %v1490 = vpop.f32.mrf.mxu0
      %v1491 = vadd.f32 0.0, %v1490
      %1492 = vmatmul.bf16.gmra.mxu0 %v1430
      %v1493 = vpop.f32.mrf.mxu0
      %v1494 = vadd.f32 0.0, %v1493
      %v1495 = vpop.f32.mrf.mxu0
      %v1496 = vadd.f32 0.0, %v1495
      %1497 = vmatmul.bf16.gmra.mxu0 %v1433
      %v1498 = vpop.f32.mrf.mxu0
      %v1499 = vadd.f32 0.0, %v1498
      %v1500 = vpop.f32.mrf.mxu0
      %v1501 = vadd.f32 0.0, %v1500
      %1502 = vmatmul.bf16.gmra.mxu0 %v1436
      %v1503 = vpop.f32.mrf.mxu0
      %v1504 = vadd.f32 0.0, %v1503
      %v1505 = vpop.f32.mrf.mxu0
      %v1506 = vadd.f32 0.0, %v1505
      %1507 = vmatmul.bf16.gmra.mxu0 %v1439
      %v1508 = vpop.f32.mrf.mxu0
      %v1509 = vadd.f32 0.0, %v1508
      %v1510 = vpop.f32.mrf.mxu0
      %v1511 = vadd.f32 0.0, %v1510
      %1512 = vmatmul.bf16.gmra.mxu0 %v1442
      %v1513 = vpop.f32.mrf.mxu0
      %v1514 = vadd.f32 0.0, %v1513
      %v1515 = vpop.f32.mrf.mxu0
      %v1516 = vadd.f32 0.0, %v1515
      %1517 = vmatmul.bf16.gmra.mxu0 %v1445
      %v1518 = vpop.f32.mrf.mxu0
      %v1519 = vadd.f32 0.0, %v1518
      %v1520 = vpop.f32.mrf.mxu0
      %v1521 = vadd.f32 0.0, %v1520
      %1522 = vmatmul.bf16.gmra.mxu0 %v1448
      %v1523 = vpop.f32.mrf.mxu0
      %v1524 = vadd.f32 0.0, %v1523
      %v1525 = vpop.f32.mrf.mxu0
      %v1526 = vadd.f32 0.0, %v1525
      %1527 = vmatmul.bf16.gmra.mxu0 %v1451
      %v1528 = vpop.f32.mrf.mxu0
      %v1529 = vadd.f32 0.0, %v1528
      %v1530 = vpop.f32.mrf.mxu0
      %v1531 = vadd.f32 0.0, %v1530
      %1532 = vmatmul.bf16.gmra.mxu0 %v1454
      %v1533 = vpop.f32.mrf.mxu0
      %v1534 = vadd.f32 0.0, %v1533
      %v1535 = vpop.f32.mrf.mxu0
      %v1536 = vadd.f32 0.0, %v1535
      %1537 = vmatmul.bf16.gmra.mxu0 %v1457
      %v1538 = vpop.f32.mrf.mxu0
      %v1539 = vadd.f32 0.0, %v1538
      %v1540 = vpop.f32.mrf.mxu0
      %v1541 = vadd.f32 0.0, %v1540
      %1542 = vmatmul.bf16.gmra.mxu0 %v1460
      %v1543 = vpop.f32.mrf.mxu0
      %v1544 = vadd.f32 0.0, %v1543
      %v1545 = vpop.f32.mrf.mxu0
      %v1546 = vadd.f32 0.0, %v1545
      %1547 = vmatmul.bf16.gmra.mxu0 %v1463
      %v1548 = vpop.f32.mrf.mxu0
      %v1549 = vadd.f32 0.0, %v1548
      %v1550 = vpop.f32.mrf.mxu0
      %v1551 = vadd.f32 0.0, %v1550
      %1552 = vmatmul.bf16.gmra.mxu0 %v1466
      %v1553 = vpop.f32.mrf.mxu0
      %v1554 = vadd.f32 0.0, %v1553
      %v1555 = vpop.f32.mrf.mxu0
      %v1556 = vadd.f32 0.0, %v1555
      %1557 = vmatmul.bf16.gmra.mxu0 %v1469
      %v1558 = vpop.f32.mrf.mxu0
      %v1559 = vadd.f32 0.0, %v1558
      %v1560 = vpop.f32.mrf.mxu0
      %v1561 = vadd.f32 0.0, %v1560
      %1562 = vdwg.mxu0
      %v1563 = vadd.f32 %v1163, %v1484
      %v1564 = vadd.f32 %v1165, %v1486
      %v1565 = vadd.f32 %v1168, %v1489
      %v1566 = vadd.f32 %v1170, %v1491
      %v1567 = vadd.f32 %v1173, %v1494
      %v1568 = vadd.f32 %v1175, %v1496
      %v1569 = vadd.f32 %v1178, %v1499
      %v1570 = vadd.f32 %v1180, %v1501
      %v1571 = vadd.f32 %v1183, %v1504
      %v1572 = vadd.f32 %v1185, %v1506
      %v1573 = vadd.f32 %v1188, %v1509
      %v1574 = vadd.f32 %v1190, %v1511
      %v1575 = vadd.f32 %v1193, %v1514
      %v1576 = vadd.f32 %v1195, %v1516
      %v1577 = vadd.f32 %v1198, %v1519
      %v1578 = vadd.f32 %v1200, %v1521
      %v1579 = vadd.f32 %v1203, %v1524
      %v1580 = vadd.f32 %v1205, %v1526
      %v1581 = vadd.f32 %v1208, %v1529
      %v1582 = vadd.f32 %v1210, %v1531
      %v1583 = vadd.f32 %v1213, %v1534
      %v1584 = vadd.f32 %v1215, %v1536
      %v1585 = vadd.f32 %v1218, %v1539
      %v1586 = vadd.f32 %v1220, %v1541
      %v1587 = vadd.f32 %v1223, %v1544
      %v1588 = vadd.f32 %v1225, %v1546
      %v1589 = vadd.f32 %v1228, %v1549
      %v1590 = vadd.f32 %v1230, %v1551
      %v1591 = vadd.f32 %v1233, %v1554
      %v1592 = vadd.f32 %v1235, %v1556
      %v1593 = vadd.f32 %v1238, %v1559
      %v1594 = vadd.f32 %v1240, %v1561
      %s1595 = scalar_lea.vmem %s1, 12
      %v1596 = vld [vmem:[%s1595] sm:$0xf]
      %v1599 = vunpack.c.l.b16 %v436
      %v1600 = vunpack.c.l.b16 %v437
      %v1601 = vpack.c.b16 %v1600, %v1599
      %v1603 = vsel %vm880, %v1601, 0
      %v1606 = vsel %vm929, %v1596, 0
      %1608 = vmatpush.bf16.msra.mxu0 0
      %1609 = vmatpush.bf16.msra.mxu0 0
      %1610 = vmatpush.bf16.msra.mxu0 0
      %1611 = vmatpush.bf16.msra.mxu0 0
      %1612 = vmatpush.bf16.msra.mxu0 0
      %1613 = vmatpush.bf16.msra.mxu0 0
      %1614 = vmatpush.bf16.msra.mxu0 0
      %1615 = vmatpush.bf16.msra.mxu0 %v1606
      %1616 = vmatmul.bf16.gmra.mxu0 %v1106
      %v1617 = vpop.f32.mrf.mxu0
      %v1618 = vadd.f32 0.0, %v1617
      %v1619 = vpop.f32.mrf.mxu0
      %v1620 = vadd.f32 0.0, %v1619
      %1621 = vmatmul.bf16.gmra.mxu0 %v1109
      %v1622 = vpop.f32.mrf.mxu0
      %v1623 = vadd.f32 0.0, %v1622
      %v1624 = vpop.f32.mrf.mxu0
      %v1625 = vadd.f32 0.0, %v1624
      %1626 = vmatmul.bf16.gmra.mxu0 %v1112
      %v1627 = vpop.f32.mrf.mxu0
      %v1628 = vadd.f32 0.0, %v1627
      %v1629 = vpop.f32.mrf.mxu0
      %v1630 = vadd.f32 0.0, %v1629
      %1631 = vmatmul.bf16.gmra.mxu0 %v1115
      %v1632 = vpop.f32.mrf.mxu0
      %v1633 = vadd.f32 0.0, %v1632
      %v1634 = vpop.f32.mrf.mxu0
      %v1635 = vadd.f32 0.0, %v1634
      %1636 = vmatmul.bf16.gmra.mxu0 %v1118
      %v1637 = vpop.f32.mrf.mxu0
      %v1638 = vadd.f32 0.0, %v1637
      %v1639 = vpop.f32.mrf.mxu0
      %v1640 = vadd.f32 0.0, %v1639
      %1641 = vmatmul.bf16.gmra.mxu0 %v1121
      %v1642 = vpop.f32.mrf.mxu0
      %v1643 = vadd.f32 0.0, %v1642
      %v1644 = vpop.f32.mrf.mxu0
      %v1645 = vadd.f32 0.0, %v1644
      %1646 = vmatmul.bf16.gmra.mxu0 %v1124
      %v1647 = vpop.f32.mrf.mxu0
      %v1648 = vadd.f32 0.0, %v1647
      %v1649 = vpop.f32.mrf.mxu0
      %v1650 = vadd.f32 0.0, %v1649
      %1651 = vmatmul.bf16.gmra.mxu0 %v1127
      %v1652 = vpop.f32.mrf.mxu0
      %v1653 = vadd.f32 0.0, %v1652
      %v1654 = vpop.f32.mrf.mxu0
      %v1655 = vadd.f32 0.0, %v1654
      %1656 = vmatmul.bf16.gmra.mxu0 %v1130
      %v1657 = vpop.f32.mrf.mxu0
      %v1658 = vadd.f32 0.0, %v1657
      %v1659 = vpop.f32.mrf.mxu0
      %v1660 = vadd.f32 0.0, %v1659
      %1661 = vmatmul.bf16.gmra.mxu0 %v1133
      %v1662 = vpop.f32.mrf.mxu0
      %v1663 = vadd.f32 0.0, %v1662
      %v1664 = vpop.f32.mrf.mxu0
      %v1665 = vadd.f32 0.0, %v1664
      %1666 = vmatmul.bf16.gmra.mxu0 %v1136
      %v1667 = vpop.f32.mrf.mxu0
      %v1668 = vadd.f32 0.0, %v1667
      %v1669 = vpop.f32.mrf.mxu0
      %v1670 = vadd.f32 0.0, %v1669
      %1671 = vmatmul.bf16.gmra.mxu0 %v1139
      %v1672 = vpop.f32.mrf.mxu0
      %v1673 = vadd.f32 0.0, %v1672
      %v1674 = vpop.f32.mrf.mxu0
      %v1675 = vadd.f32 0.0, %v1674
      %1676 = vmatmul.bf16.gmra.mxu0 %v1142
      %v1677 = vpop.f32.mrf.mxu0
      %v1678 = vadd.f32 0.0, %v1677
      %v1679 = vpop.f32.mrf.mxu0
      %v1680 = vadd.f32 0.0, %v1679
      %1681 = vmatmul.bf16.gmra.mxu0 %v1145
      %v1682 = vpop.f32.mrf.mxu0
      %v1683 = vadd.f32 0.0, %v1682
      %v1684 = vpop.f32.mrf.mxu0
      %v1685 = vadd.f32 0.0, %v1684
      %1686 = vmatmul.bf16.gmra.mxu0 %v1148
      %v1687 = vpop.f32.mrf.mxu0
      %v1688 = vadd.f32 0.0, %v1687
      %v1689 = vpop.f32.mrf.mxu0
      %v1690 = vadd.f32 0.0, %v1689
      %1691 = vmatmul.bf16.gmra.mxu0 %v1603
      %v1692 = vpop.f32.mrf.mxu0
      %v1693 = vadd.f32 0.0, %v1692
      %v1694 = vpop.f32.mrf.mxu0
      %v1695 = vadd.f32 0.0, %v1694
      %1696 = vdwg.mxu0
      %v1697 = vadd.f32 %v1563, %v1618
      %v1698 = vadd.f32 %v1564, %v1620
      %v1699 = vadd.f32 %v1565, %v1623
      %v1700 = vadd.f32 %v1566, %v1625
      %v1701 = vadd.f32 %v1567, %v1628
      %v1702 = vadd.f32 %v1568, %v1630
      %v1703 = vadd.f32 %v1569, %v1633
      %v1704 = vadd.f32 %v1570, %v1635
      %v1705 = vadd.f32 %v1571, %v1638
      %v1706 = vadd.f32 %v1572, %v1640
      %v1707 = vadd.f32 %v1573, %v1643
      %v1708 = vadd.f32 %v1574, %v1645
      %v1709 = vadd.f32 %v1575, %v1648
      %v1710 = vadd.f32 %v1576, %v1650
      %v1711 = vadd.f32 %v1577, %v1653
      %v1712 = vadd.f32 %v1578, %v1655
      %v1713 = vadd.f32 %v1579, %v1658
      %v1714 = vadd.f32 %v1580, %v1660
      %v1715 = vadd.f32 %v1581, %v1663
      %v1716 = vadd.f32 %v1582, %v1665
      %v1717 = vadd.f32 %v1583, %v1668
      %v1718 = vadd.f32 %v1584, %v1670
      %v1719 = vadd.f32 %v1585, %v1673
      %v1720 = vadd.f32 %v1586, %v1675
      %v1721 = vadd.f32 %v1587, %v1678
      %v1722 = vadd.f32 %v1588, %v1680
      %v1723 = vadd.f32 %v1589, %v1683
      %v1724 = vadd.f32 %v1590, %v1685
      %v1725 = vadd.f32 %v1591, %v1688
      %v1726 = vadd.f32 %v1592, %v1690
      %v1727 = vadd.f32 %v1593, %v1693
      %v1728 = vadd.f32 %v1594, %v1695
      %v1730 = vshrl.u32 %v436, 16
      %v1732 = vrot.slane %v1730, 4
      %v1733 = vshll.u32 %v436, 16
      %v1735 = vrot.slane %v1733, 5
      %v1736 = vor.u32 %v1732, %v1735
      %v1737 = vrot.slane %v1736, 4
      %v1739 = vshll.u32 %v437, 16
      %v1741 = vrot.slane %v1739, 5
      %v1742 = vsel %vm445, %v1737, %v1741
      %v1743 = vshrl.u32 %v437, 16
      %v1745 = vrot.slane %v1743, 4
      %v1746 = vor.u32 %v1745, %v1741
      %v1747 = vrot.slane %v1746, 4
      %v1749 = vshll.u32 %v438, 16
      %v1751 = vrot.slane %v1749, 5
      %v1752 = vsel %vm445, %v1747, %v1751
      %s1753 = scalar_lea.vmem %s1, 16
      %v1754 = vld [vmem:[%s1753] sm:$0xf]
      %v1755 = vunpack.c.l.b16 %v1742
      %v1756 = vunpack.c.l.b16 %v1752
      %v1757 = vpack.c.b16 %v1756, %v1755
      %v1759 = vsel %vm880, %v1757, 0
      %v1762 = vsel %vm929, %v1754, 0
      %1764 = vmatpush.bf16.msra.mxu0 0
      %1765 = vmatpush.bf16.msra.mxu0 0
      %1766 = vmatpush.bf16.msra.mxu0 0
      %1767 = vmatpush.bf16.msra.mxu0 0
      %1768 = vmatpush.bf16.msra.mxu0 0
      %1769 = vmatpush.bf16.msra.mxu0 0
      %1770 = vmatpush.bf16.msra.mxu0 0
      %1771 = vmatpush.bf16.msra.mxu0 %v1762
      %1772 = vmatmul.bf16.gmra.mxu0 %v885
      %v1773 = vpop.f32.mrf.mxu0
      %v1774 = vadd.f32 0.0, %v1773
      %v1775 = vpop.f32.mrf.mxu0
      %v1776 = vadd.f32 0.0, %v1775
      %1777 = vmatmul.bf16.gmra.mxu0 %v888
      %v1778 = vpop.f32.mrf.mxu0
      %v1779 = vadd.f32 0.0, %v1778
      %v1780 = vpop.f32.mrf.mxu0
      %v1781 = vadd.f32 0.0, %v1780
      %1782 = vmatmul.bf16.gmra.mxu0 %v891
      %v1783 = vpop.f32.mrf.mxu0
      %v1784 = vadd.f32 0.0, %v1783
      %v1785 = vpop.f32.mrf.mxu0
      %v1786 = vadd.f32 0.0, %v1785
      %1787 = vmatmul.bf16.gmra.mxu0 %v894
      %v1788 = vpop.f32.mrf.mxu0
      %v1789 = vadd.f32 0.0, %v1788
      %v1790 = vpop.f32.mrf.mxu0
      %v1791 = vadd.f32 0.0, %v1790
      %1792 = vmatmul.bf16.gmra.mxu0 %v897
      %v1793 = vpop.f32.mrf.mxu0
      %v1794 = vadd.f32 0.0, %v1793
      %v1795 = vpop.f32.mrf.mxu0
      %v1796 = vadd.f32 0.0, %v1795
      %1797 = vmatmul.bf16.gmra.mxu0 %v900
      %v1798 = vpop.f32.mrf.mxu0
      %v1799 = vadd.f32 0.0, %v1798
      %v1800 = vpop.f32.mrf.mxu0
      %v1801 = vadd.f32 0.0, %v1800
      %1802 = vmatmul.bf16.gmra.mxu0 %v903
      %v1803 = vpop.f32.mrf.mxu0
      %v1804 = vadd.f32 0.0, %v1803
      %v1805 = vpop.f32.mrf.mxu0
      %v1806 = vadd.f32 0.0, %v1805
      %1807 = vmatmul.bf16.gmra.mxu0 %v906
      %v1808 = vpop.f32.mrf.mxu0
      %v1809 = vadd.f32 0.0, %v1808
      %v1810 = vpop.f32.mrf.mxu0
      %v1811 = vadd.f32 0.0, %v1810
      %1812 = vmatmul.bf16.gmra.mxu0 %v909
      %v1813 = vpop.f32.mrf.mxu0
      %v1814 = vadd.f32 0.0, %v1813
      %v1815 = vpop.f32.mrf.mxu0
      %v1816 = vadd.f32 0.0, %v1815
      %1817 = vmatmul.bf16.gmra.mxu0 %v912
      %v1818 = vpop.f32.mrf.mxu0
      %v1819 = vadd.f32 0.0, %v1818
      %v1820 = vpop.f32.mrf.mxu0
      %v1821 = vadd.f32 0.0, %v1820
      %1822 = vmatmul.bf16.gmra.mxu0 %v915
      %v1823 = vpop.f32.mrf.mxu0
      %v1824 = vadd.f32 0.0, %v1823
      %v1825 = vpop.f32.mrf.mxu0
      %v1826 = vadd.f32 0.0, %v1825
      %1827 = vmatmul.bf16.gmra.mxu0 %v918
      %v1828 = vpop.f32.mrf.mxu0
      %v1829 = vadd.f32 0.0, %v1828
      %v1830 = vpop.f32.mrf.mxu0
      %v1831 = vadd.f32 0.0, %v1830
      %1832 = vmatmul.bf16.gmra.mxu0 %v921
      %v1833 = vpop.f32.mrf.mxu0
      %v1834 = vadd.f32 0.0, %v1833
      %v1835 = vpop.f32.mrf.mxu0
      %v1836 = vadd.f32 0.0, %v1835
      %1837 = vmatmul.bf16.gmra.mxu0 %v924
      %v1838 = vpop.f32.mrf.mxu0
      %v1839 = vadd.f32 0.0, %v1838
      %v1840 = vpop.f32.mrf.mxu0
      %v1841 = vadd.f32 0.0, %v1840
      %1842 = vmatmul.bf16.gmra.mxu0 %v927
      %v1843 = vpop.f32.mrf.mxu0
      %v1844 = vadd.f32 0.0, %v1843
      %v1845 = vpop.f32.mrf.mxu0
      %v1846 = vadd.f32 0.0, %v1845
      %1847 = vmatmul.bf16.gmra.mxu0 %v1759
      %v1848 = vpop.f32.mrf.mxu0
      %v1849 = vadd.f32 0.0, %v1848
      %v1850 = vpop.f32.mrf.mxu0
      %v1851 = vadd.f32 0.0, %v1850
      %1852 = vdwg.mxu0
      %v1853 = vadd.f32 %v1697, %v1774
      %v1854 = vadd.f32 %v1698, %v1776
      %v1855 = vadd.f32 %v1699, %v1779
      %v1856 = vadd.f32 %v1700, %v1781
      %v1857 = vadd.f32 %v1701, %v1784
      %v1858 = vadd.f32 %v1702, %v1786
      %v1859 = vadd.f32 %v1703, %v1789
      %v1860 = vadd.f32 %v1704, %v1791
      %v1861 = vadd.f32 %v1705, %v1794
      %v1862 = vadd.f32 %v1706, %v1796
      %v1863 = vadd.f32 %v1707, %v1799
      %v1864 = vadd.f32 %v1708, %v1801
      %v1865 = vadd.f32 %v1709, %v1804
      %v1866 = vadd.f32 %v1710, %v1806
      %v1867 = vadd.f32 %v1711, %v1809
      %v1868 = vadd.f32 %v1712, %v1811
      %v1869 = vadd.f32 %v1713, %v1814
      %v1870 = vadd.f32 %v1714, %v1816
      %v1871 = vadd.f32 %v1715, %v1819
      %v1872 = vadd.f32 %v1716, %v1821
      %v1873 = vadd.f32 %v1717, %v1824
      %v1874 = vadd.f32 %v1718, %v1826
      %v1875 = vadd.f32 %v1719, %v1829
      %v1876 = vadd.f32 %v1720, %v1831
      %v1877 = vadd.f32 %v1721, %v1834
      %v1878 = vadd.f32 %v1722, %v1836
      %v1879 = vadd.f32 %v1723, %v1839
      %v1880 = vadd.f32 %v1724, %v1841
      %v1881 = vadd.f32 %v1725, %v1844
      %v1882 = vadd.f32 %v1726, %v1846
      %v1883 = vadd.f32 %v1727, %v1849
      %v1884 = vadd.f32 %v1728, %v1851
      %v1886 = vrot.slane %v436, 5
      %v1887 = vrot.slane %v1886, 4
      %v1888 = vrot.slane %v437, 5
      %v1889 = vsel %vm1260, %v1887, %v1888
      %v1890 = vrot.slane %v1888, 4
      %v1891 = vrot.slane %v438, 5
      %v1892 = vsel %vm1260, %v1890, %v1891
      %s1893 = scalar_lea.vmem %s1, 20
      %v1894 = vld [vmem:[%s1893] sm:$0xf]
      %v1895 = vunpack.c.l.b16 %v1889
      %v1896 = vunpack.c.l.b16 %v1892
      %v1897 = vpack.c.b16 %v1896, %v1895
      %v1899 = vsel %vm880, %v1897, 0
      %v1902 = vsel %vm929, %v1894, 0
      %1904 = vmatpush.bf16.msra.mxu0 0
      %1905 = vmatpush.bf16.msra.mxu0 0
      %1906 = vmatpush.bf16.msra.mxu0 0
      %1907 = vmatpush.bf16.msra.mxu0 0
      %1908 = vmatpush.bf16.msra.mxu0 0
      %1909 = vmatpush.bf16.msra.mxu0 0
      %1910 = vmatpush.bf16.msra.mxu0 0
      %1911 = vmatpush.bf16.msra.mxu0 %v1902
      %1912 = vmatmul.bf16.gmra.mxu0 %v1427
      %v1913 = vpop.f32.mrf.mxu0
      %v1914 = vadd.f32 0.0, %v1913
      %v1915 = vpop.f32.mrf.mxu0
      %v1916 = vadd.f32 0.0, %v1915
      %1917 = vmatmul.bf16.gmra.mxu0 %v1430
      %v1918 = vpop.f32.mrf.mxu0
      %v1919 = vadd.f32 0.0, %v1918
      %v1920 = vpop.f32.mrf.mxu0
      %v1921 = vadd.f32 0.0, %v1920
      %1922 = vmatmul.bf16.gmra.mxu0 %v1433
      %v1923 = vpop.f32.mrf.mxu0
      %v1924 = vadd.f32 0.0, %v1923
      %v1925 = vpop.f32.mrf.mxu0
      %v1926 = vadd.f32 0.0, %v1925
      %1927 = vmatmul.bf16.gmra.mxu0 %v1436
      %v1928 = vpop.f32.mrf.mxu0
      %v1929 = vadd.f32 0.0, %v1928
      %v1930 = vpop.f32.mrf.mxu0
      %v1931 = vadd.f32 0.0, %v1930
      %1932 = vmatmul.bf16.gmra.mxu0 %v1439
      %v1933 = vpop.f32.mrf.mxu0
      %v1934 = vadd.f32 0.0, %v1933
      %v1935 = vpop.f32.mrf.mxu0
      %v1936 = vadd.f32 0.0, %v1935
      %1937 = vmatmul.bf16.gmra.mxu0 %v1442
      %v1938 = vpop.f32.mrf.mxu0
      %v1939 = vadd.f32 0.0, %v1938
      %v1940 = vpop.f32.mrf.mxu0
      %v1941 = vadd.f32 0.0, %v1940
      %1942 = vmatmul.bf16.gmra.mxu0 %v1445
      %v1943 = vpop.f32.mrf.mxu0
      %v1944 = vadd.f32 0.0, %v1943
      %v1945 = vpop.f32.mrf.mxu0
      %v1946 = vadd.f32 0.0, %v1945
      %1947 = vmatmul.bf16.gmra.mxu0 %v1448
      %v1948 = vpop.f32.mrf.mxu0
      %v1949 = vadd.f32 0.0, %v1948
      %v1950 = vpop.f32.mrf.mxu0
      %v1951 = vadd.f32 0.0, %v1950
      %1952 = vmatmul.bf16.gmra.mxu0 %v1451
      %v1953 = vpop.f32.mrf.mxu0
      %v1954 = vadd.f32 0.0, %v1953
      %v1955 = vpop.f32.mrf.mxu0
      %v1956 = vadd.f32 0.0, %v1955
      %1957 = vmatmul.bf16.gmra.mxu0 %v1454
      %v1958 = vpop.f32.mrf.mxu0
      %v1959 = vadd.f32 0.0, %v1958
      %v1960 = vpop.f32.mrf.mxu0
      %v1961 = vadd.f32 0.0, %v1960
      %1962 = vmatmul.bf16.gmra.mxu0 %v1457
      %v1963 = vpop.f32.mrf.mxu0
      %v1964 = vadd.f32 0.0, %v1963
      %v1965 = vpop.f32.mrf.mxu0
      %v1966 = vadd.f32 0.0, %v1965
      %1967 = vmatmul.bf16.gmra.mxu0 %v1460
      %v1968 = vpop.f32.mrf.mxu0
      %v1969 = vadd.f32 0.0, %v1968
      %v1970 = vpop.f32.mrf.mxu0
      %v1971 = vadd.f32 0.0, %v1970
      %1972 = vmatmul.bf16.gmra.mxu0 %v1463
      %v1973 = vpop.f32.mrf.mxu0
      %v1974 = vadd.f32 0.0, %v1973
      %v1975 = vpop.f32.mrf.mxu0
      %v1976 = vadd.f32 0.0, %v1975
      %1977 = vmatmul.bf16.gmra.mxu0 %v1466
      %v1978 = vpop.f32.mrf.mxu0
      %v1979 = vadd.f32 0.0, %v1978
      %v1980 = vpop.f32.mrf.mxu0
      %v1981 = vadd.f32 0.0, %v1980
      %1982 = vmatmul.bf16.gmra.mxu0 %v1469
      %v1983 = vpop.f32.mrf.mxu0
      %v1984 = vadd.f32 0.0, %v1983
      %v1985 = vpop.f32.mrf.mxu0
      %v1986 = vadd.f32 0.0, %v1985
      %1987 = vmatmul.bf16.gmra.mxu0 %v1899
      %v1988 = vpop.f32.mrf.mxu0
      %v1989 = vadd.f32 0.0, %v1988
      %v1990 = vpop.f32.mrf.mxu0
      %v1991 = vadd.f32 0.0, %v1990
      %1992 = vdwg.mxu0
      %v1993 = vadd.f32 %v1853, %v1914
      %v1994 = vadd.f32 %v1854, %v1916
      %v1995 = vadd.f32 %v1855, %v1919
      %v1996 = vadd.f32 %v1856, %v1921
      %v1997 = vadd.f32 %v1857, %v1924
      %v1998 = vadd.f32 %v1858, %v1926
      %v1999 = vadd.f32 %v1859, %v1929
      %v2000 = vadd.f32 %v1860, %v1931
      %v2001 = vadd.f32 %v1861, %v1934
      %v2002 = vadd.f32 %v1862, %v1936
      %v2003 = vadd.f32 %v1863, %v1939
      %v2004 = vadd.f32 %v1864, %v1941
      %v2005 = vadd.f32 %v1865, %v1944
      %v2006 = vadd.f32 %v1866, %v1946
      %v2007 = vadd.f32 %v1867, %v1949
      %v2008 = vadd.f32 %v1868, %v1951
      %v2009 = vadd.f32 %v1869, %v1954
      %v2010 = vadd.f32 %v1870, %v1956
      %v2011 = vadd.f32 %v1871, %v1959
      %v2012 = vadd.f32 %v1872, %v1961
      %v2013 = vadd.f32 %v1873, %v1964
      %v2014 = vadd.f32 %v1874, %v1966
      %v2015 = vadd.f32 %v1875, %v1969
      %v2016 = vadd.f32 %v1876, %v1971
      %v2017 = vadd.f32 %v1877, %v1974
      %v2018 = vadd.f32 %v1878, %v1976
      %v2019 = vadd.f32 %v1879, %v1979
      %v2020 = vadd.f32 %v1880, %v1981
      %v2021 = vadd.f32 %v1881, %v1984
      %v2022 = vadd.f32 %v1882, %v1986
      %v2023 = vadd.f32 %v1883, %v1989
      %v2024 = vadd.f32 %v1884, %v1991
      %s2025 = scalar_lea.vmem %s1, 24
      %v2026 = vld [vmem:[%s2025] sm:$0xf]
      %v2029 = vunpack.c.l.b16 %v439
      %v2030 = vunpack.c.l.b16 %v440
      %v2031 = vpack.c.b16 %v2030, %v2029
      %v2033 = vsel %vm880, %v2031, 0
      %v2036 = vsel %vm929, %v2026, 0
      %2038 = vmatpush.bf16.msra.mxu0 0
      %2039 = vmatpush.bf16.msra.mxu0 0
      %2040 = vmatpush.bf16.msra.mxu0 0
      %2041 = vmatpush.bf16.msra.mxu0 0
      %2042 = vmatpush.bf16.msra.mxu0 0
      %2043 = vmatpush.bf16.msra.mxu0 0
      %2044 = vmatpush.bf16.msra.mxu0 0
      %2045 = vmatpush.bf16.msra.mxu0 %v2036
      %2046 = vmatmul.bf16.gmra.mxu0 %v1109
      %v2047 = vpop.f32.mrf.mxu0
      %v2048 = vadd.f32 0.0, %v2047
      %v2049 = vpop.f32.mrf.mxu0
      %v2050 = vadd.f32 0.0, %v2049
      %2051 = vmatmul.bf16.gmra.mxu0 %v1112
      %v2052 = vpop.f32.mrf.mxu0
      %v2053 = vadd.f32 0.0, %v2052
      %v2054 = vpop.f32.mrf.mxu0
      %v2055 = vadd.f32 0.0, %v2054
      %2056 = vmatmul.bf16.gmra.mxu0 %v1115
      %v2057 = vpop.f32.mrf.mxu0
      %v2058 = vadd.f32 0.0, %v2057
      %v2059 = vpop.f32.mrf.mxu0
      %v2060 = vadd.f32 0.0, %v2059
      %2061 = vmatmul.bf16.gmra.mxu0 %v1118
      %v2062 = vpop.f32.mrf.mxu0
      %v2063 = vadd.f32 0.0, %v2062
      %v2064 = vpop.f32.mrf.mxu0
      %v2065 = vadd.f32 0.0, %v2064
      %2066 = vmatmul.bf16.gmra.mxu0 %v1121
      %v2067 = vpop.f32.mrf.mxu0
      %v2068 = vadd.f32 0.0, %v2067
      %v2069 = vpop.f32.mrf.mxu0
      %v2070 = vadd.f32 0.0, %v2069
      %2071 = vmatmul.bf16.gmra.mxu0 %v1124
      %v2072 = vpop.f32.mrf.mxu0
      %v2073 = vadd.f32 0.0, %v2072
      %v2074 = vpop.f32.mrf.mxu0
      %v2075 = vadd.f32 0.0, %v2074
      %2076 = vmatmul.bf16.gmra.mxu0 %v1127
      %v2077 = vpop.f32.mrf.mxu0
      %v2078 = vadd.f32 0.0, %v2077
      %v2079 = vpop.f32.mrf.mxu0
      %v2080 = vadd.f32 0.0, %v2079
      %2081 = vmatmul.bf16.gmra.mxu0 %v1130
      %v2082 = vpop.f32.mrf.mxu0
      %v2083 = vadd.f32 0.0, %v2082
      %v2084 = vpop.f32.mrf.mxu0
      %v2085 = vadd.f32 0.0, %v2084
      %2086 = vmatmul.bf16.gmra.mxu0 %v1133
      %v2087 = vpop.f32.mrf.mxu0
      %v2088 = vadd.f32 0.0, %v2087
      %v2089 = vpop.f32.mrf.mxu0
      %v2090 = vadd.f32 0.0, %v2089
      %2091 = vmatmul.bf16.gmra.mxu0 %v1136
      %v2092 = vpop.f32.mrf.mxu0
      %v2093 = vadd.f32 0.0, %v2092
      %v2094 = vpop.f32.mrf.mxu0
      %v2095 = vadd.f32 0.0, %v2094
      %2096 = vmatmul.bf16.gmra.mxu0 %v1139
      %v2097 = vpop.f32.mrf.mxu0
      %v2098 = vadd.f32 0.0, %v2097
      %v2099 = vpop.f32.mrf.mxu0
      %v2100 = vadd.f32 0.0, %v2099
      %2101 = vmatmul.bf16.gmra.mxu0 %v1142
      %v2102 = vpop.f32.mrf.mxu0
      %v2103 = vadd.f32 0.0, %v2102
      %v2104 = vpop.f32.mrf.mxu0
      %v2105 = vadd.f32 0.0, %v2104
      %2106 = vmatmul.bf16.gmra.mxu0 %v1145
      %v2107 = vpop.f32.mrf.mxu0
      %v2108 = vadd.f32 0.0, %v2107
      %v2109 = vpop.f32.mrf.mxu0
      %v2110 = vadd.f32 0.0, %v2109
      %2111 = vmatmul.bf16.gmra.mxu0 %v1148
      %v2112 = vpop.f32.mrf.mxu0
      %v2113 = vadd.f32 0.0, %v2112
      %v2114 = vpop.f32.mrf.mxu0
      %v2115 = vadd.f32 0.0, %v2114
      %2116 = vmatmul.bf16.gmra.mxu0 %v1603
      %v2117 = vpop.f32.mrf.mxu0
      %v2118 = vadd.f32 0.0, %v2117
      %v2119 = vpop.f32.mrf.mxu0
      %v2120 = vadd.f32 0.0, %v2119
      %2121 = vmatmul.bf16.gmra.mxu0 %v2033
      %v2122 = vpop.f32.mrf.mxu0
      %v2123 = vadd.f32 0.0, %v2122
      %v2124 = vpop.f32.mrf.mxu0
      %v2125 = vadd.f32 0.0, %v2124
      %2126 = vdwg.mxu0
      %v2127 = vadd.f32 %v1993, %v2048
      %v2128 = vadd.f32 %v1994, %v2050
      %v2129 = vadd.f32 %v1995, %v2053
      %v2130 = vadd.f32 %v1996, %v2055
      %v2131 = vadd.f32 %v1997, %v2058
      %v2132 = vadd.f32 %v1998, %v2060
      %v2133 = vadd.f32 %v1999, %v2063
      %v2134 = vadd.f32 %v2000, %v2065
      %v2135 = vadd.f32 %v2001, %v2068
      %v2136 = vadd.f32 %v2002, %v2070
      %v2137 = vadd.f32 %v2003, %v2073
      %v2138 = vadd.f32 %v2004, %v2075
      %v2139 = vadd.f32 %v2005, %v2078
      %v2140 = vadd.f32 %v2006, %v2080
      %v2141 = vadd.f32 %v2007, %v2083
      %v2142 = vadd.f32 %v2008, %v2085
      %v2143 = vadd.f32 %v2009, %v2088
      %v2144 = vadd.f32 %v2010, %v2090
      %v2145 = vadd.f32 %v2011, %v2093
      %v2146 = vadd.f32 %v2012, %v2095
      %v2147 = vadd.f32 %v2013, %v2098
      %v2148 = vadd.f32 %v2014, %v2100
      %v2149 = vadd.f32 %v2015, %v2103
      %v2150 = vadd.f32 %v2016, %v2105
      %v2151 = vadd.f32 %v2017, %v2108
      %v2152 = vadd.f32 %v2018, %v2110
      %v2153 = vadd.f32 %v2019, %v2113
      %v2154 = vadd.f32 %v2020, %v2115
      %v2155 = vadd.f32 %v2021, %v2118
      %v2156 = vadd.f32 %v2022, %v2120
      %v2157 = vadd.f32 %v2023, %v2123
      %v2158 = vadd.f32 %v2024, %v2125
      %v2160 = vshrl.u32 %v439, 16
      %v2162 = vrot.slane %v2160, 4
      %v2163 = vshll.u32 %v439, 16
      %v2165 = vrot.slane %v2163, 5
      %v2166 = vor.u32 %v2162, %v2165
      %v2167 = vrot.slane %v2166, 4
      %v2169 = vshll.u32 %v440, 16
      %v2171 = vrot.slane %v2169, 5
      %v2172 = vsel %vm445, %v2167, %v2171
      %v2173 = vshrl.u32 %v440, 16
      %v2175 = vrot.slane %v2173, 4
      %v2176 = vor.u32 %v2175, %v2171
      %v2177 = vrot.slane %v2176, 4
      %v2179 = vshll.u32 %v441, 16
      %v2181 = vrot.slane %v2179, 5
      %v2182 = vsel %vm445, %v2177, %v2181
      %s2183 = scalar_lea.vmem %s1, 28
      %v2184 = vld [vmem:[%s2183] sm:$0xf]
      %v2185 = vunpack.c.l.b16 %v2172
      %v2186 = vunpack.c.l.b16 %v2182
      %v2187 = vpack.c.b16 %v2186, %v2185
      %v2189 = vsel %vm880, %v2187, 0
      %v2192 = vsel %vm929, %v2184, 0
      %2194 = vmatpush.bf16.msra.mxu0 0
      %2195 = vmatpush.bf16.msra.mxu0 0
      %2196 = vmatpush.bf16.msra.mxu0 0
      %2197 = vmatpush.bf16.msra.mxu0 0
      %2198 = vmatpush.bf16.msra.mxu0 0
      %2199 = vmatpush.bf16.msra.mxu0 0
      %2200 = vmatpush.bf16.msra.mxu0 0
      %2201 = vmatpush.bf16.msra.mxu0 %v2192
      %2202 = vmatmul.bf16.gmra.mxu0 %v888
      %v2203 = vpop.f32.mrf.mxu0
      %v2204 = vadd.f32 0.0, %v2203
      %v2205 = vpop.f32.mrf.mxu0
      %v2206 = vadd.f32 0.0, %v2205
      %2207 = vmatmul.bf16.gmra.mxu0 %v891
      %v2208 = vpop.f32.mrf.mxu0
      %v2209 = vadd.f32 0.0, %v2208
      %v2210 = vpop.f32.mrf.mxu0
      %v2211 = vadd.f32 0.0, %v2210
      %2212 = vmatmul.bf16.gmra.mxu0 %v894
      %v2213 = vpop.f32.mrf.mxu0
      %v2214 = vadd.f32 0.0, %v2213
      %v2215 = vpop.f32.mrf.mxu0
      %v2216 = vadd.f32 0.0, %v2215
      %2217 = vmatmul.bf16.gmra.mxu0 %v897
      %v2218 = vpop.f32.mrf.mxu0
      %v2219 = vadd.f32 0.0, %v2218
      %v2220 = vpop.f32.mrf.mxu0
      %v2221 = vadd.f32 0.0, %v2220
      %2222 = vmatmul.bf16.gmra.mxu0 %v900
      %v2223 = vpop.f32.mrf.mxu0
      %v2224 = vadd.f32 0.0, %v2223
      %v2225 = vpop.f32.mrf.mxu0
      %v2226 = vadd.f32 0.0, %v2225
      %2227 = vmatmul.bf16.gmra.mxu0 %v903
      %v2228 = vpop.f32.mrf.mxu0
      %v2229 = vadd.f32 0.0, %v2228
      %v2230 = vpop.f32.mrf.mxu0
      %v2231 = vadd.f32 0.0, %v2230
      %2232 = vmatmul.bf16.gmra.mxu0 %v906
      %v2233 = vpop.f32.mrf.mxu0
      %v2234 = vadd.f32 0.0, %v2233
      %v2235 = vpop.f32.mrf.mxu0
      %v2236 = vadd.f32 0.0, %v2235
      %2237 = vmatmul.bf16.gmra.mxu0 %v909
      %v2238 = vpop.f32.mrf.mxu0
      %v2239 = vadd.f32 0.0, %v2238
      %v2240 = vpop.f32.mrf.mxu0
      %v2241 = vadd.f32 0.0, %v2240
      %2242 = vmatmul.bf16.gmra.mxu0 %v912
      %v2243 = vpop.f32.mrf.mxu0
      %v2244 = vadd.f32 0.0, %v2243
      %v2245 = vpop.f32.mrf.mxu0
      %v2246 = vadd.f32 0.0, %v2245
      %2247 = vmatmul.bf16.gmra.mxu0 %v915
      %v2248 = vpop.f32.mrf.mxu0
      %v2249 = vadd.f32 0.0, %v2248
      %v2250 = vpop.f32.mrf.mxu0
      %v2251 = vadd.f32 0.0, %v2250
      %2252 = vmatmul.bf16.gmra.mxu0 %v918
      %v2253 = vpop.f32.mrf.mxu0
      %v2254 = vadd.f32 0.0, %v2253
      %v2255 = vpop.f32.mrf.mxu0
      %v2256 = vadd.f32 0.0, %v2255
      %2257 = vmatmul.bf16.gmra.mxu0 %v921
      %v2258 = vpop.f32.mrf.mxu0
      %v2259 = vadd.f32 0.0, %v2258
      %v2260 = vpop.f32.mrf.mxu0
      %v2261 = vadd.f32 0.0, %v2260
      %2262 = vmatmul.bf16.gmra.mxu0 %v924
      %v2263 = vpop.f32.mrf.mxu0
      %v2264 = vadd.f32 0.0, %v2263
      %v2265 = vpop.f32.mrf.mxu0
      %v2266 = vadd.f32 0.0, %v2265
      %2267 = vmatmul.bf16.gmra.mxu0 %v927
      %v2268 = vpop.f32.mrf.mxu0
      %v2269 = vadd.f32 0.0, %v2268
      %v2270 = vpop.f32.mrf.mxu0
      %v2271 = vadd.f32 0.0, %v2270
      %2272 = vmatmul.bf16.gmra.mxu0 %v1759
      %v2273 = vpop.f32.mrf.mxu0
      %v2274 = vadd.f32 0.0, %v2273
      %v2275 = vpop.f32.mrf.mxu0
      %v2276 = vadd.f32 0.0, %v2275
      %2277 = vmatmul.bf16.gmra.mxu0 %v2189
      %v2278 = vpop.f32.mrf.mxu0
      %v2279 = vadd.f32 0.0, %v2278
      %v2280 = vpop.f32.mrf.mxu0
      %v2281 = vadd.f32 0.0, %v2280
      %2282 = vdwg.mxu0
      %v2283 = vadd.f32 %v2127, %v2204
      %v2284 = vadd.f32 %v2128, %v2206
      %v2285 = vadd.f32 %v2129, %v2209
      %v2286 = vadd.f32 %v2130, %v2211
      %v2287 = vadd.f32 %v2131, %v2214
      %v2288 = vadd.f32 %v2132, %v2216
      %v2289 = vadd.f32 %v2133, %v2219
      %v2290 = vadd.f32 %v2134, %v2221
      %v2291 = vadd.f32 %v2135, %v2224
      %v2292 = vadd.f32 %v2136, %v2226
      %v2293 = vadd.f32 %v2137, %v2229
      %v2294 = vadd.f32 %v2138, %v2231
      %v2295 = vadd.f32 %v2139, %v2234
      %v2296 = vadd.f32 %v2140, %v2236
      %v2297 = vadd.f32 %v2141, %v2239
      %v2298 = vadd.f32 %v2142, %v2241
      %v2299 = vadd.f32 %v2143, %v2244
      %v2300 = vadd.f32 %v2144, %v2246
      %v2301 = vadd.f32 %v2145, %v2249
      %v2302 = vadd.f32 %v2146, %v2251
      %v2303 = vadd.f32 %v2147, %v2254
      %v2304 = vadd.f32 %v2148, %v2256
      %v2305 = vadd.f32 %v2149, %v2259
      %v2306 = vadd.f32 %v2150, %v2261
      %v2307 = vadd.f32 %v2151, %v2264
      %v2308 = vadd.f32 %v2152, %v2266
      %v2309 = vadd.f32 %v2153, %v2269
      %v2310 = vadd.f32 %v2154, %v2271
      %v2311 = vadd.f32 %v2155, %v2274
      %v2312 = vadd.f32 %v2156, %v2276
      %v2313 = vadd.f32 %v2157, %v2279
      %v2314 = vadd.f32 %v2158, %v2281
      %v2316 = vrot.slane %v439, 5
      %v2317 = vrot.slane %v2316, 4
      %v2318 = vrot.slane %v440, 5
      %v2319 = vsel %vm1260, %v2317, %v2318
      %v2320 = vrot.slane %v2318, 4
      %v2321 = vrot.slane %v441, 5
      %v2322 = vsel %vm1260, %v2320, %v2321
      %s2323 = scalar_lea.vmem %s1, 32
      %v2324 = vld [vmem:[%s2323] sm:$0xf]
      %v2325 = vunpack.c.l.b16 %v2319
      %v2326 = vunpack.c.l.b16 %v2322
      %v2327 = vpack.c.b16 %v2326, %v2325
      %v2329 = vsel %vm880, %v2327, 0
      %v2332 = vsel %vm929, %v2324, 0
      %2334 = vmatpush.bf16.msra.mxu0 0
      %2335 = vmatpush.bf16.msra.mxu0 0
      %2336 = vmatpush.bf16.msra.mxu0 0
      %2337 = vmatpush.bf16.msra.mxu0 0
      %2338 = vmatpush.bf16.msra.mxu0 0
      %2339 = vmatpush.bf16.msra.mxu0 0
      %2340 = vmatpush.bf16.msra.mxu0 0
      %2341 = vmatpush.bf16.msra.mxu0 %v2332
      %2342 = vmatmul.bf16.gmra.mxu0 %v1430
      %v2343 = vpop.f32.mrf.mxu0
      %v2344 = vadd.f32 0.0, %v2343
      %v2345 = vpop.f32.mrf.mxu0
      %v2346 = vadd.f32 0.0, %v2345
      %2347 = vmatmul.bf16.gmra.mxu0 %v1433
      %v2348 = vpop.f32.mrf.mxu0
      %v2349 = vadd.f32 0.0, %v2348
      %v2350 = vpop.f32.mrf.mxu0
      %v2351 = vadd.f32 0.0, %v2350
      %2352 = vmatmul.bf16.gmra.mxu0 %v1436
      %v2353 = vpop.f32.mrf.mxu0
      %v2354 = vadd.f32 0.0, %v2353
      %v2355 = vpop.f32.mrf.mxu0
      %v2356 = vadd.f32 0.0, %v2355
      %2357 = vmatmul.bf16.gmra.mxu0 %v1439
      %v2358 = vpop.f32.mrf.mxu0
      %v2359 = vadd.f32 0.0, %v2358
      %v2360 = vpop.f32.mrf.mxu0
      %v2361 = vadd.f32 0.0, %v2360
      %2362 = vmatmul.bf16.gmra.mxu0 %v1442
      %v2363 = vpop.f32.mrf.mxu0
      %v2364 = vadd.f32 0.0, %v2363
      %v2365 = vpop.f32.mrf.mxu0
      %v2366 = vadd.f32 0.0, %v2365
      %2367 = vmatmul.bf16.gmra.mxu0 %v1445
      %v2368 = vpop.f32.mrf.mxu0
      %v2369 = vadd.f32 0.0, %v2368
      %v2370 = vpop.f32.mrf.mxu0
      %v2371 = vadd.f32 0.0, %v2370
      %2372 = vmatmul.bf16.gmra.mxu0 %v1448
      %v2373 = vpop.f32.mrf.mxu0
      %v2374 = vadd.f32 0.0, %v2373
      %v2375 = vpop.f32.mrf.mxu0
      %v2376 = vadd.f32 0.0, %v2375
      %2377 = vmatmul.bf16.gmra.mxu0 %v1451
      %v2378 = vpop.f32.mrf.mxu0
      %v2379 = vadd.f32 0.0, %v2378
      %v2380 = vpop.f32.mrf.mxu0
      %v2381 = vadd.f32 0.0, %v2380
      %2382 = vmatmul.bf16.gmra.mxu0 %v1454
      %v2383 = vpop.f32.mrf.mxu0
      %v2384 = vadd.f32 0.0, %v2383
      %v2385 = vpop.f32.mrf.mxu0
      %v2386 = vadd.f32 0.0, %v2385
      %2387 = vmatmul.bf16.gmra.mxu0 %v1457
      %v2388 = vpop.f32.mrf.mxu0
      %v2389 = vadd.f32 0.0, %v2388
      %v2390 = vpop.f32.mrf.mxu0
      %v2391 = vadd.f32 0.0, %v2390
      %2392 = vmatmul.bf16.gmra.mxu0 %v1460
      %v2393 = vpop.f32.mrf.mxu0
      %v2394 = vadd.f32 0.0, %v2393
      %v2395 = vpop.f32.mrf.mxu0
      %v2396 = vadd.f32 0.0, %v2395
      %2397 = vmatmul.bf16.gmra.mxu0 %v1463
      %v2398 = vpop.f32.mrf.mxu0
      %v2399 = vadd.f32 0.0, %v2398
      %v2400 = vpop.f32.mrf.mxu0
      %v2401 = vadd.f32 0.0, %v2400
      %2402 = vmatmul.bf16.gmra.mxu0 %v1466
      %v2403 = vpop.f32.mrf.mxu0
      %v2404 = vadd.f32 0.0, %v2403
      %v2405 = vpop.f32.mrf.mxu0
      %v2406 = vadd.f32 0.0, %v2405
      %2407 = vmatmul.bf16.gmra.mxu0 %v1469
      %v2408 = vpop.f32.mrf.mxu0
      %v2409 = vadd.f32 0.0, %v2408
      %v2410 = vpop.f32.mrf.mxu0
      %v2411 = vadd.f32 0.0, %v2410
      %2412 = vmatmul.bf16.gmra.mxu0 %v1899
      %v2413 = vpop.f32.mrf.mxu0
      %v2414 = vadd.f32 0.0, %v2413
      %v2415 = vpop.f32.mrf.mxu0
      %v2416 = vadd.f32 0.0, %v2415
      %2417 = vmatmul.bf16.gmra.mxu0 %v2329
      %v2418 = vpop.f32.mrf.mxu0
      %v2419 = vadd.f32 0.0, %v2418
      %v2420 = vpop.f32.mrf.mxu0
      %v2421 = vadd.f32 0.0, %v2420
      %2422 = vdwg.mxu0
      %v2423 = vadd.f32 %v2283, %v2344
      %v2424 = vadd.f32 %v2284, %v2346
      %v2425 = vadd.f32 %v2285, %v2349
      %v2426 = vadd.f32 %v2286, %v2351
      %v2427 = vadd.f32 %v2287, %v2354
      %v2428 = vadd.f32 %v2288, %v2356
      %v2429 = vadd.f32 %v2289, %v2359
      %v2430 = vadd.f32 %v2290, %v2361
      %v2431 = vadd.f32 %v2291, %v2364
      %v2432 = vadd.f32 %v2292, %v2366
      %v2433 = vadd.f32 %v2293, %v2369
      %v2434 = vadd.f32 %v2294, %v2371
      %v2435 = vadd.f32 %v2295, %v2374
      %v2436 = vadd.f32 %v2296, %v2376
      %v2437 = vadd.f32 %v2297, %v2379
      %v2438 = vadd.f32 %v2298, %v2381
      %v2439 = vadd.f32 %v2299, %v2384
      %v2440 = vadd.f32 %v2300, %v2386
      %v2441 = vadd.f32 %v2301, %v2389
      %v2442 = vadd.f32 %v2302, %v2391
      %v2443 = vadd.f32 %v2303, %v2394
      %v2444 = vadd.f32 %v2304, %v2396
      %v2445 = vadd.f32 %v2305, %v2399
      %v2446 = vadd.f32 %v2306, %v2401
      %v2447 = vadd.f32 %v2307, %v2404
      %v2448 = vadd.f32 %v2308, %v2406
      %v2449 = vadd.f32 %v2309, %v2409
      %v2450 = vadd.f32 %v2310, %v2411
      %v2451 = vadd.f32 %v2311, %v2414
      %v2452 = vadd.f32 %v2312, %v2416
      %v2453 = vadd.f32 %v2313, %v2419
      %v2454 = vadd.f32 %v2314, %v2421
      %v2455 = vld [vmem:[%s2] sm:$0x1]
      %v2457 = vperm.slane %v2455, 0
      %v2459 = vadd.f32 %v2423, %v2457
      %v2460 = vadd.f32 %v2424, %v2457
      %v2461 = vadd.f32 %v2425, %v2457
      %v2462 = vadd.f32 %v2426, %v2457
      %v2463 = vadd.f32 %v2427, %v2457
      %v2464 = vadd.f32 %v2428, %v2457
      %v2465 = vadd.f32 %v2429, %v2457
      %v2466 = vadd.f32 %v2430, %v2457
      %v2467 = vadd.f32 %v2431, %v2457
      %v2468 = vadd.f32 %v2432, %v2457
      %v2469 = vadd.f32 %v2433, %v2457
      %v2470 = vadd.f32 %v2434, %v2457
      %v2471 = vadd.f32 %v2435, %v2457
      %v2472 = vadd.f32 %v2436, %v2457
      %v2473 = vadd.f32 %v2437, %v2457
      %v2474 = vadd.f32 %v2438, %v2457
      %v2475 = vadd.f32 %v2439, %v2457
      %v2476 = vadd.f32 %v2440, %v2457
      %v2477 = vadd.f32 %v2441, %v2457
      %v2478 = vadd.f32 %v2442, %v2457
      %v2479 = vadd.f32 %v2443, %v2457
      %v2480 = vadd.f32 %v2444, %v2457
      %v2481 = vadd.f32 %v2445, %v2457
      %v2482 = vadd.f32 %v2446, %v2457
      %v2483 = vadd.f32 %v2447, %v2457
      %v2484 = vadd.f32 %v2448, %v2457
      %v2485 = vadd.f32 %v2449, %v2457
      %v2486 = vadd.f32 %v2450, %v2457
      %v2487 = vadd.f32 %v2451, %v2457
      %v2488 = vadd.f32 %v2452, %v2457
      %v2489 = vadd.f32 %v2453, %v2457
      %v2490 = vadd.f32 %v2454, %v2457
      %v2491 = vmax.f32 %v2459, 0.0
      %v2492 = vmax.f32 %v2460, 0.0
      %v2493 = vmax.f32 %v2461, 0.0
      %v2494 = vmax.f32 %v2462, 0.0
      %v2495 = vmax.f32 %v2463, 0.0
      %v2496 = vmax.f32 %v2464, 0.0
      %v2497 = vmax.f32 %v2465, 0.0
      %v2498 = vmax.f32 %v2466, 0.0
      %v2499 = vmax.f32 %v2467, 0.0
      %v2500 = vmax.f32 %v2468, 0.0
      %v2501 = vmax.f32 %v2469, 0.0
      %v2502 = vmax.f32 %v2470, 0.0
      %v2503 = vmax.f32 %v2471, 0.0
      %v2504 = vmax.f32 %v2472, 0.0
      %v2505 = vmax.f32 %v2473, 0.0
      %v2506 = vmax.f32 %v2474, 0.0
      %v2507 = vmax.f32 %v2475, 0.0
      %v2508 = vmax.f32 %v2476, 0.0
      %v2509 = vmax.f32 %v2477, 0.0
      %v2510 = vmax.f32 %v2478, 0.0
      %v2511 = vmax.f32 %v2479, 0.0
      %v2512 = vmax.f32 %v2480, 0.0
      %v2513 = vmax.f32 %v2481, 0.0
      %v2514 = vmax.f32 %v2482, 0.0
      %v2515 = vmax.f32 %v2483, 0.0
      %v2516 = vmax.f32 %v2484, 0.0
      %v2517 = vmax.f32 %v2485, 0.0
      %v2518 = vmax.f32 %v2486, 0.0
      %v2519 = vmax.f32 %v2487, 0.0
      %v2520 = vmax.f32 %v2488, 0.0
      %v2521 = vmax.f32 %v2489, 0.0
      %v2522 = vmax.f32 %v2490, 0.0
      %v2523 = vpack.c.bf16 %v2492, %v2491
      %v2524 = vpack.c.bf16 %v2494, %v2493
      %v2525 = vpack.c.bf16 %v2496, %v2495
      %v2526 = vpack.c.bf16 %v2498, %v2497
      %v2527 = vpack.c.bf16 %v2500, %v2499
      %v2528 = vpack.c.bf16 %v2502, %v2501
      %v2529 = vpack.c.bf16 %v2504, %v2503
      %v2530 = vpack.c.bf16 %v2506, %v2505
      %v2531 = vpack.c.bf16 %v2508, %v2507
      %v2532 = vpack.c.bf16 %v2510, %v2509
      %v2533 = vpack.c.bf16 %v2512, %v2511
      %v2534 = vpack.c.bf16 %v2514, %v2513
      %v2535 = vpack.c.bf16 %v2516, %v2515
      %v2536 = vpack.c.bf16 %v2518, %v2517
      %v2537 = vpack.c.bf16 %v2520, %v2519
      %v2538 = vpack.c.bf16 %v2522, %v2521
      %v2539 = vld [vmem:[%s3] sm:$0xf]
      %vm2588 = vcmask 1046528
      %v2589 = vrot.slane %v283, 1
      %v2590 = vrot.slane %v284, 1
      %v2591 = vsel %vm2588, %v2589, %v2590
      %v2592 = vrot.slane %v285, 1
      %v2593 = vsel %vm2588, %v2590, %v2592
      %v2594 = vrot.slane %v286, 1
      %v2595 = vrot.slane %v287, 1
      %v2596 = vsel %vm2588, %v2594, %v2595
      %v2597 = vrot.slane %v288, 1
      %v2598 = vsel %vm2588, %v2595, %v2597
      %v2599 = vrot.slane %v289, 1
      %v2600 = vrot.slane %v290, 1
      %v2601 = vsel %vm2588, %v2599, %v2600
      %v2602 = vrot.slane %v291, 1
      %v2603 = vsel %vm2588, %v2600, %v2602
      %v2604 = vrot.slane %v292, 1
      %v2605 = vrot.slane %v293, 1
      %v2606 = vsel %vm2588, %v2604, %v2605
      %v2607 = vrot.slane %v294, 1
      %v2608 = vsel %vm2588, %v2605, %v2607
      %v2609 = vrot.slane %v295, 1
      %v2610 = vrot.slane %v296, 1
      %v2611 = vsel %vm2588, %v2609, %v2610
      %v2612 = vrot.slane %v297, 1
      %v2613 = vsel %vm2588, %v2610, %v2612
      %v2614 = vrot.slane %v298, 1
      %v2615 = vrot.slane %v299, 1
      %v2616 = vsel %vm2588, %v2614, %v2615
      %v2617 = vrot.slane %v300, 1
      %v2618 = vsel %vm2588, %v2615, %v2617
      %v2619 = vrot.slane %v301, 1
      %v2620 = vrot.slane %v302, 1
      %v2621 = vsel %vm2588, %v2619, %v2620
      %v2622 = vrot.slane %v303, 1
      %v2623 = vsel %vm2588, %v2620, %v2622
      %v2624 = vrot.slane %v304, 1
      %v2625 = vrot.slane %v305, 1
      %v2626 = vsel %vm2588, %v2624, %v2625
      %v2627 = vrot.slane %v306, 1
      %v2628 = vsel %vm2588, %v2625, %v2627
      %v2629 = vrot.slane %v307, 1
      %v2630 = vrot.slane %v308, 1
      %v2631 = vsel %vm2588, %v2629, %v2630
      %v2632 = vrot.slane %v309, 1
      %v2633 = vsel %vm2588, %v2630, %v2632
      %v2634 = vrot.slane %v310, 1
      %v2635 = vrot.slane %v311, 1
      %v2636 = vsel %vm2588, %v2634, %v2635
      %v2637 = vrot.slane %v312, 1
      %v2638 = vsel %vm2588, %v2635, %v2637
      %v2639 = vrot.slane %v313, 1
      %v2640 = vrot.slane %v314, 1
      %v2641 = vsel %vm2588, %v2639, %v2640
      %v2642 = vrot.slane %v315, 1
      %v2643 = vsel %vm2588, %v2640, %v2642
      %v2644 = vrot.slane %v316, 1
      %v2645 = vrot.slane %v317, 1
      %v2646 = vsel %vm2588, %v2644, %v2645
      %v2647 = vrot.slane %v318, 1
      %v2648 = vsel %vm2588, %v2645, %v2647
      %v2649 = vrot.slane %v319, 1
      %v2650 = vrot.slane %v320, 1
      %v2651 = vsel %vm2588, %v2649, %v2650
      %v2652 = vrot.slane %v321, 1
      %v2653 = vsel %vm2588, %v2650, %v2652
      %v2654 = vrot.slane %v322, 1
      %v2655 = vrot.slane %v323, 1
      %v2656 = vsel %vm2588, %v2654, %v2655
      %v2657 = vrot.slane %v324, 1
      %v2658 = vsel %vm2588, %v2655, %v2657
      %v2659 = vrot.slane %v325, 1
      %v2660 = vrot.slane %v326, 1
      %v2661 = vsel %vm2588, %v2659, %v2660
      %v2662 = vrot.slane %v327, 1
      %v2663 = vsel %vm2588, %v2660, %v2662
      %v2664 = vrot.slane %v328, 1
      %v2665 = vrot.slane %v329, 1
      %v2666 = vsel %vm2588, %v2664, %v2665
      %v2667 = vrot.slane %v330, 1
      %v2668 = vsel %vm2588, %v2665, %v2667
      %v2701 = vld [vmem:[%s4] sm:$0x1]
      %v2703 = vperm.slane %v2701, 0
      %v2706 = vsel %vm880, %v2523, 0
      %v2709 = vsel %vm880, %v2524, 0
      %v2712 = vsel %vm880, %v2525, 0
      %v2715 = vsel %vm880, %v2526, 0
      %v2718 = vsel %vm880, %v2527, 0
      %v2721 = vsel %vm880, %v2528, 0
      %v2724 = vsel %vm880, %v2529, 0
      %v2727 = vsel %vm880, %v2530, 0
      %v2730 = vsel %vm880, %v2531, 0
      %v2733 = vsel %vm880, %v2532, 0
      %v2736 = vsel %vm880, %v2533, 0
      %v2739 = vsel %vm880, %v2534, 0
      %v2742 = vsel %vm880, %v2535, 0
      %v2745 = vsel %vm880, %v2536, 0
      %v2748 = vsel %vm880, %v2537, 0
      %v2751 = vsel %vm880, %v2538, 0
      %v2754 = vsel %vm929, %v2539, 0
      %2756 = vmatpush.bf16.msra.mxu0 0
      %2757 = vmatpush.bf16.msra.mxu0 0
      %2758 = vmatpush.bf16.msra.mxu0 0
      %2759 = vmatpush.bf16.msra.mxu0 0
      %2760 = vmatpush.bf16.msra.mxu0 0
      %2761 = vmatpush.bf16.msra.mxu0 0
      %2762 = vmatpush.bf16.msra.mxu0 0
      %2763 = vmatpush.bf16.msra.mxu0 %v2754
      %2764 = vmatmul.bf16.gmra.mxu0 %v2706
      %v2765 = vpop.f32.mrf.mxu0
      %v2766 = vadd.f32 %v2703, %v2765
      %v2767 = vpop.f32.mrf.mxu0
      %v2768 = vadd.f32 %v2703, %v2767
      %2769 = vmatmul.bf16.gmra.mxu0 %v2709
      %v2770 = vpop.f32.mrf.mxu0
      %v2771 = vadd.f32 %v2703, %v2770
      %v2772 = vpop.f32.mrf.mxu0
      %v2773 = vadd.f32 %v2703, %v2772
      %2774 = vmatmul.bf16.gmra.mxu0 %v2712
      %v2775 = vpop.f32.mrf.mxu0
      %v2776 = vadd.f32 %v2703, %v2775
      %v2777 = vpop.f32.mrf.mxu0
      %v2778 = vadd.f32 %v2703, %v2777
      %2779 = vmatmul.bf16.gmra.mxu0 %v2715
      %v2780 = vpop.f32.mrf.mxu0
      %v2781 = vadd.f32 %v2703, %v2780
      %v2782 = vpop.f32.mrf.mxu0
      %v2783 = vadd.f32 %v2703, %v2782
      %2784 = vmatmul.bf16.gmra.mxu0 %v2718
      %v2785 = vpop.f32.mrf.mxu0
      %v2786 = vadd.f32 %v2703, %v2785
      %v2787 = vpop.f32.mrf.mxu0
      %v2788 = vadd.f32 %v2703, %v2787
      %2789 = vmatmul.bf16.gmra.mxu0 %v2721
      %v2790 = vpop.f32.mrf.mxu0
      %v2791 = vadd.f32 %v2703, %v2790
      %v2792 = vpop.f32.mrf.mxu0
      %v2793 = vadd.f32 %v2703, %v2792
      %2794 = vmatmul.bf16.gmra.mxu0 %v2724
      %v2795 = vpop.f32.mrf.mxu0
      %v2796 = vadd.f32 %v2703, %v2795
      %v2797 = vpop.f32.mrf.mxu0
      %v2798 = vadd.f32 %v2703, %v2797
      %2799 = vmatmul.bf16.gmra.mxu0 %v2727
      %v2800 = vpop.f32.mrf.mxu0
      %v2801 = vadd.f32 %v2703, %v2800
      %v2802 = vpop.f32.mrf.mxu0
      %v2803 = vadd.f32 %v2703, %v2802
      %2804 = vmatmul.bf16.gmra.mxu0 %v2730
      %v2805 = vpop.f32.mrf.mxu0
      %v2806 = vadd.f32 %v2703, %v2805
      %v2807 = vpop.f32.mrf.mxu0
      %v2808 = vadd.f32 %v2703, %v2807
      %2809 = vmatmul.bf16.gmra.mxu0 %v2733
      %v2810 = vpop.f32.mrf.mxu0
      %v2811 = vadd.f32 %v2703, %v2810
      %v2812 = vpop.f32.mrf.mxu0
      %v2813 = vadd.f32 %v2703, %v2812
      %2814 = vmatmul.bf16.gmra.mxu0 %v2736
      %v2815 = vpop.f32.mrf.mxu0
      %v2816 = vadd.f32 %v2703, %v2815
      %v2817 = vpop.f32.mrf.mxu0
      %v2818 = vadd.f32 %v2703, %v2817
      %2819 = vmatmul.bf16.gmra.mxu0 %v2739
      %v2820 = vpop.f32.mrf.mxu0
      %v2821 = vadd.f32 %v2703, %v2820
      %v2822 = vpop.f32.mrf.mxu0
      %v2823 = vadd.f32 %v2703, %v2822
      %2824 = vmatmul.bf16.gmra.mxu0 %v2742
      %v2825 = vpop.f32.mrf.mxu0
      %v2826 = vadd.f32 %v2703, %v2825
      %v2827 = vpop.f32.mrf.mxu0
      %v2828 = vadd.f32 %v2703, %v2827
      %2829 = vmatmul.bf16.gmra.mxu0 %v2745
      %v2830 = vpop.f32.mrf.mxu0
      %v2831 = vadd.f32 %v2703, %v2830
      %v2832 = vpop.f32.mrf.mxu0
      %v2833 = vadd.f32 %v2703, %v2832
      %2834 = vmatmul.bf16.gmra.mxu0 %v2748
      %v2835 = vpop.f32.mrf.mxu0
      %v2836 = vadd.f32 %v2703, %v2835
      %v2837 = vpop.f32.mrf.mxu0
      %v2838 = vadd.f32 %v2703, %v2837
      %2839 = vmatmul.bf16.gmra.mxu0 %v2751
      %v2840 = vpop.f32.mrf.mxu0
      %v2841 = vadd.f32 %v2703, %v2840
      %v2842 = vpop.f32.mrf.mxu0
      %v2843 = vadd.f32 %v2703, %v2842
      %2844 = vdwg.mxu0
      %v2845 = vadd.f32 %v2766, %v2591
      %v2846 = vadd.f32 %v2768, %v2593
      %v2847 = vadd.f32 %v2771, %v2596
      %v2848 = vadd.f32 %v2773, %v2598
      %v2849 = vadd.f32 %v2776, %v2601
      %v2850 = vadd.f32 %v2778, %v2603
      %v2851 = vadd.f32 %v2781, %v2606
      %v2852 = vadd.f32 %v2783, %v2608
      %v2853 = vadd.f32 %v2786, %v2611
      %v2854 = vadd.f32 %v2788, %v2613
      %v2855 = vadd.f32 %v2791, %v2616
      %v2856 = vadd.f32 %v2793, %v2618
      %v2857 = vadd.f32 %v2796, %v2621
      %v2858 = vadd.f32 %v2798, %v2623
      %v2859 = vadd.f32 %v2801, %v2626
      %v2860 = vadd.f32 %v2803, %v2628
      %v2861 = vadd.f32 %v2806, %v2631
      %v2862 = vadd.f32 %v2808, %v2633
      %v2863 = vadd.f32 %v2811, %v2636
      %v2864 = vadd.f32 %v2813, %v2638
      %v2865 = vadd.f32 %v2816, %v2641
      %v2866 = vadd.f32 %v2818, %v2643
      %v2867 = vadd.f32 %v2821, %v2646
      %v2868 = vadd.f32 %v2823, %v2648
      %v2869 = vadd.f32 %v2826, %v2651
      %v2870 = vadd.f32 %v2828, %v2653
      %v2871 = vadd.f32 %v2831, %v2656
      %v2872 = vadd.f32 %v2833, %v2658
      %v2873 = vadd.f32 %v2836, %v2661
      %v2874 = vadd.f32 %v2838, %v2663
      %v2875 = vadd.f32 %v2841, %v2666
      %v2876 = vadd.f32 %v2843, %v2668
      %v2877 = vmax.f32 %v2845, 0.0
      %v2878 = vmax.f32 %v2846, 0.0
      %v2879 = vmax.f32 %v2847, 0.0
      %v2880 = vmax.f32 %v2848, 0.0
      %v2881 = vmax.f32 %v2849, 0.0
      %v2882 = vmax.f32 %v2850, 0.0
      %v2883 = vmax.f32 %v2851, 0.0
      %v2884 = vmax.f32 %v2852, 0.0
      %v2885 = vmax.f32 %v2853, 0.0
      %v2886 = vmax.f32 %v2854, 0.0
      %v2887 = vmax.f32 %v2855, 0.0
      %v2888 = vmax.f32 %v2856, 0.0
      %v2889 = vmax.f32 %v2857, 0.0
      %v2890 = vmax.f32 %v2858, 0.0
      %v2891 = vmax.f32 %v2859, 0.0
      %v2892 = vmax.f32 %v2860, 0.0
      %v2893 = vmax.f32 %v2861, 0.0
      %v2894 = vmax.f32 %v2862, 0.0
      %v2895 = vmax.f32 %v2863, 0.0
      %v2896 = vmax.f32 %v2864, 0.0
      %v2897 = vmax.f32 %v2865, 0.0
      %v2898 = vmax.f32 %v2866, 0.0
      %v2899 = vmax.f32 %v2867, 0.0
      %v2900 = vmax.f32 %v2868, 0.0
      %v2901 = vmax.f32 %v2869, 0.0
      %v2902 = vmax.f32 %v2870, 0.0
      %v2903 = vmax.f32 %v2871, 0.0
      %v2904 = vmax.f32 %v2872, 0.0
      %v2905 = vmax.f32 %v2873, 0.0
      %v2906 = vmax.f32 %v2874, 0.0
      %v2907 = vmax.f32 %v2875, 0.0
      %v2908 = vmax.f32 %v2876, 0.0
      %2909 = vst.msk [vmem:[#allocation2] sm:$0xff] %vm880, 0.0
      %2910 = vst.msk [vmem:[#allocation2 + $0x8] sm:$0xff] %vm880, 0.0
      %2911 = vst.msk [vmem:[#allocation2 + $0x10] sm:$0xff] %vm880, 0.0
      %2912 = vst.msk [vmem:[#allocation2 + $0x18] sm:$0xff] %vm880, 0.0
      %2913 = vst.msk [vmem:[#allocation2 + $0x20] sm:$0xff] %vm880, 0.0
      %2914 = vst.msk [vmem:[#allocation2 + $0x28] sm:$0xff] %vm880, 0.0
      %2915 = vst.msk [vmem:[#allocation2 + $0x30] sm:$0xff] %vm880, 0.0
      %2916 = vst.msk [vmem:[#allocation2 + $0x38] sm:$0xff] %vm880, 0.0
      %2917 = vst.msk [vmem:[#allocation2 + $0x40] sm:$0xff] %vm880, 0.0
      %2918 = vst.msk [vmem:[#allocation2 + $0x48] sm:$0xff] %vm880, 0.0
      %2919 = vst.msk [vmem:[#allocation2 + $0x50] sm:$0xff] %vm880, 0.0
      %2920 = vst.msk [vmem:[#allocation2 + $0x58] sm:$0xff] %vm880, 0.0
      %2921 = vst.msk [vmem:[#allocation2 + $0x60] sm:$0xff] %vm880, 0.0
      %2922 = vst.msk [vmem:[#allocation2 + $0x68] sm:$0xff] %vm880, 0.0
      %2923 = vst.msk [vmem:[#allocation2 + $0x70] sm:$0xff] %vm880, 0.0
      %2924 = vst.msk [vmem:[#allocation2 + $0x78] sm:$0xff] %vm880, 0.0
      %2925 = vst.msk [vmem:[#allocation2 + $0x80] sm:$0xff] %vm880, 0.0
      %2926 = vst.msk [vmem:[#allocation2 + $0x88] sm:$0xff] %vm880, 0.0
      %2927 = vst.msk [vmem:[#allocation2 + $0x90] sm:$0xff] %vm880, 0.0
      %2928 = vst.msk [vmem:[#allocation2 + $0x98] sm:$0xff] %vm880, 0.0
      %2929 = vst.msk [vmem:[#allocation2 + $0xa0] sm:$0xff] %vm880, 0.0
      %2930 = vst.msk [vmem:[#allocation2 + $0xa8] sm:$0xff] %vm880, 0.0
      %2931 = vst.msk [vmem:[#allocation2 + $0xb0] sm:$0xff] %vm880, 0.0
      %2932 = vst.msk [vmem:[#allocation2 + $0xb8] sm:$0xff] %vm880, 0.0
      %2933 = vst.msk [vmem:[#allocation2 + $0xc0] sm:$0xff] %vm880, 0.0
      %2934 = vst.msk [vmem:[#allocation2 + $0xc8] sm:$0xff] %vm880, 0.0
      %2935 = vst.msk [vmem:[#allocation2 + $0xd0] sm:$0xff] %vm880, 0.0
      %2936 = vst.msk [vmem:[#allocation2 + $0xd8] sm:$0xff] %vm880, 0.0
      %2937 = vst.msk [vmem:[#allocation2 + $0xe0] sm:$0xff] %vm880, 0.0
      %2938 = vst.msk [vmem:[#allocation2 + $0xe8] sm:$0xff] %vm880, 0.0
      %2939 = vst.msk [vmem:[#allocation2 + $0xf0] sm:$0xff] %vm880, 0.0
      %2940 = vst.msk [vmem:[#allocation2 + $0xf8] sm:$0xff] %vm880, 0.0
      %2941 = vst.msk [vmem:[#allocation2 + $0x100] sm:$0xff] %vm880, 0.0
      %2942 = vst.msk [vmem:[#allocation2 + $0x108] sm:$0xff] %vm880, 0.0
      %2943 = vst.msk [vmem:[#allocation2 + $0x110] sm:$0xff] %vm880, 0.0
      %2944 = vst.msk [vmem:[#allocation2 + $0x118] sm:$0xff] %vm880, 0.0
      %2945 = vst.msk [vmem:[#allocation2 + $0x120] sm:$0xff] %vm880, 0.0
      %2946 = vst.msk [vmem:[#allocation2 + $0x128] sm:$0xff] %vm880, 0.0
      %2947 = vst.msk [vmem:[#allocation2 + $0x130] sm:$0xff] %vm880, 0.0
      %2948 = vst.msk [vmem:[#allocation2 + $0x138] sm:$0xff] %vm880, 0.0
      %2949 = vst.msk [vmem:[#allocation2 + $0x140] sm:$0xff] %vm880, 0.0
      %2950 = vst.msk [vmem:[#allocation2 + $0x148] sm:$0xff] %vm880, 0.0
      %2951 = vst.msk [vmem:[#allocation2 + $0x150] sm:$0xff] %vm880, 0.0
      %2952 = vst.msk [vmem:[#allocation2 + $0x158] sm:$0xff] %vm880, 0.0
      %2953 = vst.msk [vmem:[#allocation2 + $0x160] sm:$0xff] %vm880, 0.0
      %2954 = vst.msk [vmem:[#allocation2 + $0x168] sm:$0xff] %vm880, 0.0
      %2955 = vst.msk [vmem:[#allocation2 + $0x170] sm:$0xff] %vm880, 0.0
      %2956 = vst.msk [vmem:[#allocation2 + $0x178] sm:$0xff] %vm880, 0.0
      %2957 = vst.msk [vmem:[#allocation2 + $0x180] sm:$0xff] %vm880, 0.0
      %2958 = vst.msk [vmem:[#allocation2 + $0x188] sm:$0xff] %vm880, 0.0
      %2959 = vst.msk [vmem:[#allocation2 + $0x190] sm:$0xff] %vm880, 0.0
      %2960 = vst.msk [vmem:[#allocation2 + $0x198] sm:$0xff] %vm880, 0.0
      %2961 = vst.msk [vmem:[#allocation2 + $0x1a0] sm:$0xff] %vm880, 0.0
      %2962 = vst.msk [vmem:[#allocation2 + $0x1a8] sm:$0xff] %vm880, 0.0
      %2963 = vst.msk [vmem:[#allocation2 + $0x1b0] sm:$0xff] %vm880, 0.0
      %2964 = vst.msk [vmem:[#allocation2 + $0x1b8] sm:$0xff] %vm880, 0.0
      %2965 = vst.msk [vmem:[#allocation2 + $0x1c0] sm:$0xff] %vm880, 0.0
      %2966 = vst.msk [vmem:[#allocation2 + $0x1c8] sm:$0xff] %vm880, 0.0
      %2967 = vst.msk [vmem:[#allocation2 + $0x1d0] sm:$0xff] %vm880, 0.0
      %2968 = vst.msk [vmem:[#allocation2 + $0x1d8] sm:$0xff] %vm880, 0.0
      %2969 = vst.msk [vmem:[#allocation2 + $0x1e0] sm:$0xff] %vm880, 0.0
      %2970 = vst.msk [vmem:[#allocation2 + $0x1e8] sm:$0xff] %vm880, 0.0
      %2971 = vst.msk [vmem:[#allocation2 + $0x1f0] sm:$0xff] %vm880, 0.0
      %2972 = vst.msk [vmem:[#allocation2 + $0x1f8] sm:$0xff] %vm880, 0.0
      %2973 = vst.msk [vmem:[#allocation2 + $0x200] sm:$0xff] %vm880, 0.0
      %2974 = vst.msk [vmem:[#allocation2 + $0x208] sm:$0xff] %vm880, 0.0
      %2975 = vst.msk [vmem:[#allocation2 + $0x210] sm:$0xff] %vm880, 0.0
      %2976 = vst.msk [vmem:[#allocation2 + $0x218] sm:$0xff] %vm880, 0.0
      %2977 = vst.msk [vmem:[#allocation2 + $0x220] sm:$0xff] %vm880, 0.0
      %2978 = vst.msk [vmem:[#allocation2 + $0x228] sm:$0xff] %vm880, 0.0
      %2979 = vst.msk [vmem:[#allocation2 + $0x230] sm:$0xff] %vm880, 0.0
      %2980 = vst.msk [vmem:[#allocation2 + $0x238] sm:$0xff] %vm880, 0.0
      %s2981 = scalar_lea.vmem [#allocation2], 32
      %2982 = vst.msk [vmem:[%s2981 + $0x8] sm:$0xff] %vm880, %v2877
      %2983 = vst.msk [vmem:[%s2981 + $0x10] sm:$0xff] %vm880, %v2878
      %2984 = vst.msk [vmem:[%s2981 + $0x28] sm:$0xff] %vm880, %v2879
      %2985 = vst.msk [vmem:[%s2981 + $0x30] sm:$0xff] %vm880, %v2880
      %2986 = vst.msk [vmem:[%s2981 + $0x48] sm:$0xff] %vm880, %v2881
      %2987 = vst.msk [vmem:[%s2981 + $0x50] sm:$0xff] %vm880, %v2882
      %2988 = vst.msk [vmem:[%s2981 + $0x68] sm:$0xff] %vm880, %v2883
      %2989 = vst.msk [vmem:[%s2981 + $0x70] sm:$0xff] %vm880, %v2884
      %2990 = vst.msk [vmem:[%s2981 + $0x88] sm:$0xff] %vm880, %v2885
      %2991 = vst.msk [vmem:[%s2981 + $0x90] sm:$0xff] %vm880, %v2886
      %2992 = vst.msk [vmem:[%s2981 + $0xa8] sm:$0xff] %vm880, %v2887
      %2993 = vst.msk [vmem:[%s2981 + $0xb0] sm:$0xff] %vm880, %v2888
      %2994 = vst.msk [vmem:[%s2981 + $0xc8] sm:$0xff] %vm880, %v2889
      %2995 = vst.msk [vmem:[%s2981 + $0xd0] sm:$0xff] %vm880, %v2890
      %2996 = vst.msk [vmem:[%s2981 + $0xe8] sm:$0xff] %vm880, %v2891
      %2997 = vst.msk [vmem:[%s2981 + $0xf0] sm:$0xff] %vm880, %v2892
      %2998 = vst.msk [vmem:[%s2981 + $0x108] sm:$0xff] %vm880, %v2893
      %2999 = vst.msk [vmem:[%s2981 + $0x110] sm:$0xff] %vm880, %v2894
      %3000 = vst.msk [vmem:[%s2981 + $0x128] sm:$0xff] %vm880, %v2895
      %3001 = vst.msk [vmem:[%s2981 + $0x130] sm:$0xff] %vm880, %v2896
      %3002 = vst.msk [vmem:[%s2981 + $0x148] sm:$0xff] %vm880, %v2897
      %3003 = vst.msk [vmem:[%s2981 + $0x150] sm:$0xff] %vm880, %v2898
      %3004 = vst.msk [vmem:[%s2981 + $0x168] sm:$0xff] %vm880, %v2899
      %3005 = vst.msk [vmem:[%s2981 + $0x170] sm:$0xff] %vm880, %v2900
      %3006 = vst.msk [vmem:[%s2981 + $0x188] sm:$0xff] %vm880, %v2901
      %3007 = vst.msk [vmem:[%s2981 + $0x190] sm:$0xff] %vm880, %v2902
      %3008 = vst.msk [vmem:[%s2981 + $0x1a8] sm:$0xff] %vm880, %v2903
      %3009 = vst.msk [vmem:[%s2981 + $0x1b0] sm:$0xff] %vm880, %v2904
      %3010 = vst.msk [vmem:[%s2981 + $0x1c8] sm:$0xff] %vm880, %v2905
      %3011 = vst.msk [vmem:[%s2981 + $0x1d0] sm:$0xff] %vm880, %v2906
      %3012 = vst.msk [vmem:[%s2981 + $0x1e8] sm:$0xff] %vm880, %v2907
      %3013 = vst.msk [vmem:[%s2981 + $0x1f0] sm:$0xff] %vm880, %v2908
      %v3014 = vld [vmem:[%s6] sm:$0x1]
      %v3015 = vld [vmem:[#allocation2 + $0x7] sm:$0xff]
      %v3016 = vld [vmem:[#allocation2 + $0xf] sm:$0xff]
      %v3017 = vld [vmem:[#allocation2 + $0x27] sm:$0xff]
      %v3018 = vld [vmem:[#allocation2 + $0x2f] sm:$0xff]
      %v3019 = vld [vmem:[#allocation2 + $0x47] sm:$0xff]
      %v3020 = vld [vmem:[#allocation2 + $0x4f] sm:$0xff]
      %v3021 = vld [vmem:[#allocation2 + $0x67] sm:$0xff]
      %v3022 = vld [vmem:[#allocation2 + $0x6f] sm:$0xff]
      %v3023 = vld [vmem:[#allocation2 + $0x87] sm:$0xff]
      %v3024 = vld [vmem:[#allocation2 + $0x8f] sm:$0xff]
      %v3025 = vld [vmem:[#allocation2 + $0xa7] sm:$0xff]
      %v3026 = vld [vmem:[#allocation2 + $0xaf] sm:$0xff]
      %v3027 = vld [vmem:[#allocation2 + $0xc7] sm:$0xff]
      %v3028 = vld [vmem:[#allocation2 + $0xcf] sm:$0xff]
      %v3029 = vld [vmem:[#allocation2 + $0xe7] sm:$0xff]
      %v3030 = vld [vmem:[#allocation2 + $0xef] sm:$0xff]
      %v3031 = vld [vmem:[#allocation2 + $0x107] sm:$0xff]
      %v3032 = vld [vmem:[#allocation2 + $0x10f] sm:$0xff]
      %v3033 = vld [vmem:[#allocation2 + $0x127] sm:$0xff]
      %v3034 = vld [vmem:[#allocation2 + $0x12f] sm:$0xff]
      %v3035 = vld [vmem:[#allocation2 + $0x147] sm:$0xff]
      %v3036 = vld [vmem:[#allocation2 + $0x14f] sm:$0xff]
      %v3037 = vld [vmem:[#allocation2 + $0x167] sm:$0xff]
      %v3038 = vld [vmem:[#allocation2 + $0x16f] sm:$0xff]
      %v3039 = vld [vmem:[#allocation2 + $0x187] sm:$0xff]
      %v3040 = vld [vmem:[#allocation2 + $0x18f] sm:$0xff]
      %v3041 = vld [vmem:[#allocation2 + $0x1a7] sm:$0xff]
      %v3042 = vld [vmem:[#allocation2 + $0x1af] sm:$0xff]
      %v3043 = vld [vmem:[#allocation2 + $0x1c7] sm:$0xff]
      %v3044 = vld [vmem:[#allocation2 + $0x1cf] sm:$0xff]
      %v3045 = vld [vmem:[#allocation2 + $0x1e7] sm:$0xff]
      %v3046 = vld [vmem:[#allocation2 + $0x1ef] sm:$0xff]
      %v3047 = vpack.c.bf16 %v3016, %v3015
      %v3048 = vpack.c.bf16 %v3018, %v3017
      %v3049 = vpack.c.bf16 %v3020, %v3019
      %v3050 = vpack.c.bf16 %v3022, %v3021
      %v3051 = vpack.c.bf16 %v3024, %v3023
      %v3052 = vpack.c.bf16 %v3026, %v3025
      %v3053 = vpack.c.bf16 %v3028, %v3027
      %v3054 = vpack.c.bf16 %v3030, %v3029
      %v3055 = vpack.c.bf16 %v3032, %v3031
      %v3056 = vpack.c.bf16 %v3034, %v3033
      %v3057 = vpack.c.bf16 %v3036, %v3035
      %v3058 = vpack.c.bf16 %v3038, %v3037
      %v3059 = vpack.c.bf16 %v3040, %v3039
      %v3060 = vpack.c.bf16 %v3042, %v3041
      %v3061 = vpack.c.bf16 %v3044, %v3043
      %v3062 = vpack.c.bf16 %v3046, %v3045
      %v3063 = vld [vmem:[%s5] sm:$0xf]
      %v3064 = vld [vmem:[#allocation2 + $0x8] sm:$0xff]
      %v3065 = vld [vmem:[#allocation2 + $0x10] sm:$0xff]
      %v3066 = vld [vmem:[#allocation2 + $0x28] sm:$0xff]
      %v3067 = vld [vmem:[#allocation2 + $0x30] sm:$0xff]
      %v3068 = vld [vmem:[#allocation2 + $0x48] sm:$0xff]
      %v3069 = vld [vmem:[#allocation2 + $0x50] sm:$0xff]
      %v3070 = vld [vmem:[#allocation2 + $0x68] sm:$0xff]
      %v3071 = vld [vmem:[#allocation2 + $0x70] sm:$0xff]
      %v3072 = vld [vmem:[#allocation2 + $0x88] sm:$0xff]
      %v3073 = vld [vmem:[#allocation2 + $0x90] sm:$0xff]
      %v3074 = vld [vmem:[#allocation2 + $0xa8] sm:$0xff]
      %v3075 = vld [vmem:[#allocation2 + $0xb0] sm:$0xff]
      %v3076 = vld [vmem:[#allocation2 + $0xc8] sm:$0xff]
      %v3077 = vld [vmem:[#allocation2 + $0xd0] sm:$0xff]
      %v3078 = vld [vmem:[#allocation2 + $0xe8] sm:$0xff]
      %v3079 = vld [vmem:[#allocation2 + $0xf0] sm:$0xff]
      %v3080 = vld [vmem:[#allocation2 + $0x108] sm:$0xff]
      %v3081 = vld [vmem:[#allocation2 + $0x110] sm:$0xff]
      %v3082 = vld [vmem:[#allocation2 + $0x128] sm:$0xff]
      %v3083 = vld [vmem:[#allocation2 + $0x130] sm:$0xff]
      %v3084 = vld [vmem:[#allocation2 + $0x148] sm:$0xff]
      %v3085 = vld [vmem:[#allocation2 + $0x150] sm:$0xff]
      %v3086 = vld [vmem:[#allocation2 + $0x168] sm:$0xff]
      %v3087 = vld [vmem:[#allocation2 + $0x170] sm:$0xff]
      %v3088 = vld [vmem:[#allocation2 + $0x188] sm:$0xff]
      %v3089 = vld [vmem:[#allocation2 + $0x190] sm:$0xff]
      %v3090 = vld [vmem:[#allocation2 + $0x1a8] sm:$0xff]
      %v3091 = vld [vmem:[#allocation2 + $0x1b0] sm:$0xff]
      %v3092 = vld [vmem:[#allocation2 + $0x1c8] sm:$0xff]
      %v3093 = vld [vmem:[#allocation2 + $0x1d0] sm:$0xff]
      %v3094 = vld [vmem:[#allocation2 + $0x1e8] sm:$0xff]
      %v3095 = vld [vmem:[#allocation2 + $0x1f0] sm:$0xff]
      %v3096 = vpack.c.bf16 %v3065, %v3064
      %v3097 = vpack.c.bf16 %v3067, %v3066
      %v3098 = vpack.c.bf16 %v3069, %v3068
      %v3099 = vpack.c.bf16 %v3071, %v3070
      %v3100 = vpack.c.bf16 %v3073, %v3072
      %v3101 = vpack.c.bf16 %v3075, %v3074
      %v3102 = vpack.c.bf16 %v3077, %v3076
      %v3103 = vpack.c.bf16 %v3079, %v3078
      %v3104 = vpack.c.bf16 %v3081, %v3080
      %v3105 = vpack.c.bf16 %v3083, %v3082
      %v3106 = vpack.c.bf16 %v3085, %v3084
      %v3107 = vpack.c.bf16 %v3087, %v3086
      %v3108 = vpack.c.bf16 %v3089, %v3088
      %v3109 = vpack.c.bf16 %v3091, %v3090
      %v3110 = vpack.c.bf16 %v3093, %v3092
      %v3111 = vpack.c.bf16 %v3095, %v3094
      %s3112 = scalar_lea.vmem %s5, 4
      %v3113 = vld [vmem:[%s3112] sm:$0xf]
      %v3115 = vsel %vm880, %v3096, 0
      %v3118 = vsel %vm880, %v3097, 0
      %v3121 = vsel %vm880, %v3098, 0
      %v3124 = vsel %vm880, %v3099, 0
      %v3127 = vsel %vm880, %v3100, 0
      %v3130 = vsel %vm880, %v3101, 0
      %v3133 = vsel %vm880, %v3102, 0
      %v3136 = vsel %vm880, %v3103, 0
      %v3139 = vsel %vm880, %v3104, 0
      %v3142 = vsel %vm880, %v3105, 0
      %v3145 = vsel %vm880, %v3106, 0
      %v3148 = vsel %vm880, %v3107, 0
      %v3151 = vsel %vm880, %v3108, 0
      %v3154 = vsel %vm880, %v3109, 0
      %v3157 = vsel %vm880, %v3110, 0
      %v3160 = vsel %vm880, %v3111, 0
      %v3163 = vsel %vm929, %v3113, 0
      %3165 = vmatpush.bf16.msra.mxu0 0
      %3166 = vmatpush.bf16.msra.mxu0 0
      %3167 = vmatpush.bf16.msra.mxu0 0
      %3168 = vmatpush.bf16.msra.mxu0 0
      %3169 = vmatpush.bf16.msra.mxu0 0
      %3170 = vmatpush.bf16.msra.mxu0 0
      %3171 = vmatpush.bf16.msra.mxu0 0
      %3172 = vmatpush.bf16.msra.mxu0 %v3163
      %3173 = vmatmul.bf16.gmra.mxu0 %v3115
      %v3174 = vpop.f32.mrf.mxu0
      %v3175 = vadd.f32 0.0, %v3174
      %v3176 = vpop.f32.mrf.mxu0
      %v3177 = vadd.f32 0.0, %v3176
      %3178 = vmatmul.bf16.gmra.mxu0 %v3118
      %v3179 = vpop.f32.mrf.mxu0
      %v3180 = vadd.f32 0.0, %v3179
      %v3181 = vpop.f32.mrf.mxu0
      %v3182 = vadd.f32 0.0, %v3181
      %3183 = vmatmul.bf16.gmra.mxu0 %v3121
      %v3184 = vpop.f32.mrf.mxu0
      %v3185 = vadd.f32 0.0, %v3184
      %v3186 = vpop.f32.mrf.mxu0
      %v3187 = vadd.f32 0.0, %v3186
      %3188 = vmatmul.bf16.gmra.mxu0 %v3124
      %v3189 = vpop.f32.mrf.mxu0
      %v3190 = vadd.f32 0.0, %v3189
      %v3191 = vpop.f32.mrf.mxu0
      %v3192 = vadd.f32 0.0, %v3191
      %3193 = vmatmul.bf16.gmra.mxu0 %v3127
      %v3194 = vpop.f32.mrf.mxu0
      %v3195 = vadd.f32 0.0, %v3194
      %v3196 = vpop.f32.mrf.mxu0
      %v3197 = vadd.f32 0.0, %v3196
      %3198 = vmatmul.bf16.gmra.mxu0 %v3130
      %v3199 = vpop.f32.mrf.mxu0
      %v3200 = vadd.f32 0.0, %v3199
      %v3201 = vpop.f32.mrf.mxu0
      %v3202 = vadd.f32 0.0, %v3201
      %3203 = vmatmul.bf16.gmra.mxu0 %v3133
      %v3204 = vpop.f32.mrf.mxu0
      %v3205 = vadd.f32 0.0, %v3204
      %v3206 = vpop.f32.mrf.mxu0
      %v3207 = vadd.f32 0.0, %v3206
      %3208 = vmatmul.bf16.gmra.mxu0 %v3136
      %v3209 = vpop.f32.mrf.mxu0
      %v3210 = vadd.f32 0.0, %v3209
      %v3211 = vpop.f32.mrf.mxu0
      %v3212 = vadd.f32 0.0, %v3211
      %3213 = vmatmul.bf16.gmra.mxu0 %v3139
      %v3214 = vpop.f32.mrf.mxu0
      %v3215 = vadd.f32 0.0, %v3214
      %v3216 = vpop.f32.mrf.mxu0
      %v3217 = vadd.f32 0.0, %v3216
      %3218 = vmatmul.bf16.gmra.mxu0 %v3142
      %v3219 = vpop.f32.mrf.mxu0
      %v3220 = vadd.f32 0.0, %v3219
      %v3221 = vpop.f32.mrf.mxu0
      %v3222 = vadd.f32 0.0, %v3221
      %3223 = vmatmul.bf16.gmra.mxu0 %v3145
      %v3224 = vpop.f32.mrf.mxu0
      %v3225 = vadd.f32 0.0, %v3224
      %v3226 = vpop.f32.mrf.mxu0
      %v3227 = vadd.f32 0.0, %v3226
      %3228 = vmatmul.bf16.gmra.mxu0 %v3148
      %v3229 = vpop.f32.mrf.mxu0
      %v3230 = vadd.f32 0.0, %v3229
      %v3231 = vpop.f32.mrf.mxu0
      %v3232 = vadd.f32 0.0, %v3231
      %3233 = vmatmul.bf16.gmra.mxu0 %v3151
      %v3234 = vpop.f32.mrf.mxu0
      %v3235 = vadd.f32 0.0, %v3234
      %v3236 = vpop.f32.mrf.mxu0
      %v3237 = vadd.f32 0.0, %v3236
      %3238 = vmatmul.bf16.gmra.mxu0 %v3154
      %v3239 = vpop.f32.mrf.mxu0
      %v3240 = vadd.f32 0.0, %v3239
      %v3241 = vpop.f32.mrf.mxu0
      %v3242 = vadd.f32 0.0, %v3241
      %3243 = vmatmul.bf16.gmra.mxu0 %v3157
      %v3244 = vpop.f32.mrf.mxu0
      %v3245 = vadd.f32 0.0, %v3244
      %v3246 = vpop.f32.mrf.mxu0
      %v3247 = vadd.f32 0.0, %v3246
      %3248 = vmatmul.bf16.gmra.mxu0 %v3160
      %v3249 = vpop.f32.mrf.mxu0
      %v3250 = vadd.f32 0.0, %v3249
      %v3251 = vpop.f32.mrf.mxu0
      %v3252 = vadd.f32 0.0, %v3251
      %3253 = vdwg.mxu0
      %v3255 = vsel %vm880, %v3047, 0
      %v3258 = vsel %vm880, %v3048, 0
      %v3261 = vsel %vm880, %v3049, 0
      %v3264 = vsel %vm880, %v3050, 0
      %v3267 = vsel %vm880, %v3051, 0
      %v3270 = vsel %vm880, %v3052, 0
      %v3273 = vsel %vm880, %v3053, 0
      %v3276 = vsel %vm880, %v3054, 0
      %v3279 = vsel %vm880, %v3055, 0
      %v3282 = vsel %vm880, %v3056, 0
      %v3285 = vsel %vm880, %v3057, 0
      %v3288 = vsel %vm880, %v3058, 0
      %v3291 = vsel %vm880, %v3059, 0
      %v3294 = vsel %vm880, %v3060, 0
      %v3297 = vsel %vm880, %v3061, 0
      %v3300 = vsel %vm880, %v3062, 0
      %v3303 = vsel %vm929, %v3063, 0
      %3305 = vmatpush.bf16.msra.mxu0 0
      %3306 = vmatpush.bf16.msra.mxu0 0
      %3307 = vmatpush.bf16.msra.mxu0 0
      %3308 = vmatpush.bf16.msra.mxu0 0
      %3309 = vmatpush.bf16.msra.mxu0 0
      %3310 = vmatpush.bf16.msra.mxu0 0
      %3311 = vmatpush.bf16.msra.mxu0 0
      %3312 = vmatpush.bf16.msra.mxu0 %v3303
      %3313 = vmatmul.bf16.gmra.mxu0 %v3255
      %v3314 = vpop.f32.mrf.mxu0
      %v3315 = vadd.f32 %v3175, %v3314
      %v3316 = vpop.f32.mrf.mxu0
      %v3317 = vadd.f32 %v3177, %v3316
      %3318 = vmatmul.bf16.gmra.mxu0 %v3258
      %v3319 = vpop.f32.mrf.mxu0
      %v3320 = vadd.f32 %v3180, %v3319
      %v3321 = vpop.f32.mrf.mxu0
      %v3322 = vadd.f32 %v3182, %v3321
      %3323 = vmatmul.bf16.gmra.mxu0 %v3261
      %v3324 = vpop.f32.mrf.mxu0
      %v3325 = vadd.f32 %v3185, %v3324
      %v3326 = vpop.f32.mrf.mxu0
      %v3327 = vadd.f32 %v3187, %v3326
      %3328 = vmatmul.bf16.gmra.mxu0 %v3264
      %v3329 = vpop.f32.mrf.mxu0
      %v3330 = vadd.f32 %v3190, %v3329
      %v3331 = vpop.f32.mrf.mxu0
      %v3332 = vadd.f32 %v3192, %v3331
      %3333 = vmatmul.bf16.gmra.mxu0 %v3267
      %v3334 = vpop.f32.mrf.mxu0
      %v3335 = vadd.f32 %v3195, %v3334
      %v3336 = vpop.f32.mrf.mxu0
      %v3337 = vadd.f32 %v3197, %v3336
      %3338 = vmatmul.bf16.gmra.mxu0 %v3270
      %v3339 = vpop.f32.mrf.mxu0
      %v3340 = vadd.f32 %v3200, %v3339
      %v3341 = vpop.f32.mrf.mxu0
      %v3342 = vadd.f32 %v3202, %v3341
      %3343 = vmatmul.bf16.gmra.mxu0 %v3273
      %v3344 = vpop.f32.mrf.mxu0
      %v3345 = vadd.f32 %v3205, %v3344
      %v3346 = vpop.f32.mrf.mxu0
      %v3347 = vadd.f32 %v3207, %v3346
      %3348 = vmatmul.bf16.gmra.mxu0 %v3276
      %v3349 = vpop.f32.mrf.mxu0
      %v3350 = vadd.f32 %v3210, %v3349
      %v3351 = vpop.f32.mrf.mxu0
      %v3352 = vadd.f32 %v3212, %v3351
      %3353 = vmatmul.bf16.gmra.mxu0 %v3279
      %v3354 = vpop.f32.mrf.mxu0
      %v3355 = vadd.f32 %v3215, %v3354
      %v3356 = vpop.f32.mrf.mxu0
      %v3357 = vadd.f32 %v3217, %v3356
      %3358 = vmatmul.bf16.gmra.mxu0 %v3282
      %v3359 = vpop.f32.mrf.mxu0
      %v3360 = vadd.f32 %v3220, %v3359
      %v3361 = vpop.f32.mrf.mxu0
      %v3362 = vadd.f32 %v3222, %v3361
      %3363 = vmatmul.bf16.gmra.mxu0 %v3285
      %v3364 = vpop.f32.mrf.mxu0
      %v3365 = vadd.f32 %v3225, %v3364
      %v3366 = vpop.f32.mrf.mxu0
      %v3367 = vadd.f32 %v3227, %v3366
      %3368 = vmatmul.bf16.gmra.mxu0 %v3288
      %v3369 = vpop.f32.mrf.mxu0
      %v3370 = vadd.f32 %v3230, %v3369
      %v3371 = vpop.f32.mrf.mxu0
      %v3372 = vadd.f32 %v3232, %v3371
      %3373 = vmatmul.bf16.gmra.mxu0 %v3291
      %v3374 = vpop.f32.mrf.mxu0
      %v3375 = vadd.f32 %v3235, %v3374
      %v3376 = vpop.f32.mrf.mxu0
      %v3377 = vadd.f32 %v3237, %v3376
      %3378 = vmatmul.bf16.gmra.mxu0 %v3294
      %v3379 = vpop.f32.mrf.mxu0
      %v3380 = vadd.f32 %v3240, %v3379
      %v3381 = vpop.f32.mrf.mxu0
      %v3382 = vadd.f32 %v3242, %v3381
      %3383 = vmatmul.bf16.gmra.mxu0 %v3297
      %v3384 = vpop.f32.mrf.mxu0
      %v3385 = vadd.f32 %v3245, %v3384
      %v3386 = vpop.f32.mrf.mxu0
      %v3387 = vadd.f32 %v3247, %v3386
      %3388 = vmatmul.bf16.gmra.mxu0 %v3300
      %v3389 = vpop.f32.mrf.mxu0
      %v3390 = vadd.f32 %v3250, %v3389
      %v3391 = vpop.f32.mrf.mxu0
      %v3392 = vadd.f32 %v3252, %v3391
      %3393 = vdwg.mxu0
      %v3394 = vld [vmem:[%s2981 + $0x7] sm:$0xff]
      %v3395 = vld [vmem:[%s2981 + $0xf] sm:$0xff]
      %v3396 = vld [vmem:[%s2981 + $0x27] sm:$0xff]
      %v3397 = vld [vmem:[%s2981 + $0x2f] sm:$0xff]
      %v3398 = vld [vmem:[%s2981 + $0x47] sm:$0xff]
      %v3399 = vld [vmem:[%s2981 + $0x4f] sm:$0xff]
      %v3400 = vld [vmem:[%s2981 + $0x67] sm:$0xff]
      %v3401 = vld [vmem:[%s2981 + $0x6f] sm:$0xff]
      %v3402 = vld [vmem:[%s2981 + $0x87] sm:$0xff]
      %v3403 = vld [vmem:[%s2981 + $0x8f] sm:$0xff]
      %v3404 = vld [vmem:[%s2981 + $0xa7] sm:$0xff]
      %v3405 = vld [vmem:[%s2981 + $0xaf] sm:$0xff]
      %v3406 = vld [vmem:[%s2981 + $0xc7] sm:$0xff]
      %v3407 = vld [vmem:[%s2981 + $0xcf] sm:$0xff]
      %v3408 = vld [vmem:[%s2981 + $0xe7] sm:$0xff]
      %v3409 = vld [vmem:[%s2981 + $0xef] sm:$0xff]
      %v3410 = vld [vmem:[%s2981 + $0x107] sm:$0xff]
      %v3411 = vld [vmem:[%s2981 + $0x10f] sm:$0xff]
      %v3412 = vld [vmem:[%s2981 + $0x127] sm:$0xff]
      %v3413 = vld [vmem:[%s2981 + $0x12f] sm:$0xff]
      %v3414 = vld [vmem:[%s2981 + $0x147] sm:$0xff]
      %v3415 = vld [vmem:[%s2981 + $0x14f] sm:$0xff]
      %v3416 = vld [vmem:[%s2981 + $0x167] sm:$0xff]
      %v3417 = vld [vmem:[%s2981 + $0x16f] sm:$0xff]
      %v3418 = vld [vmem:[%s2981 + $0x187] sm:$0xff]
      %v3419 = vld [vmem:[%s2981 + $0x18f] sm:$0xff]
      %v3420 = vld [vmem:[%s2981 + $0x1a7] sm:$0xff]
      %v3421 = vld [vmem:[%s2981 + $0x1af] sm:$0xff]
      %v3422 = vld [vmem:[%s2981 + $0x1c7] sm:$0xff]
      %v3423 = vld [vmem:[%s2981 + $0x1cf] sm:$0xff]
      %v3424 = vld [vmem:[%s2981 + $0x1e7] sm:$0xff]
      %v3425 = vld [vmem:[%s2981 + $0x1ef] sm:$0xff]
      %v3426 = vpack.c.bf16 %v3395, %v3394
      %v3427 = vpack.c.bf16 %v3397, %v3396
      %v3428 = vpack.c.bf16 %v3399, %v3398
      %v3429 = vpack.c.bf16 %v3401, %v3400
      %v3430 = vpack.c.bf16 %v3403, %v3402
      %v3431 = vpack.c.bf16 %v3405, %v3404
      %v3432 = vpack.c.bf16 %v3407, %v3406
      %v3433 = vpack.c.bf16 %v3409, %v3408
      %v3434 = vpack.c.bf16 %v3411, %v3410
      %v3435 = vpack.c.bf16 %v3413, %v3412
      %v3436 = vpack.c.bf16 %v3415, %v3414
      %v3437 = vpack.c.bf16 %v3417, %v3416
      %v3438 = vpack.c.bf16 %v3419, %v3418
      %v3439 = vpack.c.bf16 %v3421, %v3420
      %v3440 = vpack.c.bf16 %v3423, %v3422
      %v3441 = vpack.c.bf16 %v3425, %v3424
      %s3442 = scalar_lea.vmem %s5, 8
      %v3443 = vld [vmem:[%s3442] sm:$0xf]
      %v3445 = vsel %vm880, %v3426, 0
      %v3448 = vsel %vm880, %v3427, 0
      %v3451 = vsel %vm880, %v3428, 0
      %v3454 = vsel %vm880, %v3429, 0
      %v3457 = vsel %vm880, %v3430, 0
      %v3460 = vsel %vm880, %v3431, 0
      %v3463 = vsel %vm880, %v3432, 0
      %v3466 = vsel %vm880, %v3433, 0
      %v3469 = vsel %vm880, %v3434, 0
      %v3472 = vsel %vm880, %v3435, 0
      %v3475 = vsel %vm880, %v3436, 0
      %v3478 = vsel %vm880, %v3437, 0
      %v3481 = vsel %vm880, %v3438, 0
      %v3484 = vsel %vm880, %v3439, 0
      %v3487 = vsel %vm880, %v3440, 0
      %v3490 = vsel %vm880, %v3441, 0
      %v3493 = vsel %vm929, %v3443, 0
      %3495 = vmatpush.bf16.msra.mxu0 0
      %3496 = vmatpush.bf16.msra.mxu0 0
      %3497 = vmatpush.bf16.msra.mxu0 0
      %3498 = vmatpush.bf16.msra.mxu0 0
      %3499 = vmatpush.bf16.msra.mxu0 0
      %3500 = vmatpush.bf16.msra.mxu0 0
      %3501 = vmatpush.bf16.msra.mxu0 0
      %3502 = vmatpush.bf16.msra.mxu0 %v3493
      %3503 = vmatmul.bf16.gmra.mxu0 %v3445
      %v3504 = vpop.f32.mrf.mxu0
      %v3505 = vadd.f32 0.0, %v3504
      %v3506 = vpop.f32.mrf.mxu0
      %v3507 = vadd.f32 0.0, %v3506
      %3508 = vmatmul.bf16.gmra.mxu0 %v3448
      %v3509 = vpop.f32.mrf.mxu0
      %v3510 = vadd.f32 0.0, %v3509
      %v3511 = vpop.f32.mrf.mxu0
      %v3512 = vadd.f32 0.0, %v3511
      %3513 = vmatmul.bf16.gmra.mxu0 %v3451
      %v3514 = vpop.f32.mrf.mxu0
      %v3515 = vadd.f32 0.0, %v3514
      %v3516 = vpop.f32.mrf.mxu0
      %v3517 = vadd.f32 0.0, %v3516
      %3518 = vmatmul.bf16.gmra.mxu0 %v3454
      %v3519 = vpop.f32.mrf.mxu0
      %v3520 = vadd.f32 0.0, %v3519
      %v3521 = vpop.f32.mrf.mxu0
      %v3522 = vadd.f32 0.0, %v3521
      %3523 = vmatmul.bf16.gmra.mxu0 %v3457
      %v3524 = vpop.f32.mrf.mxu0
      %v3525 = vadd.f32 0.0, %v3524
      %v3526 = vpop.f32.mrf.mxu0
      %v3527 = vadd.f32 0.0, %v3526
      %3528 = vmatmul.bf16.gmra.mxu0 %v3460
      %v3529 = vpop.f32.mrf.mxu0
      %v3530 = vadd.f32 0.0, %v3529
      %v3531 = vpop.f32.mrf.mxu0
      %v3532 = vadd.f32 0.0, %v3531
      %3533 = vmatmul.bf16.gmra.mxu0 %v3463
      %v3534 = vpop.f32.mrf.mxu0
      %v3535 = vadd.f32 0.0, %v3534
      %v3536 = vpop.f32.mrf.mxu0
      %v3537 = vadd.f32 0.0, %v3536
      %3538 = vmatmul.bf16.gmra.mxu0 %v3466
      %v3539 = vpop.f32.mrf.mxu0
      %v3540 = vadd.f32 0.0, %v3539
      %v3541 = vpop.f32.mrf.mxu0
      %v3542 = vadd.f32 0.0, %v3541
      %3543 = vmatmul.bf16.gmra.mxu0 %v3469
      %v3544 = vpop.f32.mrf.mxu0
      %v3545 = vadd.f32 0.0, %v3544
      %v3546 = vpop.f32.mrf.mxu0
      %v3547 = vadd.f32 0.0, %v3546
      %3548 = vmatmul.bf16.gmra.mxu0 %v3472
      %v3549 = vpop.f32.mrf.mxu0
      %v3550 = vadd.f32 0.0, %v3549
      %v3551 = vpop.f32.mrf.mxu0
      %v3552 = vadd.f32 0.0, %v3551
      %3553 = vmatmul.bf16.gmra.mxu0 %v3475
      %v3554 = vpop.f32.mrf.mxu0
      %v3555 = vadd.f32 0.0, %v3554
      %v3556 = vpop.f32.mrf.mxu0
      %v3557 = vadd.f32 0.0, %v3556
      %3558 = vmatmul.bf16.gmra.mxu0 %v3478
      %v3559 = vpop.f32.mrf.mxu0
      %v3560 = vadd.f32 0.0, %v3559
      %v3561 = vpop.f32.mrf.mxu0
      %v3562 = vadd.f32 0.0, %v3561
      %3563 = vmatmul.bf16.gmra.mxu0 %v3481
      %v3564 = vpop.f32.mrf.mxu0
      %v3565 = vadd.f32 0.0, %v3564
      %v3566 = vpop.f32.mrf.mxu0
      %v3567 = vadd.f32 0.0, %v3566
      %3568 = vmatmul.bf16.gmra.mxu0 %v3484
      %v3569 = vpop.f32.mrf.mxu0
      %v3570 = vadd.f32 0.0, %v3569
      %v3571 = vpop.f32.mrf.mxu0
      %v3572 = vadd.f32 0.0, %v3571
      %3573 = vmatmul.bf16.gmra.mxu0 %v3487
      %v3574 = vpop.f32.mrf.mxu0
      %v3575 = vadd.f32 0.0, %v3574
      %v3576 = vpop.f32.mrf.mxu0
      %v3577 = vadd.f32 0.0, %v3576
      %3578 = vmatmul.bf16.gmra.mxu0 %v3490
      %v3579 = vpop.f32.mrf.mxu0
      %v3580 = vadd.f32 0.0, %v3579
      %v3581 = vpop.f32.mrf.mxu0
      %v3582 = vadd.f32 0.0, %v3581
      %3583 = vdwg.mxu0
      %v3584 = vadd.f32 %v3315, %v3505
      %v3585 = vadd.f32 %v3317, %v3507
      %v3586 = vadd.f32 %v3320, %v3510
      %v3587 = vadd.f32 %v3322, %v3512
      %v3588 = vadd.f32 %v3325, %v3515
      %v3589 = vadd.f32 %v3327, %v3517
      %v3590 = vadd.f32 %v3330, %v3520
      %v3591 = vadd.f32 %v3332, %v3522
      %v3592 = vadd.f32 %v3335, %v3525
      %v3593 = vadd.f32 %v3337, %v3527
      %v3594 = vadd.f32 %v3340, %v3530
      %v3595 = vadd.f32 %v3342, %v3532
      %v3596 = vadd.f32 %v3345, %v3535
      %v3597 = vadd.f32 %v3347, %v3537
      %v3598 = vadd.f32 %v3350, %v3540
      %v3599 = vadd.f32 %v3352, %v3542
      %v3600 = vadd.f32 %v3355, %v3545
      %v3601 = vadd.f32 %v3357, %v3547
      %v3602 = vadd.f32 %v3360, %v3550
      %v3603 = vadd.f32 %v3362, %v3552
      %v3604 = vadd.f32 %v3365, %v3555
      %v3605 = vadd.f32 %v3367, %v3557
      %v3606 = vadd.f32 %v3370, %v3560
      %v3607 = vadd.f32 %v3372, %v3562
      %v3608 = vadd.f32 %v3375, %v3565
      %v3609 = vadd.f32 %v3377, %v3567
      %v3610 = vadd.f32 %v3380, %v3570
      %v3611 = vadd.f32 %v3382, %v3572
      %v3612 = vadd.f32 %v3385, %v3575
      %v3613 = vadd.f32 %v3387, %v3577
      %v3614 = vadd.f32 %v3390, %v3580
      %v3615 = vadd.f32 %v3392, %v3582
      %v3616 = vld [vmem:[%s2981 + $0x8] sm:$0xff]
      %v3617 = vld [vmem:[%s2981 + $0x10] sm:$0xff]
      %v3618 = vld [vmem:[%s2981 + $0x28] sm:$0xff]
      %v3619 = vld [vmem:[%s2981 + $0x30] sm:$0xff]
      %v3620 = vld [vmem:[%s2981 + $0x48] sm:$0xff]
      %v3621 = vld [vmem:[%s2981 + $0x50] sm:$0xff]
      %v3622 = vld [vmem:[%s2981 + $0x68] sm:$0xff]
      %v3623 = vld [vmem:[%s2981 + $0x70] sm:$0xff]
      %v3624 = vld [vmem:[%s2981 + $0x88] sm:$0xff]
      %v3625 = vld [vmem:[%s2981 + $0x90] sm:$0xff]
      %v3626 = vld [vmem:[%s2981 + $0xa8] sm:$0xff]
      %v3627 = vld [vmem:[%s2981 + $0xb0] sm:$0xff]
      %v3628 = vld [vmem:[%s2981 + $0xc8] sm:$0xff]
      %v3629 = vld [vmem:[%s2981 + $0xd0] sm:$0xff]
      %v3630 = vld [vmem:[%s2981 + $0xe8] sm:$0xff]
      %v3631 = vld [vmem:[%s2981 + $0xf0] sm:$0xff]
      %v3632 = vld [vmem:[%s2981 + $0x108] sm:$0xff]
      %v3633 = vld [vmem:[%s2981 + $0x110] sm:$0xff]
      %v3634 = vld [vmem:[%s2981 + $0x128] sm:$0xff]
      %v3635 = vld [vmem:[%s2981 + $0x130] sm:$0xff]
      %v3636 = vld [vmem:[%s2981 + $0x148] sm:$0xff]
      %v3637 = vld [vmem:[%s2981 + $0x150] sm:$0xff]
      %v3638 = vld [vmem:[%s2981 + $0x168] sm:$0xff]
      %v3639 = vld [vmem:[%s2981 + $0x170] sm:$0xff]
      %v3640 = vld [vmem:[%s2981 + $0x188] sm:$0xff]
      %v3641 = vld [vmem:[%s2981 + $0x190] sm:$0xff]
      %v3642 = vld [vmem:[%s2981 + $0x1a8] sm:$0xff]
      %v3643 = vld [vmem:[%s2981 + $0x1b0] sm:$0xff]
      %v3644 = vld [vmem:[%s2981 + $0x1c8] sm:$0xff]
      %v3645 = vld [vmem:[%s2981 + $0x1d0] sm:$0xff]
      %v3646 = vld [vmem:[%s2981 + $0x1e8] sm:$0xff]
      %v3647 = vld [vmem:[%s2981 + $0x1f0] sm:$0xff]
      %v3648 = vpack.c.bf16 %v3617, %v3616
      %v3649 = vpack.c.bf16 %v3619, %v3618
      %v3650 = vpack.c.bf16 %v3621, %v3620
      %v3651 = vpack.c.bf16 %v3623, %v3622
      %v3652 = vpack.c.bf16 %v3625, %v3624
      %v3653 = vpack.c.bf16 %v3627, %v3626
      %v3654 = vpack.c.bf16 %v3629, %v3628
      %v3655 = vpack.c.bf16 %v3631, %v3630
      %v3656 = vpack.c.bf16 %v3633, %v3632
      %v3657 = vpack.c.bf16 %v3635, %v3634
      %v3658 = vpack.c.bf16 %v3637, %v3636
      %v3659 = vpack.c.bf16 %v3639, %v3638
      %v3660 = vpack.c.bf16 %v3641, %v3640
      %v3661 = vpack.c.bf16 %v3643, %v3642
      %v3662 = vpack.c.bf16 %v3645, %v3644
      %v3663 = vpack.c.bf16 %v3647, %v3646
      %s3664 = scalar_lea.vmem %s5, 12
      %v3665 = vld [vmem:[%s3664] sm:$0xf]
      %v3667 = vsel %vm880, %v3648, 0
      %v3670 = vsel %vm880, %v3649, 0
      %v3673 = vsel %vm880, %v3650, 0
      %v3676 = vsel %vm880, %v3651, 0
      %v3679 = vsel %vm880, %v3652, 0
      %v3682 = vsel %vm880, %v3653, 0
      %v3685 = vsel %vm880, %v3654, 0
      %v3688 = vsel %vm880, %v3655, 0
      %v3691 = vsel %vm880, %v3656, 0
      %v3694 = vsel %vm880, %v3657, 0
      %v3697 = vsel %vm880, %v3658, 0
      %v3700 = vsel %vm880, %v3659, 0
      %v3703 = vsel %vm880, %v3660, 0
      %v3706 = vsel %vm880, %v3661, 0
      %v3709 = vsel %vm880, %v3662, 0
      %v3712 = vsel %vm880, %v3663, 0
      %v3715 = vsel %vm929, %v3665, 0
      %3717 = vmatpush.bf16.msra.mxu0 0
      %3718 = vmatpush.bf16.msra.mxu0 0
      %3719 = vmatpush.bf16.msra.mxu0 0
      %3720 = vmatpush.bf16.msra.mxu0 0
      %3721 = vmatpush.bf16.msra.mxu0 0
      %3722 = vmatpush.bf16.msra.mxu0 0
      %3723 = vmatpush.bf16.msra.mxu0 0
      %3724 = vmatpush.bf16.msra.mxu0 %v3715
      %3725 = vmatmul.bf16.gmra.mxu0 %v3667
      %v3726 = vpop.f32.mrf.mxu0
      %v3727 = vadd.f32 0.0, %v3726
      %v3728 = vpop.f32.mrf.mxu0
      %v3729 = vadd.f32 0.0, %v3728
      %3730 = vmatmul.bf16.gmra.mxu0 %v3670
      %v3731 = vpop.f32.mrf.mxu0
      %v3732 = vadd.f32 0.0, %v3731
      %v3733 = vpop.f32.mrf.mxu0
      %v3734 = vadd.f32 0.0, %v3733
      %3735 = vmatmul.bf16.gmra.mxu0 %v3673
      %v3736 = vpop.f32.mrf.mxu0
      %v3737 = vadd.f32 0.0, %v3736
      %v3738 = vpop.f32.mrf.mxu0
      %v3739 = vadd.f32 0.0, %v3738
      %3740 = vmatmul.bf16.gmra.mxu0 %v3676
      %v3741 = vpop.f32.mrf.mxu0
      %v3742 = vadd.f32 0.0, %v3741
      %v3743 = vpop.f32.mrf.mxu0
      %v3744 = vadd.f32 0.0, %v3743
      %3745 = vmatmul.bf16.gmra.mxu0 %v3679
      %v3746 = vpop.f32.mrf.mxu0
      %v3747 = vadd.f32 0.0, %v3746
      %v3748 = vpop.f32.mrf.mxu0
      %v3749 = vadd.f32 0.0, %v3748
      %3750 = vmatmul.bf16.gmra.mxu0 %v3682
      %v3751 = vpop.f32.mrf.mxu0
      %v3752 = vadd.f32 0.0, %v3751
      %v3753 = vpop.f32.mrf.mxu0
      %v3754 = vadd.f32 0.0, %v3753
      %3755 = vmatmul.bf16.gmra.mxu0 %v3685
      %v3756 = vpop.f32.mrf.mxu0
      %v3757 = vadd.f32 0.0, %v3756
      %v3758 = vpop.f32.mrf.mxu0
      %v3759 = vadd.f32 0.0, %v3758
      %3760 = vmatmul.bf16.gmra.mxu0 %v3688
      %v3761 = vpop.f32.mrf.mxu0
      %v3762 = vadd.f32 0.0, %v3761
      %v3763 = vpop.f32.mrf.mxu0
      %v3764 = vadd.f32 0.0, %v3763
      %3765 = vmatmul.bf16.gmra.mxu0 %v3691
      %v3766 = vpop.f32.mrf.mxu0
      %v3767 = vadd.f32 0.0, %v3766
      %v3768 = vpop.f32.mrf.mxu0
      %v3769 = vadd.f32 0.0, %v3768
      %3770 = vmatmul.bf16.gmra.mxu0 %v3694
      %v3771 = vpop.f32.mrf.mxu0
      %v3772 = vadd.f32 0.0, %v3771
      %v3773 = vpop.f32.mrf.mxu0
      %v3774 = vadd.f32 0.0, %v3773
      %3775 = vmatmul.bf16.gmra.mxu0 %v3697
      %v3776 = vpop.f32.mrf.mxu0
      %v3777 = vadd.f32 0.0, %v3776
      %v3778 = vpop.f32.mrf.mxu0
      %v3779 = vadd.f32 0.0, %v3778
      %3780 = vmatmul.bf16.gmra.mxu0 %v3700
      %v3781 = vpop.f32.mrf.mxu0
      %v3782 = vadd.f32 0.0, %v3781
      %v3783 = vpop.f32.mrf.mxu0
      %v3784 = vadd.f32 0.0, %v3783
      %3785 = vmatmul.bf16.gmra.mxu0 %v3703
      %v3786 = vpop.f32.mrf.mxu0
      %v3787 = vadd.f32 0.0, %v3786
      %v3788 = vpop.f32.mrf.mxu0
      %v3789 = vadd.f32 0.0, %v3788
      %3790 = vmatmul.bf16.gmra.mxu0 %v3706
      %v3791 = vpop.f32.mrf.mxu0
      %v3792 = vadd.f32 0.0, %v3791
      %v3793 = vpop.f32.mrf.mxu0
      %v3794 = vadd.f32 0.0, %v3793
      %3795 = vmatmul.bf16.gmra.mxu0 %v3709
      %v3796 = vpop.f32.mrf.mxu0
      %v3797 = vadd.f32 0.0, %v3796
      %v3798 = vpop.f32.mrf.mxu0
      %v3799 = vadd.f32 0.0, %v3798
      %3800 = vmatmul.bf16.gmra.mxu0 %v3712
      %v3801 = vpop.f32.mrf.mxu0
      %v3802 = vadd.f32 0.0, %v3801
      %v3803 = vpop.f32.mrf.mxu0
      %v3804 = vadd.f32 0.0, %v3803
      %3805 = vdwg.mxu0
      %v3806 = vadd.f32 %v3584, %v3727
      %v3807 = vadd.f32 %v3585, %v3729
      %v3808 = vadd.f32 %v3586, %v3732
      %v3809 = vadd.f32 %v3587, %v3734
      %v3810 = vadd.f32 %v3588, %v3737
      %v3811 = vadd.f32 %v3589, %v3739
      %v3812 = vadd.f32 %v3590, %v3742
      %v3813 = vadd.f32 %v3591, %v3744
      %v3814 = vadd.f32 %v3592, %v3747
      %v3815 = vadd.f32 %v3593, %v3749
      %v3816 = vadd.f32 %v3594, %v3752
      %v3817 = vadd.f32 %v3595, %v3754
      %v3818 = vadd.f32 %v3596, %v3757
      %v3819 = vadd.f32 %v3597, %v3759
      %v3820 = vadd.f32 %v3598, %v3762
      %v3821 = vadd.f32 %v3599, %v3764
      %v3822 = vadd.f32 %v3600, %v3767
      %v3823 = vadd.f32 %v3601, %v3769
      %v3824 = vadd.f32 %v3602, %v3772
      %v3825 = vadd.f32 %v3603, %v3774
      %v3826 = vadd.f32 %v3604, %v3777
      %v3827 = vadd.f32 %v3605, %v3779
      %v3828 = vadd.f32 %v3606, %v3782
      %v3829 = vadd.f32 %v3607, %v3784
      %v3830 = vadd.f32 %v3608, %v3787
      %v3831 = vadd.f32 %v3609, %v3789
      %v3832 = vadd.f32 %v3610, %v3792
      %v3833 = vadd.f32 %v3611, %v3794
      %v3834 = vadd.f32 %v3612, %v3797
      %v3835 = vadd.f32 %v3613, %v3799
      %v3836 = vadd.f32 %v3614, %v3802
      %v3837 = vadd.f32 %v3615, %v3804
      %v3839 = vperm.slane %v3014, 0
      %v3841 = vadd.f32 %v3806, %v3839
      %v3842 = vadd.f32 %v3807, %v3839
      %v3843 = vadd.f32 %v3808, %v3839
      %v3844 = vadd.f32 %v3809, %v3839
      %v3845 = vadd.f32 %v3810, %v3839
      %v3846 = vadd.f32 %v3811, %v3839
      %v3847 = vadd.f32 %v3812, %v3839
      %v3848 = vadd.f32 %v3813, %v3839
      %v3849 = vadd.f32 %v3814, %v3839
      %v3850 = vadd.f32 %v3815, %v3839
      %v3851 = vadd.f32 %v3816, %v3839
      %v3852 = vadd.f32 %v3817, %v3839
      %v3853 = vadd.f32 %v3818, %v3839
      %v3854 = vadd.f32 %v3819, %v3839
      %v3855 = vadd.f32 %v3820, %v3839
      %v3856 = vadd.f32 %v3821, %v3839
      %v3857 = vadd.f32 %v3822, %v3839
      %v3858 = vadd.f32 %v3823, %v3839
      %v3859 = vadd.f32 %v3824, %v3839
      %v3860 = vadd.f32 %v3825, %v3839
      %v3861 = vadd.f32 %v3826, %v3839
      %v3862 = vadd.f32 %v3827, %v3839
      %v3863 = vadd.f32 %v3828, %v3839
      %v3864 = vadd.f32 %v3829, %v3839
      %v3865 = vadd.f32 %v3830, %v3839
      %v3866 = vadd.f32 %v3831, %v3839
      %v3867 = vadd.f32 %v3832, %v3839
      %v3868 = vadd.f32 %v3833, %v3839
      %v3869 = vadd.f32 %v3834, %v3839
      %v3870 = vadd.f32 %v3835, %v3839
      %v3871 = vadd.f32 %v3836, %v3839
      %v3872 = vadd.f32 %v3837, %v3839
      %vm3873 = vcmask 31744
      %3874 = vst.msk [vmem:[%s278] sm:$0xff] %vm3873, %v3841
      %3875 = vst.msk [vmem:[%s278 + $0x8] sm:$0xff] %vm3873, %v3842
      %3876 = vst.msk [vmem:[%s278 + $0x10] sm:$0xff] %vm3873, %v3843
      %3877 = vst.msk [vmem:[%s278 + $0x18] sm:$0xff] %vm3873, %v3844
      %3878 = vst.msk [vmem:[%s278 + $0x20] sm:$0xff] %vm3873, %v3845
      %3879 = vst.msk [vmem:[%s278 + $0x28] sm:$0xff] %vm3873, %v3846
      %3880 = vst.msk [vmem:[%s278 + $0x30] sm:$0xff] %vm3873, %v3847
      %3881 = vst.msk [vmem:[%s278 + $0x38] sm:$0xff] %vm3873, %v3848
      %3882 = vst.msk [vmem:[%s278 + $0x40] sm:$0xff] %vm3873, %v3849
      %3883 = vst.msk [vmem:[%s278 + $0x48] sm:$0xff] %vm3873, %v3850
      %3884 = vst.msk [vmem:[%s278 + $0x50] sm:$0xff] %vm3873, %v3851
      %3885 = vst.msk [vmem:[%s278 + $0x58] sm:$0xff] %vm3873, %v3852
      %3886 = vst.msk [vmem:[%s278 + $0x60] sm:$0xff] %vm3873, %v3853
      %3887 = vst.msk [vmem:[%s278 + $0x68] sm:$0xff] %vm3873, %v3854
      %3888 = vst.msk [vmem:[%s278 + $0x70] sm:$0xff] %vm3873, %v3855
      %3889 = vst.msk [vmem:[%s278 + $0x78] sm:$0xff] %vm3873, %v3856
      %3890 = vst.msk [vmem:[%s278 + $0x80] sm:$0xff] %vm3873, %v3857
      %3891 = vst.msk [vmem:[%s278 + $0x88] sm:$0xff] %vm3873, %v3858
      %3892 = vst.msk [vmem:[%s278 + $0x90] sm:$0xff] %vm3873, %v3859
      %3893 = vst.msk [vmem:[%s278 + $0x98] sm:$0xff] %vm3873, %v3860
      %3894 = vst.msk [vmem:[%s278 + $0xa0] sm:$0xff] %vm3873, %v3861
      %3895 = vst.msk [vmem:[%s278 + $0xa8] sm:$0xff] %vm3873, %v3862
      %3896 = vst.msk [vmem:[%s278 + $0xb0] sm:$0xff] %vm3873, %v3863
      %3897 = vst.msk [vmem:[%s278 + $0xb8] sm:$0xff] %vm3873, %v3864
      %3898 = vst.msk [vmem:[%s278 + $0xc0] sm:$0xff] %vm3873, %v3865
      %3899 = vst.msk [vmem:[%s278 + $0xc8] sm:$0xff] %vm3873, %v3866
      %3900 = vst.msk [vmem:[%s278 + $0xd0] sm:$0xff] %vm3873, %v3867
      %3901 = vst.msk [vmem:[%s278 + $0xd8] sm:$0xff] %vm3873, %v3868
      %3902 = vst.msk [vmem:[%s278 + $0xe0] sm:$0xff] %vm3873, %v3869
      %3903 = vst.msk [vmem:[%s278 + $0xe8] sm:$0xff] %vm3873, %v3870
      %3904 = vst.msk [vmem:[%s278 + $0xf0] sm:$0xff] %vm3873, %v3871
      %3905 = vst.msk [vmem:[%s278 + $0xf8] sm:$0xff] %vm3873, %v3872
      %v3906 = vld [vmem:[#allocation2 + $0x8] sm:$0xff]
      %v3907 = vld [vmem:[#allocation2 + $0x10] sm:$0xff]
      %v3908 = vld [vmem:[#allocation2 + $0x28] sm:$0xff]
      %v3909 = vld [vmem:[#allocation2 + $0x30] sm:$0xff]
      %v3910 = vld [vmem:[#allocation2 + $0x48] sm:$0xff]
      %v3911 = vld [vmem:[#allocation2 + $0x50] sm:$0xff]
      %v3912 = vld [vmem:[#allocation2 + $0x68] sm:$0xff]
      %v3913 = vld [vmem:[#allocation2 + $0x70] sm:$0xff]
      %v3914 = vld [vmem:[#allocation2 + $0x88] sm:$0xff]
      %v3915 = vld [vmem:[#allocation2 + $0x90] sm:$0xff]
      %v3916 = vld [vmem:[#allocation2 + $0xa8] sm:$0xff]
      %v3917 = vld [vmem:[#allocation2 + $0xb0] sm:$0xff]
      %v3918 = vld [vmem:[#allocation2 + $0xc8] sm:$0xff]
      %v3919 = vld [vmem:[#allocation2 + $0xd0] sm:$0xff]
      %v3920 = vld [vmem:[#allocation2 + $0xe8] sm:$0xff]
      %v3921 = vld [vmem:[#allocation2 + $0xf0] sm:$0xff]
      %v3922 = vld [vmem:[#allocation2 + $0x108] sm:$0xff]
      %v3923 = vld [vmem:[#allocation2 + $0x110] sm:$0xff]
      %v3924 = vld [vmem:[#allocation2 + $0x128] sm:$0xff]
      %v3925 = vld [vmem:[#allocation2 + $0x130] sm:$0xff]
      %v3926 = vld [vmem:[#allocation2 + $0x148] sm:$0xff]
      %v3927 = vld [vmem:[#allocation2 + $0x150] sm:$0xff]
      %v3928 = vld [vmem:[#allocation2 + $0x168] sm:$0xff]
      %v3929 = vld [vmem:[#allocation2 + $0x170] sm:$0xff]
      %v3930 = vld [vmem:[#allocation2 + $0x188] sm:$0xff]
      %v3931 = vld [vmem:[#allocation2 + $0x190] sm:$0xff]
      %v3932 = vld [vmem:[#allocation2 + $0x1a8] sm:$0xff]
      %v3933 = vld [vmem:[#allocation2 + $0x1b0] sm:$0xff]
      %v3934 = vld [vmem:[#allocation2 + $0x1c8] sm:$0xff]
      %v3935 = vld [vmem:[#allocation2 + $0x1d0] sm:$0xff]
      %v3936 = vld [vmem:[#allocation2 + $0x1e8] sm:$0xff]
      %v3937 = vld [vmem:[#allocation2 + $0x1f0] sm:$0xff]
      %v3938 = vpack.c.bf16 %v3907, %v3906
      %v3939 = vpack.c.bf16 %v3909, %v3908
      %v3940 = vpack.c.bf16 %v3911, %v3910
      %v3941 = vpack.c.bf16 %v3913, %v3912
      %v3942 = vpack.c.bf16 %v3915, %v3914
      %v3943 = vpack.c.bf16 %v3917, %v3916
      %v3944 = vpack.c.bf16 %v3919, %v3918
      %v3945 = vpack.c.bf16 %v3921, %v3920
      %v3946 = vpack.c.bf16 %v3923, %v3922
      %v3947 = vpack.c.bf16 %v3925, %v3924
      %v3948 = vpack.c.bf16 %v3927, %v3926
      %v3949 = vpack.c.bf16 %v3929, %v3928
      %v3950 = vpack.c.bf16 %v3931, %v3930
      %v3951 = vpack.c.bf16 %v3933, %v3932
      %v3952 = vpack.c.bf16 %v3935, %v3934
      %v3953 = vpack.c.bf16 %v3937, %v3936
      %s3954 = scalar_lea.vmem %s5, 16
      %v3955 = vld [vmem:[%s3954] sm:$0xf]
      %v3956 = vld [vmem:[#allocation2 + $0x9] sm:$0xff]
      %v3957 = vld [vmem:[#allocation2 + $0x11] sm:$0xff]
      %v3958 = vld [vmem:[#allocation2 + $0x29] sm:$0xff]
      %v3959 = vld [vmem:[#allocation2 + $0x31] sm:$0xff]
      %v3960 = vld [vmem:[#allocation2 + $0x49] sm:$0xff]
      %v3961 = vld [vmem:[#allocation2 + $0x51] sm:$0xff]
      %v3962 = vld [vmem:[#allocation2 + $0x69] sm:$0xff]
      %v3963 = vld [vmem:[#allocation2 + $0x71] sm:$0xff]
      %v3964 = vld [vmem:[#allocation2 + $0x89] sm:$0xff]
      %v3965 = vld [vmem:[#allocation2 + $0x91] sm:$0xff]
      %v3966 = vld [vmem:[#allocation2 + $0xa9] sm:$0xff]
      %v3967 = vld [vmem:[#allocation2 + $0xb1] sm:$0xff]
      %v3968 = vld [vmem:[#allocation2 + $0xc9] sm:$0xff]
      %v3969 = vld [vmem:[#allocation2 + $0xd1] sm:$0xff]
      %v3970 = vld [vmem:[#allocation2 + $0xe9] sm:$0xff]
      %v3971 = vld [vmem:[#allocation2 + $0xf1] sm:$0xff]
      %v3972 = vld [vmem:[#allocation2 + $0x109] sm:$0xff]
      %v3973 = vld [vmem:[#allocation2 + $0x111] sm:$0xff]
      %v3974 = vld [vmem:[#allocation2 + $0x129] sm:$0xff]
      %v3975 = vld [vmem:[#allocation2 + $0x131] sm:$0xff]
      %v3976 = vld [vmem:[#allocation2 + $0x149] sm:$0xff]
      %v3977 = vld [vmem:[#allocation2 + $0x151] sm:$0xff]
      %v3978 = vld [vmem:[#allocation2 + $0x169] sm:$0xff]
      %v3979 = vld [vmem:[#allocation2 + $0x171] sm:$0xff]
      %v3980 = vld [vmem:[#allocation2 + $0x189] sm:$0xff]
      %v3981 = vld [vmem:[#allocation2 + $0x191] sm:$0xff]
      %v3982 = vld [vmem:[#allocation2 + $0x1a9] sm:$0xff]
      %v3983 = vld [vmem:[#allocation2 + $0x1b1] sm:$0xff]
      %v3984 = vld [vmem:[#allocation2 + $0x1c9] sm:$0xff]
      %v3985 = vld [vmem:[#allocation2 + $0x1d1] sm:$0xff]
      %v3986 = vld [vmem:[#allocation2 + $0x1e9] sm:$0xff]
      %v3987 = vld [vmem:[#allocation2 + $0x1f1] sm:$0xff]
      %v3988 = vpack.c.bf16 %v3957, %v3956
      %v3989 = vpack.c.bf16 %v3959, %v3958
      %v3990 = vpack.c.bf16 %v3961, %v3960
      %v3991 = vpack.c.bf16 %v3963, %v3962
      %v3992 = vpack.c.bf16 %v3965, %v3964
      %v3993 = vpack.c.bf16 %v3967, %v3966
      %v3994 = vpack.c.bf16 %v3969, %v3968
      %v3995 = vpack.c.bf16 %v3971, %v3970
      %v3996 = vpack.c.bf16 %v3973, %v3972
      %v3997 = vpack.c.bf16 %v3975, %v3974
      %v3998 = vpack.c.bf16 %v3977, %v3976
      %v3999 = vpack.c.bf16 %v3979, %v3978
      %v4000 = vpack.c.bf16 %v3981, %v3980
      %v4001 = vpack.c.bf16 %v3983, %v3982
      %v4002 = vpack.c.bf16 %v3985, %v3984
      %v4003 = vpack.c.bf16 %v3987, %v3986
      %s4004 = scalar_lea.vmem %s5, 20
      %v4005 = vld [vmem:[%s4004] sm:$0xf]
      %v4007 = vsel %vm880, %v3988, 0
      %v4010 = vsel %vm880, %v3989, 0
      %v4013 = vsel %vm880, %v3990, 0
      %v4016 = vsel %vm880, %v3991, 0
      %v4019 = vsel %vm880, %v3992, 0
      %v4022 = vsel %vm880, %v3993, 0
      %v4025 = vsel %vm880, %v3994, 0
      %v4028 = vsel %vm880, %v3995, 0
      %v4031 = vsel %vm880, %v3996, 0
      %v4034 = vsel %vm880, %v3997, 0
      %v4037 = vsel %vm880, %v3998, 0
      %v4040 = vsel %vm880, %v3999, 0
      %v4043 = vsel %vm880, %v4000, 0
      %v4046 = vsel %vm880, %v4001, 0
      %v4049 = vsel %vm880, %v4002, 0
      %v4052 = vsel %vm880, %v4003, 0
      %v4055 = vsel %vm929, %v4005, 0
      %4057 = vmatpush.bf16.msra.mxu0 0
      %4058 = vmatpush.bf16.msra.mxu0 0
      %4059 = vmatpush.bf16.msra.mxu0 0
      %4060 = vmatpush.bf16.msra.mxu0 0
      %4061 = vmatpush.bf16.msra.mxu0 0
      %4062 = vmatpush.bf16.msra.mxu0 0
      %4063 = vmatpush.bf16.msra.mxu0 0
      %4064 = vmatpush.bf16.msra.mxu0 %v4055
      %4065 = vmatmul.bf16.gmra.mxu0 %v4007
      %v4066 = vpop.f32.mrf.mxu0
      %v4067 = vadd.f32 0.0, %v4066
      %v4068 = vpop.f32.mrf.mxu0
      %v4069 = vadd.f32 0.0, %v4068
      %4070 = vmatmul.bf16.gmra.mxu0 %v4010
      %v4071 = vpop.f32.mrf.mxu0
      %v4072 = vadd.f32 0.0, %v4071
      %v4073 = vpop.f32.mrf.mxu0
      %v4074 = vadd.f32 0.0, %v4073
      %4075 = vmatmul.bf16.gmra.mxu0 %v4013
      %v4076 = vpop.f32.mrf.mxu0
      %v4077 = vadd.f32 0.0, %v4076
      %v4078 = vpop.f32.mrf.mxu0
      %v4079 = vadd.f32 0.0, %v4078
      %4080 = vmatmul.bf16.gmra.mxu0 %v4016
      %v4081 = vpop.f32.mrf.mxu0
      %v4082 = vadd.f32 0.0, %v4081
      %v4083 = vpop.f32.mrf.mxu0
      %v4084 = vadd.f32 0.0, %v4083
      %4085 = vmatmul.bf16.gmra.mxu0 %v4019
      %v4086 = vpop.f32.mrf.mxu0
      %v4087 = vadd.f32 0.0, %v4086
      %v4088 = vpop.f32.mrf.mxu0
      %v4089 = vadd.f32 0.0, %v4088
      %4090 = vmatmul.bf16.gmra.mxu0 %v4022
      %v4091 = vpop.f32.mrf.mxu0
      %v4092 = vadd.f32 0.0, %v4091
      %v4093 = vpop.f32.mrf.mxu0
      %v4094 = vadd.f32 0.0, %v4093
      %4095 = vmatmul.bf16.gmra.mxu0 %v4025
      %v4096 = vpop.f32.mrf.mxu0
      %v4097 = vadd.f32 0.0, %v4096
      %v4098 = vpop.f32.mrf.mxu0
      %v4099 = vadd.f32 0.0, %v4098
      %4100 = vmatmul.bf16.gmra.mxu0 %v4028
      %v4101 = vpop.f32.mrf.mxu0
      %v4102 = vadd.f32 0.0, %v4101
      %v4103 = vpop.f32.mrf.mxu0
      %v4104 = vadd.f32 0.0, %v4103
      %4105 = vmatmul.bf16.gmra.mxu0 %v4031
      %v4106 = vpop.f32.mrf.mxu0
      %v4107 = vadd.f32 0.0, %v4106
      %v4108 = vpop.f32.mrf.mxu0
      %v4109 = vadd.f32 0.0, %v4108
      %4110 = vmatmul.bf16.gmra.mxu0 %v4034
      %v4111 = vpop.f32.mrf.mxu0
      %v4112 = vadd.f32 0.0, %v4111
      %v4113 = vpop.f32.mrf.mxu0
      %v4114 = vadd.f32 0.0, %v4113
      %4115 = vmatmul.bf16.gmra.mxu0 %v4037
      %v4116 = vpop.f32.mrf.mxu0
      %v4117 = vadd.f32 0.0, %v4116
      %v4118 = vpop.f32.mrf.mxu0
      %v4119 = vadd.f32 0.0, %v4118
      %4120 = vmatmul.bf16.gmra.mxu0 %v4040
      %v4121 = vpop.f32.mrf.mxu0
      %v4122 = vadd.f32 0.0, %v4121
      %v4123 = vpop.f32.mrf.mxu0
      %v4124 = vadd.f32 0.0, %v4123
      %4125 = vmatmul.bf16.gmra.mxu0 %v4043
      %v4126 = vpop.f32.mrf.mxu0
      %v4127 = vadd.f32 0.0, %v4126
      %v4128 = vpop.f32.mrf.mxu0
      %v4129 = vadd.f32 0.0, %v4128
      %4130 = vmatmul.bf16.gmra.mxu0 %v4046
      %v4131 = vpop.f32.mrf.mxu0
      %v4132 = vadd.f32 0.0, %v4131
      %v4133 = vpop.f32.mrf.mxu0
      %v4134 = vadd.f32 0.0, %v4133
      %4135 = vmatmul.bf16.gmra.mxu0 %v4049
      %v4136 = vpop.f32.mrf.mxu0
      %v4137 = vadd.f32 0.0, %v4136
      %v4138 = vpop.f32.mrf.mxu0
      %v4139 = vadd.f32 0.0, %v4138
      %4140 = vmatmul.bf16.gmra.mxu0 %v4052
      %v4141 = vpop.f32.mrf.mxu0
      %v4142 = vadd.f32 0.0, %v4141
      %v4143 = vpop.f32.mrf.mxu0
      %v4144 = vadd.f32 0.0, %v4143
      %4145 = vdwg.mxu0
      %v4147 = vsel %vm880, %v3938, 0
      %v4150 = vsel %vm880, %v3939, 0
      %v4153 = vsel %vm880, %v3940, 0
      %v4156 = vsel %vm880, %v3941, 0
      %v4159 = vsel %vm880, %v3942, 0
      %v4162 = vsel %vm880, %v3943, 0
      %v4165 = vsel %vm880, %v3944, 0
      %v4168 = vsel %vm880, %v3945, 0
      %v4171 = vsel %vm880, %v3946, 0
      %v4174 = vsel %vm880, %v3947, 0
      %v4177 = vsel %vm880, %v3948, 0
      %v4180 = vsel %vm880, %v3949, 0
      %v4183 = vsel %vm880, %v3950, 0
      %v4186 = vsel %vm880, %v3951, 0
      %v4189 = vsel %vm880, %v3952, 0
      %v4192 = vsel %vm880, %v3953, 0
      %v4195 = vsel %vm929, %v3955, 0
      %4197 = vmatpush.bf16.msra.mxu0 0
      %4198 = vmatpush.bf16.msra.mxu0 0
      %4199 = vmatpush.bf16.msra.mxu0 0
      %4200 = vmatpush.bf16.msra.mxu0 0
      %4201 = vmatpush.bf16.msra.mxu0 0
      %4202 = vmatpush.bf16.msra.mxu0 0
      %4203 = vmatpush.bf16.msra.mxu0 0
      %4204 = vmatpush.bf16.msra.mxu0 %v4195
      %4205 = vmatmul.bf16.gmra.mxu0 %v4147
      %v4206 = vpop.f32.mrf.mxu0
      %v4207 = vadd.f32 %v4067, %v4206
      %v4208 = vpop.f32.mrf.mxu0
      %v4209 = vadd.f32 %v4069, %v4208
      %4210 = vmatmul.bf16.gmra.mxu0 %v4150
      %v4211 = vpop.f32.mrf.mxu0
      %v4212 = vadd.f32 %v4072, %v4211
      %v4213 = vpop.f32.mrf.mxu0
      %v4214 = vadd.f32 %v4074, %v4213
      %4215 = vmatmul.bf16.gmra.mxu0 %v4153
      %v4216 = vpop.f32.mrf.mxu0
      %v4217 = vadd.f32 %v4077, %v4216
      %v4218 = vpop.f32.mrf.mxu0
      %v4219 = vadd.f32 %v4079, %v4218
      %4220 = vmatmul.bf16.gmra.mxu0 %v4156
      %v4221 = vpop.f32.mrf.mxu0
      %v4222 = vadd.f32 %v4082, %v4221
      %v4223 = vpop.f32.mrf.mxu0
      %v4224 = vadd.f32 %v4084, %v4223
      %4225 = vmatmul.bf16.gmra.mxu0 %v4159
      %v4226 = vpop.f32.mrf.mxu0
      %v4227 = vadd.f32 %v4087, %v4226
      %v4228 = vpop.f32.mrf.mxu0
      %v4229 = vadd.f32 %v4089, %v4228
      %4230 = vmatmul.bf16.gmra.mxu0 %v4162
      %v4231 = vpop.f32.mrf.mxu0
      %v4232 = vadd.f32 %v4092, %v4231
      %v4233 = vpop.f32.mrf.mxu0
      %v4234 = vadd.f32 %v4094, %v4233
      %4235 = vmatmul.bf16.gmra.mxu0 %v4165
      %v4236 = vpop.f32.mrf.mxu0
      %v4237 = vadd.f32 %v4097, %v4236
      %v4238 = vpop.f32.mrf.mxu0
      %v4239 = vadd.f32 %v4099, %v4238
      %4240 = vmatmul.bf16.gmra.mxu0 %v4168
      %v4241 = vpop.f32.mrf.mxu0
      %v4242 = vadd.f32 %v4102, %v4241
      %v4243 = vpop.f32.mrf.mxu0
      %v4244 = vadd.f32 %v4104, %v4243
      %4245 = vmatmul.bf16.gmra.mxu0 %v4171
      %v4246 = vpop.f32.mrf.mxu0
      %v4247 = vadd.f32 %v4107, %v4246
      %v4248 = vpop.f32.mrf.mxu0
      %v4249 = vadd.f32 %v4109, %v4248
      %4250 = vmatmul.bf16.gmra.mxu0 %v4174
      %v4251 = vpop.f32.mrf.mxu0
      %v4252 = vadd.f32 %v4112, %v4251
      %v4253 = vpop.f32.mrf.mxu0
      %v4254 = vadd.f32 %v4114, %v4253
      %4255 = vmatmul.bf16.gmra.mxu0 %v4177
      %v4256 = vpop.f32.mrf.mxu0
      %v4257 = vadd.f32 %v4117, %v4256
      %v4258 = vpop.f32.mrf.mxu0
      %v4259 = vadd.f32 %v4119, %v4258
      %4260 = vmatmul.bf16.gmra.mxu0 %v4180
      %v4261 = vpop.f32.mrf.mxu0
      %v4262 = vadd.f32 %v4122, %v4261
      %v4263 = vpop.f32.mrf.mxu0
      %v4264 = vadd.f32 %v4124, %v4263
      %4265 = vmatmul.bf16.gmra.mxu0 %v4183
      %v4266 = vpop.f32.mrf.mxu0
      %v4267 = vadd.f32 %v4127, %v4266
      %v4268 = vpop.f32.mrf.mxu0
      %v4269 = vadd.f32 %v4129, %v4268
      %4270 = vmatmul.bf16.gmra.mxu0 %v4186
      %v4271 = vpop.f32.mrf.mxu0
      %v4272 = vadd.f32 %v4132, %v4271
      %v4273 = vpop.f32.mrf.mxu0
      %v4274 = vadd.f32 %v4134, %v4273
      %4275 = vmatmul.bf16.gmra.mxu0 %v4189
      %v4276 = vpop.f32.mrf.mxu0
      %v4277 = vadd.f32 %v4137, %v4276
      %v4278 = vpop.f32.mrf.mxu0
      %v4279 = vadd.f32 %v4139, %v4278
      %4280 = vmatmul.bf16.gmra.mxu0 %v4192
      %v4281 = vpop.f32.mrf.mxu0
      %v4282 = vadd.f32 %v4142, %v4281
      %v4283 = vpop.f32.mrf.mxu0
      %v4284 = vadd.f32 %v4144, %v4283
      %4285 = vdwg.mxu0
      %v4286 = vld [vmem:[%s2981 + $0x8] sm:$0xff]
      %v4287 = vld [vmem:[%s2981 + $0x10] sm:$0xff]
      %v4288 = vld [vmem:[%s2981 + $0x28] sm:$0xff]
      %v4289 = vld [vmem:[%s2981 + $0x30] sm:$0xff]
      %v4290 = vld [vmem:[%s2981 + $0x48] sm:$0xff]
      %v4291 = vld [vmem:[%s2981 + $0x50] sm:$0xff]
      %v4292 = vld [vmem:[%s2981 + $0x68] sm:$0xff]
      %v4293 = vld [vmem:[%s2981 + $0x70] sm:$0xff]
      %v4294 = vld [vmem:[%s2981 + $0x88] sm:$0xff]
      %v4295 = vld [vmem:[%s2981 + $0x90] sm:$0xff]
      %v4296 = vld [vmem:[%s2981 + $0xa8] sm:$0xff]
      %v4297 = vld [vmem:[%s2981 + $0xb0] sm:$0xff]
      %v4298 = vld [vmem:[%s2981 + $0xc8] sm:$0xff]
      %v4299 = vld [vmem:[%s2981 + $0xd0] sm:$0xff]
      %v4300 = vld [vmem:[%s2981 + $0xe8] sm:$0xff]
      %v4301 = vld [vmem:[%s2981 + $0xf0] sm:$0xff]
      %v4302 = vld [vmem:[%s2981 + $0x108] sm:$0xff]
      %v4303 = vld [vmem:[%s2981 + $0x110] sm:$0xff]
      %v4304 = vld [vmem:[%s2981 + $0x128] sm:$0xff]
      %v4305 = vld [vmem:[%s2981 + $0x130] sm:$0xff]
      %v4306 = vld [vmem:[%s2981 + $0x148] sm:$0xff]
      %v4307 = vld [vmem:[%s2981 + $0x150] sm:$0xff]
      %v4308 = vld [vmem:[%s2981 + $0x168] sm:$0xff]
      %v4309 = vld [vmem:[%s2981 + $0x170] sm:$0xff]
      %v4310 = vld [vmem:[%s2981 + $0x188] sm:$0xff]
      %v4311 = vld [vmem:[%s2981 + $0x190] sm:$0xff]
      %v4312 = vld [vmem:[%s2981 + $0x1a8] sm:$0xff]
      %v4313 = vld [vmem:[%s2981 + $0x1b0] sm:$0xff]
      %v4314 = vld [vmem:[%s2981 + $0x1c8] sm:$0xff]
      %v4315 = vld [vmem:[%s2981 + $0x1d0] sm:$0xff]
      %v4316 = vld [vmem:[%s2981 + $0x1e8] sm:$0xff]
      %v4317 = vld [vmem:[%s2981 + $0x1f0] sm:$0xff]
      %v4318 = vpack.c.bf16 %v4287, %v4286
      %v4319 = vpack.c.bf16 %v4289, %v4288
      %v4320 = vpack.c.bf16 %v4291, %v4290
      %v4321 = vpack.c.bf16 %v4293, %v4292
      %v4322 = vpack.c.bf16 %v4295, %v4294
      %v4323 = vpack.c.bf16 %v4297, %v4296
      %v4324 = vpack.c.bf16 %v4299, %v4298
      %v4325 = vpack.c.bf16 %v4301, %v4300
      %v4326 = vpack.c.bf16 %v4303, %v4302
      %v4327 = vpack.c.bf16 %v4305, %v4304
      %v4328 = vpack.c.bf16 %v4307, %v4306
      %v4329 = vpack.c.bf16 %v4309, %v4308
      %v4330 = vpack.c.bf16 %v4311, %v4310
      %v4331 = vpack.c.bf16 %v4313, %v4312
      %v4332 = vpack.c.bf16 %v4315, %v4314
      %v4333 = vpack.c.bf16 %v4317, %v4316
      %s4334 = scalar_lea.vmem %s5, 24
      %v4335 = vld [vmem:[%s4334] sm:$0xf]
      %v4337 = vsel %vm880, %v4318, 0
      %v4340 = vsel %vm880, %v4319, 0
      %v4343 = vsel %vm880, %v4320, 0
      %v4346 = vsel %vm880, %v4321, 0
      %v4349 = vsel %vm880, %v4322, 0
      %v4352 = vsel %vm880, %v4323, 0
      %v4355 = vsel %vm880, %v4324, 0
      %v4358 = vsel %vm880, %v4325, 0
      %v4361 = vsel %vm880, %v4326, 0
      %v4364 = vsel %vm880, %v4327, 0
      %v4367 = vsel %vm880, %v4328, 0
      %v4370 = vsel %vm880, %v4329, 0
      %v4373 = vsel %vm880, %v4330, 0
      %v4376 = vsel %vm880, %v4331, 0
      %v4379 = vsel %vm880, %v4332, 0
      %v4382 = vsel %vm880, %v4333, 0
      %v4385 = vsel %vm929, %v4335, 0
      %4387 = vmatpush.bf16.msra.mxu0 0
      %4388 = vmatpush.bf16.msra.mxu0 0
      %4389 = vmatpush.bf16.msra.mxu0 0
      %4390 = vmatpush.bf16.msra.mxu0 0
      %4391 = vmatpush.bf16.msra.mxu0 0
      %4392 = vmatpush.bf16.msra.mxu0 0
      %4393 = vmatpush.bf16.msra.mxu0 0
      %4394 = vmatpush.bf16.msra.mxu0 %v4385
      %4395 = vmatmul.bf16.gmra.mxu0 %v4337
      %v4396 = vpop.f32.mrf.mxu0
      %v4397 = vadd.f32 0.0, %v4396
      %v4398 = vpop.f32.mrf.mxu0
      %v4399 = vadd.f32 0.0, %v4398
      %4400 = vmatmul.bf16.gmra.mxu0 %v4340
      %v4401 = vpop.f32.mrf.mxu0
      %v4402 = vadd.f32 0.0, %v4401
      %v4403 = vpop.f32.mrf.mxu0
      %v4404 = vadd.f32 0.0, %v4403
      %4405 = vmatmul.bf16.gmra.mxu0 %v4343
      %v4406 = vpop.f32.mrf.mxu0
      %v4407 = vadd.f32 0.0, %v4406
      %v4408 = vpop.f32.mrf.mxu0
      %v4409 = vadd.f32 0.0, %v4408
      %4410 = vmatmul.bf16.gmra.mxu0 %v4346
      %v4411 = vpop.f32.mrf.mxu0
      %v4412 = vadd.f32 0.0, %v4411
      %v4413 = vpop.f32.mrf.mxu0
      %v4414 = vadd.f32 0.0, %v4413
      %4415 = vmatmul.bf16.gmra.mxu0 %v4349
      %v4416 = vpop.f32.mrf.mxu0
      %v4417 = vadd.f32 0.0, %v4416
      %v4418 = vpop.f32.mrf.mxu0
      %v4419 = vadd.f32 0.0, %v4418
      %4420 = vmatmul.bf16.gmra.mxu0 %v4352
      %v4421 = vpop.f32.mrf.mxu0
      %v4422 = vadd.f32 0.0, %v4421
      %v4423 = vpop.f32.mrf.mxu0
      %v4424 = vadd.f32 0.0, %v4423
      %4425 = vmatmul.bf16.gmra.mxu0 %v4355
      %v4426 = vpop.f32.mrf.mxu0
      %v4427 = vadd.f32 0.0, %v4426
      %v4428 = vpop.f32.mrf.mxu0
      %v4429 = vadd.f32 0.0, %v4428
      %4430 = vmatmul.bf16.gmra.mxu0 %v4358
      %v4431 = vpop.f32.mrf.mxu0
      %v4432 = vadd.f32 0.0, %v4431
      %v4433 = vpop.f32.mrf.mxu0
      %v4434 = vadd.f32 0.0, %v4433
      %4435 = vmatmul.bf16.gmra.mxu0 %v4361
      %v4436 = vpop.f32.mrf.mxu0
      %v4437 = vadd.f32 0.0, %v4436
      %v4438 = vpop.f32.mrf.mxu0
      %v4439 = vadd.f32 0.0, %v4438
      %4440 = vmatmul.bf16.gmra.mxu0 %v4364
      %v4441 = vpop.f32.mrf.mxu0
      %v4442 = vadd.f32 0.0, %v4441
      %v4443 = vpop.f32.mrf.mxu0
      %v4444 = vadd.f32 0.0, %v4443
      %4445 = vmatmul.bf16.gmra.mxu0 %v4367
      %v4446 = vpop.f32.mrf.mxu0
      %v4447 = vadd.f32 0.0, %v4446
      %v4448 = vpop.f32.mrf.mxu0
      %v4449 = vadd.f32 0.0, %v4448
      %4450 = vmatmul.bf16.gmra.mxu0 %v4370
      %v4451 = vpop.f32.mrf.mxu0
      %v4452 = vadd.f32 0.0, %v4451
      %v4453 = vpop.f32.mrf.mxu0
      %v4454 = vadd.f32 0.0, %v4453
      %4455 = vmatmul.bf16.gmra.mxu0 %v4373
      %v4456 = vpop.f32.mrf.mxu0
      %v4457 = vadd.f32 0.0, %v4456
      %v4458 = vpop.f32.mrf.mxu0
      %v4459 = vadd.f32 0.0, %v4458
      %4460 = vmatmul.bf16.gmra.mxu0 %v4376
      %v4461 = vpop.f32.mrf.mxu0
      %v4462 = vadd.f32 0.0, %v4461
      %v4463 = vpop.f32.mrf.mxu0
      %v4464 = vadd.f32 0.0, %v4463
      %4465 = vmatmul.bf16.gmra.mxu0 %v4379
      %v4466 = vpop.f32.mrf.mxu0
      %v4467 = vadd.f32 0.0, %v4466
      %v4468 = vpop.f32.mrf.mxu0
      %v4469 = vadd.f32 0.0, %v4468
      %4470 = vmatmul.bf16.gmra.mxu0 %v4382
      %v4471 = vpop.f32.mrf.mxu0
      %v4472 = vadd.f32 0.0, %v4471
      %v4473 = vpop.f32.mrf.mxu0
      %v4474 = vadd.f32 0.0, %v4473
      %4475 = vdwg.mxu0
      %v4476 = vadd.f32 %v4207, %v4397
      %v4477 = vadd.f32 %v4209, %v4399
      %v4478 = vadd.f32 %v4212, %v4402
      %v4479 = vadd.f32 %v4214, %v4404
      %v4480 = vadd.f32 %v4217, %v4407
      %v4481 = vadd.f32 %v4219, %v4409
      %v4482 = vadd.f32 %v4222, %v4412
      %v4483 = vadd.f32 %v4224, %v4414
      %v4484 = vadd.f32 %v4227, %v4417
      %v4485 = vadd.f32 %v4229, %v4419
      %v4486 = vadd.f32 %v4232, %v4422
      %v4487 = vadd.f32 %v4234, %v4424
      %v4488 = vadd.f32 %v4237, %v4427
      %v4489 = vadd.f32 %v4239, %v4429
      %v4490 = vadd.f32 %v4242, %v4432
      %v4491 = vadd.f32 %v4244, %v4434
      %v4492 = vadd.f32 %v4247, %v4437
      %v4493 = vadd.f32 %v4249, %v4439
      %v4494 = vadd.f32 %v4252, %v4442
      %v4495 = vadd.f32 %v4254, %v4444
      %v4496 = vadd.f32 %v4257, %v4447
      %v4497 = vadd.f32 %v4259, %v4449
      %v4498 = vadd.f32 %v4262, %v4452
      %v4499 = vadd.f32 %v4264, %v4454
      %v4500 = vadd.f32 %v4267, %v4457
      %v4501 = vadd.f32 %v4269, %v4459
      %v4502 = vadd.f32 %v4272, %v4462
      %v4503 = vadd.f32 %v4274, %v4464
      %v4504 = vadd.f32 %v4277, %v4467
      %v4505 = vadd.f32 %v4279, %v4469
      %v4506 = vadd.f32 %v4282, %v4472
      %v4507 = vadd.f32 %v4284, %v4474
      %v4508 = vld [vmem:[%s2981 + $0x9] sm:$0xff]
      %v4509 = vld [vmem:[%s2981 + $0x11] sm:$0xff]
      %v4510 = vld [vmem:[%s2981 + $0x29] sm:$0xff]
      %v4511 = vld [vmem:[%s2981 + $0x31] sm:$0xff]
      %v4512 = vld [vmem:[%s2981 + $0x49] sm:$0xff]
      %v4513 = vld [vmem:[%s2981 + $0x51] sm:$0xff]
      %v4514 = vld [vmem:[%s2981 + $0x69] sm:$0xff]
      %v4515 = vld [vmem:[%s2981 + $0x71] sm:$0xff]
      %v4516 = vld [vmem:[%s2981 + $0x89] sm:$0xff]
      %v4517 = vld [vmem:[%s2981 + $0x91] sm:$0xff]
      %v4518 = vld [vmem:[%s2981 + $0xa9] sm:$0xff]
      %v4519 = vld [vmem:[%s2981 + $0xb1] sm:$0xff]
      %v4520 = vld [vmem:[%s2981 + $0xc9] sm:$0xff]
      %v4521 = vld [vmem:[%s2981 + $0xd1] sm:$0xff]
      %v4522 = vld [vmem:[%s2981 + $0xe9] sm:$0xff]
      %v4523 = vld [vmem:[%s2981 + $0xf1] sm:$0xff]
      %v4524 = vld [vmem:[%s2981 + $0x109] sm:$0xff]
      %v4525 = vld [vmem:[%s2981 + $0x111] sm:$0xff]
      %v4526 = vld [vmem:[%s2981 + $0x129] sm:$0xff]
      %v4527 = vld [vmem:[%s2981 + $0x131] sm:$0xff]
      %v4528 = vld [vmem:[%s2981 + $0x149] sm:$0xff]
      %v4529 = vld [vmem:[%s2981 + $0x151] sm:$0xff]
      %v4530 = vld [vmem:[%s2981 + $0x169] sm:$0xff]
      %v4531 = vld [vmem:[%s2981 + $0x171] sm:$0xff]
      %v4532 = vld [vmem:[%s2981 + $0x189] sm:$0xff]
      %v4533 = vld [vmem:[%s2981 + $0x191] sm:$0xff]
      %v4534 = vld [vmem:[%s2981 + $0x1a9] sm:$0xff]
      %v4535 = vld [vmem:[%s2981 + $0x1b1] sm:$0xff]
      %v4536 = vld [vmem:[%s2981 + $0x1c9] sm:$0xff]
      %v4537 = vld [vmem:[%s2981 + $0x1d1] sm:$0xff]
      %v4538 = vld [vmem:[%s2981 + $0x1e9] sm:$0xff]
      %v4539 = vld [vmem:[%s2981 + $0x1f1] sm:$0xff]
      %v4540 = vpack.c.bf16 %v4509, %v4508
      %v4541 = vpack.c.bf16 %v4511, %v4510
      %v4542 = vpack.c.bf16 %v4513, %v4512
      %v4543 = vpack.c.bf16 %v4515, %v4514
      %v4544 = vpack.c.bf16 %v4517, %v4516
      %v4545 = vpack.c.bf16 %v4519, %v4518
      %v4546 = vpack.c.bf16 %v4521, %v4520
      %v4547 = vpack.c.bf16 %v4523, %v4522
      %v4548 = vpack.c.bf16 %v4525, %v4524
      %v4549 = vpack.c.bf16 %v4527, %v4526
      %v4550 = vpack.c.bf16 %v4529, %v4528
      %v4551 = vpack.c.bf16 %v4531, %v4530
      %v4552 = vpack.c.bf16 %v4533, %v4532
      %v4553 = vpack.c.bf16 %v4535, %v4534
      %v4554 = vpack.c.bf16 %v4537, %v4536
      %v4555 = vpack.c.bf16 %v4539, %v4538
      %s4556 = scalar_lea.vmem %s5, 28
      %v4557 = vld [vmem:[%s4556] sm:$0xf]
      %v4559 = vsel %vm880, %v4540, 0
      %v4562 = vsel %vm880, %v4541, 0
      %v4565 = vsel %vm880, %v4542, 0
      %v4568 = vsel %vm880, %v4543, 0
      %v4571 = vsel %vm880, %v4544, 0
      %v4574 = vsel %vm880, %v4545, 0
      %v4577 = vsel %vm880, %v4546, 0
      %v4580 = vsel %vm880, %v4547, 0
      %v4583 = vsel %vm880, %v4548, 0
      %v4586 = vsel %vm880, %v4549, 0
      %v4589 = vsel %vm880, %v4550, 0
      %v4592 = vsel %vm880, %v4551, 0
      %v4595 = vsel %vm880, %v4552, 0
      %v4598 = vsel %vm880, %v4553, 0
      %v4601 = vsel %vm880, %v4554, 0
      %v4604 = vsel %vm880, %v4555, 0
      %v4607 = vsel %vm929, %v4557, 0
      %4609 = vmatpush.bf16.msra.mxu0 0
      %4610 = vmatpush.bf16.msra.mxu0 0
      %4611 = vmatpush.bf16.msra.mxu0 0
      %4612 = vmatpush.bf16.msra.mxu0 0
      %4613 = vmatpush.bf16.msra.mxu0 0
      %4614 = vmatpush.bf16.msra.mxu0 0
      %4615 = vmatpush.bf16.msra.mxu0 0
      %4616 = vmatpush.bf16.msra.mxu0 %v4607
      %4617 = vmatmul.bf16.gmra.mxu0 %v4559
      %v4618 = vpop.f32.mrf.mxu0
      %v4619 = vadd.f32 0.0, %v4618
      %v4620 = vpop.f32.mrf.mxu0
      %v4621 = vadd.f32 0.0, %v4620
      %4622 = vmatmul.bf16.gmra.mxu0 %v4562
      %v4623 = vpop.f32.mrf.mxu0
      %v4624 = vadd.f32 0.0, %v4623
      %v4625 = vpop.f32.mrf.mxu0
      %v4626 = vadd.f32 0.0, %v4625
      %4627 = vmatmul.bf16.gmra.mxu0 %v4565
      %v4628 = vpop.f32.mrf.mxu0
      %v4629 = vadd.f32 0.0, %v4628
      %v4630 = vpop.f32.mrf.mxu0
      %v4631 = vadd.f32 0.0, %v4630
      %4632 = vmatmul.bf16.gmra.mxu0 %v4568
      %v4633 = vpop.f32.mrf.mxu0
      %v4634 = vadd.f32 0.0, %v4633
      %v4635 = vpop.f32.mrf.mxu0
      %v4636 = vadd.f32 0.0, %v4635
      %4637 = vmatmul.bf16.gmra.mxu0 %v4571
      %v4638 = vpop.f32.mrf.mxu0
      %v4639 = vadd.f32 0.0, %v4638
      %v4640 = vpop.f32.mrf.mxu0
      %v4641 = vadd.f32 0.0, %v4640
      %4642 = vmatmul.bf16.gmra.mxu0 %v4574
      %v4643 = vpop.f32.mrf.mxu0
      %v4644 = vadd.f32 0.0, %v4643
      %v4645 = vpop.f32.mrf.mxu0
      %v4646 = vadd.f32 0.0, %v4645
      %4647 = vmatmul.bf16.gmra.mxu0 %v4577
      %v4648 = vpop.f32.mrf.mxu0
      %v4649 = vadd.f32 0.0, %v4648
      %v4650 = vpop.f32.mrf.mxu0
      %v4651 = vadd.f32 0.0, %v4650
      %4652 = vmatmul.bf16.gmra.mxu0 %v4580
      %v4653 = vpop.f32.mrf.mxu0
      %v4654 = vadd.f32 0.0, %v4653
      %v4655 = vpop.f32.mrf.mxu0
      %v4656 = vadd.f32 0.0, %v4655
      %4657 = vmatmul.bf16.gmra.mxu0 %v4583
      %v4658 = vpop.f32.mrf.mxu0
      %v4659 = vadd.f32 0.0, %v4658
      %v4660 = vpop.f32.mrf.mxu0
      %v4661 = vadd.f32 0.0, %v4660
      %4662 = vmatmul.bf16.gmra.mxu0 %v4586
      %v4663 = vpop.f32.mrf.mxu0
      %v4664 = vadd.f32 0.0, %v4663
      %v4665 = vpop.f32.mrf.mxu0
      %v4666 = vadd.f32 0.0, %v4665
      %4667 = vmatmul.bf16.gmra.mxu0 %v4589
      %v4668 = vpop.f32.mrf.mxu0
      %v4669 = vadd.f32 0.0, %v4668
      %v4670 = vpop.f32.mrf.mxu0
      %v4671 = vadd.f32 0.0, %v4670
      %4672 = vmatmul.bf16.gmra.mxu0 %v4592
      %v4673 = vpop.f32.mrf.mxu0
      %v4674 = vadd.f32 0.0, %v4673
      %v4675 = vpop.f32.mrf.mxu0
      %v4676 = vadd.f32 0.0, %v4675
      %4677 = vmatmul.bf16.gmra.mxu0 %v4595
      %v4678 = vpop.f32.mrf.mxu0
      %v4679 = vadd.f32 0.0, %v4678
      %v4680 = vpop.f32.mrf.mxu0
      %v4681 = vadd.f32 0.0, %v4680
      %4682 = vmatmul.bf16.gmra.mxu0 %v4598
      %v4683 = vpop.f32.mrf.mxu0
      %v4684 = vadd.f32 0.0, %v4683
      %v4685 = vpop.f32.mrf.mxu0
      %v4686 = vadd.f32 0.0, %v4685
      %4687 = vmatmul.bf16.gmra.mxu0 %v4601
      %v4688 = vpop.f32.mrf.mxu0
      %v4689 = vadd.f32 0.0, %v4688
      %v4690 = vpop.f32.mrf.mxu0
      %v4691 = vadd.f32 0.0, %v4690
      %4692 = vmatmul.bf16.gmra.mxu0 %v4604
      %v4693 = vpop.f32.mrf.mxu0
      %v4694 = vadd.f32 0.0, %v4693
      %v4695 = vpop.f32.mrf.mxu0
      %v4696 = vadd.f32 0.0, %v4695
      %4697 = vdwg.mxu0
      %v4698 = vadd.f32 %v4476, %v4619
      %v4699 = vadd.f32 %v4477, %v4621
      %v4700 = vadd.f32 %v4478, %v4624
      %v4701 = vadd.f32 %v4479, %v4626
      %v4702 = vadd.f32 %v4480, %v4629
      %v4703 = vadd.f32 %v4481, %v4631
      %v4704 = vadd.f32 %v4482, %v4634
      %v4705 = vadd.f32 %v4483, %v4636
      %v4706 = vadd.f32 %v4484, %v4639
      %v4707 = vadd.f32 %v4485, %v4641
      %v4708 = vadd.f32 %v4486, %v4644
      %v4709 = vadd.f32 %v4487, %v4646
      %v4710 = vadd.f32 %v4488, %v4649
      %v4711 = vadd.f32 %v4489, %v4651
      %v4712 = vadd.f32 %v4490, %v4654
      %v4713 = vadd.f32 %v4491, %v4656
      %v4714 = vadd.f32 %v4492, %v4659
      %v4715 = vadd.f32 %v4493, %v4661
      %v4716 = vadd.f32 %v4494, %v4664
      %v4717 = vadd.f32 %v4495, %v4666
      %v4718 = vadd.f32 %v4496, %v4669
      %v4719 = vadd.f32 %v4497, %v4671
      %v4720 = vadd.f32 %v4498, %v4674
      %v4721 = vadd.f32 %v4499, %v4676
      %v4722 = vadd.f32 %v4500, %v4679
      %v4723 = vadd.f32 %v4501, %v4681
      %v4724 = vadd.f32 %v4502, %v4684
      %v4725 = vadd.f32 %v4503, %v4686
      %v4726 = vadd.f32 %v4504, %v4689
      %v4727 = vadd.f32 %v4505, %v4691
      %v4728 = vadd.f32 %v4506, %v4694
      %v4729 = vadd.f32 %v4507, %v4696
      %v4730 = vadd.f32 %v4698, %v3839
      %v4731 = vadd.f32 %v4699, %v3839
      %v4732 = vadd.f32 %v4700, %v3839
      %v4733 = vadd.f32 %v4701, %v3839
      %v4734 = vadd.f32 %v4702, %v3839
      %v4735 = vadd.f32 %v4703, %v3839
      %v4736 = vadd.f32 %v4704, %v3839
      %v4737 = vadd.f32 %v4705, %v3839
      %v4738 = vadd.f32 %v4706, %v3839
      %v4739 = vadd.f32 %v4707, %v3839
      %v4740 = vadd.f32 %v4708, %v3839
      %v4741 = vadd.f32 %v4709, %v3839
      %v4742 = vadd.f32 %v4710, %v3839
      %v4743 = vadd.f32 %v4711, %v3839
      %v4744 = vadd.f32 %v4712, %v3839
      %v4745 = vadd.f32 %v4713, %v3839
      %v4746 = vadd.f32 %v4714, %v3839
      %v4747 = vadd.f32 %v4715, %v3839
      %v4748 = vadd.f32 %v4716, %v3839
      %v4749 = vadd.f32 %v4717, %v3839
      %v4750 = vadd.f32 %v4718, %v3839
      %v4751 = vadd.f32 %v4719, %v3839
      %v4752 = vadd.f32 %v4720, %v3839
      %v4753 = vadd.f32 %v4721, %v3839
      %v4754 = vadd.f32 %v4722, %v3839
      %v4755 = vadd.f32 %v4723, %v3839
      %v4756 = vadd.f32 %v4724, %v3839
      %v4757 = vadd.f32 %v4725, %v3839
      %v4758 = vadd.f32 %v4726, %v3839
      %v4759 = vadd.f32 %v4727, %v3839
      %v4760 = vadd.f32 %v4728, %v3839
      %v4761 = vadd.f32 %v4729, %v3839
      %s4762 = scalar_lea.vmem %s278, 256
      %4763 = vst.msk [vmem:[%s4762] sm:$0xff] %vm3873, %v4730
      %4764 = vst.msk [vmem:[%s4762 + $0x8] sm:$0xff] %vm3873, %v4731
      %4765 = vst.msk [vmem:[%s4762 + $0x10] sm:$0xff] %vm3873, %v4732
      %4766 = vst.msk [vmem:[%s4762 + $0x18] sm:$0xff] %vm3873, %v4733
      %4767 = vst.msk [vmem:[%s4762 + $0x20] sm:$0xff] %vm3873, %v4734
      %4768 = vst.msk [vmem:[%s4762 + $0x28] sm:$0xff] %vm3873, %v4735
      %4769 = vst.msk [vmem:[%s4762 + $0x30] sm:$0xff] %vm3873, %v4736
      %4770 = vst.msk [vmem:[%s4762 + $0x38] sm:$0xff] %vm3873, %v4737
      %4771 = vst.msk [vmem:[%s4762 + $0x40] sm:$0xff] %vm3873, %v4738
      %4772 = vst.msk [vmem:[%s4762 + $0x48] sm:$0xff] %vm3873, %v4739
      %4773 = vst.msk [vmem:[%s4762 + $0x50] sm:$0xff] %vm3873, %v4740
      %4774 = vst.msk [vmem:[%s4762 + $0x58] sm:$0xff] %vm3873, %v4741
      %4775 = vst.msk [vmem:[%s4762 + $0x60] sm:$0xff] %vm3873, %v4742
      %4776 = vst.msk [vmem:[%s4762 + $0x68] sm:$0xff] %vm3873, %v4743
      %4777 = vst.msk [vmem:[%s4762 + $0x70] sm:$0xff] %vm3873, %v4744
      %4778 = vst.msk [vmem:[%s4762 + $0x78] sm:$0xff] %vm3873, %v4745
      %4779 = vst.msk [vmem:[%s4762 + $0x80] sm:$0xff] %vm3873, %v4746
      %4780 = vst.msk [vmem:[%s4762 + $0x88] sm:$0xff] %vm3873, %v4747
      %4781 = vst.msk [vmem:[%s4762 + $0x90] sm:$0xff] %vm3873, %v4748
      %4782 = vst.msk [vmem:[%s4762 + $0x98] sm:$0xff] %vm3873, %v4749
      %4783 = vst.msk [vmem:[%s4762 + $0xa0] sm:$0xff] %vm3873, %v4750
      %4784 = vst.msk [vmem:[%s4762 + $0xa8] sm:$0xff] %vm3873, %v4751
      %4785 = vst.msk [vmem:[%s4762 + $0xb0] sm:$0xff] %vm3873, %v4752
      %4786 = vst.msk [vmem:[%s4762 + $0xb8] sm:$0xff] %vm3873, %v4753
      %4787 = vst.msk [vmem:[%s4762 + $0xc0] sm:$0xff] %vm3873, %v4754
      %4788 = vst.msk [vmem:[%s4762 + $0xc8] sm:$0xff] %vm3873, %v4755
      %4789 = vst.msk [vmem:[%s4762 + $0xd0] sm:$0xff] %vm3873, %v4756
      %4790 = vst.msk [vmem:[%s4762 + $0xd8] sm:$0xff] %vm3873, %v4757
      %4791 = vst.msk [vmem:[%s4762 + $0xe0] sm:$0xff] %vm3873, %v4758
      %4792 = vst.msk [vmem:[%s4762 + $0xe8] sm:$0xff] %vm3873, %v4759
      %4793 = vst.msk [vmem:[%s4762 + $0xf0] sm:$0xff] %vm3873, %v4760
      %4794 = vst.msk [vmem:[%s4762 + $0xf8] sm:$0xff] %vm3873, %v4761
      %v4795 = vld [vmem:[%s2981 + $0x7] sm:$0xff]
      %v4796 = vld [vmem:[%s2981 + $0xf] sm:$0xff]
      %v4797 = vld [vmem:[%s2981 + $0x27] sm:$0xff]
      %v4798 = vld [vmem:[%s2981 + $0x2f] sm:$0xff]
      %v4799 = vld [vmem:[%s2981 + $0x47] sm:$0xff]
      %v4800 = vld [vmem:[%s2981 + $0x4f] sm:$0xff]
      %v4801 = vld [vmem:[%s2981 + $0x67] sm:$0xff]
      %v4802 = vld [vmem:[%s2981 + $0x6f] sm:$0xff]
      %v4803 = vld [vmem:[%s2981 + $0x87] sm:$0xff]
      %v4804 = vld [vmem:[%s2981 + $0x8f] sm:$0xff]
      %v4805 = vld [vmem:[%s2981 + $0xa7] sm:$0xff]
      %v4806 = vld [vmem:[%s2981 + $0xaf] sm:$0xff]
      %v4807 = vld [vmem:[%s2981 + $0xc7] sm:$0xff]
      %v4808 = vld [vmem:[%s2981 + $0xcf] sm:$0xff]
      %v4809 = vld [vmem:[%s2981 + $0xe7] sm:$0xff]
      %v4810 = vld [vmem:[%s2981 + $0xef] sm:$0xff]
      %v4811 = vld [vmem:[%s2981 + $0x107] sm:$0xff]
      %v4812 = vld [vmem:[%s2981 + $0x10f] sm:$0xff]
      %v4813 = vld [vmem:[%s2981 + $0x127] sm:$0xff]
      %v4814 = vld [vmem:[%s2981 + $0x12f] sm:$0xff]
      %v4815 = vld [vmem:[%s2981 + $0x147] sm:$0xff]
      %v4816 = vld [vmem:[%s2981 + $0x14f] sm:$0xff]
      %v4817 = vld [vmem:[%s2981 + $0x167] sm:$0xff]
      %v4818 = vld [vmem:[%s2981 + $0x16f] sm:$0xff]
      %v4819 = vld [vmem:[%s2981 + $0x187] sm:$0xff]
      %v4820 = vld [vmem:[%s2981 + $0x18f] sm:$0xff]
      %v4821 = vld [vmem:[%s2981 + $0x1a7] sm:$0xff]
      %v4822 = vld [vmem:[%s2981 + $0x1af] sm:$0xff]
      %v4823 = vld [vmem:[%s2981 + $0x1c7] sm:$0xff]
      %v4824 = vld [vmem:[%s2981 + $0x1cf] sm:$0xff]
      %v4825 = vld [vmem:[%s2981 + $0x1e7] sm:$0xff]
      %v4826 = vld [vmem:[%s2981 + $0x1ef] sm:$0xff]
      %v4827 = vpack.c.bf16 %v4796, %v4795
      %v4828 = vpack.c.bf16 %v4798, %v4797
      %v4829 = vpack.c.bf16 %v4800, %v4799
      %v4830 = vpack.c.bf16 %v4802, %v4801
      %v4831 = vpack.c.bf16 %v4804, %v4803
      %v4832 = vpack.c.bf16 %v4806, %v4805
      %v4833 = vpack.c.bf16 %v4808, %v4807
      %v4834 = vpack.c.bf16 %v4810, %v4809
      %v4835 = vpack.c.bf16 %v4812, %v4811
      %v4836 = vpack.c.bf16 %v4814, %v4813
      %v4837 = vpack.c.bf16 %v4816, %v4815
      %v4838 = vpack.c.bf16 %v4818, %v4817
      %v4839 = vpack.c.bf16 %v4820, %v4819
      %v4840 = vpack.c.bf16 %v4822, %v4821
      %v4841 = vpack.c.bf16 %v4824, %v4823
      %v4842 = vpack.c.bf16 %v4826, %v4825
      %s4843 = scalar_lea.vmem %s5, 32
      %v4844 = vld [vmem:[%s4843] sm:$0xf]
      %v4845 = vld [vmem:[%s2981 + $0x8] sm:$0xff]
      %v4846 = vld [vmem:[%s2981 + $0x10] sm:$0xff]
      %v4847 = vld [vmem:[%s2981 + $0x28] sm:$0xff]
      %v4848 = vld [vmem:[%s2981 + $0x30] sm:$0xff]
      %v4849 = vld [vmem:[%s2981 + $0x48] sm:$0xff]
      %v4850 = vld [vmem:[%s2981 + $0x50] sm:$0xff]
      %v4851 = vld [vmem:[%s2981 + $0x68] sm:$0xff]
      %v4852 = vld [vmem:[%s2981 + $0x70] sm:$0xff]
      %v4853 = vld [vmem:[%s2981 + $0x88] sm:$0xff]
      %v4854 = vld [vmem:[%s2981 + $0x90] sm:$0xff]
      %v4855 = vld [vmem:[%s2981 + $0xa8] sm:$0xff]
      %v4856 = vld [vmem:[%s2981 + $0xb0] sm:$0xff]
      %v4857 = vld [vmem:[%s2981 + $0xc8] sm:$0xff]
      %v4858 = vld [vmem:[%s2981 + $0xd0] sm:$0xff]
      %v4859 = vld [vmem:[%s2981 + $0xe8] sm:$0xff]
      %v4860 = vld [vmem:[%s2981 + $0xf0] sm:$0xff]
      %v4861 = vld [vmem:[%s2981 + $0x108] sm:$0xff]
      %v4862 = vld [vmem:[%s2981 + $0x110] sm:$0xff]
      %v4863 = vld [vmem:[%s2981 + $0x128] sm:$0xff]
      %v4864 = vld [vmem:[%s2981 + $0x130] sm:$0xff]
      %v4865 = vld [vmem:[%s2981 + $0x148] sm:$0xff]
      %v4866 = vld [vmem:[%s2981 + $0x150] sm:$0xff]
      %v4867 = vld [vmem:[%s2981 + $0x168] sm:$0xff]
      %v4868 = vld [vmem:[%s2981 + $0x170] sm:$0xff]
      %v4869 = vld [vmem:[%s2981 + $0x188] sm:$0xff]
      %v4870 = vld [vmem:[%s2981 + $0x190] sm:$0xff]
      %v4871 = vld [vmem:[%s2981 + $0x1a8] sm:$0xff]
      %v4872 = vld [vmem:[%s2981 + $0x1b0] sm:$0xff]
      %v4873 = vld [vmem:[%s2981 + $0x1c8] sm:$0xff]
      %v4874 = vld [vmem:[%s2981 + $0x1d0] sm:$0xff]
      %v4875 = vld [vmem:[%s2981 + $0x1e8] sm:$0xff]
      %v4876 = vld [vmem:[%s2981 + $0x1f0] sm:$0xff]
      %v4877 = vpack.c.bf16 %v4846, %v4845
      %v4878 = vpack.c.bf16 %v4848, %v4847
      %v4879 = vpack.c.bf16 %v4850, %v4849
      %v4880 = vpack.c.bf16 %v4852, %v4851
      %v4881 = vpack.c.bf16 %v4854, %v4853
      %v4882 = vpack.c.bf16 %v4856, %v4855
      %v4883 = vpack.c.bf16 %v4858, %v4857
      %v4884 = vpack.c.bf16 %v4860, %v4859
      %v4885 = vpack.c.bf16 %v4862, %v4861
      %v4886 = vpack.c.bf16 %v4864, %v4863
      %v4887 = vpack.c.bf16 %v4866, %v4865
      %v4888 = vpack.c.bf16 %v4868, %v4867
      %v4889 = vpack.c.bf16 %v4870, %v4869
      %v4890 = vpack.c.bf16 %v4872, %v4871
      %v4891 = vpack.c.bf16 %v4874, %v4873
      %v4892 = vpack.c.bf16 %v4876, %v4875
      %s4893 = scalar_lea.vmem %s5, 36
      %v4894 = vld [vmem:[%s4893] sm:$0xf]
      %v4896 = vsel %vm880, %v4877, 0
      %v4899 = vsel %vm880, %v4878, 0
      %v4902 = vsel %vm880, %v4879, 0
      %v4905 = vsel %vm880, %v4880, 0
      %v4908 = vsel %vm880, %v4881, 0
      %v4911 = vsel %vm880, %v4882, 0
      %v4914 = vsel %vm880, %v4883, 0
      %v4917 = vsel %vm880, %v4884, 0
      %v4920 = vsel %vm880, %v4885, 0
      %v4923 = vsel %vm880, %v4886, 0
      %v4926 = vsel %vm880, %v4887, 0
      %v4929 = vsel %vm880, %v4888, 0
      %v4932 = vsel %vm880, %v4889, 0
      %v4935 = vsel %vm880, %v4890, 0
      %v4938 = vsel %vm880, %v4891, 0
      %v4941 = vsel %vm880, %v4892, 0
      %v4944 = vsel %vm929, %v4894, 0
      %4946 = vmatpush.bf16.msra.mxu0 0
      %4947 = vmatpush.bf16.msra.mxu0 0
      %4948 = vmatpush.bf16.msra.mxu0 0
      %4949 = vmatpush.bf16.msra.mxu0 0
      %4950 = vmatpush.bf16.msra.mxu0 0
      %4951 = vmatpush.bf16.msra.mxu0 0
      %4952 = vmatpush.bf16.msra.mxu0 0
      %4953 = vmatpush.bf16.msra.mxu0 %v4944
      %4954 = vmatmul.bf16.gmra.mxu0 %v4896
      %v4955 = vpop.f32.mrf.mxu0
      %v4956 = vadd.f32 0.0, %v4955
      %v4957 = vpop.f32.mrf.mxu0
      %v4958 = vadd.f32 0.0, %v4957
      %4959 = vmatmul.bf16.gmra.mxu0 %v4899
      %v4960 = vpop.f32.mrf.mxu0
      %v4961 = vadd.f32 0.0, %v4960
      %v4962 = vpop.f32.mrf.mxu0
      %v4963 = vadd.f32 0.0, %v4962
      %4964 = vmatmul.bf16.gmra.mxu0 %v4902
      %v4965 = vpop.f32.mrf.mxu0
      %v4966 = vadd.f32 0.0, %v4965
      %v4967 = vpop.f32.mrf.mxu0
      %v4968 = vadd.f32 0.0, %v4967
      %4969 = vmatmul.bf16.gmra.mxu0 %v4905
      %v4970 = vpop.f32.mrf.mxu0
      %v4971 = vadd.f32 0.0, %v4970
      %v4972 = vpop.f32.mrf.mxu0
      %v4973 = vadd.f32 0.0, %v4972
      %4974 = vmatmul.bf16.gmra.mxu0 %v4908
      %v4975 = vpop.f32.mrf.mxu0
      %v4976 = vadd.f32 0.0, %v4975
      %v4977 = vpop.f32.mrf.mxu0
      %v4978 = vadd.f32 0.0, %v4977
      %4979 = vmatmul.bf16.gmra.mxu0 %v4911
      %v4980 = vpop.f32.mrf.mxu0
      %v4981 = vadd.f32 0.0, %v4980
      %v4982 = vpop.f32.mrf.mxu0
      %v4983 = vadd.f32 0.0, %v4982
      %4984 = vmatmul.bf16.gmra.mxu0 %v4914
      %v4985 = vpop.f32.mrf.mxu0
      %v4986 = vadd.f32 0.0, %v4985
      %v4987 = vpop.f32.mrf.mxu0
      %v4988 = vadd.f32 0.0, %v4987
      %4989 = vmatmul.bf16.gmra.mxu0 %v4917
      %v4990 = vpop.f32.mrf.mxu0
      %v4991 = vadd.f32 0.0, %v4990
      %v4992 = vpop.f32.mrf.mxu0
      %v4993 = vadd.f32 0.0, %v4992
      %4994 = vmatmul.bf16.gmra.mxu0 %v4920
      %v4995 = vpop.f32.mrf.mxu0
      %v4996 = vadd.f32 0.0, %v4995
      %v4997 = vpop.f32.mrf.mxu0
      %v4998 = vadd.f32 0.0, %v4997
      %4999 = vmatmul.bf16.gmra.mxu0 %v4923
      %v5000 = vpop.f32.mrf.mxu0
      %v5001 = vadd.f32 0.0, %v5000
      %v5002 = vpop.f32.mrf.mxu0
      %v5003 = vadd.f32 0.0, %v5002
      %5004 = vmatmul.bf16.gmra.mxu0 %v4926
      %v5005 = vpop.f32.mrf.mxu0
      %v5006 = vadd.f32 0.0, %v5005
      %v5007 = vpop.f32.mrf.mxu0
      %v5008 = vadd.f32 0.0, %v5007
      %5009 = vmatmul.bf16.gmra.mxu0 %v4929
      %v5010 = vpop.f32.mrf.mxu0
      %v5011 = vadd.f32 0.0, %v5010
      %v5012 = vpop.f32.mrf.mxu0
      %v5013 = vadd.f32 0.0, %v5012
      %5014 = vmatmul.bf16.gmra.mxu0 %v4932
      %v5015 = vpop.f32.mrf.mxu0
      %v5016 = vadd.f32 0.0, %v5015
      %v5017 = vpop.f32.mrf.mxu0
      %v5018 = vadd.f32 0.0, %v5017
      %5019 = vmatmul.bf16.gmra.mxu0 %v4935
      %v5020 = vpop.f32.mrf.mxu0
      %v5021 = vadd.f32 0.0, %v5020
      %v5022 = vpop.f32.mrf.mxu0
      %v5023 = vadd.f32 0.0, %v5022
      %5024 = vmatmul.bf16.gmra.mxu0 %v4938
      %v5025 = vpop.f32.mrf.mxu0
      %v5026 = vadd.f32 0.0, %v5025
      %v5027 = vpop.f32.mrf.mxu0
      %v5028 = vadd.f32 0.0, %v5027
      %5029 = vmatmul.bf16.gmra.mxu0 %v4941
      %v5030 = vpop.f32.mrf.mxu0
      %v5031 = vadd.f32 0.0, %v5030
      %v5032 = vpop.f32.mrf.mxu0
      %v5033 = vadd.f32 0.0, %v5032
      %5034 = vdwg.mxu0
      %v5036 = vsel %vm880, %v4827, 0
      %v5039 = vsel %vm880, %v4828, 0
      %v5042 = vsel %vm880, %v4829, 0
      %v5045 = vsel %vm880, %v4830, 0
      %v5048 = vsel %vm880, %v4831, 0
      %v5051 = vsel %vm880, %v4832, 0
      %v5054 = vsel %vm880, %v4833, 0
      %v5057 = vsel %vm880, %v4834, 0
      %v5060 = vsel %vm880, %v4835, 0
      %v5063 = vsel %vm880, %v4836, 0
      %v5066 = vsel %vm880, %v4837, 0
      %v5069 = vsel %vm880, %v4838, 0
      %v5072 = vsel %vm880, %v4839, 0
      %v5075 = vsel %vm880, %v4840, 0
      %v5078 = vsel %vm880, %v4841, 0
      %v5081 = vsel %vm880, %v4842, 0
      %v5084 = vsel %vm929, %v4844, 0
      %5086 = vmatpush.bf16.msra.mxu0 0
      %5087 = vmatpush.bf16.msra.mxu0 0
      %5088 = vmatpush.bf16.msra.mxu0 0
      %5089 = vmatpush.bf16.msra.mxu0 0
      %5090 = vmatpush.bf16.msra.mxu0 0
      %5091 = vmatpush.bf16.msra.mxu0 0
      %5092 = vmatpush.bf16.msra.mxu0 0
      %5093 = vmatpush.bf16.msra.mxu0 %v5084
      %5094 = vmatmul.bf16.gmra.mxu0 %v5036
      %v5095 = vpop.f32.mrf.mxu0
      %v5096 = vadd.f32 %v4956, %v5095
      %v5097 = vpop.f32.mrf.mxu0
      %v5098 = vadd.f32 %v4958, %v5097
      %5099 = vmatmul.bf16.gmra.mxu0 %v5039
      %v5100 = vpop.f32.mrf.mxu0
      %v5101 = vadd.f32 %v4961, %v5100
      %v5102 = vpop.f32.mrf.mxu0
      %v5103 = vadd.f32 %v4963, %v5102
      %5104 = vmatmul.bf16.gmra.mxu0 %v5042
      %v5105 = vpop.f32.mrf.mxu0
      %v5106 = vadd.f32 %v4966, %v5105
      %v5107 = vpop.f32.mrf.mxu0
      %v5108 = vadd.f32 %v4968, %v5107
      %5109 = vmatmul.bf16.gmra.mxu0 %v5045
      %v5110 = vpop.f32.mrf.mxu0
      %v5111 = vadd.f32 %v4971, %v5110
      %v5112 = vpop.f32.mrf.mxu0
      %v5113 = vadd.f32 %v4973, %v5112
      %5114 = vmatmul.bf16.gmra.mxu0 %v5048
      %v5115 = vpop.f32.mrf.mxu0
      %v5116 = vadd.f32 %v4976, %v5115
      %v5117 = vpop.f32.mrf.mxu0
      %v5118 = vadd.f32 %v4978, %v5117
      %5119 = vmatmul.bf16.gmra.mxu0 %v5051
      %v5120 = vpop.f32.mrf.mxu0
      %v5121 = vadd.f32 %v4981, %v5120
      %v5122 = vpop.f32.mrf.mxu0
      %v5123 = vadd.f32 %v4983, %v5122
      %5124 = vmatmul.bf16.gmra.mxu0 %v5054
      %v5125 = vpop.f32.mrf.mxu0
      %v5126 = vadd.f32 %v4986, %v5125
      %v5127 = vpop.f32.mrf.mxu0
      %v5128 = vadd.f32 %v4988, %v5127
      %5129 = vmatmul.bf16.gmra.mxu0 %v5057
      %v5130 = vpop.f32.mrf.mxu0
      %v5131 = vadd.f32 %v4991, %v5130
      %v5132 = vpop.f32.mrf.mxu0
      %v5133 = vadd.f32 %v4993, %v5132
      %5134 = vmatmul.bf16.gmra.mxu0 %v5060
      %v5135 = vpop.f32.mrf.mxu0
      %v5136 = vadd.f32 %v4996, %v5135
      %v5137 = vpop.f32.mrf.mxu0
      %v5138 = vadd.f32 %v4998, %v5137
      %5139 = vmatmul.bf16.gmra.mxu0 %v5063
      %v5140 = vpop.f32.mrf.mxu0
      %v5141 = vadd.f32 %v5001, %v5140
      %v5142 = vpop.f32.mrf.mxu0
      %v5143 = vadd.f32 %v5003, %v5142
      %5144 = vmatmul.bf16.gmra.mxu0 %v5066
      %v5145 = vpop.f32.mrf.mxu0
      %v5146 = vadd.f32 %v5006, %v5145
      %v5147 = vpop.f32.mrf.mxu0
      %v5148 = vadd.f32 %v5008, %v5147
      %5149 = vmatmul.bf16.gmra.mxu0 %v5069
      %v5150 = vpop.f32.mrf.mxu0
      %v5151 = vadd.f32 %v5011, %v5150
      %v5152 = vpop.f32.mrf.mxu0
      %v5153 = vadd.f32 %v5013, %v5152
      %5154 = vmatmul.bf16.gmra.mxu0 %v5072
      %v5155 = vpop.f32.mrf.mxu0
      %v5156 = vadd.f32 %v5016, %v5155
      %v5157 = vpop.f32.mrf.mxu0
      %v5158 = vadd.f32 %v5018, %v5157
      %5159 = vmatmul.bf16.gmra.mxu0 %v5075
      %v5160 = vpop.f32.mrf.mxu0
      %v5161 = vadd.f32 %v5021, %v5160
      %v5162 = vpop.f32.mrf.mxu0
      %v5163 = vadd.f32 %v5023, %v5162
      %5164 = vmatmul.bf16.gmra.mxu0 %v5078
      %v5165 = vpop.f32.mrf.mxu0
      %v5166 = vadd.f32 %v5026, %v5165
      %v5167 = vpop.f32.mrf.mxu0
      %v5168 = vadd.f32 %v5028, %v5167
      %5169 = vmatmul.bf16.gmra.mxu0 %v5081
      %v5170 = vpop.f32.mrf.mxu0
      %v5171 = vadd.f32 %v5031, %v5170
      %v5172 = vpop.f32.mrf.mxu0
      %v5173 = vadd.f32 %v5033, %v5172
      %5174 = vdwg.mxu0
      %s5175 = scalar_lea.vmem [#allocation2], 64
      %v5176 = vld [vmem:[%s5175 + $0x7] sm:$0xff]
      %v5177 = vld [vmem:[%s5175 + $0xf] sm:$0xff]
      %v5178 = vld [vmem:[%s5175 + $0x27] sm:$0xff]
      %v5179 = vld [vmem:[%s5175 + $0x2f] sm:$0xff]
      %v5180 = vld [vmem:[%s5175 + $0x47] sm:$0xff]
      %v5181 = vld [vmem:[%s5175 + $0x4f] sm:$0xff]
      %v5182 = vld [vmem:[%s5175 + $0x67] sm:$0xff]
      %v5183 = vld [vmem:[%s5175 + $0x6f] sm:$0xff]
      %v5184 = vld [vmem:[%s5175 + $0x87] sm:$0xff]
      %v5185 = vld [vmem:[%s5175 + $0x8f] sm:$0xff]
      %v5186 = vld [vmem:[%s5175 + $0xa7] sm:$0xff]
      %v5187 = vld [vmem:[%s5175 + $0xaf] sm:$0xff]
      %v5188 = vld [vmem:[%s5175 + $0xc7] sm:$0xff]
      %v5189 = vld [vmem:[%s5175 + $0xcf] sm:$0xff]
      %v5190 = vld [vmem:[%s5175 + $0xe7] sm:$0xff]
      %v5191 = vld [vmem:[%s5175 + $0xef] sm:$0xff]
      %v5192 = vld [vmem:[%s5175 + $0x107] sm:$0xff]
      %v5193 = vld [vmem:[%s5175 + $0x10f] sm:$0xff]
      %v5194 = vld [vmem:[%s5175 + $0x127] sm:$0xff]
      %v5195 = vld [vmem:[%s5175 + $0x12f] sm:$0xff]
      %v5196 = vld [vmem:[%s5175 + $0x147] sm:$0xff]
      %v5197 = vld [vmem:[%s5175 + $0x14f] sm:$0xff]
      %v5198 = vld [vmem:[%s5175 + $0x167] sm:$0xff]
      %v5199 = vld [vmem:[%s5175 + $0x16f] sm:$0xff]
      %v5200 = vld [vmem:[%s5175 + $0x187] sm:$0xff]
      %v5201 = vld [vmem:[%s5175 + $0x18f] sm:$0xff]
      %v5202 = vld [vmem:[%s5175 + $0x1a7] sm:$0xff]
      %v5203 = vld [vmem:[%s5175 + $0x1af] sm:$0xff]
      %v5204 = vld [vmem:[%s5175 + $0x1c7] sm:$0xff]
      %v5205 = vld [vmem:[%s5175 + $0x1cf] sm:$0xff]
      %v5206 = vld [vmem:[%s5175 + $0x1e7] sm:$0xff]
      %v5207 = vld [vmem:[%s5175 + $0x1ef] sm:$0xff]
      %v5208 = vpack.c.bf16 %v5177, %v5176
      %v5209 = vpack.c.bf16 %v5179, %v5178
      %v5210 = vpack.c.bf16 %v5181, %v5180
      %v5211 = vpack.c.bf16 %v5183, %v5182
      %v5212 = vpack.c.bf16 %v5185, %v5184
      %v5213 = vpack.c.bf16 %v5187, %v5186
      %v5214 = vpack.c.bf16 %v5189, %v5188
      %v5215 = vpack.c.bf16 %v5191, %v5190
      %v5216 = vpack.c.bf16 %v5193, %v5192
      %v5217 = vpack.c.bf16 %v5195, %v5194
      %v5218 = vpack.c.bf16 %v5197, %v5196
      %v5219 = vpack.c.bf16 %v5199, %v5198
      %v5220 = vpack.c.bf16 %v5201, %v5200
      %v5221 = vpack.c.bf16 %v5203, %v5202
      %v5222 = vpack.c.bf16 %v5205, %v5204
      %v5223 = vpack.c.bf16 %v5207, %v5206
      %s5224 = scalar_lea.vmem %s5, 40
      %v5225 = vld [vmem:[%s5224] sm:$0xf]
      %v5227 = vsel %vm880, %v5208, 0
      %v5230 = vsel %vm880, %v5209, 0
      %v5233 = vsel %vm880, %v5210, 0
      %v5236 = vsel %vm880, %v5211, 0
      %v5239 = vsel %vm880, %v5212, 0
      %v5242 = vsel %vm880, %v5213, 0
      %v5245 = vsel %vm880, %v5214, 0
      %v5248 = vsel %vm880, %v5215, 0
      %v5251 = vsel %vm880, %v5216, 0
      %v5254 = vsel %vm880, %v5217, 0
      %v5257 = vsel %vm880, %v5218, 0
      %v5260 = vsel %vm880, %v5219, 0
      %v5263 = vsel %vm880, %v5220, 0
      %v5266 = vsel %vm880, %v5221, 0
      %v5269 = vsel %vm880, %v5222, 0
      %v5272 = vsel %vm880, %v5223, 0
      %v5275 = vsel %vm929, %v5225, 0
      %5277 = vmatpush.bf16.msra.mxu0 0
      %5278 = vmatpush.bf16.msra.mxu0 0
      %5279 = vmatpush.bf16.msra.mxu0 0
      %5280 = vmatpush.bf16.msra.mxu0 0
      %5281 = vmatpush.bf16.msra.mxu0 0
      %5282 = vmatpush.bf16.msra.mxu0 0
      %5283 = vmatpush.bf16.msra.mxu0 0
      %5284 = vmatpush.bf16.msra.mxu0 %v5275
      %5285 = vmatmul.bf16.gmra.mxu0 %v5227
      %v5286 = vpop.f32.mrf.mxu0
      %v5287 = vadd.f32 0.0, %v5286
      %v5288 = vpop.f32.mrf.mxu0
      %v5289 = vadd.f32 0.0, %v5288
      %5290 = vmatmul.bf16.gmra.mxu0 %v5230
      %v5291 = vpop.f32.mrf.mxu0
      %v5292 = vadd.f32 0.0, %v5291
      %v5293 = vpop.f32.mrf.mxu0
      %v5294 = vadd.f32 0.0, %v5293
      %5295 = vmatmul.bf16.gmra.mxu0 %v5233
      %v5296 = vpop.f32.mrf.mxu0
      %v5297 = vadd.f32 0.0, %v5296
      %v5298 = vpop.f32.mrf.mxu0
      %v5299 = vadd.f32 0.0, %v5298
      %5300 = vmatmul.bf16.gmra.mxu0 %v5236
      %v5301 = vpop.f32.mrf.mxu0
      %v5302 = vadd.f32 0.0, %v5301
      %v5303 = vpop.f32.mrf.mxu0
      %v5304 = vadd.f32 0.0, %v5303
      %5305 = vmatmul.bf16.gmra.mxu0 %v5239
      %v5306 = vpop.f32.mrf.mxu0
      %v5307 = vadd.f32 0.0, %v5306
      %v5308 = vpop.f32.mrf.mxu0
      %v5309 = vadd.f32 0.0, %v5308
      %5310 = vmatmul.bf16.gmra.mxu0 %v5242
      %v5311 = vpop.f32.mrf.mxu0
      %v5312 = vadd.f32 0.0, %v5311
      %v5313 = vpop.f32.mrf.mxu0
      %v5314 = vadd.f32 0.0, %v5313
      %5315 = vmatmul.bf16.gmra.mxu0 %v5245
      %v5316 = vpop.f32.mrf.mxu0
      %v5317 = vadd.f32 0.0, %v5316
      %v5318 = vpop.f32.mrf.mxu0
      %v5319 = vadd.f32 0.0, %v5318
      %5320 = vmatmul.bf16.gmra.mxu0 %v5248
      %v5321 = vpop.f32.mrf.mxu0
      %v5322 = vadd.f32 0.0, %v5321
      %v5323 = vpop.f32.mrf.mxu0
      %v5324 = vadd.f32 0.0, %v5323
      %5325 = vmatmul.bf16.gmra.mxu0 %v5251
      %v5326 = vpop.f32.mrf.mxu0
      %v5327 = vadd.f32 0.0, %v5326
      %v5328 = vpop.f32.mrf.mxu0
      %v5329 = vadd.f32 0.0, %v5328
      %5330 = vmatmul.bf16.gmra.mxu0 %v5254
      %v5331 = vpop.f32.mrf.mxu0
      %v5332 = vadd.f32 0.0, %v5331
      %v5333 = vpop.f32.mrf.mxu0
      %v5334 = vadd.f32 0.0, %v5333
      %5335 = vmatmul.bf16.gmra.mxu0 %v5257
      %v5336 = vpop.f32.mrf.mxu0
      %v5337 = vadd.f32 0.0, %v5336
      %v5338 = vpop.f32.mrf.mxu0
      %v5339 = vadd.f32 0.0, %v5338
      %5340 = vmatmul.bf16.gmra.mxu0 %v5260
      %v5341 = vpop.f32.mrf.mxu0
      %v5342 = vadd.f32 0.0, %v5341
      %v5343 = vpop.f32.mrf.mxu0
      %v5344 = vadd.f32 0.0, %v5343
      %5345 = vmatmul.bf16.gmra.mxu0 %v5263
      %v5346 = vpop.f32.mrf.mxu0
      %v5347 = vadd.f32 0.0, %v5346
      %v5348 = vpop.f32.mrf.mxu0
      %v5349 = vadd.f32 0.0, %v5348
      %5350 = vmatmul.bf16.gmra.mxu0 %v5266
      %v5351 = vpop.f32.mrf.mxu0
      %v5352 = vadd.f32 0.0, %v5351
      %v5353 = vpop.f32.mrf.mxu0
      %v5354 = vadd.f32 0.0, %v5353
      %5355 = vmatmul.bf16.gmra.mxu0 %v5269
      %v5356 = vpop.f32.mrf.mxu0
      %v5357 = vadd.f32 0.0, %v5356
      %v5358 = vpop.f32.mrf.mxu0
      %v5359 = vadd.f32 0.0, %v5358
      %5360 = vmatmul.bf16.gmra.mxu0 %v5272
      %v5361 = vpop.f32.mrf.mxu0
      %v5362 = vadd.f32 0.0, %v5361
      %v5363 = vpop.f32.mrf.mxu0
      %v5364 = vadd.f32 0.0, %v5363
      %5365 = vdwg.mxu0
      %v5366 = vadd.f32 %v5096, %v5287
      %v5367 = vadd.f32 %v5098, %v5289
      %v5368 = vadd.f32 %v5101, %v5292
      %v5369 = vadd.f32 %v5103, %v5294
      %v5370 = vadd.f32 %v5106, %v5297
      %v5371 = vadd.f32 %v5108, %v5299
      %v5372 = vadd.f32 %v5111, %v5302
      %v5373 = vadd.f32 %v5113, %v5304
      %v5374 = vadd.f32 %v5116, %v5307
      %v5375 = vadd.f32 %v5118, %v5309
      %v5376 = vadd.f32 %v5121, %v5312
      %v5377 = vadd.f32 %v5123, %v5314
      %v5378 = vadd.f32 %v5126, %v5317
      %v5379 = vadd.f32 %v5128, %v5319
      %v5380 = vadd.f32 %v5131, %v5322
      %v5381 = vadd.f32 %v5133, %v5324
      %v5382 = vadd.f32 %v5136, %v5327
      %v5383 = vadd.f32 %v5138, %v5329
      %v5384 = vadd.f32 %v5141, %v5332
      %v5385 = vadd.f32 %v5143, %v5334
      %v5386 = vadd.f32 %v5146, %v5337
      %v5387 = vadd.f32 %v5148, %v5339
      %v5388 = vadd.f32 %v5151, %v5342
      %v5389 = vadd.f32 %v5153, %v5344
      %v5390 = vadd.f32 %v5156, %v5347
      %v5391 = vadd.f32 %v5158, %v5349
      %v5392 = vadd.f32 %v5161, %v5352
      %v5393 = vadd.f32 %v5163, %v5354
      %v5394 = vadd.f32 %v5166, %v5357
      %v5395 = vadd.f32 %v5168, %v5359
      %v5396 = vadd.f32 %v5171, %v5362
      %v5397 = vadd.f32 %v5173, %v5364
      %v5398 = vld [vmem:[%s5175 + $0x8] sm:$0xff]
      %v5399 = vld [vmem:[%s5175 + $0x10] sm:$0xff]
      %v5400 = vld [vmem:[%s5175 + $0x28] sm:$0xff]
      %v5401 = vld [vmem:[%s5175 + $0x30] sm:$0xff]
      %v5402 = vld [vmem:[%s5175 + $0x48] sm:$0xff]
      %v5403 = vld [vmem:[%s5175 + $0x50] sm:$0xff]
      %v5404 = vld [vmem:[%s5175 + $0x68] sm:$0xff]
      %v5405 = vld [vmem:[%s5175 + $0x70] sm:$0xff]
      %v5406 = vld [vmem:[%s5175 + $0x88] sm:$0xff]
      %v5407 = vld [vmem:[%s5175 + $0x90] sm:$0xff]
      %v5408 = vld [vmem:[%s5175 + $0xa8] sm:$0xff]
      %v5409 = vld [vmem:[%s5175 + $0xb0] sm:$0xff]
      %v5410 = vld [vmem:[%s5175 + $0xc8] sm:$0xff]
      %v5411 = vld [vmem:[%s5175 + $0xd0] sm:$0xff]
      %v5412 = vld [vmem:[%s5175 + $0xe8] sm:$0xff]
      %v5413 = vld [vmem:[%s5175 + $0xf0] sm:$0xff]
      %v5414 = vld [vmem:[%s5175 + $0x108] sm:$0xff]
      %v5415 = vld [vmem:[%s5175 + $0x110] sm:$0xff]
      %v5416 = vld [vmem:[%s5175 + $0x128] sm:$0xff]
      %v5417 = vld [vmem:[%s5175 + $0x130] sm:$0xff]
      %v5418 = vld [vmem:[%s5175 + $0x148] sm:$0xff]
      %v5419 = vld [vmem:[%s5175 + $0x150] sm:$0xff]
      %v5420 = vld [vmem:[%s5175 + $0x168] sm:$0xff]
      %v5421 = vld [vmem:[%s5175 + $0x170] sm:$0xff]
      %v5422 = vld [vmem:[%s5175 + $0x188] sm:$0xff]
      %v5423 = vld [vmem:[%s5175 + $0x190] sm:$0xff]
      %v5424 = vld [vmem:[%s5175 + $0x1a8] sm:$0xff]
      %v5425 = vld [vmem:[%s5175 + $0x1b0] sm:$0xff]
      %v5426 = vld [vmem:[%s5175 + $0x1c8] sm:$0xff]
      %v5427 = vld [vmem:[%s5175 + $0x1d0] sm:$0xff]
      %v5428 = vld [vmem:[%s5175 + $0x1e8] sm:$0xff]
      %v5429 = vld [vmem:[%s5175 + $0x1f0] sm:$0xff]
      %v5430 = vpack.c.bf16 %v5399, %v5398
      %v5431 = vpack.c.bf16 %v5401, %v5400
      %v5432 = vpack.c.bf16 %v5403, %v5402
      %v5433 = vpack.c.bf16 %v5405, %v5404
      %v5434 = vpack.c.bf16 %v5407, %v5406
      %v5435 = vpack.c.bf16 %v5409, %v5408
      %v5436 = vpack.c.bf16 %v5411, %v5410
      %v5437 = vpack.c.bf16 %v5413, %v5412
      %v5438 = vpack.c.bf16 %v5415, %v5414
      %v5439 = vpack.c.bf16 %v5417, %v5416
      %v5440 = vpack.c.bf16 %v5419, %v5418
      %v5441 = vpack.c.bf16 %v5421, %v5420
      %v5442 = vpack.c.bf16 %v5423, %v5422
      %v5443 = vpack.c.bf16 %v5425, %v5424
      %v5444 = vpack.c.bf16 %v5427, %v5426
      %v5445 = vpack.c.bf16 %v5429, %v5428
      %s5446 = scalar_lea.vmem %s5, 44
      %v5447 = vld [vmem:[%s5446] sm:$0xf]
      %v5449 = vsel %vm880, %v5430, 0
      %v5452 = vsel %vm880, %v5431, 0
      %v5455 = vsel %vm880, %v5432, 0
      %v5458 = vsel %vm880, %v5433, 0
      %v5461 = vsel %vm880, %v5434, 0
      %v5464 = vsel %vm880, %v5435, 0
      %v5467 = vsel %vm880, %v5436, 0
      %v5470 = vsel %vm880, %v5437, 0
      %v5473 = vsel %vm880, %v5438, 0
      %v5476 = vsel %vm880, %v5439, 0
      %v5479 = vsel %vm880, %v5440, 0
      %v5482 = vsel %vm880, %v5441, 0
      %v5485 = vsel %vm880, %v5442, 0
      %v5488 = vsel %vm880, %v5443, 0
      %v5491 = vsel %vm880, %v5444, 0
      %v5494 = vsel %vm880, %v5445, 0
      %v5497 = vsel %vm929, %v5447, 0
      %5499 = vmatpush.bf16.msra.mxu0 0
      %5500 = vmatpush.bf16.msra.mxu0 0
      %5501 = vmatpush.bf16.msra.mxu0 0
      %5502 = vmatpush.bf16.msra.mxu0 0
      %5503 = vmatpush.bf16.msra.mxu0 0
      %5504 = vmatpush.bf16.msra.mxu0 0
      %5505 = vmatpush.bf16.msra.mxu0 0
      %5506 = vmatpush.bf16.msra.mxu0 %v5497
      %5507 = vmatmul.bf16.gmra.mxu0 %v5449
      %v5508 = vpop.f32.mrf.mxu0
      %v5509 = vadd.f32 0.0, %v5508
      %v5510 = vpop.f32.mrf.mxu0
      %v5511 = vadd.f32 0.0, %v5510
      %5512 = vmatmul.bf16.gmra.mxu0 %v5452
      %v5513 = vpop.f32.mrf.mxu0
      %v5514 = vadd.f32 0.0, %v5513
      %v5515 = vpop.f32.mrf.mxu0
      %v5516 = vadd.f32 0.0, %v5515
      %5517 = vmatmul.bf16.gmra.mxu0 %v5455
      %v5518 = vpop.f32.mrf.mxu0
      %v5519 = vadd.f32 0.0, %v5518
      %v5520 = vpop.f32.mrf.mxu0
      %v5521 = vadd.f32 0.0, %v5520
      %5522 = vmatmul.bf16.gmra.mxu0 %v5458
      %v5523 = vpop.f32.mrf.mxu0
      %v5524 = vadd.f32 0.0, %v5523
      %v5525 = vpop.f32.mrf.mxu0
      %v5526 = vadd.f32 0.0, %v5525
      %5527 = vmatmul.bf16.gmra.mxu0 %v5461
      %v5528 = vpop.f32.mrf.mxu0
      %v5529 = vadd.f32 0.0, %v5528
      %v5530 = vpop.f32.mrf.mxu0
      %v5531 = vadd.f32 0.0, %v5530
      %5532 = vmatmul.bf16.gmra.mxu0 %v5464
      %v5533 = vpop.f32.mrf.mxu0
      %v5534 = vadd.f32 0.0, %v5533
      %v5535 = vpop.f32.mrf.mxu0
      %v5536 = vadd.f32 0.0, %v5535
      %5537 = vmatmul.bf16.gmra.mxu0 %v5467
      %v5538 = vpop.f32.mrf.mxu0
      %v5539 = vadd.f32 0.0, %v5538
      %v5540 = vpop.f32.mrf.mxu0
      %v5541 = vadd.f32 0.0, %v5540
      %5542 = vmatmul.bf16.gmra.mxu0 %v5470
      %v5543 = vpop.f32.mrf.mxu0
      %v5544 = vadd.f32 0.0, %v5543
      %v5545 = vpop.f32.mrf.mxu0
      %v5546 = vadd.f32 0.0, %v5545
      %5547 = vmatmul.bf16.gmra.mxu0 %v5473
      %v5548 = vpop.f32.mrf.mxu0
      %v5549 = vadd.f32 0.0, %v5548
      %v5550 = vpop.f32.mrf.mxu0
      %v5551 = vadd.f32 0.0, %v5550
      %5552 = vmatmul.bf16.gmra.mxu0 %v5476
      %v5553 = vpop.f32.mrf.mxu0
      %v5554 = vadd.f32 0.0, %v5553
      %v5555 = vpop.f32.mrf.mxu0
      %v5556 = vadd.f32 0.0, %v5555
      %5557 = vmatmul.bf16.gmra.mxu0 %v5479
      %v5558 = vpop.f32.mrf.mxu0
      %v5559 = vadd.f32 0.0, %v5558
      %v5560 = vpop.f32.mrf.mxu0
      %v5561 = vadd.f32 0.0, %v5560
      %5562 = vmatmul.bf16.gmra.mxu0 %v5482
      %v5563 = vpop.f32.mrf.mxu0
      %v5564 = vadd.f32 0.0, %v5563
      %v5565 = vpop.f32.mrf.mxu0
      %v5566 = vadd.f32 0.0, %v5565
      %5567 = vmatmul.bf16.gmra.mxu0 %v5485
      %v5568 = vpop.f32.mrf.mxu0
      %v5569 = vadd.f32 0.0, %v5568
      %v5570 = vpop.f32.mrf.mxu0
      %v5571 = vadd.f32 0.0, %v5570
      %5572 = vmatmul.bf16.gmra.mxu0 %v5488
      %v5573 = vpop.f32.mrf.mxu0
      %v5574 = vadd.f32 0.0, %v5573
      %v5575 = vpop.f32.mrf.mxu0
      %v5576 = vadd.f32 0.0, %v5575
      %5577 = vmatmul.bf16.gmra.mxu0 %v5491
      %v5578 = vpop.f32.mrf.mxu0
      %v5579 = vadd.f32 0.0, %v5578
      %v5580 = vpop.f32.mrf.mxu0
      %v5581 = vadd.f32 0.0, %v5580
      %5582 = vmatmul.bf16.gmra.mxu0 %v5494
      %v5583 = vpop.f32.mrf.mxu0
      %v5584 = vadd.f32 0.0, %v5583
      %v5585 = vpop.f32.mrf.mxu0
      %v5586 = vadd.f32 0.0, %v5585
      %5587 = vdwg.mxu0
      %v5588 = vadd.f32 %v5366, %v5509
      %v5589 = vadd.f32 %v5367, %v5511
      %v5590 = vadd.f32 %v5368, %v5514
      %v5591 = vadd.f32 %v5369, %v5516
      %v5592 = vadd.f32 %v5370, %v5519
      %v5593 = vadd.f32 %v5371, %v5521
      %v5594 = vadd.f32 %v5372, %v5524
      %v5595 = vadd.f32 %v5373, %v5526
      %v5596 = vadd.f32 %v5374, %v5529
      %v5597 = vadd.f32 %v5375, %v5531
      %v5598 = vadd.f32 %v5376, %v5534
      %v5599 = vadd.f32 %v5377, %v5536
      %v5600 = vadd.f32 %v5378, %v5539
      %v5601 = vadd.f32 %v5379, %v5541
      %v5602 = vadd.f32 %v5380, %v5544
      %v5603 = vadd.f32 %v5381, %v5546
      %v5604 = vadd.f32 %v5382, %v5549
      %v5605 = vadd.f32 %v5383, %v5551
      %v5606 = vadd.f32 %v5384, %v5554
      %v5607 = vadd.f32 %v5385, %v5556
      %v5608 = vadd.f32 %v5386, %v5559
      %v5609 = vadd.f32 %v5387, %v5561
      %v5610 = vadd.f32 %v5388, %v5564
      %v5611 = vadd.f32 %v5389, %v5566
      %v5612 = vadd.f32 %v5390, %v5569
      %v5613 = vadd.f32 %v5391, %v5571
      %v5614 = vadd.f32 %v5392, %v5574
      %v5615 = vadd.f32 %v5393, %v5576
      %v5616 = vadd.f32 %v5394, %v5579
      %v5617 = vadd.f32 %v5395, %v5581
      %v5618 = vadd.f32 %v5396, %v5584
      %v5619 = vadd.f32 %v5397, %v5586
      %v5620 = vadd.f32 %v5588, %v3839
      %v5621 = vadd.f32 %v5589, %v3839
      %v5622 = vadd.f32 %v5590, %v3839
      %v5623 = vadd.f32 %v5591, %v3839
      %v5624 = vadd.f32 %v5592, %v3839
      %v5625 = vadd.f32 %v5593, %v3839
      %v5626 = vadd.f32 %v5594, %v3839
      %v5627 = vadd.f32 %v5595, %v3839
      %v5628 = vadd.f32 %v5596, %v3839
      %v5629 = vadd.f32 %v5597, %v3839
      %v5630 = vadd.f32 %v5598, %v3839
      %v5631 = vadd.f32 %v5599, %v3839
      %v5632 = vadd.f32 %v5600, %v3839
      %v5633 = vadd.f32 %v5601, %v3839
      %v5634 = vadd.f32 %v5602, %v3839
      %v5635 = vadd.f32 %v5603, %v3839
      %v5636 = vadd.f32 %v5604, %v3839
      %v5637 = vadd.f32 %v5605, %v3839
      %v5638 = vadd.f32 %v5606, %v3839
      %v5639 = vadd.f32 %v5607, %v3839
      %v5640 = vadd.f32 %v5608, %v3839
      %v5641 = vadd.f32 %v5609, %v3839
      %v5642 = vadd.f32 %v5610, %v3839
      %v5643 = vadd.f32 %v5611, %v3839
      %v5644 = vadd.f32 %v5612, %v3839
      %v5645 = vadd.f32 %v5613, %v3839
      %v5646 = vadd.f32 %v5614, %v3839
      %v5647 = vadd.f32 %v5615, %v3839
      %v5648 = vadd.f32 %v5616, %v3839
      %v5649 = vadd.f32 %v5617, %v3839
      %v5650 = vadd.f32 %v5618, %v3839
      %v5651 = vadd.f32 %v5619, %v3839
      %s5652 = scalar_lea.vmem %s278, 512
      %5653 = vst.msk [vmem:[%s5652] sm:$0xff] %vm3873, %v5620
      %5654 = vst.msk [vmem:[%s5652 + $0x8] sm:$0xff] %vm3873, %v5621
      %5655 = vst.msk [vmem:[%s5652 + $0x10] sm:$0xff] %vm3873, %v5622
      %5656 = vst.msk [vmem:[%s5652 + $0x18] sm:$0xff] %vm3873, %v5623
      %5657 = vst.msk [vmem:[%s5652 + $0x20] sm:$0xff] %vm3873, %v5624
      %5658 = vst.msk [vmem:[%s5652 + $0x28] sm:$0xff] %vm3873, %v5625
      %5659 = vst.msk [vmem:[%s5652 + $0x30] sm:$0xff] %vm3873, %v5626
      %5660 = vst.msk [vmem:[%s5652 + $0x38] sm:$0xff] %vm3873, %v5627
      %5661 = vst.msk [vmem:[%s5652 + $0x40] sm:$0xff] %vm3873, %v5628
      %5662 = vst.msk [vmem:[%s5652 + $0x48] sm:$0xff] %vm3873, %v5629
      %5663 = vst.msk [vmem:[%s5652 + $0x50] sm:$0xff] %vm3873, %v5630
      %5664 = vst.msk [vmem:[%s5652 + $0x58] sm:$0xff] %vm3873, %v5631
      %5665 = vst.msk [vmem:[%s5652 + $0x60] sm:$0xff] %vm3873, %v5632
      %5666 = vst.msk [vmem:[%s5652 + $0x68] sm:$0xff] %vm3873, %v5633
      %5667 = vst.msk [vmem:[%s5652 + $0x70] sm:$0xff] %vm3873, %v5634
      %5668 = vst.msk [vmem:[%s5652 + $0x78] sm:$0xff] %vm3873, %v5635
      %5669 = vst.msk [vmem:[%s5652 + $0x80] sm:$0xff] %vm3873, %v5636
      %5670 = vst.msk [vmem:[%s5652 + $0x88] sm:$0xff] %vm3873, %v5637
      %5671 = vst.msk [vmem:[%s5652 + $0x90] sm:$0xff] %vm3873, %v5638
      %5672 = vst.msk [vmem:[%s5652 + $0x98] sm:$0xff] %vm3873, %v5639
      %5673 = vst.msk [vmem:[%s5652 + $0xa0] sm:$0xff] %vm3873, %v5640
      %5674 = vst.msk [vmem:[%s5652 + $0xa8] sm:$0xff] %vm3873, %v5641
      %5675 = vst.msk [vmem:[%s5652 + $0xb0] sm:$0xff] %vm3873, %v5642
      %5676 = vst.msk [vmem:[%s5652 + $0xb8] sm:$0xff] %vm3873, %v5643
      %5677 = vst.msk [vmem:[%s5652 + $0xc0] sm:$0xff] %vm3873, %v5644
      %5678 = vst.msk [vmem:[%s5652 + $0xc8] sm:$0xff] %vm3873, %v5645
      %5679 = vst.msk [vmem:[%s5652 + $0xd0] sm:$0xff] %vm3873, %v5646
      %5680 = vst.msk [vmem:[%s5652 + $0xd8] sm:$0xff] %vm3873, %v5647
      %5681 = vst.msk [vmem:[%s5652 + $0xe0] sm:$0xff] %vm3873, %v5648
      %5682 = vst.msk [vmem:[%s5652 + $0xe8] sm:$0xff] %vm3873, %v5649
      %5683 = vst.msk [vmem:[%s5652 + $0xf0] sm:$0xff] %vm3873, %v5650
      %5684 = vst.msk [vmem:[%s5652 + $0xf8] sm:$0xff] %vm3873, %v5651
      %v5685 = vld [vmem:[%s2981 + $0x8] sm:$0xff]
      %v5686 = vld [vmem:[%s2981 + $0x10] sm:$0xff]
      %v5687 = vld [vmem:[%s2981 + $0x28] sm:$0xff]
      %v5688 = vld [vmem:[%s2981 + $0x30] sm:$0xff]
      %v5689 = vld [vmem:[%s2981 + $0x48] sm:$0xff]
      %v5690 = vld [vmem:[%s2981 + $0x50] sm:$0xff]
      %v5691 = vld [vmem:[%s2981 + $0x68] sm:$0xff]
      %v5692 = vld [vmem:[%s2981 + $0x70] sm:$0xff]
      %v5693 = vld [vmem:[%s2981 + $0x88] sm:$0xff]
      %v5694 = vld [vmem:[%s2981 + $0x90] sm:$0xff]
      %v5695 = vld [vmem:[%s2981 + $0xa8] sm:$0xff]
      %v5696 = vld [vmem:[%s2981 + $0xb0] sm:$0xff]
      %v5697 = vld [vmem:[%s2981 + $0xc8] sm:$0xff]
      %v5698 = vld [vmem:[%s2981 + $0xd0] sm:$0xff]
      %v5699 = vld [vmem:[%s2981 + $0xe8] sm:$0xff]
      %v5700 = vld [vmem:[%s2981 + $0xf0] sm:$0xff]
      %v5701 = vld [vmem:[%s2981 + $0x108] sm:$0xff]
      %v5702 = vld [vmem:[%s2981 + $0x110] sm:$0xff]
      %v5703 = vld [vmem:[%s2981 + $0x128] sm:$0xff]
      %v5704 = vld [vmem:[%s2981 + $0x130] sm:$0xff]
      %v5705 = vld [vmem:[%s2981 + $0x148] sm:$0xff]
      %v5706 = vld [vmem:[%s2981 + $0x150] sm:$0xff]
      %v5707 = vld [vmem:[%s2981 + $0x168] sm:$0xff]
      %v5708 = vld [vmem:[%s2981 + $0x170] sm:$0xff]
      %v5709 = vld [vmem:[%s2981 + $0x188] sm:$0xff]
      %v5710 = vld [vmem:[%s2981 + $0x190] sm:$0xff]
      %v5711 = vld [vmem:[%s2981 + $0x1a8] sm:$0xff]
      %v5712 = vld [vmem:[%s2981 + $0x1b0] sm:$0xff]
      %v5713 = vld [vmem:[%s2981 + $0x1c8] sm:$0xff]
      %v5714 = vld [vmem:[%s2981 + $0x1d0] sm:$0xff]
      %v5715 = vld [vmem:[%s2981 + $0x1e8] sm:$0xff]
      %v5716 = vld [vmem:[%s2981 + $0x1f0] sm:$0xff]
      %v5717 = vpack.c.bf16 %v5686, %v5685
      %v5718 = vpack.c.bf16 %v5688, %v5687
      %v5719 = vpack.c.bf16 %v5690, %v5689
      %v5720 = vpack.c.bf16 %v5692, %v5691
      %v5721 = vpack.c.bf16 %v5694, %v5693
      %v5722 = vpack.c.bf16 %v5696, %v5695
      %v5723 = vpack.c.bf16 %v5698, %v5697
      %v5724 = vpack.c.bf16 %v5700, %v5699
      %v5725 = vpack.c.bf16 %v5702, %v5701
      %v5726 = vpack.c.bf16 %v5704, %v5703
      %v5727 = vpack.c.bf16 %v5706, %v5705
      %v5728 = vpack.c.bf16 %v5708, %v5707
      %v5729 = vpack.c.bf16 %v5710, %v5709
      %v5730 = vpack.c.bf16 %v5712, %v5711
      %v5731 = vpack.c.bf16 %v5714, %v5713
      %v5732 = vpack.c.bf16 %v5716, %v5715
      %s5733 = scalar_lea.vmem %s5, 48
      %v5734 = vld [vmem:[%s5733] sm:$0xf]
      %v5735 = vld [vmem:[%s2981 + $0x9] sm:$0xff]
      %v5736 = vld [vmem:[%s2981 + $0x11] sm:$0xff]
      %v5737 = vld [vmem:[%s2981 + $0x29] sm:$0xff]
      %v5738 = vld [vmem:[%s2981 + $0x31] sm:$0xff]
      %v5739 = vld [vmem:[%s2981 + $0x49] sm:$0xff]
      %v5740 = vld [vmem:[%s2981 + $0x51] sm:$0xff]
      %v5741 = vld [vmem:[%s2981 + $0x69] sm:$0xff]
      %v5742 = vld [vmem:[%s2981 + $0x71] sm:$0xff]
      %v5743 = vld [vmem:[%s2981 + $0x89] sm:$0xff]
      %v5744 = vld [vmem:[%s2981 + $0x91] sm:$0xff]
      %v5745 = vld [vmem:[%s2981 + $0xa9] sm:$0xff]
      %v5746 = vld [vmem:[%s2981 + $0xb1] sm:$0xff]
      %v5747 = vld [vmem:[%s2981 + $0xc9] sm:$0xff]
      %v5748 = vld [vmem:[%s2981 + $0xd1] sm:$0xff]
      %v5749 = vld [vmem:[%s2981 + $0xe9] sm:$0xff]
      %v5750 = vld [vmem:[%s2981 + $0xf1] sm:$0xff]
      %v5751 = vld [vmem:[%s2981 + $0x109] sm:$0xff]
      %v5752 = vld [vmem:[%s2981 + $0x111] sm:$0xff]
      %v5753 = vld [vmem:[%s2981 + $0x129] sm:$0xff]
      %v5754 = vld [vmem:[%s2981 + $0x131] sm:$0xff]
      %v5755 = vld [vmem:[%s2981 + $0x149] sm:$0xff]
      %v5756 = vld [vmem:[%s2981 + $0x151] sm:$0xff]
      %v5757 = vld [vmem:[%s2981 + $0x169] sm:$0xff]
      %v5758 = vld [vmem:[%s2981 + $0x171] sm:$0xff]
      %v5759 = vld [vmem:[%s2981 + $0x189] sm:$0xff]
      %v5760 = vld [vmem:[%s2981 + $0x191] sm:$0xff]
      %v5761 = vld [vmem:[%s2981 + $0x1a9] sm:$0xff]
      %v5762 = vld [vmem:[%s2981 + $0x1b1] sm:$0xff]
      %v5763 = vld [vmem:[%s2981 + $0x1c9] sm:$0xff]
      %v5764 = vld [vmem:[%s2981 + $0x1d1] sm:$0xff]
      %v5765 = vld [vmem:[%s2981 + $0x1e9] sm:$0xff]
      %v5766 = vld [vmem:[%s2981 + $0x1f1] sm:$0xff]
      %v5767 = vpack.c.bf16 %v5736, %v5735
      %v5768 = vpack.c.bf16 %v5738, %v5737
      %v5769 = vpack.c.bf16 %v5740, %v5739
      %v5770 = vpack.c.bf16 %v5742, %v5741
      %v5771 = vpack.c.bf16 %v5744, %v5743
      %v5772 = vpack.c.bf16 %v5746, %v5745
      %v5773 = vpack.c.bf16 %v5748, %v5747
      %v5774 = vpack.c.bf16 %v5750, %v5749
      %v5775 = vpack.c.bf16 %v5752, %v5751
      %v5776 = vpack.c.bf16 %v5754, %v5753
      %v5777 = vpack.c.bf16 %v5756, %v5755
      %v5778 = vpack.c.bf16 %v5758, %v5757
      %v5779 = vpack.c.bf16 %v5760, %v5759
      %v5780 = vpack.c.bf16 %v5762, %v5761
      %v5781 = vpack.c.bf16 %v5764, %v5763
      %v5782 = vpack.c.bf16 %v5766, %v5765
      %s5783 = scalar_lea.vmem %s5, 52
      %v5784 = vld [vmem:[%s5783] sm:$0xf]
      %v5786 = vsel %vm880, %v5767, 0
      %v5789 = vsel %vm880, %v5768, 0
      %v5792 = vsel %vm880, %v5769, 0
      %v5795 = vsel %vm880, %v5770, 0
      %v5798 = vsel %vm880, %v5771, 0
      %v5801 = vsel %vm880, %v5772, 0
      %v5804 = vsel %vm880, %v5773, 0
      %v5807 = vsel %vm880, %v5774, 0
      %v5810 = vsel %vm880, %v5775, 0
      %v5813 = vsel %vm880, %v5776, 0
      %v5816 = vsel %vm880, %v5777, 0
      %v5819 = vsel %vm880, %v5778, 0
      %v5822 = vsel %vm880, %v5779, 0
      %v5825 = vsel %vm880, %v5780, 0
      %v5828 = vsel %vm880, %v5781, 0
      %v5831 = vsel %vm880, %v5782, 0
      %v5834 = vsel %vm929, %v5784, 0
      %5836 = vmatpush.bf16.msra.mxu0 0
      %5837 = vmatpush.bf16.msra.mxu0 0
      %5838 = vmatpush.bf16.msra.mxu0 0
      %5839 = vmatpush.bf16.msra.mxu0 0
      %5840 = vmatpush.bf16.msra.mxu0 0
      %5841 = vmatpush.bf16.msra.mxu0 0
      %5842 = vmatpush.bf16.msra.mxu0 0
      %5843 = vmatpush.bf16.msra.mxu0 %v5834
      %5844 = vmatmul.bf16.gmra.mxu0 %v5786
      %v5845 = vpop.f32.mrf.mxu0
      %v5846 = vadd.f32 0.0, %v5845
      %v5847 = vpop.f32.mrf.mxu0
      %v5848 = vadd.f32 0.0, %v5847
      %5849 = vmatmul.bf16.gmra.mxu0 %v5789
      %v5850 = vpop.f32.mrf.mxu0
      %v5851 = vadd.f32 0.0, %v5850
      %v5852 = vpop.f32.mrf.mxu0
      %v5853 = vadd.f32 0.0, %v5852
      %5854 = vmatmul.bf16.gmra.mxu0 %v5792
      %v5855 = vpop.f32.mrf.mxu0
      %v5856 = vadd.f32 0.0, %v5855
      %v5857 = vpop.f32.mrf.mxu0
      %v5858 = vadd.f32 0.0, %v5857
      %5859 = vmatmul.bf16.gmra.mxu0 %v5795
      %v5860 = vpop.f32.mrf.mxu0
      %v5861 = vadd.f32 0.0, %v5860
      %v5862 = vpop.f32.mrf.mxu0
      %v5863 = vadd.f32 0.0, %v5862
      %5864 = vmatmul.bf16.gmra.mxu0 %v5798
      %v5865 = vpop.f32.mrf.mxu0
      %v5866 = vadd.f32 0.0, %v5865
      %v5867 = vpop.f32.mrf.mxu0
      %v5868 = vadd.f32 0.0, %v5867
      %5869 = vmatmul.bf16.gmra.mxu0 %v5801
      %v5870 = vpop.f32.mrf.mxu0
      %v5871 = vadd.f32 0.0, %v5870
      %v5872 = vpop.f32.mrf.mxu0
      %v5873 = vadd.f32 0.0, %v5872
      %5874 = vmatmul.bf16.gmra.mxu0 %v5804
      %v5875 = vpop.f32.mrf.mxu0
      %v5876 = vadd.f32 0.0, %v5875
      %v5877 = vpop.f32.mrf.mxu0
      %v5878 = vadd.f32 0.0, %v5877
      %5879 = vmatmul.bf16.gmra.mxu0 %v5807
      %v5880 = vpop.f32.mrf.mxu0
      %v5881 = vadd.f32 0.0, %v5880
      %v5882 = vpop.f32.mrf.mxu0
      %v5883 = vadd.f32 0.0, %v5882
      %5884 = vmatmul.bf16.gmra.mxu0 %v5810
      %v5885 = vpop.f32.mrf.mxu0
      %v5886 = vadd.f32 0.0, %v5885
      %v5887 = vpop.f32.mrf.mxu0
      %v5888 = vadd.f32 0.0, %v5887
      %5889 = vmatmul.bf16.gmra.mxu0 %v5813
      %v5890 = vpop.f32.mrf.mxu0
      %v5891 = vadd.f32 0.0, %v5890
      %v5892 = vpop.f32.mrf.mxu0
      %v5893 = vadd.f32 0.0, %v5892
      %5894 = vmatmul.bf16.gmra.mxu0 %v5816
      %v5895 = vpop.f32.mrf.mxu0
      %v5896 = vadd.f32 0.0, %v5895
      %v5897 = vpop.f32.mrf.mxu0
      %v5898 = vadd.f32 0.0, %v5897
      %5899 = vmatmul.bf16.gmra.mxu0 %v5819
      %v5900 = vpop.f32.mrf.mxu0
      %v5901 = vadd.f32 0.0, %v5900
      %v5902 = vpop.f32.mrf.mxu0
      %v5903 = vadd.f32 0.0, %v5902
      %5904 = vmatmul.bf16.gmra.mxu0 %v5822
      %v5905 = vpop.f32.mrf.mxu0
      %v5906 = vadd.f32 0.0, %v5905
      %v5907 = vpop.f32.mrf.mxu0
      %v5908 = vadd.f32 0.0, %v5907
      %5909 = vmatmul.bf16.gmra.mxu0 %v5825
      %v5910 = vpop.f32.mrf.mxu0
      %v5911 = vadd.f32 0.0, %v5910
      %v5912 = vpop.f32.mrf.mxu0
      %v5913 = vadd.f32 0.0, %v5912
      %5914 = vmatmul.bf16.gmra.mxu0 %v5828
      %v5915 = vpop.f32.mrf.mxu0
      %v5916 = vadd.f32 0.0, %v5915
      %v5917 = vpop.f32.mrf.mxu0
      %v5918 = vadd.f32 0.0, %v5917
      %5919 = vmatmul.bf16.gmra.mxu0 %v5831
      %v5920 = vpop.f32.mrf.mxu0
      %v5921 = vadd.f32 0.0, %v5920
      %v5922 = vpop.f32.mrf.mxu0
      %v5923 = vadd.f32 0.0, %v5922
      %5924 = vdwg.mxu0
      %v5926 = vsel %vm880, %v5717, 0
      %v5929 = vsel %vm880, %v5718, 0
      %v5932 = vsel %vm880, %v5719, 0
      %v5935 = vsel %vm880, %v5720, 0
      %v5938 = vsel %vm880, %v5721, 0
      %v5941 = vsel %vm880, %v5722, 0
      %v5944 = vsel %vm880, %v5723, 0
      %v5947 = vsel %vm880, %v5724, 0
      %v5950 = vsel %vm880, %v5725, 0
      %v5953 = vsel %vm880, %v5726, 0
      %v5956 = vsel %vm880, %v5727, 0
      %v5959 = vsel %vm880, %v5728, 0
      %v5962 = vsel %vm880, %v5729, 0
      %v5965 = vsel %vm880, %v5730, 0
      %v5968 = vsel %vm880, %v5731, 0
      %v5971 = vsel %vm880, %v5732, 0
      %v5974 = vsel %vm929, %v5734, 0
      %5976 = vmatpush.bf16.msra.mxu0 0
      %5977 = vmatpush.bf16.msra.mxu0 0
      %5978 = vmatpush.bf16.msra.mxu0 0
      %5979 = vmatpush.bf16.msra.mxu0 0
      %5980 = vmatpush.bf16.msra.mxu0 0
      %5981 = vmatpush.bf16.msra.mxu0 0
      %5982 = vmatpush.bf16.msra.mxu0 0
      %5983 = vmatpush.bf16.msra.mxu0 %v5974
      %5984 = vmatmul.bf16.gmra.mxu0 %v5926
      %v5985 = vpop.f32.mrf.mxu0
      %v5986 = vadd.f32 %v5846, %v5985
      %v5987 = vpop.f32.mrf.mxu0
      %v5988 = vadd.f32 %v5848, %v5987
      %5989 = vmatmul.bf16.gmra.mxu0 %v5929
      %v5990 = vpop.f32.mrf.mxu0
      %v5991 = vadd.f32 %v5851, %v5990
      %v5992 = vpop.f32.mrf.mxu0
      %v5993 = vadd.f32 %v5853, %v5992
      %5994 = vmatmul.bf16.gmra.mxu0 %v5932
      %v5995 = vpop.f32.mrf.mxu0
      %v5996 = vadd.f32 %v5856, %v5995
      %v5997 = vpop.f32.mrf.mxu0
      %v5998 = vadd.f32 %v5858, %v5997
      %5999 = vmatmul.bf16.gmra.mxu0 %v5935
      %v6000 = vpop.f32.mrf.mxu0
      %v6001 = vadd.f32 %v5861, %v6000
      %v6002 = vpop.f32.mrf.mxu0
      %v6003 = vadd.f32 %v5863, %v6002
      %6004 = vmatmul.bf16.gmra.mxu0 %v5938
      %v6005 = vpop.f32.mrf.mxu0
      %v6006 = vadd.f32 %v5866, %v6005
      %v6007 = vpop.f32.mrf.mxu0
      %v6008 = vadd.f32 %v5868, %v6007
      %6009 = vmatmul.bf16.gmra.mxu0 %v5941
      %v6010 = vpop.f32.mrf.mxu0
      %v6011 = vadd.f32 %v5871, %v6010
      %v6012 = vpop.f32.mrf.mxu0
      %v6013 = vadd.f32 %v5873, %v6012
      %6014 = vmatmul.bf16.gmra.mxu0 %v5944
      %v6015 = vpop.f32.mrf.mxu0
      %v6016 = vadd.f32 %v5876, %v6015
      %v6017 = vpop.f32.mrf.mxu0
      %v6018 = vadd.f32 %v5878, %v6017
      %6019 = vmatmul.bf16.gmra.mxu0 %v5947
      %v6020 = vpop.f32.mrf.mxu0
      %v6021 = vadd.f32 %v5881, %v6020
      %v6022 = vpop.f32.mrf.mxu0
      %v6023 = vadd.f32 %v5883, %v6022
      %6024 = vmatmul.bf16.gmra.mxu0 %v5950
      %v6025 = vpop.f32.mrf.mxu0
      %v6026 = vadd.f32 %v5886, %v6025
      %v6027 = vpop.f32.mrf.mxu0
      %v6028 = vadd.f32 %v5888, %v6027
      %6029 = vmatmul.bf16.gmra.mxu0 %v5953
      %v6030 = vpop.f32.mrf.mxu0
      %v6031 = vadd.f32 %v5891, %v6030
      %v6032 = vpop.f32.mrf.mxu0
      %v6033 = vadd.f32 %v5893, %v6032
      %6034 = vmatmul.bf16.gmra.mxu0 %v5956
      %v6035 = vpop.f32.mrf.mxu0
      %v6036 = vadd.f32 %v5896, %v6035
      %v6037 = vpop.f32.mrf.mxu0
      %v6038 = vadd.f32 %v5898, %v6037
      %6039 = vmatmul.bf16.gmra.mxu0 %v5959
      %v6040 = vpop.f32.mrf.mxu0
      %v6041 = vadd.f32 %v5901, %v6040
      %v6042 = vpop.f32.mrf.mxu0
      %v6043 = vadd.f32 %v5903, %v6042
      %6044 = vmatmul.bf16.gmra.mxu0 %v5962
      %v6045 = vpop.f32.mrf.mxu0
      %v6046 = vadd.f32 %v5906, %v6045
      %v6047 = vpop.f32.mrf.mxu0
      %v6048 = vadd.f32 %v5908, %v6047
      %6049 = vmatmul.bf16.gmra.mxu0 %v5965
      %v6050 = vpop.f32.mrf.mxu0
      %v6051 = vadd.f32 %v5911, %v6050
      %v6052 = vpop.f32.mrf.mxu0
      %v6053 = vadd.f32 %v5913, %v6052
      %6054 = vmatmul.bf16.gmra.mxu0 %v5968
      %v6055 = vpop.f32.mrf.mxu0
      %v6056 = vadd.f32 %v5916, %v6055
      %v6057 = vpop.f32.mrf.mxu0
      %v6058 = vadd.f32 %v5918, %v6057
      %6059 = vmatmul.bf16.gmra.mxu0 %v5971
      %v6060 = vpop.f32.mrf.mxu0
      %v6061 = vadd.f32 %v5921, %v6060
      %v6062 = vpop.f32.mrf.mxu0
      %v6063 = vadd.f32 %v5923, %v6062
      %6064 = vdwg.mxu0
      %v6065 = vld [vmem:[%s5175 + $0x8] sm:$0xff]
      %v6066 = vld [vmem:[%s5175 + $0x10] sm:$0xff]
      %v6067 = vld [vmem:[%s5175 + $0x28] sm:$0xff]
      %v6068 = vld [vmem:[%s5175 + $0x30] sm:$0xff]
      %v6069 = vld [vmem:[%s5175 + $0x48] sm:$0xff]
      %v6070 = vld [vmem:[%s5175 + $0x50] sm:$0xff]
      %v6071 = vld [vmem:[%s5175 + $0x68] sm:$0xff]
      %v6072 = vld [vmem:[%s5175 + $0x70] sm:$0xff]
      %v6073 = vld [vmem:[%s5175 + $0x88] sm:$0xff]
      %v6074 = vld [vmem:[%s5175 + $0x90] sm:$0xff]
      %v6075 = vld [vmem:[%s5175 + $0xa8] sm:$0xff]
      %v6076 = vld [vmem:[%s5175 + $0xb0] sm:$0xff]
      %v6077 = vld [vmem:[%s5175 + $0xc8] sm:$0xff]
      %v6078 = vld [vmem:[%s5175 + $0xd0] sm:$0xff]
      %v6079 = vld [vmem:[%s5175 + $0xe8] sm:$0xff]
      %v6080 = vld [vmem:[%s5175 + $0xf0] sm:$0xff]
      %v6081 = vld [vmem:[%s5175 + $0x108] sm:$0xff]
      %v6082 = vld [vmem:[%s5175 + $0x110] sm:$0xff]
      %v6083 = vld [vmem:[%s5175 + $0x128] sm:$0xff]
      %v6084 = vld [vmem:[%s5175 + $0x130] sm:$0xff]
      %v6085 = vld [vmem:[%s5175 + $0x148] sm:$0xff]
      %v6086 = vld [vmem:[%s5175 + $0x150] sm:$0xff]
      %v6087 = vld [vmem:[%s5175 + $0x168] sm:$0xff]
      %v6088 = vld [vmem:[%s5175 + $0x170] sm:$0xff]
      %v6089 = vld [vmem:[%s5175 + $0x188] sm:$0xff]
      %v6090 = vld [vmem:[%s5175 + $0x190] sm:$0xff]
      %v6091 = vld [vmem:[%s5175 + $0x1a8] sm:$0xff]
      %v6092 = vld [vmem:[%s5175 + $0x1b0] sm:$0xff]
      %v6093 = vld [vmem:[%s5175 + $0x1c8] sm:$0xff]
      %v6094 = vld [vmem:[%s5175 + $0x1d0] sm:$0xff]
      %v6095 = vld [vmem:[%s5175 + $0x1e8] sm:$0xff]
      %v6096 = vld [vmem:[%s5175 + $0x1f0] sm:$0xff]
      %v6097 = vpack.c.bf16 %v6066, %v6065
      %v6098 = vpack.c.bf16 %v6068, %v6067
      %v6099 = vpack.c.bf16 %v6070, %v6069
      %v6100 = vpack.c.bf16 %v6072, %v6071
      %v6101 = vpack.c.bf16 %v6074, %v6073
      %v6102 = vpack.c.bf16 %v6076, %v6075
      %v6103 = vpack.c.bf16 %v6078, %v6077
      %v6104 = vpack.c.bf16 %v6080, %v6079
      %v6105 = vpack.c.bf16 %v6082, %v6081
      %v6106 = vpack.c.bf16 %v6084, %v6083
      %v6107 = vpack.c.bf16 %v6086, %v6085
      %v6108 = vpack.c.bf16 %v6088, %v6087
      %v6109 = vpack.c.bf16 %v6090, %v6089
      %v6110 = vpack.c.bf16 %v6092, %v6091
      %v6111 = vpack.c.bf16 %v6094, %v6093
      %v6112 = vpack.c.bf16 %v6096, %v6095
      %s6113 = scalar_lea.vmem %s5, 56
      %v6114 = vld [vmem:[%s6113] sm:$0xf]
      %v6116 = vsel %vm880, %v6097, 0
      %v6119 = vsel %vm880, %v6098, 0
      %v6122 = vsel %vm880, %v6099, 0
      %v6125 = vsel %vm880, %v6100, 0
      %v6128 = vsel %vm880, %v6101, 0
      %v6131 = vsel %vm880, %v6102, 0
      %v6134 = vsel %vm880, %v6103, 0
      %v6137 = vsel %vm880, %v6104, 0
      %v6140 = vsel %vm880, %v6105, 0
      %v6143 = vsel %vm880, %v6106, 0
      %v6146 = vsel %vm880, %v6107, 0
      %v6149 = vsel %vm880, %v6108, 0
      %v6152 = vsel %vm880, %v6109, 0
      %v6155 = vsel %vm880, %v6110, 0
      %v6158 = vsel %vm880, %v6111, 0
      %v6161 = vsel %vm880, %v6112, 0
      %v6164 = vsel %vm929, %v6114, 0
      %6166 = vmatpush.bf16.msra.mxu0 0
      %6167 = vmatpush.bf16.msra.mxu0 0
      %6168 = vmatpush.bf16.msra.mxu0 0
      %6169 = vmatpush.bf16.msra.mxu0 0
      %6170 = vmatpush.bf16.msra.mxu0 0
      %6171 = vmatpush.bf16.msra.mxu0 0
      %6172 = vmatpush.bf16.msra.mxu0 0
      %6173 = vmatpush.bf16.msra.mxu0 %v6164
      %6174 = vmatmul.bf16.gmra.mxu0 %v6116
      %v6175 = vpop.f32.mrf.mxu0
      %v6176 = vadd.f32 0.0, %v6175
      %v6177 = vpop.f32.mrf.mxu0
      %v6178 = vadd.f32 0.0, %v6177
      %6179 = vmatmul.bf16.gmra.mxu0 %v6119
      %v6180 = vpop.f32.mrf.mxu0
      %v6181 = vadd.f32 0.0, %v6180
      %v6182 = vpop.f32.mrf.mxu0
      %v6183 = vadd.f32 0.0, %v6182
      %6184 = vmatmul.bf16.gmra.mxu0 %v6122
      %v6185 = vpop.f32.mrf.mxu0
      %v6186 = vadd.f32 0.0, %v6185
      %v6187 = vpop.f32.mrf.mxu0
      %v6188 = vadd.f32 0.0, %v6187
      %6189 = vmatmul.bf16.gmra.mxu0 %v6125
      %v6190 = vpop.f32.mrf.mxu0
      %v6191 = vadd.f32 0.0, %v6190
      %v6192 = vpop.f32.mrf.mxu0
      %v6193 = vadd.f32 0.0, %v6192
      %6194 = vmatmul.bf16.gmra.mxu0 %v6128
      %v6195 = vpop.f32.mrf.mxu0
      %v6196 = vadd.f32 0.0, %v6195
      %v6197 = vpop.f32.mrf.mxu0
      %v6198 = vadd.f32 0.0, %v6197
      %6199 = vmatmul.bf16.gmra.mxu0 %v6131
      %v6200 = vpop.f32.mrf.mxu0
      %v6201 = vadd.f32 0.0, %v6200
      %v6202 = vpop.f32.mrf.mxu0
      %v6203 = vadd.f32 0.0, %v6202
      %6204 = vmatmul.bf16.gmra.mxu0 %v6134
      %v6205 = vpop.f32.mrf.mxu0
      %v6206 = vadd.f32 0.0, %v6205
      %v6207 = vpop.f32.mrf.mxu0
      %v6208 = vadd.f32 0.0, %v6207
      %6209 = vmatmul.bf16.gmra.mxu0 %v6137
      %v6210 = vpop.f32.mrf.mxu0
      %v6211 = vadd.f32 0.0, %v6210
      %v6212 = vpop.f32.mrf.mxu0
      %v6213 = vadd.f32 0.0, %v6212
      %6214 = vmatmul.bf16.gmra.mxu0 %v6140
      %v6215 = vpop.f32.mrf.mxu0
      %v6216 = vadd.f32 0.0, %v6215
      %v6217 = vpop.f32.mrf.mxu0
      %v6218 = vadd.f32 0.0, %v6217
      %6219 = vmatmul.bf16.gmra.mxu0 %v6143
      %v6220 = vpop.f32.mrf.mxu0
      %v6221 = vadd.f32 0.0, %v6220
      %v6222 = vpop.f32.mrf.mxu0
      %v6223 = vadd.f32 0.0, %v6222
      %6224 = vmatmul.bf16.gmra.mxu0 %v6146
      %v6225 = vpop.f32.mrf.mxu0
      %v6226 = vadd.f32 0.0, %v6225
      %v6227 = vpop.f32.mrf.mxu0
      %v6228 = vadd.f32 0.0, %v6227
      %6229 = vmatmul.bf16.gmra.mxu0 %v6149
      %v6230 = vpop.f32.mrf.mxu0
      %v6231 = vadd.f32 0.0, %v6230
      %v6232 = vpop.f32.mrf.mxu0
      %v6233 = vadd.f32 0.0, %v6232
      %6234 = vmatmul.bf16.gmra.mxu0 %v6152
      %v6235 = vpop.f32.mrf.mxu0
      %v6236 = vadd.f32 0.0, %v6235
      %v6237 = vpop.f32.mrf.mxu0
      %v6238 = vadd.f32 0.0, %v6237
      %6239 = vmatmul.bf16.gmra.mxu0 %v6155
      %v6240 = vpop.f32.mrf.mxu0
      %v6241 = vadd.f32 0.0, %v6240
      %v6242 = vpop.f32.mrf.mxu0
      %v6243 = vadd.f32 0.0, %v6242
      %6244 = vmatmul.bf16.gmra.mxu0 %v6158
      %v6245 = vpop.f32.mrf.mxu0
      %v6246 = vadd.f32 0.0, %v6245
      %v6247 = vpop.f32.mrf.mxu0
      %v6248 = vadd.f32 0.0, %v6247
      %6249 = vmatmul.bf16.gmra.mxu0 %v6161
      %v6250 = vpop.f32.mrf.mxu0
      %v6251 = vadd.f32 0.0, %v6250
      %v6252 = vpop.f32.mrf.mxu0
      %v6253 = vadd.f32 0.0, %v6252
      %6254 = vdwg.mxu0
      %v6255 = vadd.f32 %v5986, %v6176
      %v6256 = vadd.f32 %v5988, %v6178
      %v6257 = vadd.f32 %v5991, %v6181
      %v6258 = vadd.f32 %v5993, %v6183
      %v6259 = vadd.f32 %v5996, %v6186
      %v6260 = vadd.f32 %v5998, %v6188
      %v6261 = vadd.f32 %v6001, %v6191
      %v6262 = vadd.f32 %v6003, %v6193
      %v6263 = vadd.f32 %v6006, %v6196
      %v6264 = vadd.f32 %v6008, %v6198
      %v6265 = vadd.f32 %v6011, %v6201
      %v6266 = vadd.f32 %v6013, %v6203
      %v6267 = vadd.f32 %v6016, %v6206
      %v6268 = vadd.f32 %v6018, %v6208
      %v6269 = vadd.f32 %v6021, %v6211
      %v6270 = vadd.f32 %v6023, %v6213
      %v6271 = vadd.f32 %v6026, %v6216
      %v6272 = vadd.f32 %v6028, %v6218
      %v6273 = vadd.f32 %v6031, %v6221
      %v6274 = vadd.f32 %v6033, %v6223
      %v6275 = vadd.f32 %v6036, %v6226
      %v6276 = vadd.f32 %v6038, %v6228
      %v6277 = vadd.f32 %v6041, %v6231
      %v6278 = vadd.f32 %v6043, %v6233
      %v6279 = vadd.f32 %v6046, %v6236
      %v6280 = vadd.f32 %v6048, %v6238
      %v6281 = vadd.f32 %v6051, %v6241
      %v6282 = vadd.f32 %v6053, %v6243
      %v6283 = vadd.f32 %v6056, %v6246
      %v6284 = vadd.f32 %v6058, %v6248
      %v6285 = vadd.f32 %v6061, %v6251
      %v6286 = vadd.f32 %v6063, %v6253
      %v6287 = vld [vmem:[%s5175 + $0x9] sm:$0xff]
      %v6288 = vld [vmem:[%s5175 + $0x11] sm:$0xff]
      %v6289 = vld [vmem:[%s5175 + $0x29] sm:$0xff]
      %v6290 = vld [vmem:[%s5175 + $0x31] sm:$0xff]
      %v6291 = vld [vmem:[%s5175 + $0x49] sm:$0xff]
      %v6292 = vld [vmem:[%s5175 + $0x51] sm:$0xff]
      %v6293 = vld [vmem:[%s5175 + $0x69] sm:$0xff]
      %v6294 = vld [vmem:[%s5175 + $0x71] sm:$0xff]
      %v6295 = vld [vmem:[%s5175 + $0x89] sm:$0xff]
      %v6296 = vld [vmem:[%s5175 + $0x91] sm:$0xff]
      %v6297 = vld [vmem:[%s5175 + $0xa9] sm:$0xff]
      %v6298 = vld [vmem:[%s5175 + $0xb1] sm:$0xff]
      %v6299 = vld [vmem:[%s5175 + $0xc9] sm:$0xff]
      %v6300 = vld [vmem:[%s5175 + $0xd1] sm:$0xff]
      %v6301 = vld [vmem:[%s5175 + $0xe9] sm:$0xff]
      %v6302 = vld [vmem:[%s5175 + $0xf1] sm:$0xff]
      %v6303 = vld [vmem:[%s5175 + $0x109] sm:$0xff]
      %v6304 = vld [vmem:[%s5175 + $0x111] sm:$0xff]
      %v6305 = vld [vmem:[%s5175 + $0x129] sm:$0xff]
      %v6306 = vld [vmem:[%s5175 + $0x131] sm:$0xff]
      %v6307 = vld [vmem:[%s5175 + $0x149] sm:$0xff]
      %v6308 = vld [vmem:[%s5175 + $0x151] sm:$0xff]
      %v6309 = vld [vmem:[%s5175 + $0x169] sm:$0xff]
      %v6310 = vld [vmem:[%s5175 + $0x171] sm:$0xff]
      %v6311 = vld [vmem:[%s5175 + $0x189] sm:$0xff]
      %v6312 = vld [vmem:[%s5175 + $0x191] sm:$0xff]
      %v6313 = vld [vmem:[%s5175 + $0x1a9] sm:$0xff]
      %v6314 = vld [vmem:[%s5175 + $0x1b1] sm:$0xff]
      %v6315 = vld [vmem:[%s5175 + $0x1c9] sm:$0xff]
      %v6316 = vld [vmem:[%s5175 + $0x1d1] sm:$0xff]
      %v6317 = vld [vmem:[%s5175 + $0x1e9] sm:$0xff]
      %v6318 = vld [vmem:[%s5175 + $0x1f1] sm:$0xff]
      %v6319 = vpack.c.bf16 %v6288, %v6287
      %v6320 = vpack.c.bf16 %v6290, %v6289
      %v6321 = vpack.c.bf16 %v6292, %v6291
      %v6322 = vpack.c.bf16 %v6294, %v6293
      %v6323 = vpack.c.bf16 %v6296, %v6295
      %v6324 = vpack.c.bf16 %v6298, %v6297
      %v6325 = vpack.c.bf16 %v6300, %v6299
      %v6326 = vpack.c.bf16 %v6302, %v6301
      %v6327 = vpack.c.bf16 %v6304, %v6303
      %v6328 = vpack.c.bf16 %v6306, %v6305
      %v6329 = vpack.c.bf16 %v6308, %v6307
      %v6330 = vpack.c.bf16 %v6310, %v6309
      %v6331 = vpack.c.bf16 %v6312, %v6311
      %v6332 = vpack.c.bf16 %v6314, %v6313
      %v6333 = vpack.c.bf16 %v6316, %v6315
      %v6334 = vpack.c.bf16 %v6318, %v6317
      %s6335 = scalar_lea.vmem %s5, 60
      %v6336 = vld [vmem:[%s6335] sm:$0xf]
      %v6338 = vsel %vm880, %v6319, 0
      %v6341 = vsel %vm880, %v6320, 0
      %v6344 = vsel %vm880, %v6321, 0
      %v6347 = vsel %vm880, %v6322, 0
      %v6350 = vsel %vm880, %v6323, 0
      %v6353 = vsel %vm880, %v6324, 0
      %v6356 = vsel %vm880, %v6325, 0
      %v6359 = vsel %vm880, %v6326, 0
      %v6362 = vsel %vm880, %v6327, 0
      %v6365 = vsel %vm880, %v6328, 0
      %v6368 = vsel %vm880, %v6329, 0
      %v6371 = vsel %vm880, %v6330, 0
      %v6374 = vsel %vm880, %v6331, 0
      %v6377 = vsel %vm880, %v6332, 0
      %v6380 = vsel %vm880, %v6333, 0
      %v6383 = vsel %vm880, %v6334, 0
      %v6386 = vsel %vm929, %v6336, 0
      %6388 = vmatpush.bf16.msra.mxu0 0
      %6389 = vmatpush.bf16.msra.mxu0 0
      %6390 = vmatpush.bf16.msra.mxu0 0
      %6391 = vmatpush.bf16.msra.mxu0 0
      %6392 = vmatpush.bf16.msra.mxu0 0
      %6393 = vmatpush.bf16.msra.mxu0 0
      %6394 = vmatpush.bf16.msra.mxu0 0
      %6395 = vmatpush.bf16.msra.mxu0 %v6386
      %6396 = vmatmul.bf16.gmra.mxu0 %v6338
      %v6397 = vpop.f32.mrf.mxu0
      %v6398 = vadd.f32 0.0, %v6397
      %v6399 = vpop.f32.mrf.mxu0
      %v6400 = vadd.f32 0.0, %v6399
      %6401 = vmatmul.bf16.gmra.mxu0 %v6341
      %v6402 = vpop.f32.mrf.mxu0
      %v6403 = vadd.f32 0.0, %v6402
      %v6404 = vpop.f32.mrf.mxu0
      %v6405 = vadd.f32 0.0, %v6404
      %6406 = vmatmul.bf16.gmra.mxu0 %v6344
      %v6407 = vpop.f32.mrf.mxu0
      %v6408 = vadd.f32 0.0, %v6407
      %v6409 = vpop.f32.mrf.mxu0
      %v6410 = vadd.f32 0.0, %v6409
      %6411 = vmatmul.bf16.gmra.mxu0 %v6347
      %v6412 = vpop.f32.mrf.mxu0
      %v6413 = vadd.f32 0.0, %v6412
      %v6414 = vpop.f32.mrf.mxu0
      %v6415 = vadd.f32 0.0, %v6414
      %6416 = vmatmul.bf16.gmra.mxu0 %v6350
      %v6417 = vpop.f32.mrf.mxu0
      %v6418 = vadd.f32 0.0, %v6417
      %v6419 = vpop.f32.mrf.mxu0
      %v6420 = vadd.f32 0.0, %v6419
      %6421 = vmatmul.bf16.gmra.mxu0 %v6353
      %v6422 = vpop.f32.mrf.mxu0
      %v6423 = vadd.f32 0.0, %v6422
      %v6424 = vpop.f32.mrf.mxu0
      %v6425 = vadd.f32 0.0, %v6424
      %6426 = vmatmul.bf16.gmra.mxu0 %v6356
      %v6427 = vpop.f32.mrf.mxu0
      %v6428 = vadd.f32 0.0, %v6427
      %v6429 = vpop.f32.mrf.mxu0
      %v6430 = vadd.f32 0.0, %v6429
      %6431 = vmatmul.bf16.gmra.mxu0 %v6359
      %v6432 = vpop.f32.mrf.mxu0
      %v6433 = vadd.f32 0.0, %v6432
      %v6434 = vpop.f32.mrf.mxu0
      %v6435 = vadd.f32 0.0, %v6434
      %6436 = vmatmul.bf16.gmra.mxu0 %v6362
      %v6437 = vpop.f32.mrf.mxu0
      %v6438 = vadd.f32 0.0, %v6437
      %v6439 = vpop.f32.mrf.mxu0
      %v6440 = vadd.f32 0.0, %v6439
      %6441 = vmatmul.bf16.gmra.mxu0 %v6365
      %v6442 = vpop.f32.mrf.mxu0
      %v6443 = vadd.f32 0.0, %v6442
      %v6444 = vpop.f32.mrf.mxu0
      %v6445 = vadd.f32 0.0, %v6444
      %6446 = vmatmul.bf16.gmra.mxu0 %v6368
      %v6447 = vpop.f32.mrf.mxu0
      %v6448 = vadd.f32 0.0, %v6447
      %v6449 = vpop.f32.mrf.mxu0
      %v6450 = vadd.f32 0.0, %v6449
      %6451 = vmatmul.bf16.gmra.mxu0 %v6371
      %v6452 = vpop.f32.mrf.mxu0
      %v6453 = vadd.f32 0.0, %v6452
      %v6454 = vpop.f32.mrf.mxu0
      %v6455 = vadd.f32 0.0, %v6454
      %6456 = vmatmul.bf16.gmra.mxu0 %v6374
      %v6457 = vpop.f32.mrf.mxu0
      %v6458 = vadd.f32 0.0, %v6457
      %v6459 = vpop.f32.mrf.mxu0
      %v6460 = vadd.f32 0.0, %v6459
      %6461 = vmatmul.bf16.gmra.mxu0 %v6377
      %v6462 = vpop.f32.mrf.mxu0
      %v6463 = vadd.f32 0.0, %v6462
      %v6464 = vpop.f32.mrf.mxu0
      %v6465 = vadd.f32 0.0, %v6464
      %6466 = vmatmul.bf16.gmra.mxu0 %v6380
      %v6467 = vpop.f32.mrf.mxu0
      %v6468 = vadd.f32 0.0, %v6467
      %v6469 = vpop.f32.mrf.mxu0
      %v6470 = vadd.f32 0.0, %v6469
      %6471 = vmatmul.bf16.gmra.mxu0 %v6383
      %v6472 = vpop.f32.mrf.mxu0
      %v6473 = vadd.f32 0.0, %v6472
      %v6474 = vpop.f32.mrf.mxu0
      %v6475 = vadd.f32 0.0, %v6474
      %6476 = vdwg.mxu0
      %v6477 = vadd.f32 %v6255, %v6398
      %v6478 = vadd.f32 %v6256, %v6400
      %v6479 = vadd.f32 %v6257, %v6403
      %v6480 = vadd.f32 %v6258, %v6405
      %v6481 = vadd.f32 %v6259, %v6408
      %v6482 = vadd.f32 %v6260, %v6410
      %v6483 = vadd.f32 %v6261, %v6413
      %v6484 = vadd.f32 %v6262, %v6415
      %v6485 = vadd.f32 %v6263, %v6418
      %v6486 = vadd.f32 %v6264, %v6420
      %v6487 = vadd.f32 %v6265, %v6423
      %v6488 = vadd.f32 %v6266, %v6425
      %v6489 = vadd.f32 %v6267, %v6428
      %v6490 = vadd.f32 %v6268, %v6430
      %v6491 = vadd.f32 %v6269, %v6433
      %v6492 = vadd.f32 %v6270, %v6435
      %v6493 = vadd.f32 %v6271, %v6438
      %v6494 = vadd.f32 %v6272, %v6440
      %v6495 = vadd.f32 %v6273, %v6443
      %v6496 = vadd.f32 %v6274, %v6445
      %v6497 = vadd.f32 %v6275, %v6448
      %v6498 = vadd.f32 %v6276, %v6450
      %v6499 = vadd.f32 %v6277, %v6453
      %v6500 = vadd.f32 %v6278, %v6455
      %v6501 = vadd.f32 %v6279, %v6458
      %v6502 = vadd.f32 %v6280, %v6460
      %v6503 = vadd.f32 %v6281, %v6463
      %v6504 = vadd.f32 %v6282, %v6465
      %v6505 = vadd.f32 %v6283, %v6468
      %v6506 = vadd.f32 %v6284, %v6470
      %v6507 = vadd.f32 %v6285, %v6473
      %v6508 = vadd.f32 %v6286, %v6475
      %v6509 = vadd.f32 %v6477, %v3839
      %v6510 = vadd.f32 %v6478, %v3839
      %v6511 = vadd.f32 %v6479, %v3839
      %v6512 = vadd.f32 %v6480, %v3839
      %v6513 = vadd.f32 %v6481, %v3839
      %v6514 = vadd.f32 %v6482, %v3839
      %v6515 = vadd.f32 %v6483, %v3839
      %v6516 = vadd.f32 %v6484, %v3839
      %v6517 = vadd.f32 %v6485, %v3839
      %v6518 = vadd.f32 %v6486, %v3839
      %v6519 = vadd.f32 %v6487, %v3839
      %v6520 = vadd.f32 %v6488, %v3839
      %v6521 = vadd.f32 %v6489, %v3839
      %v6522 = vadd.f32 %v6490, %v3839
      %v6523 = vadd.f32 %v6491, %v3839
      %v6524 = vadd.f32 %v6492, %v3839
      %v6525 = vadd.f32 %v6493, %v3839
      %v6526 = vadd.f32 %v6494, %v3839
      %v6527 = vadd.f32 %v6495, %v3839
      %v6528 = vadd.f32 %v6496, %v3839
      %v6529 = vadd.f32 %v6497, %v3839
      %v6530 = vadd.f32 %v6498, %v3839
      %v6531 = vadd.f32 %v6499, %v3839
      %v6532 = vadd.f32 %v6500, %v3839
      %v6533 = vadd.f32 %v6501, %v3839
      %v6534 = vadd.f32 %v6502, %v3839
      %v6535 = vadd.f32 %v6503, %v3839
      %v6536 = vadd.f32 %v6504, %v3839
      %v6537 = vadd.f32 %v6505, %v3839
      %v6538 = vadd.f32 %v6506, %v3839
      %v6539 = vadd.f32 %v6507, %v3839
      %v6540 = vadd.f32 %v6508, %v3839
      %s6541 = scalar_lea.vmem %s278, 768
      %6542 = vst.msk [vmem:[%s6541] sm:$0xff] %vm3873, %v6509
      %6543 = vst.msk [vmem:[%s6541 + $0x8] sm:$0xff] %vm3873, %v6510
      %6544 = vst.msk [vmem:[%s6541 + $0x10] sm:$0xff] %vm3873, %v6511
      %6545 = vst.msk [vmem:[%s6541 + $0x18] sm:$0xff] %vm3873, %v6512
      %6546 = vst.msk [vmem:[%s6541 + $0x20] sm:$0xff] %vm3873, %v6513
      %6547 = vst.msk [vmem:[%s6541 + $0x28] sm:$0xff] %vm3873, %v6514
      %6548 = vst.msk [vmem:[%s6541 + $0x30] sm:$0xff] %vm3873, %v6515
      %6549 = vst.msk [vmem:[%s6541 + $0x38] sm:$0xff] %vm3873, %v6516
      %6550 = vst.msk [vmem:[%s6541 + $0x40] sm:$0xff] %vm3873, %v6517
      %6551 = vst.msk [vmem:[%s6541 + $0x48] sm:$0xff] %vm3873, %v6518
      %6552 = vst.msk [vmem:[%s6541 + $0x50] sm:$0xff] %vm3873, %v6519
      %6553 = vst.msk [vmem:[%s6541 + $0x58] sm:$0xff] %vm3873, %v6520
      %6554 = vst.msk [vmem:[%s6541 + $0x60] sm:$0xff] %vm3873, %v6521
      %6555 = vst.msk [vmem:[%s6541 + $0x68] sm:$0xff] %vm3873, %v6522
      %6556 = vst.msk [vmem:[%s6541 + $0x70] sm:$0xff] %vm3873, %v6523
      %6557 = vst.msk [vmem:[%s6541 + $0x78] sm:$0xff] %vm3873, %v6524
      %6558 = vst.msk [vmem:[%s6541 + $0x80] sm:$0xff] %vm3873, %v6525
      %6559 = vst.msk [vmem:[%s6541 + $0x88] sm:$0xff] %vm3873, %v6526
      %6560 = vst.msk [vmem:[%s6541 + $0x90] sm:$0xff] %vm3873, %v6527
      %6561 = vst.msk [vmem:[%s6541 + $0x98] sm:$0xff] %vm3873, %v6528
      %6562 = vst.msk [vmem:[%s6541 + $0xa0] sm:$0xff] %vm3873, %v6529
      %6563 = vst.msk [vmem:[%s6541 + $0xa8] sm:$0xff] %vm3873, %v6530
      %6564 = vst.msk [vmem:[%s6541 + $0xb0] sm:$0xff] %vm3873, %v6531
      %6565 = vst.msk [vmem:[%s6541 + $0xb8] sm:$0xff] %vm3873, %v6532
      %6566 = vst.msk [vmem:[%s6541 + $0xc0] sm:$0xff] %vm3873, %v6533
      %6567 = vst.msk [vmem:[%s6541 + $0xc8] sm:$0xff] %vm3873, %v6534
      %6568 = vst.msk [vmem:[%s6541 + $0xd0] sm:$0xff] %vm3873, %v6535
      %6569 = vst.msk [vmem:[%s6541 + $0xd8] sm:$0xff] %vm3873, %v6536
      %6570 = vst.msk [vmem:[%s6541 + $0xe0] sm:$0xff] %vm3873, %v6537
      %6571 = vst.msk [vmem:[%s6541 + $0xe8] sm:$0xff] %vm3873, %v6538
      %6572 = vst.msk [vmem:[%s6541 + $0xf0] sm:$0xff] %vm3873, %v6539
      %6573 = vst.msk [vmem:[%s6541 + $0xf8] sm:$0xff] %vm3873, %v6540
      %p6574 = scmp.lt.s32.totalorder %s18, 1
      %s6575 = scalar_select %p6574, %s18, 1
      %s6576 = smul.addr %s6575, 128
      %s6577 = smul.addr %s6576, 8
      %s6578 = scalar_lea.vmem %s7, %s6577
      // Predicated region
      $region49: #{decoder_forward_pallas.1} parent=47 // pred_check
        %p6579 = pneg %p188
      $region50: #{decoder_forward_pallas.1} parent=47 // pred_check_branch
        %6581 = sbr.rel (%p6579) target = $region52
      $region51: #{decoder_forward_pallas.1} parent=47 // pred_region
        _
      $region52: #{decoder_forward_pallas.1} parent=47 // pred_fallthru
        _
    $region48: #{decoder_forward_pallas.1} parent=5 // pred_fallthru
      _
    %p6582 = scmp.le.s32.totalorder 2, %s13
    // Predicated region
    $region53: #{decoder_forward_pallas.1} parent=5 // pred_check
      %p6583 = pneg %p6582
    $region54: #{decoder_forward_pallas.1} parent=5 // pred_check_branch
      %6585 = sbr.rel (%p6583) target = $region56
    $region55: #{decoder_forward_pallas.1} parent=5 // pred_region
      %s6586 = ssub.s32 %s13, 2
      // Predicated region
      $region57: #{decoder_forward_pallas.1} parent=55 // pred_check
        %p6587 = pneg %p194
      $region58: #{decoder_forward_pallas.1} parent=55 // pred_check_branch
        %6589 = sbr.rel (%p6587) target = $region60
      $region59: #{decoder_forward_pallas.1} parent=55 // pred_region
        %p6590 = scmp.lt.s32.totalorder %s19, 1
        %s6591 = scalar_select %p6590, %s19, 1
        %s6592 = smul.addr %s6591, 128
        %s6593 = smul.addr %s6592, 8
        %s6594 = scalar_lea.vmem %s7, %s6593
      $region60: #{decoder_forward_pallas.1} parent=55 // pred_fallthru
        _
    $region56: #{decoder_forward_pallas.1} parent=5 // pred_fallthru
      _
  $region6: #{decoder_forward_pallas.1} parent=0 // loop_footer
    %s17 = sadd.s32 1, %s13
  $region7: #{decoder_forward_pallas.1} parent=0 // loop_footer_branch
    %12 = sbr.rel target = $region3
  $region8: #{decoder_forward_pallas.1} parent=0 // loop_exit
    _

</llo_original>
